<compile_context>
chip_gen: v7x
topology: tpu7x:2x2x1
jax: 0.10.0
libtpu: 0.0.40
codegen_flags: <defaults>
</compile_context>

<pallas_src>
import functools
import math

import jax
import jax.numpy as jnp
import numpy as np
from jax.experimental import pallas as pl
from jax.experimental.pallas import tpu as pltpu

_LANE = 128     # lane width; channel dims are packed / padded against this
_EPS = 1e-5     # GroupNorm eps (PyTorch default)


def _slab_layout(stride):
    """(taps per 128-lane K-slab, number of K-slabs) for a 3x3 conv."""
    tps = max(1, _LANE // stride)
    return tps, -(-9 // tps)


# ----------------------------- fused Conv3 kernel -----------------------------

def _conv3_block_kernel(x_ref, place_ref, w1_ref, w2_ref, w3_ref,
                        b_ref, gamma_ref, beta_ref, gmat_ref, mask_ref,
                        o_ref, hpad_ref, *, H, W, cin, cout, inv_cnt, is_res):
    # x_ref     : (R, cin_pad) bf16      spatially zero-padded input, flat rows
    # place_ref : (cin_pad, 128) bf16    lane-placement (identity block)
    # w1/2/3_ref: (nslabs*128, 128) bf16 tap-packed conv weights
    # b/gamma/beta_ref : (3, 128) f32    per-conv bias / GN affine (lane padded)
    # gmat_ref  : (128, 128) f32         block-diagonal GroupNorm(8) aggregation
    # mask_ref  : (M, 1) f32             1 for real pixels, 0 for the 2 wrap cols
    # o_ref     : (M, cout) f32          band-layout output (wrapper crops wraps)
    # hpad_ref  : (R, 128) f32           scratch: flat zero-padded activation
    Wp = W + 2
    M = H * Wp

    # Lane-expand x to 128 channels and rewrite the WHOLE padded scratch.  This
    # single store doubles as the memset: borders, spare rows and padding lanes
    # all come out zero, so there is no per-step memset and no stale data.
    hpad_ref[...] = jnp.dot(x_ref[...], place_ref[...],
                            preferred_element_type=jnp.float32)

    mask = mask_ref[...]                                     # (M, 1) f32

    def packed_lhs(stride):
        # Pack tap windows along the contraction dim: tap t occupies lanes
        # [(t % tps) * stride, ...) of K-slab t // tps.  Every window is a
        # contiguous flat row window of hpad; lane placement is an XLU roll
        # plus a VPU add (lanes >= stride are guaranteed zero, adds are exact).
        tps, nslabs = _slab_layout(stride)
        slabs = []
        for s in range(nslabs):
            acc = None
            for p, t in enumerate(range(s * tps, min(9, (s + 1) * tps))):
                off = (t // 3) * Wp + (t % 3)
                win = hpad_ref[off:off + M, :]
                if p:
                    win = pltpu.roll(win, shift=p * stride, axis=1)
                acc = win if acc is None else acc + win
            slabs.append(acc)
        lhs = slabs[0] if nslabs == 1 else jnp.concatenate(slabs, axis=1)
        return lhs.astype(jnp.bfloat16)                      # one cast per conv

    def conv_gn_relu(w_ref, stride, j):
        # 3x3 conv as ONE accumulating MXU dot over the packed K dim, then
        # GroupNorm(8) + ReLU (stats in f32; only the real rows are counted).
        y = jnp.dot(packed_lhs(stride), w_ref[...],
                    preferred_element_type=jnp.float32) + b_ref[j:j + 1, :]
        ym = y * mask
        s2 = jnp.concatenate([jnp.sum(ym, axis=0, keepdims=True),
                              jnp.sum(ym * ym, axis=0, keepdims=True)], axis=0)
        g = jnp.dot(s2, gmat_ref[...], preferred_element_type=jnp.float32)
        mean = g[0:1, :] * inv_cnt
        var = jnp.maximum(g[1:2, :] * inv_cnt - mean * mean, 0.0)   # clamp >= 0
        yn = (y - mean) * jax.lax.rsqrt(var + _EPS)
        yn = yn * gamma_ref[j:j + 1, :] + beta_ref[j:j + 1, :]
        return jnp.maximum(yn, 0.0)                          # (M, 128) f32

    def store_padded(h):
        # Interior band only; the mask re-zeroes the two wrap columns so the
        # zero halo stays intact for the next conv.
        hpad_ref[W + 3:W + 3 + M, :] = h * mask

    h1 = conv_gn_relu(w1_ref, cin, 0)                        # .main
    if is_res:
        o_ref[...] = h1[:, :cout]                            # residual parked in out
    store_padded(h1)
    h2 = conv_gn_relu(w2_ref, cout, 1)                       # .conv[0:3]
    store_padded(h2)
    h3 = conv_gn_relu(w3_ref, cout, 2)                       # .conv[3:6]

    if is_res:
        o_ref[...] = (o_ref[...] + h3[:, :cout]) * (1.0 / 1.414)
    else:
        o_ref[...] = h3[:, :cout]


# ----------------------------- wrapper -----------------------------

def _pad_last(a, size):
    return jnp.pad(a, [(0, 0)] * (a.ndim - 1) + [(0, size - a.shape[-1])])


def _pack_weight(w, stride):
    """(3, 3, cin, cout) -> (nslabs*128, 128) bf16 with taps packed along K."""
    cin, cout = int(w.shape[2]), int(w.shape[3])
    tps, nslabs = _slab_layout(stride)
    wp = jnp.zeros((nslabs * _LANE, _LANE), jnp.float32)
    for t in range(9):
        kh, kw = divmod(t, 3)
        s, p = divmod(t, tps)
        row = s * _LANE + p * stride
        wp = wp.at[row:row + cin, :cout].set(w[kh, kw])
    return wp.astype(jnp.bfloat16)


def conv3_forward(params, x_nchw, is_res):
    """Conv3.forward. x_nchw: (N, Cin, H, W) f32 -> (N, Cout, H, W) f32."""
    x = jnp.transpose(x_nchw, (0, 2, 3, 1)).astype(jnp.float32)   # NHWC
    N, H, W, Cin = x.shape
    Cout = params["c1"]["w"].shape[-1]
    assert Cin <= _LANE and Cout <= _LANE and Cout % 8 == 0
    # TODO(synk): channel tiling (Cin/Cout > 128), spatial row-tiling with a halo
    # for large H*W (v7x 64 MiB VMEM) and multi-image grid steps are not needed
    # at these shapes and are not implemented.

    Wp, M = W + 2, H * (W + 2)
    R = -(-((H + 2) * Wp + 2) // 8) * 8        # flat padded rows (+2 window overrun)
    cin_pad = -(-Cin // 8) * 8

    # Tiny flat input slab: spatial zero pad -> flatten -> pad rows/chans.  Only
    # real bytes go to HBM (no 128-lane, no f32 padded image materialised).
    xsp = jnp.pad(x, ((0, 0), (1, 1), (1, 1), (0, 0))).reshape(N, (H + 2) * Wp, Cin)
    xflat = jnp.pad(xsp, ((0, 0), (0, R - (H + 2) * Wp), (0, cin_pad - Cin)))
    xflat = xflat.astype(jnp.bfloat16)

    place = jnp.eye(cin_pad, _LANE, dtype=jnp.bfloat16)      # lane placement

    w1 = _pack_weight(params["c1"]["w"], Cin)                # (128, 128)
    w2 = _pack_weight(params["c2"]["w"], Cout)               # (384, 128)
    w3 = _pack_weight(params["c3"]["w"], Cout)               # (384, 128)

    convs = [params["c1"], params["c2"], params["c3"]]
    b = jnp.stack([_pad_last(c["b"], _LANE) for c in convs])        # (3, 128) f32
    gamma = jnp.stack([_pad_last(c["gamma"], _LANE) for c in convs])
    beta = jnp.stack([_pad_last(c["beta"], _LANE) for c in convs])

    cpg = Cout // 8
    ch = np.arange(_LANE)
    gmat = jnp.asarray(((ch[:, None] // cpg == ch[None, :] // cpg)
                        & (ch[:, None] < Cout) & (ch[None, :] < Cout)
                        ).astype(np.float32))                        # (128, 128)

    mask = jnp.asarray(((np.arange(M) % Wp) < W).astype(np.float32)[:, None])

    kernel = functools.partial(
        _conv3_block_kernel, H=H, W=W, cin=Cin, cout=Cout,
        inv_cnt=1.0 / float(H * W * cpg), is_res=is_res)

    out = pl.pallas_call(
        kernel,
        out_shape=jax.ShapeDtypeStruct((N, M, Cout), jnp.float32),
        grid_spec=pltpu.PrefetchScalarGridSpec(
            num_scalar_prefetch=0,
            grid=(N,),
            in_specs=[
                pl.BlockSpec((None, R, cin_pad), lambda i: (i, 0, 0)),
                pl.BlockSpec((cin_pad, _LANE), lambda i: (0, 0)),
                pl.BlockSpec(w1.shape, lambda i: (0, 0)),
                pl.BlockSpec(w2.shape, lambda i: (0, 0)),
                pl.BlockSpec(w3.shape, lambda i: (0, 0)),
                pl.BlockSpec((3, _LANE), lambda i: (0, 0)),
                pl.BlockSpec((3, _LANE), lambda i: (0, 0)),
                pl.BlockSpec((3, _LANE), lambda i: (0, 0)),
                pl.BlockSpec((_LANE, _LANE), lambda i: (0, 0)),
                pl.BlockSpec((M, 1), lambda i: (0, 0)),
            ],
            out_specs=pl.BlockSpec((None, M, Cout), lambda i: (i, 0, 0)),
            scratch_shapes=[pltpu.VMEM((R, _LANE), jnp.float32)],
        ),
        compiler_params=pltpu.CompilerParams(
            dimension_semantics=("parallel",),
        ),
    )(xflat, place, w1, w2, w3, b, gamma, beta, gmat, mask)

    y = out.reshape(N, H, Wp, Cout)[:, :, :W, :]             # drop the 2 wrap cols
    return jnp.transpose(y, (0, 3, 1, 2))                    # NHWC -> NCHW


# ----------------------------- parameters & reference -----------------------------

def _conv_params(key, cin, cout, ksize=3):
    kw, kb = jax.random.split(key)
    bound = 1.0 / math.sqrt(cin * ksize * ksize)
    w = jax.random.uniform(kw, (ksize, ksize, cin, cout), jnp.float32, -bound, bound)
    b = jax.random.uniform(kb, (cout,), jnp.float32, -bound, bound)
    return {"w": w, "b": b,
            "gamma": jnp.ones((cout,), jnp.float32),
            "beta": jnp.zeros((cout,), jnp.float32)}


def init_conv3_params(key, cin, cout):
    k1, k2, k3 = jax.random.split(key, 3)
    return {"c1": _conv_params(k1, cin, cout),
            "c2": _conv_params(k2, cout, cout),
            "c3": _conv_params(k3, cout, cout)}


def conv3_reference(params, x_nchw, is_res):
    """Pure-JAX f32 reference matching the PyTorch Conv3 forward."""
    x = jnp.transpose(x_nchw, (0, 2, 3, 1)).astype(jnp.float32)

    def conv_gn_relu(h, p):
        y = jax.lax.conv_general_dilated(
            h, p["w"], (1, 1), "SAME",
            dimension_numbers=("NHWC", "HWIO", "NHWC")) + p["b"]
        n, hh, ww, c = y.shape
        yg = y.reshape(n, hh * ww, 8, c // 8)
        mean = yg.mean(axis=(1, 3), keepdims=True)
        var = yg.var(axis=(1, 3), keepdims=True)
        yn = ((yg - mean) * jax.lax.rsqrt(var + _EPS)).reshape(n, hh, ww, c)
        yn = yn * p["gamma"] + p["beta"]
        return jnp.maximum(yn, 0.0)

    h1 = conv_gn_relu(x, params["c1"])
    h3 = conv_gn_relu(conv_gn_relu(h1, params["c2"]), params["c3"])
    out = (h1 + h3) / 1.414 if is_res else h3
    return jnp.transpose(out, (0, 3, 1, 2))


# ----------------------------- main -----------------------------

if __name__ == "__main__":
    root = jax.random.PRNGKey(0)
    kp, kx = jax.random.split(root)

    N, Cin, Cout, H, W = 2, 4, 32, 16, 16
    params = init_conv3_params(kp, Cin, Cout)
    x = jax.random.uniform(kx, (N, Cin, H, W), jnp.float32)

    fwd_res = jax.jit(functools.partial(conv3_forward, is_res=True))
    fwd_plain = jax.jit(functools.partial(conv3_forward, is_res=False))

    y_res = fwd_res(params, x)
    y_plain = fwd_plain(params, x)
    jax.block_until_ready((y_res, y_plain))

    assert y_res.shape == (N, Cout, H, W), y_res.shape
    assert y_plain.shape == (N, Cout, H, W), y_plain.shape
    assert bool(jnp.all(jnp.isfinite(y_res))) and bool(jnp.all(jnp.isfinite(y_plain)))

    # Validate against a pure-JAX f32 reference (kernel uses bf16 MXU operands,
    # so tolerance is loose but far below any structural-bug error).
    err_res = float(jnp.max(jnp.abs(y_res - conv3_reference(params, x, True))))
    err_plain = float(jnp.max(jnp.abs(y_plain - conv3_reference(params, x, False))))
    assert err_res < 0.15 and err_plain < 0.15, (err_res, err_plain)

    print("KERNEL_OK")
</pallas_src>

<mosaic_0001>
module attributes {stable_mosaic.version = 11 : i64} {
  func.func @_conv3_block_kernel(%arg0: i32, %arg1: memref<1x328x8xbf16, #tpu.memory_space<vmem>>, %arg2: memref<8x128xbf16, #tpu.memory_space<vmem>>, %arg3: memref<128x128xbf16, #tpu.memory_space<vmem>>, %arg4: memref<384x128xbf16, #tpu.memory_space<vmem>>, %arg5: memref<384x128xbf16, #tpu.memory_space<vmem>>, %arg6: memref<3x128xf32, #tpu.memory_space<vmem>>, %arg7: memref<3x128xf32, #tpu.memory_space<vmem>>, %arg8: memref<3x128xf32, #tpu.memory_space<vmem>>, %arg9: memref<128x128xf32, #tpu.memory_space<vmem>>, %arg10: memref<288x1xf32, #tpu.memory_space<vmem>>, %arg11: memref<1x288x32xf32, #tpu.memory_space<vmem>>, %arg12: memref<328x128xf32, #tpu.memory_space<vmem>>) attributes {dimension_semantics = [#tpu.dimension_semantics<parallel>], iteration_bounds = array<i64: 2>, scalar_prefetch = 0 : i64, scratch_operands = 1 : i64, tpu.core_type = #tpu.core_type<tc>, window_params = [{transform_indices = @transform_0, window_bounds = array<i64: 1, 328, 8>}, {pipeline_mode = #tpu.pipeline_mode<synchronous>, transform_indices = @transform_1, window_bounds = array<i64: 8, 128>}, {pipeline_mode = #tpu.pipeline_mode<synchronous>, transform_indices = @transform_2, window_bounds = array<i64: 128, 128>}, {pipeline_mode = #tpu.pipeline_mode<synchronous>, transform_indices = @transform_3, window_bounds = array<i64: 384, 128>}, {pipeline_mode = #tpu.pipeline_mode<synchronous>, transform_indices = @transform_4, window_bounds = array<i64: 384, 128>}, {pipeline_mode = #tpu.pipeline_mode<synchronous>, transform_indices = @transform_5, window_bounds = array<i64: 3, 128>}, {pipeline_mode = #tpu.pipeline_mode<synchronous>, transform_indices = @transform_6, window_bounds = array<i64: 3, 128>}, {pipeline_mode = #tpu.pipeline_mode<synchronous>, transform_indices = @transform_7, window_bounds = array<i64: 3, 128>}, {pipeline_mode = #tpu.pipeline_mode<synchronous>, transform_indices = @transform_8, window_bounds = array<i64: 128, 128>}, {pipeline_mode = #tpu.pipeline_mode<synchronous>, transform_indices = @transform_9, window_bounds = array<i64: 288, 1>}, {transform_indices = @transform_10, window_bounds = array<i64: 1, 288, 32>}]} {
    %c0 = arith.constant 0 : index
    %c0_0 = arith.constant 0 : index
    %c0_1 = arith.constant 0 : index
    %0 = vector.load %arg1[%c0, %c0_0, %c0_1] : memref<1x328x8xbf16, #tpu.memory_space<vmem>>, vector<1x328x8xbf16>
    %1 = vector.shape_cast %0 : vector<1x328x8xbf16> to vector<328x8xbf16>
    %c0_2 = arith.constant 0 : index
    %c0_3 = arith.constant 0 : index
    %2 = vector.load %arg2[%c0_2, %c0_3] : memref<8x128xbf16, #tpu.memory_space<vmem>>, vector<8x128xbf16>
    %cst = arith.constant dense<0.000000e+00> : vector<328x128xf32>
    %3 = tpu.matmul %1, %2, %cst {dimension_numbers = #tpu.dot_dimension_numbers<[1], [0], [0], [1], [0, 0, 1, 1], [], []>} : vector<328x8xbf16>, vector<8x128xbf16>, vector<328x128xf32> -> vector<328x128xf32>
    %c0_4 = arith.constant 0 : index
    %c0_5 = arith.constant 0 : index
    %4 = vector.load %arg12[%c0_4, %c0_5] : memref<328x128xf32, #tpu.memory_space<vmem>>, vector<328x128xf32>
    tpu.vector_store %arg12[%c0_4, %c0_5], %3 {strides = array<i32>} : memref<328x128xf32, #tpu.memory_space<vmem>>, vector<328x128xf32>,
    %c0_6 = arith.constant 0 : index
    %c0_7 = arith.constant 0 : index
    %5 = vector.load %arg10[%c0_6, %c0_7] : memref<288x1xf32, #tpu.memory_space<vmem>>, vector<288x1xf32>
    %c0_8 = arith.constant 0 : index
    %c0_9 = arith.constant 0 : index
    %6 = vector.load %arg12[%c0_8, %c0_9] : memref<328x128xf32, #tpu.memory_space<vmem>>, vector<288x128xf32>
    %c1 = arith.constant 1 : index
    %c0_10 = arith.constant 0 : index
    %7 = vector.load %arg12[%c1, %c0_10] : memref<328x128xf32, #tpu.memory_space<vmem>>, vector<288x128xf32>
    %c4_i32 = arith.constant 4 : i32
    %8 = tpu.dynamic_rotate %7 by %c4_i32 dim 1 : vector<288x128xf32>, i32 -> vector<288x128xf32>
    %9 = arith.addf %6, %8 : vector<288x128xf32>
    %c2 = arith.constant 2 : index
    %c0_11 = arith.constant 0 : index
    %10 = vector.load %arg12[%c2, %c0_11] : memref<328x128xf32, #tpu.memory_space<vmem>>, vector<288x128xf32>
    %c8_i32 = arith.constant 8 : i32
    %11 = tpu.dynamic_rotate %10 by %c8_i32 dim 1 : vector<288x128xf32>, i32 -> vector<288x128xf32>
    %12 = arith.addf %9, %11 : vector<288x128xf32>
    %c18 = arith.constant 18 : index
    %c0_12 = arith.constant 0 : index
    %13 = vector.load %arg12[%c18, %c0_12] : memref<328x128xf32, #tpu.memory_space<vmem>>, vector<288x128xf32>
    %c12_i32 = arith.constant 12 : i32
    %14 = tpu.dynamic_rotate %13 by %c12_i32 dim 1 : vector<288x128xf32>, i32 -> vector<288x128xf32>
    %15 = arith.addf %12, %14 : vector<288x128xf32>
    %c19 = arith.constant 19 : index
    %c0_13 = arith.constant 0 : index
    %16 = vector.load %arg12[%c19, %c0_13] : memref<328x128xf32, #tpu.memory_space<vmem>>, vector<288x128xf32>
    %c16_i32 = arith.constant 16 : i32
    %17 = tpu.dynamic_rotate %16 by %c16_i32 dim 1 : vector<288x128xf32>, i32 -> vector<288x128xf32>
    %18 = arith.addf %15, %17 : vector<288x128xf32>
    %c20 = arith.constant 20 : index
    %c0_14 = arith.constant 0 : index
    %19 = vector.load %arg12[%c20, %c0_14] : memref<328x128xf32, #tpu.memory_space<vmem>>, vector<288x128xf32>
    %c20_i32 = arith.constant 20 : i32
    %20 = tpu.dynamic_rotate %19 by %c20_i32 dim 1 : vector<288x128xf32>, i32 -> vector<288x128xf32>
    %21 = arith.addf %18, %20 : vector<288x128xf32>
    %c36 = arith.constant 36 : index
    %c0_15 = arith.constant 0 : index
    %22 = vector.load %arg12[%c36, %c0_15] : memref<328x128xf32, #tpu.memory_space<vmem>>, vector<288x128xf32>
    %c24_i32 = arith.constant 24 : i32
    %23 = tpu.dynamic_rotate %22 by %c24_i32 dim 1 : vector<288x128xf32>, i32 -> vector<288x128xf32>
    %24 = arith.addf %21, %23 : vector<288x128xf32>
    %c37 = arith.constant 37 : index
    %c0_16 = arith.constant 0 : index
    %25 = vector.load %arg12[%c37, %c0_16] : memref<328x128xf32, #tpu.memory_space<vmem>>, vector<288x128xf32>
    %c28_i32 = arith.constant 28 : i32
    %26 = tpu.dynamic_rotate %25 by %c28_i32 dim 1 : vector<288x128xf32>, i32 -> vector<288x128xf32>
    %27 = arith.addf %24, %26 : vector<288x128xf32>
    %c38 = arith.constant 38 : index
    %c0_17 = arith.constant 0 : index
    %28 = vector.load %arg12[%c38, %c0_17] : memref<328x128xf32, #tpu.memory_space<vmem>>, vector<288x128xf32>
    %c32_i32 = arith.constant 32 : i32
    %29 = tpu.dynamic_rotate %28 by %c32_i32 dim 1 : vector<288x128xf32>, i32 -> vector<288x128xf32>
    %30 = arith.addf %27, %29 : vector<288x128xf32>
    %31 = arith.truncf %30 : vector<288x128xf32> to vector<288x128xbf16>
    %c0_18 = arith.constant 0 : index
    %c0_19 = arith.constant 0 : index
    %32 = vector.load %arg3[%c0_18, %c0_19] : memref<128x128xbf16, #tpu.memory_space<vmem>>, vector<128x128xbf16>
    %cst_20 = arith.constant dense<0.000000e+00> : vector<288x128xf32>
    %33 = tpu.matmul %31, %32, %cst_20 {dimension_numbers = #tpu.dot_dimension_numbers<[1], [0], [0], [1], [0, 0, 1, 1], [], []>} : vector<288x128xbf16>, vector<128x128xbf16>, vector<288x128xf32> -> vector<288x128xf32>
    %c0_21 = arith.constant 0 : index
    %c0_22 = arith.constant 0 : index
    %34 = vector.load %arg6[%c0_21, %c0_22] : memref<3x128xf32, #tpu.memory_space<vmem>>, vector<1x128xf32>
    %35 = vector.broadcast %34 : vector<1x128xf32> to vector<288x128xf32>
    %36 = arith.addf %33, %35 : vector<288x128xf32>
    %37 = vector.broadcast %5 : vector<288x1xf32> to vector<288x128xf32>
    %38 = arith.mulf %36, %37 : vector<288x128xf32>
    %cst_23 = arith.constant dense<0.000000e+00> : vector<128xf32>
    %39 = vector.multi_reduction <add>, %38, %cst_23 [0] : vector<288x128xf32> to vector<128xf32>
    %40 = vector.shape_cast %39 : vector<128xf32> to vector<1x128xf32>
    %41 = arith.mulf %38, %38 : vector<288x128xf32>
    %cst_24 = arith.constant dense<0.000000e+00> : vector<128xf32>
    %42 = vector.multi_reduction <add>, %41, %cst_24 [0] : vector<288x128xf32> to vector<128xf32>
    %43 = vector.shape_cast %42 : vector<128xf32> to vector<1x128xf32>
    %44 = tpu.concatenate %40, %43 in 0 : vector<1x128xf32>, vector<1x128xf32> -> vector<2x128xf32>
    %c0_25 = arith.constant 0 : index
    %c0_26 = arith.constant 0 : index
    %45 = vector.load %arg9[%c0_25, %c0_26] : memref<128x128xf32, #tpu.memory_space<vmem>>, vector<128x128xf32>
    %cst_27 = arith.constant dense<0.000000e+00> : vector<2x128xf32>
    %46 = tpu.matmul %44, %45, %cst_27 {dimension_numbers = #tpu.dot_dimension_numbers<[1], [0], [0], [1], [0, 0, 1, 1], [], []>} : vector<2x128xf32>, vector<128x128xf32>, vector<2x128xf32> -> vector<2x128xf32>
    %47 = vector.extract_strided_slice %46 {offsets = [0, 0], sizes = [1, 128], strides = [1, 1]} : vector<2x128xf32> to vector<1x128xf32>
    %cst_28 = arith.constant 9.765625E-4 : f32
    %48 = vector.broadcast %cst_28 : f32 to vector<1x128xf32>
    %49 = arith.mulf %47, %48 : vector<1x128xf32>
    %50 = vector.extract_strided_slice %46 {offsets = [1, 0], sizes = [1, 128], strides = [1, 1]} : vector<2x128xf32> to vector<1x128xf32>
    %cst_29 = arith.constant 9.765625E-4 : f32
    %51 = vector.broadcast %cst_29 : f32 to vector<1x128xf32>
    %52 = arith.mulf %50, %51 : vector<1x128xf32>
    %53 = arith.mulf %49, %49 : vector<1x128xf32>
    %54 = arith.subf %52, %53 : vector<1x128xf32>
    %cst_30 = arith.constant 0.000000e+00 : f32
    %55 = vector.broadcast %cst_30 : f32 to vector<1x128xf32>
    %56 = arith.maximumf %54, %55 : vector<1x128xf32>
    %57 = vector.broadcast %49 : vector<1x128xf32> to vector<288x128xf32>
    %58 = arith.subf %36, %57 : vector<288x128xf32>
    %cst_31 = arith.constant 9.99999974E-6 : f32
    %59 = vector.broadcast %cst_31 : f32 to vector<1x128xf32>
    %60 = arith.addf %56, %59 : vector<1x128xf32>
    %61 = math.rsqrt %60 : vector<1x128xf32>
    %62 = vector.broadcast %61 : vector<1x128xf32> to vector<288x128xf32>
    %63 = arith.mulf %58, %62 : vector<288x128xf32>
    %c0_32 = arith.constant 0 : index
    %c0_33 = arith.constant 0 : index
    %64 = vector.load %arg7[%c0_32, %c0_33] : memref<3x128xf32, #tpu.memory_space<vmem>>, vector<1x128xf32>
    %65 = vector.broadcast %64 : vector<1x128xf32> to vector<288x128xf32>
    %66 = arith.mulf %63, %65 : vector<288x128xf32>
    %c0_34 = arith.constant 0 : index
    %c0_35 = arith.constant 0 : index
    %67 = vector.load %arg8[%c0_34, %c0_35] : memref<3x128xf32, #tpu.memory_space<vmem>>, vector<1x128xf32>
    %68 = vector.broadcast %67 : vector<1x128xf32> to vector<288x128xf32>
    %69 = arith.addf %66, %68 : vector<288x128xf32>
    %cst_36 = arith.constant 0.000000e+00 : f32
    %70 = vector.broadcast %cst_36 : f32 to vector<288x128xf32>
    %71 = arith.maximumf %69, %70 : vector<288x128xf32>
    %72 = vector.extract_strided_slice %71 {offsets = [0, 0], sizes = [288, 32], strides = [1, 1]} : vector<288x128xf32> to vector<288x32xf32>
    %c0_37 = arith.constant 0 : index
    %c0_38 = arith.constant 0 : index
    %c0_39 = arith.constant 0 : index
    %73 = vector.load %arg11[%c0_37, %c0_38, %c0_39] : memref<1x288x32xf32, #tpu.memory_space<vmem>>, vector<1x288x32xf32>
    %74 = vector.shape_cast %73 : vector<1x288x32xf32> to vector<288x32xf32>
    %75 = vector.shape_cast %72 : vector<288x32xf32> to vector<1x288x32xf32>
    tpu.vector_store %arg11[%c0_37, %c0_38, %c0_39], %75 {strides = array<i32>} : memref<1x288x32xf32, #tpu.memory_space<vmem>>, vector<1x288x32xf32>,
    %76 = vector.broadcast %5 : vector<288x1xf32> to vector<288x128xf32>
    %77 = arith.mulf %71, %76 : vector<288x128xf32>
    %c19_40 = arith.constant 19 : index
    %c0_41 = arith.constant 0 : index
    %78 = vector.load %arg12[%c19_40, %c0_41] : memref<328x128xf32, #tpu.memory_space<vmem>>, vector<288x128xf32>
    tpu.vector_store %arg12[%c19_40, %c0_41], %77 {strides = array<i32>} : memref<328x128xf32, #tpu.memory_space<vmem>>, vector<288x128xf32>,
    %c0_42 = arith.constant 0 : index
    %c0_43 = arith.constant 0 : index
    %79 = vector.load %arg12[%c0_42, %c0_43] : memref<328x128xf32, #tpu.memory_space<vmem>>, vector<288x128xf32>
    %c1_44 = arith.constant 1 : index
    %c0_45 = arith.constant 0 : index
    %80 = vector.load %arg12[%c1_44, %c0_45] : memref<328x128xf32, #tpu.memory_space<vmem>>, vector<288x128xf32>
    %c32_i32_46 = arith.constant 32 : i32
    %81 = tpu.dynamic_rotate %80 by %c32_i32_46 dim 1 : vector<288x128xf32>, i32 -> vector<288x128xf32>
    %82 = arith.addf %79, %81 : vector<288x128xf32>
    %c2_47 = arith.constant 2 : index
    %c0_48 = arith.constant 0 : index
    %83 = vector.load %arg12[%c2_47, %c0_48] : memref<328x128xf32, #tpu.memory_space<vmem>>, vector<288x128xf32>
    %c64_i32 = arith.constant 64 : i32
    %84 = tpu.dynamic_rotate %83 by %c64_i32 dim 1 : vector<288x128xf32>, i32 -> vector<288x128xf32>
    %85 = arith.addf %82, %84 : vector<288x128xf32>
    %c18_49 = arith.constant 18 : index
    %c0_50 = arith.constant 0 : index
    %86 = vector.load %arg12[%c18_49, %c0_50] : memref<328x128xf32, #tpu.memory_space<vmem>>, vector<288x128xf32>
    %c96_i32 = arith.constant 96 : i32
    %87 = tpu.dynamic_rotate %86 by %c96_i32 dim 1 : vector<288x128xf32>, i32 -> vector<288x128xf32>
    %88 = arith.addf %85, %87 : vector<288x128xf32>
    %c19_51 = arith.constant 19 : index
    %c0_52 = arith.constant 0 : index
    %89 = vector.load %arg12[%c19_51, %c0_52] : memref<328x128xf32, #tpu.memory_space<vmem>>, vector<288x128xf32>
    %c20_53 = arith.constant 20 : index
    %c0_54 = arith.constant 0 : index
    %90 = vector.load %arg12[%c20_53, %c0_54] : memref<328x128xf32, #tpu.memory_space<vmem>>, vector<288x128xf32>
    %c32_i32_55 = arith.constant 32 : i32
    %91 = tpu.dynamic_rotate %90 by %c32_i32_55 dim 1 : vector<288x128xf32>, i32 -> vector<288x128xf32>
    %92 = arith.addf %89, %91 : vector<288x128xf32>
    %c36_56 = arith.constant 36 : index
    %c0_57 = arith.constant 0 : index
    %93 = vector.load %arg12[%c36_56, %c0_57] : memref<328x128xf32, #tpu.memory_space<vmem>>, vector<288x128xf32>
    %c64_i32_58 = arith.constant 64 : i32
    %94 = tpu.dynamic_rotate %93 by %c64_i32_58 dim 1 : vector<288x128xf32>, i32 -> vector<288x128xf32>
    %95 = arith.addf %92, %94 : vector<288x128xf32>
    %c37_59 = arith.constant 37 : index
    %c0_60 = arith.constant 0 : index
    %96 = vector.load %arg12[%c37_59, %c0_60] : memref<328x128xf32, #tpu.memory_space<vmem>>, vector<288x128xf32>
    %c96_i32_61 = arith.constant 96 : i32
    %97 = tpu.dynamic_rotate %96 by %c96_i32_61 dim 1 : vector<288x128xf32>, i32 -> vector<288x128xf32>
    %98 = arith.addf %95, %97 : vector<288x128xf32>
    %c38_62 = arith.constant 38 : index
    %c0_63 = arith.constant 0 : index
    %99 = vector.load %arg12[%c38_62, %c0_63] : memref<328x128xf32, #tpu.memory_space<vmem>>, vector<288x128xf32>
    %100 = tpu.concatenate %88, %98, %99 in 1 : vector<288x128xf32>, vector<288x128xf32>, vector<288x128xf32> -> vector<288x384xf32>
    %101 = arith.truncf %100 : vector<288x384xf32> to vector<288x384xbf16>
    %c0_64 = arith.constant 0 : index
    %c0_65 = arith.constant 0 : index
    %102 = vector.load %arg4[%c0_64, %c0_65] : memref<384x128xbf16, #tpu.memory_space<vmem>>, vector<384x128xbf16>
    %cst_66 = arith.constant dense<0.000000e+00> : vector<288x128xf32>
    %103 = tpu.matmul %101, %102, %cst_66 {dimension_numbers = #tpu.dot_dimension_numbers<[1], [0], [0], [1], [0, 0, 1, 1], [], []>} : vector<288x384xbf16>, vector<384x128xbf16>, vector<288x128xf32> -> vector<288x128xf32>
    %c1_67 = arith.constant 1 : index
    %c0_68 = arith.constant 0 : index
    %104 = vector.load %arg6[%c1_67, %c0_68] : memref<3x128xf32, #tpu.memory_space<vmem>>, vector<1x128xf32>
    %105 = vector.broadcast %104 : vector<1x128xf32> to vector<288x128xf32>
    %106 = arith.addf %103, %105 : vector<288x128xf32>
    %107 = vector.broadcast %5 : vector<288x1xf32> to vector<288x128xf32>
    %108 = arith.mulf %106, %107 : vector<288x128xf32>
    %cst_69 = arith.constant dense<0.000000e+00> : vector<128xf32>
    %109 = vector.multi_reduction <add>, %108, %cst_69 [0] : vector<288x128xf32> to vector<128xf32>
    %110 = vector.shape_cast %109 : vector<128xf32> to vector<1x128xf32>
    %111 = arith.mulf %108, %108 : vector<288x128xf32>
    %cst_70 = arith.constant dense<0.000000e+00> : vector<128xf32>
    %112 = vector.multi_reduction <add>, %111, %cst_70 [0] : vector<288x128xf32> to vector<128xf32>
    %113 = vector.shape_cast %112 : vector<128xf32> to vector<1x128xf32>
    %114 = tpu.concatenate %110, %113 in 0 : vector<1x128xf32>, vector<1x128xf32> -> vector<2x128xf32>
    %c0_71 = arith.constant 0 : index
    %c0_72 = arith.constant 0 : index
    %115 = vector.load %arg9[%c0_71, %c0_72] : memref<128x128xf32, #tpu.memory_space<vmem>>, vector<128x128xf32>
    %cst_73 = arith.constant dense<0.000000e+00> : vector<2x128xf32>
    %116 = tpu.matmul %114, %115, %cst_73 {dimension_numbers = #tpu.dot_dimension_numbers<[1], [0], [0], [1], [0, 0, 1, 1], [], []>} : vector<2x128xf32>, vector<128x128xf32>, vector<2x128xf32> -> vector<2x128xf32>
    %117 = vector.extract_strided_slice %116 {offsets = [0, 0], sizes = [1, 128], strides = [1, 1]} : vector<2x128xf32> to vector<1x128xf32>
    %cst_74 = arith.constant 9.765625E-4 : f32
    %118 = vector.broadcast %cst_74 : f32 to vector<1x128xf32>
    %119 = arith.mulf %117, %118 : vector<1x128xf32>
    %120 = vector.extract_strided_slice %116 {offsets = [1, 0], sizes = [1, 128], strides = [1, 1]} : vector<2x128xf32> to vector<1x128xf32>
    %cst_75 = arith.constant 9.765625E-4 : f32
    %121 = vector.broadcast %cst_75 : f32 to vector<1x128xf32>
    %122 = arith.mulf %120, %121 : vector<1x128xf32>
    %123 = arith.mulf %119, %119 : vector<1x128xf32>
    %124 = arith.subf %122, %123 : vector<1x128xf32>
    %cst_76 = arith.constant 0.000000e+00 : f32
    %125 = vector.broadcast %cst_76 : f32 to vector<1x128xf32>
    %126 = arith.maximumf %124, %125 : vector<1x128xf32>
    %127 = vector.broadcast %119 : vector<1x128xf32> to vector<288x128xf32>
    %128 = arith.subf %106, %127 : vector<288x128xf32>
    %cst_77 = arith.constant 9.99999974E-6 : f32
    %129 = vector.broadcast %cst_77 : f32 to vector<1x128xf32>
    %130 = arith.addf %126, %129 : vector<1x128xf32>
    %131 = math.rsqrt %130 : vector<1x128xf32>
    %132 = vector.broadcast %131 : vector<1x128xf32> to vector<288x128xf32>
    %133 = arith.mulf %128, %132 : vector<288x128xf32>
    %c1_78 = arith.constant 1 : index
    %c0_79 = arith.constant 0 : index
    %134 = vector.load %arg7[%c1_78, %c0_79] : memref<3x128xf32, #tpu.memory_space<vmem>>, vector<1x128xf32>
    %135 = vector.broadcast %134 : vector<1x128xf32> to vector<288x128xf32>
    %136 = arith.mulf %133, %135 : vector<288x128xf32>
    %c1_80 = arith.constant 1 : index
    %c0_81 = arith.constant 0 : index
    %137 = vector.load %arg8[%c1_80, %c0_81] : memref<3x128xf32, #tpu.memory_space<vmem>>, vector<1x128xf32>
    %138 = vector.broadcast %137 : vector<1x128xf32> to vector<288x128xf32>
    %139 = arith.addf %136, %138 : vector<288x128xf32>
    %cst_82 = arith.constant 0.000000e+00 : f32
    %140 = vector.broadcast %cst_82 : f32 to vector<288x128xf32>
    %141 = arith.maximumf %139, %140 : vector<288x128xf32>
    %142 = vector.broadcast %5 : vector<288x1xf32> to vector<288x128xf32>
    %143 = arith.mulf %141, %142 : vector<288x128xf32>
    %c19_83 = arith.constant 19 : index
    %c0_84 = arith.constant 0 : index
    %144 = vector.load %arg12[%c19_83, %c0_84] : memref<328x128xf32, #tpu.memory_space<vmem>>, vector<288x128xf32>
    tpu.vector_store %arg12[%c19_83, %c0_84], %143 {strides = array<i32>} : memref<328x128xf32, #tpu.memory_space<vmem>>, vector<288x128xf32>,
    %c0_85 = arith.constant 0 : index
    %c0_86 = arith.constant 0 : index
    %145 = vector.load %arg12[%c0_85, %c0_86] : memref<328x128xf32, #tpu.memory_space<vmem>>, vector<288x128xf32>
    %c1_87 = arith.constant 1 : index
    %c0_88 = arith.constant 0 : index
    %146 = vector.load %arg12[%c1_87, %c0_88] : memref<328x128xf32, #tpu.memory_space<vmem>>, vector<288x128xf32>
    %c32_i32_89 = arith.constant 32 : i32
    %147 = tpu.dynamic_rotate %146 by %c32_i32_89 dim 1 : vector<288x128xf32>, i32 -> vector<288x128xf32>
    %148 = arith.addf %145, %147 : vector<288x128xf32>
    %c2_90 = arith.constant 2 : index
    %c0_91 = arith.constant 0 : index
    %149 = vector.load %arg12[%c2_90, %c0_91] : memref<328x128xf32, #tpu.memory_space<vmem>>, vector<288x128xf32>
    %c64_i32_92 = arith.constant 64 : i32
    %150 = tpu.dynamic_rotate %149 by %c64_i32_92 dim 1 : vector<288x128xf32>, i32 -> vector<288x128xf32>
    %151 = arith.addf %148, %150 : vector<288x128xf32>
    %c18_93 = arith.constant 18 : index
    %c0_94 = arith.constant 0 : index
    %152 = vector.load %arg12[%c18_93, %c0_94] : memref<328x128xf32, #tpu.memory_space<vmem>>, vector<288x128xf32>
    %c96_i32_95 = arith.constant 96 : i32
    %153 = tpu.dynamic_rotate %152 by %c96_i32_95 dim 1 : vector<288x128xf32>, i32 -> vector<288x128xf32>
    %154 = arith.addf %151, %153 : vector<288x128xf32>
    %c19_96 = arith.constant 19 : index
    %c0_97 = arith.constant 0 : index
    %155 = vector.load %arg12[%c19_96, %c0_97] : memref<328x128xf32, #tpu.memory_space<vmem>>, vector<288x128xf32>
    %c20_98 = arith.constant 20 : index
    %c0_99 = arith.constant 0 : index
    %156 = vector.load %arg12[%c20_98, %c0_99] : memref<328x128xf32, #tpu.memory_space<vmem>>, vector<288x128xf32>
    %c32_i32_100 = arith.constant 32 : i32
    %157 = tpu.dynamic_rotate %156 by %c32_i32_100 dim 1 : vector<288x128xf32>, i32 -> vector<288x128xf32>
    %158 = arith.addf %155, %157 : vector<288x128xf32>
    %c36_101 = arith.constant 36 : index
    %c0_102 = arith.constant 0 : index
    %159 = vector.load %arg12[%c36_101, %c0_102] : memref<328x128xf32, #tpu.memory_space<vmem>>, vector<288x128xf32>
    %c64_i32_103 = arith.constant 64 : i32
    %160 = tpu.dynamic_rotate %159 by %c64_i32_103 dim 1 : vector<288x128xf32>, i32 -> vector<288x128xf32>
    %161 = arith.addf %158, %160 : vector<288x128xf32>
    %c37_104 = arith.constant 37 : index
    %c0_105 = arith.constant 0 : index
    %162 = vector.load %arg12[%c37_104, %c0_105] : memref<328x128xf32, #tpu.memory_space<vmem>>, vector<288x128xf32>
    %c96_i32_106 = arith.constant 96 : i32
    %163 = tpu.dynamic_rotate %162 by %c96_i32_106 dim 1 : vector<288x128xf32>, i32 -> vector<288x128xf32>
    %164 = arith.addf %161, %163 : vector<288x128xf32>
    %c38_107 = arith.constant 38 : index
    %c0_108 = arith.constant 0 : index
    %165 = vector.load %arg12[%c38_107, %c0_108] : memref<328x128xf32, #tpu.memory_space<vmem>>, vector<288x128xf32>
    %166 = tpu.concatenate %154, %164, %165 in 1 : vector<288x128xf32>, vector<288x128xf32>, vector<288x128xf32> -> vector<288x384xf32>
    %167 = arith.truncf %166 : vector<288x384xf32> to vector<288x384xbf16>
    %c0_109 = arith.constant 0 : index
    %c0_110 = arith.constant 0 : index
    %168 = vector.load %arg5[%c0_109, %c0_110] : memref<384x128xbf16, #tpu.memory_space<vmem>>, vector<384x128xbf16>
    %cst_111 = arith.constant dense<0.000000e+00> : vector<288x128xf32>
    %169 = tpu.matmul %167, %168, %cst_111 {dimension_numbers = #tpu.dot_dimension_numbers<[1], [0], [0], [1], [0, 0, 1, 1], [], []>} : vector<288x384xbf16>, vector<384x128xbf16>, vector<288x128xf32> -> vector<288x128xf32>
    %c2_112 = arith.constant 2 : index
    %c0_113 = arith.constant 0 : index
    %170 = vector.load %arg6[%c2_112, %c0_113] : memref<3x128xf32, #tpu.memory_space<vmem>>, vector<1x128xf32>
    %171 = vector.broadcast %170 : vector<1x128xf32> to vector<288x128xf32>
    %172 = arith.addf %169, %171 : vector<288x128xf32>
    %173 = vector.broadcast %5 : vector<288x1xf32> to vector<288x128xf32>
    %174 = arith.mulf %172, %173 : vector<288x128xf32>
    %cst_114 = arith.constant dense<0.000000e+00> : vector<128xf32>
    %175 = vector.multi_reduction <add>, %174, %cst_114 [0] : vector<288x128xf32> to vector<128xf32>
    %176 = vector.shape_cast %175 : vector<128xf32> to vector<1x128xf32>
    %177 = arith.mulf %174, %174 : vector<288x128xf32>
    %cst_115 = arith.constant dense<0.000000e+00> : vector<128xf32>
    %178 = vector.multi_reduction <add>, %177, %cst_115 [0] : vector<288x128xf32> to vector<128xf32>
    %179 = vector.shape_cast %178 : vector<128xf32> to vector<1x128xf32>
    %180 = tpu.concatenate %176, %179 in 0 : vector<1x128xf32>, vector<1x128xf32> -> vector<2x128xf32>
    %c0_116 = arith.constant 0 : index
    %c0_117 = arith.constant 0 : index
    %181 = vector.load %arg9[%c0_116, %c0_117] : memref<128x128xf32, #tpu.memory_space<vmem>>, vector<128x128xf32>
    %cst_118 = arith.constant dense<0.000000e+00> : vector<2x128xf32>
    %182 = tpu.matmul %180, %181, %cst_118 {dimension_numbers = #tpu.dot_dimension_numbers<[1], [0], [0], [1], [0, 0, 1, 1], [], []>} : vector<2x128xf32>, vector<128x128xf32>, vector<2x128xf32> -> vector<2x128xf32>
    %183 = vector.extract_strided_slice %182 {offsets = [0, 0], sizes = [1, 128], strides = [1, 1]} : vector<2x128xf32> to vector<1x128xf32>
    %cst_119 = arith.constant 9.765625E-4 : f32
    %184 = vector.broadcast %cst_119 : f32 to vector<1x128xf32>
    %185 = arith.mulf %183, %184 : vector<1x128xf32>
    %186 = vector.extract_strided_slice %182 {offsets = [1, 0], sizes = [1, 128], strides = [1, 1]} : vector<2x128xf32> to vector<1x128xf32>
    %cst_120 = arith.constant 9.765625E-4 : f32
    %187 = vector.broadcast %cst_120 : f32 to vector<1x128xf32>
    %188 = arith.mulf %186, %187 : vector<1x128xf32>
    %189 = arith.mulf %185, %185 : vector<1x128xf32>
    %190 = arith.subf %188, %189 : vector<1x128xf32>
    %cst_121 = arith.constant 0.000000e+00 : f32
    %191 = vector.broadcast %cst_121 : f32 to vector<1x128xf32>
    %192 = arith.maximumf %190, %191 : vector<1x128xf32>
    %193 = vector.broadcast %185 : vector<1x128xf32> to vector<288x128xf32>
    %194 = arith.subf %172, %193 : vector<288x128xf32>
    %cst_122 = arith.constant 9.99999974E-6 : f32
    %195 = vector.broadcast %cst_122 : f32 to vector<1x128xf32>
    %196 = arith.addf %192, %195 : vector<1x128xf32>
    %197 = math.rsqrt %196 : vector<1x128xf32>
    %198 = vector.broadcast %197 : vector<1x128xf32> to vector<288x128xf32>
    %199 = arith.mulf %194, %198 : vector<288x128xf32>
    %c2_123 = arith.constant 2 : index
    %c0_124 = arith.constant 0 : index
    %200 = vector.load %arg7[%c2_123, %c0_124] : memref<3x128xf32, #tpu.memory_space<vmem>>, vector<1x128xf32>
    %201 = vector.broadcast %200 : vector<1x128xf32> to vector<288x128xf32>
    %202 = arith.mulf %199, %201 : vector<288x128xf32>
    %c2_125 = arith.constant 2 : index
    %c0_126 = arith.constant 0 : index
    %203 = vector.load %arg8[%c2_125, %c0_126] : memref<3x128xf32, #tpu.memory_space<vmem>>, vector<1x128xf32>
    %204 = vector.broadcast %203 : vector<1x128xf32> to vector<288x128xf32>
    %205 = arith.addf %202, %204 : vector<288x128xf32>
    %cst_127 = arith.constant 0.000000e+00 : f32
    %206 = vector.broadcast %cst_127 : f32 to vector<288x128xf32>
    %207 = arith.maximumf %205, %206 : vector<288x128xf32>
    %c0_128 = arith.constant 0 : index
    %c0_129 = arith.constant 0 : index
    %c0_130 = arith.constant 0 : index
    %208 = vector.load %arg11[%c0_128, %c0_129, %c0_130] : memref<1x288x32xf32, #tpu.memory_space<vmem>>, vector<1x288x32xf32>
    %209 = vector.shape_cast %208 : vector<1x288x32xf32> to vector<288x32xf32>
    %210 = vector.extract_strided_slice %207 {offsets = [0, 0], sizes = [288, 32], strides = [1, 1]} : vector<288x128xf32> to vector<288x32xf32>
    %211 = arith.addf %209, %210 : vector<288x32xf32>
    %cst_131 = arith.constant 0.70721358 : f32
    %212 = vector.broadcast %cst_131 : f32 to vector<288x32xf32>
    %213 = arith.mulf %211, %212 : vector<288x32xf32>
    %c0_132 = arith.constant 0 : index
    %c0_133 = arith.constant 0 : index
    %c0_134 = arith.constant 0 : index
    %214 = vector.load %arg11[%c0_132, %c0_133, %c0_134] : memref<1x288x32xf32, #tpu.memory_space<vmem>>, vector<1x288x32xf32>
    %215 = vector.shape_cast %214 : vector<1x288x32xf32> to vector<288x32xf32>
    %216 = vector.shape_cast %213 : vector<288x32xf32> to vector<1x288x32xf32>
    tpu.vector_store %arg11[%c0_132, %c0_133, %c0_134], %216 {strides = array<i32>} : memref<1x288x32xf32, #tpu.memory_space<vmem>>, vector<1x288x32xf32>,
    return
  }
  func.func @transform_0(%arg0: i32) -> (i32, i32, i32) {
    %c0_i32 = arith.constant 0 : i32
    %c0_i32_0 = arith.constant 0 : i32
    %c0_i32_1 = arith.constant 0 : i32
    return %arg0, %c0_i32, %c0_i32_0 : i32, i32, i32
  }
  func.func @transform_1(%arg0: i32) -> (i32, i32) {
    %c0_i32 = arith.constant 0 : i32
    %c0_i32_0 = arith.constant 0 : i32
    %c0_i32_1 = arith.constant 0 : i32
    return %c0_i32, %c0_i32_0 : i32, i32
  }
  func.func @transform_2(%arg0: i32) -> (i32, i32) {
    %c0_i32 = arith.constant 0 : i32
    %c0_i32_0 = arith.constant 0 : i32
    %c0_i32_1 = arith.constant 0 : i32
    return %c0_i32, %c0_i32_0 : i32, i32
  }
  func.func @transform_3(%arg0: i32) -> (i32, i32) {
    %c0_i32 = arith.constant 0 : i32
    %c0_i32_0 = arith.constant 0 : i32
    %c0_i32_1 = arith.constant 0 : i32
    return %c0_i32, %c0_i32_0 : i32, i32
  }
  func.func @transform_4(%arg0: i32) -> (i32, i32) {
    %c0_i32 = arith.constant 0 : i32
    %c0_i32_0 = arith.constant 0 : i32
    %c0_i32_1 = arith.constant 0 : i32
    return %c0_i32, %c0_i32_0 : i32, i32
  }
  func.func @transform_5(%arg0: i32) -> (i32, i32) {
    %c0_i32 = arith.constant 0 : i32
    %c0_i32_0 = arith.constant 0 : i32
    %c0_i32_1 = arith.constant 0 : i32
    return %c0_i32, %c0_i32_0 : i32, i32
  }
  func.func @transform_6(%arg0: i32) -> (i32, i32) {
    %c0_i32 = arith.constant 0 : i32
    %c0_i32_0 = arith.constant 0 : i32
    %c0_i32_1 = arith.constant 0 : i32
    return %c0_i32, %c0_i32_0 : i32, i32
  }
  func.func @transform_7(%arg0: i32) -> (i32, i32) {
    %c0_i32 = arith.constant 0 : i32
    %c0_i32_0 = arith.constant 0 : i32
    %c0_i32_1 = arith.constant 0 : i32
    return %c0_i32, %c0_i32_0 : i32, i32
  }
  func.func @transform_8(%arg0: i32) -> (i32, i32) {
    %c0_i32 = arith.constant 0 : i32
    %c0_i32_0 = arith.constant 0 : i32
    %c0_i32_1 = arith.constant 0 : i32
    return %c0_i32, %c0_i32_0 : i32, i32
  }
  func.func @transform_9(%arg0: i32) -> (i32, i32) {
    %c0_i32 = arith.constant 0 : i32
    %c0_i32_0 = arith.constant 0 : i32
    %c0_i32_1 = arith.constant 0 : i32
    return %c0_i32, %c0_i32_0 : i32, i32
  }
  func.func @transform_10(%arg0: i32) -> (i32, i32, i32) {
    %c0_i32 = arith.constant 0 : i32
    %c0_i32_0 = arith.constant 0 : i32
    %c0_i32_1 = arith.constant 0 : i32
    return %arg0, %c0_i32, %c0_i32_0 : i32, i32, i32
  }
}

</mosaic_0001>

<llo_original>
// kernel: conv3_forward.1
$region0: #{conv3_forward.1}
  #allocation0 [shape = 'u32[]', space=smem, size = 0x4, offset = 0x4, fixed_abs, tag = 'smem constant byte address 0x4 - core index']
  #allocation1 [shape = 'u32[144,128]{1,0:T(1,128)}', space=vmem, size = 0x12000, scoped, tag = 'internal scratch']
  #allocation2 [shape = 'f32[328,128]{1,0:T(8,128)}', space=vmem, size = 0x29000, scoped, tag = 'scratch operand']
  %s0 = inlined_call_operand.vmem [shape: bf16[2,328,8], index: 0, kind: input, shape index: {}]
  %s1 = inlined_call_operand.vmem [shape: bf16[8,128], index: 1, kind: input, shape index: {}]
  %s2 = inlined_call_operand.vmem [shape: bf16[128,128], index: 2, kind: input, shape index: {}]
  %s3 = inlined_call_operand.vmem [shape: bf16[384,128], index: 3, kind: input, shape index: {}]
  %s4 = inlined_call_operand.vmem [shape: bf16[384,128], index: 4, kind: input, shape index: {}]
  %s5 = inlined_call_operand.vmem [shape: f32[3,128], index: 5, kind: input, shape index: {}]
  %s6 = inlined_call_operand.vmem [shape: f32[3,128], index: 6, kind: input, shape index: {}]
  %s7 = inlined_call_operand.vmem [shape: f32[3,128], index: 7, kind: input, shape index: {}]
  %s8 = inlined_call_operand.vmem [shape: f32[128,128], index: 8, kind: input, shape index: {}]
  %s9 = inlined_call_operand.vmem [shape: f32[288,1], index: 9, kind: input, shape index: {}]
  %s10 = inlined_call_operand.vmem [shape: f32[2,288,32], index: 10, kind: output, shape index: {}]
  %s11 = sld [smem:[#allocation0]]
  $region73: #{conv3_forward.1} parent=0
    _
  %s13 = ssub.s32 1, %s11
  %s14 = scalar_select 0, %s13, %s11
  loop: start=0, step=1, limit=4
  $region2: #{conv3_forward.1} parent=0 // loop_pre_header
    _
  $region3: #{conv3_forward.1} parent=0 // loop_header
    %s16 = sphi 0, %s20
    %p17 = scmp.ge.s32.totalorder %s16, 4
    %s26 = sphi 0, %s28
    %s29 = sphi 0, %s26
    %s30 = sphi 0, %s29
    %s46 = sphi 0, %s30
    %s50 = sphi 0, %s50
    %s52 = sphi 0, %s50
    %s53 = sphi 0, %s52
    %s67 = sphi 0, %s53
    %s71 = sphi 0, %s71
    %s73 = sphi 0, %s71
    %s74 = sphi 0, %s73
    %s88 = sphi 0, %s74
    %s92 = sphi 0, %s92
    %s94 = sphi 0, %s92
    %s95 = sphi 0, %s94
    %s109 = sphi 0, %s95
    %s113 = sphi 0, %s113
    %s115 = sphi 0, %s113
    %s116 = sphi 0, %s115
    %s130 = sphi 0, %s116
    %s134 = sphi 0, %s134
    %s136 = sphi 0, %s134
    %s137 = sphi 0, %s136
    %s151 = sphi 0, %s137
    %s155 = sphi 0, %s155
    %s157 = sphi 0, %s155
    %s158 = sphi 0, %s157
    %s172 = sphi 0, %s158
    %s176 = sphi 0, %s176
    %s178 = sphi 0, %s176
    %s179 = sphi 0, %s178
    %s193 = sphi 0, %s179
    %s197 = sphi 0, %s197
    %s199 = sphi 0, %s197
    %s200 = sphi 0, %s199
    %s214 = sphi 0, %s200
    %s218 = sphi 0, %s218
    %s220 = sphi 0, %s218
    %s221 = sphi 0, %s220
    %s235 = sphi 0, %s221
    %s241 = sphi 0, %s243
    %s244 = sphi 0, %s241
    %s245 = sphi 0, %s244
    %s261 = sphi 0, %s245
  $region4: #{conv3_forward.1} parent=0 // loop_header_branch
    %19 = sbr.rel (%p17) target = $region8
  $region5: #{conv3_forward.1} parent=0 // loop_body
    %s21 = ssub.s32 %s16, 1
    %s22 = ssub.s32 %s16, 2
    %s23 = sadd.s32 %s16, 1
    %s24 = ssub.s32 %s16, %s23
    %p25 = scmp.eq.s32.totalorder %s24, 0
    %s27 = sadd.s32 %s26, 1
    %s28 = scalar_select %p25, %s26, %s27
    %p31 = pneg %p25
    %p32 = scmp.eq.s32.totalorder %s16, 1
    %p33 = por %p31, %p32
    %p34 = scmp.ne.s32.totalorder %s26, %s29
    %p35 = scmp.eq.s32.totalorder %s16, 0
    %p36 = por %p34, %p35
    %p37 = scmp.ne.s32.totalorder %s26, %s29
    %p38 = scmp.eq.s32.totalorder %s21, 1
    %p39 = por %p37, %p38
    %p40 = scmp.ne.s32.totalorder %s29, %s30
    %p41 = scmp.eq.s32.totalorder %s21, 0
    %p42 = por %p40, %p41
    %p43 = scmp.ne.s32.totalorder %s29, %s30
    %p44 = scmp.eq.s32.totalorder %s22, 1
    %p45 = por %p43, %p44
    %p47 = scmp.ne.s32.totalorder %s30, %s46
    %p48 = scmp.eq.s32.totalorder %s22, 0
    %p49 = por %p47, %p48
    %s51 = sadd.s32 %s50, 1
    %p54 = scmp.eq.s32.totalorder %s16, 1
    %p55 = scmp.ne.s32.totalorder %s50, %s52
    %p56 = scmp.eq.s32.totalorder %s16, 0
    %p57 = por %p55, %p56
    %p58 = scmp.ne.s32.totalorder %s50, %s52
    %p59 = scmp.eq.s32.totalorder %s21, 1
    %p60 = por %p58, %p59
    %p61 = scmp.ne.s32.totalorder %s52, %s53
    %p62 = scmp.eq.s32.totalorder %s21, 0
    %p63 = por %p61, %p62
    %p64 = scmp.ne.s32.totalorder %s52, %s53
    %p65 = scmp.eq.s32.totalorder %s22, 1
    %p66 = por %p64, %p65
    %p68 = scmp.ne.s32.totalorder %s53, %s67
    %p69 = scmp.eq.s32.totalorder %s22, 0
    %p70 = por %p68, %p69
    %s72 = sadd.s32 %s71, 1
    %p75 = scmp.eq.s32.totalorder %s16, 1
    %p76 = scmp.ne.s32.totalorder %s71, %s73
    %p77 = scmp.eq.s32.totalorder %s16, 0
    %p78 = por %p76, %p77
    %p79 = scmp.ne.s32.totalorder %s71, %s73
    %p80 = scmp.eq.s32.totalorder %s21, 1
    %p81 = por %p79, %p80
    %p82 = scmp.ne.s32.totalorder %s73, %s74
    %p83 = scmp.eq.s32.totalorder %s21, 0
    %p84 = por %p82, %p83
    %p85 = scmp.ne.s32.totalorder %s73, %s74
    %p86 = scmp.eq.s32.totalorder %s22, 1
    %p87 = por %p85, %p86
    %p89 = scmp.ne.s32.totalorder %s74, %s88
    %p90 = scmp.eq.s32.totalorder %s22, 0
    %p91 = por %p89, %p90
    %s93 = sadd.s32 %s92, 1
    %p96 = scmp.eq.s32.totalorder %s16, 1
    %p97 = scmp.ne.s32.totalorder %s92, %s94
    %p98 = scmp.eq.s32.totalorder %s16, 0
    %p99 = por %p97, %p98
    %p100 = scmp.ne.s32.totalorder %s92, %s94
    %p101 = scmp.eq.s32.totalorder %s21, 1
    %p102 = por %p100, %p101
    %p103 = scmp.ne.s32.totalorder %s94, %s95
    %p104 = scmp.eq.s32.totalorder %s21, 0
    %p105 = por %p103, %p104
    %p106 = scmp.ne.s32.totalorder %s94, %s95
    %p107 = scmp.eq.s32.totalorder %s22, 1
    %p108 = por %p106, %p107
    %p110 = scmp.ne.s32.totalorder %s95, %s109
    %p111 = scmp.eq.s32.totalorder %s22, 0
    %p112 = por %p110, %p111
    %s114 = sadd.s32 %s113, 1
    %p117 = scmp.eq.s32.totalorder %s16, 1
    %p118 = scmp.ne.s32.totalorder %s113, %s115
    %p119 = scmp.eq.s32.totalorder %s16, 0
    %p120 = por %p118, %p119
    %p121 = scmp.ne.s32.totalorder %s113, %s115
    %p122 = scmp.eq.s32.totalorder %s21, 1
    %p123 = por %p121, %p122
    %p124 = scmp.ne.s32.totalorder %s115, %s116
    %p125 = scmp.eq.s32.totalorder %s21, 0
    %p126 = por %p124, %p125
    %p127 = scmp.ne.s32.totalorder %s115, %s116
    %p128 = scmp.eq.s32.totalorder %s22, 1
    %p129 = por %p127, %p128
    %p131 = scmp.ne.s32.totalorder %s116, %s130
    %p132 = scmp.eq.s32.totalorder %s22, 0
    %p133 = por %p131, %p132
    %s135 = sadd.s32 %s134, 1
    %p138 = scmp.eq.s32.totalorder %s16, 1
    %p139 = scmp.ne.s32.totalorder %s134, %s136
    %p140 = scmp.eq.s32.totalorder %s16, 0
    %p141 = por %p139, %p140
    %p142 = scmp.ne.s32.totalorder %s134, %s136
    %p143 = scmp.eq.s32.totalorder %s21, 1
    %p144 = por %p142, %p143
    %p145 = scmp.ne.s32.totalorder %s136, %s137
    %p146 = scmp.eq.s32.totalorder %s21, 0
    %p147 = por %p145, %p146
    %p148 = scmp.ne.s32.totalorder %s136, %s137
    %p149 = scmp.eq.s32.totalorder %s22, 1
    %p150 = por %p148, %p149
    %p152 = scmp.ne.s32.totalorder %s137, %s151
    %p153 = scmp.eq.s32.totalorder %s22, 0
    %p154 = por %p152, %p153
    %s156 = sadd.s32 %s155, 1
    %p159 = scmp.eq.s32.totalorder %s16, 1
    %p160 = scmp.ne.s32.totalorder %s155, %s157
    %p161 = scmp.eq.s32.totalorder %s16, 0
    %p162 = por %p160, %p161
    %p163 = scmp.ne.s32.totalorder %s155, %s157
    %p164 = scmp.eq.s32.totalorder %s21, 1
    %p165 = por %p163, %p164
    %p166 = scmp.ne.s32.totalorder %s157, %s158
    %p167 = scmp.eq.s32.totalorder %s21, 0
    %p168 = por %p166, %p167
    %p169 = scmp.ne.s32.totalorder %s157, %s158
    %p170 = scmp.eq.s32.totalorder %s22, 1
    %p171 = por %p169, %p170
    %p173 = scmp.ne.s32.totalorder %s158, %s172
    %p174 = scmp.eq.s32.totalorder %s22, 0
    %p175 = por %p173, %p174
    %s177 = sadd.s32 %s176, 1
    %p180 = scmp.eq.s32.totalorder %s16, 1
    %p181 = scmp.ne.s32.totalorder %s176, %s178
    %p182 = scmp.eq.s32.totalorder %s16, 0
    %p183 = por %p181, %p182
    %p184 = scmp.ne.s32.totalorder %s176, %s178
    %p185 = scmp.eq.s32.totalorder %s21, 1
    %p186 = por %p184, %p185
    %p187 = scmp.ne.s32.totalorder %s178, %s179
    %p188 = scmp.eq.s32.totalorder %s21, 0
    %p189 = por %p187, %p188
    %p190 = scmp.ne.s32.totalorder %s178, %s179
    %p191 = scmp.eq.s32.totalorder %s22, 1
    %p192 = por %p190, %p191
    %p194 = scmp.ne.s32.totalorder %s179, %s193
    %p195 = scmp.eq.s32.totalorder %s22, 0
    %p196 = por %p194, %p195
    %s198 = sadd.s32 %s197, 1
    %p201 = scmp.eq.s32.totalorder %s16, 1
    %p202 = scmp.ne.s32.totalorder %s197, %s199
    %p203 = scmp.eq.s32.totalorder %s16, 0
    %p204 = por %p202, %p203
    %p205 = scmp.ne.s32.totalorder %s197, %s199
    %p206 = scmp.eq.s32.totalorder %s21, 1
    %p207 = por %p205, %p206
    %p208 = scmp.ne.s32.totalorder %s199, %s200
    %p209 = scmp.eq.s32.totalorder %s21, 0
    %p210 = por %p208, %p209
    %p211 = scmp.ne.s32.totalorder %s199, %s200
    %p212 = scmp.eq.s32.totalorder %s22, 1
    %p213 = por %p211, %p212
    %p215 = scmp.ne.s32.totalorder %s200, %s214
    %p216 = scmp.eq.s32.totalorder %s22, 0
    %p217 = por %p215, %p216
    %s219 = sadd.s32 %s218, 1
    %p222 = scmp.eq.s32.totalorder %s16, 1
    %p223 = scmp.ne.s32.totalorder %s218, %s220
    %p224 = scmp.eq.s32.totalorder %s16, 0
    %p225 = por %p223, %p224
    %p226 = scmp.ne.s32.totalorder %s218, %s220
    %p227 = scmp.eq.s32.totalorder %s21, 1
    %p228 = por %p226, %p227
    %p229 = scmp.ne.s32.totalorder %s220, %s221
    %p230 = scmp.eq.s32.totalorder %s21, 0
    %p231 = por %p229, %p230
    %p232 = scmp.ne.s32.totalorder %s220, %s221
    %p233 = scmp.eq.s32.totalorder %s22, 1
    %p234 = por %p232, %p233
    %p236 = scmp.ne.s32.totalorder %s221, %s235
    %p237 = scmp.eq.s32.totalorder %s22, 0
    %p238 = por %p236, %p237
    %s239 = ssub.s32 %s16, %s23
    %p240 = scmp.eq.s32.totalorder %s239, 0
    %s242 = sadd.s32 %s241, 1
    %s243 = scalar_select %p240, %s241, %s242
    %p246 = pneg %p240
    %p247 = scmp.eq.s32.totalorder %s16, 1
    %p248 = por %p246, %p247
    %p249 = scmp.ne.s32.totalorder %s241, %s244
    %p250 = scmp.eq.s32.totalorder %s16, 0
    %p251 = por %p249, %p250
    %p252 = scmp.ne.s32.totalorder %s241, %s244
    %p253 = scmp.eq.s32.totalorder %s21, 1
    %p254 = por %p252, %p253
    %p255 = scmp.ne.s32.totalorder %s244, %s245
    %p256 = scmp.eq.s32.totalorder %s21, 0
    %p257 = por %p255, %p256
    %p258 = scmp.ne.s32.totalorder %s244, %s245
    %p259 = scmp.eq.s32.totalorder %s22, 1
    %p260 = por %p258, %p259
    %p262 = scmp.ne.s32.totalorder %s245, %s261
    %p263 = scmp.eq.s32.totalorder %s22, 0
    %p264 = por %p262, %p263
    %p265 = scmp.le.s32.totalorder 1, %s16
    %p266 = scmp.lt.s32.totalorder %s16, 3
    %p267 = pnand %p265, %p266
    %p268 = pneg %p267
    // Predicated region
    $region9: #{conv3_forward.1} parent=5 // pred_check
      _
    $region10: #{conv3_forward.1} parent=5 // pred_check_branch
      %270 = sbr.rel (%p267) target = $region12
    $region11: #{conv3_forward.1} parent=5 // pred_region
      %s271 = ssub.s32 %s16, 1
      // Predicated region
      $region13: #{conv3_forward.1} parent=11 // pred_check
        %p272 = pneg %p63
      $region14: #{conv3_forward.1} parent=11 // pred_check_branch
        %274 = sbr.rel (%p272) target = $region16
      $region15: #{conv3_forward.1} parent=11 // pred_region
        _
      $region16: #{conv3_forward.1} parent=11 // pred_fallthru
        _
      // Predicated region
      $region17: #{conv3_forward.1} parent=11 // pred_check
        %p275 = pneg %p84
      $region18: #{conv3_forward.1} parent=11 // pred_check_branch
        %277 = sbr.rel (%p275) target = $region20
      $region19: #{conv3_forward.1} parent=11 // pred_region
        _
      $region20: #{conv3_forward.1} parent=11 // pred_fallthru
        _
      // Predicated region
      $region21: #{conv3_forward.1} parent=11 // pred_check
        %p278 = pneg %p105
      $region22: #{conv3_forward.1} parent=11 // pred_check_branch
        %280 = sbr.rel (%p278) target = $region24
      $region23: #{conv3_forward.1} parent=11 // pred_region
        _
      $region24: #{conv3_forward.1} parent=11 // pred_fallthru
        _
      // Predicated region
      $region25: #{conv3_forward.1} parent=11 // pred_check
        %p281 = pneg %p126
      $region26: #{conv3_forward.1} parent=11 // pred_check_branch
        %283 = sbr.rel (%p281) target = $region28
      $region27: #{conv3_forward.1} parent=11 // pred_region
        _
      $region28: #{conv3_forward.1} parent=11 // pred_fallthru
        _
      // Predicated region
      $region29: #{conv3_forward.1} parent=11 // pred_check
        %p284 = pneg %p147
      $region30: #{conv3_forward.1} parent=11 // pred_check_branch
        %286 = sbr.rel (%p284) target = $region32
      $region31: #{conv3_forward.1} parent=11 // pred_region
        _
      $region32: #{conv3_forward.1} parent=11 // pred_fallthru
        _
      // Predicated region
      $region33: #{conv3_forward.1} parent=11 // pred_check
        %p287 = pneg %p168
      $region34: #{conv3_forward.1} parent=11 // pred_check_branch
        %289 = sbr.rel (%p287) target = $region36
      $region35: #{conv3_forward.1} parent=11 // pred_region
        _
      $region36: #{conv3_forward.1} parent=11 // pred_fallthru
        _
      // Predicated region
      $region37: #{conv3_forward.1} parent=11 // pred_check
        %p290 = pneg %p189
      $region38: #{conv3_forward.1} parent=11 // pred_check_branch
        %292 = sbr.rel (%p290) target = $region40
      $region39: #{conv3_forward.1} parent=11 // pred_region
        _
      $region40: #{conv3_forward.1} parent=11 // pred_fallthru
        _
      // Predicated region
      $region41: #{conv3_forward.1} parent=11 // pred_check
        %p293 = pneg %p210
      $region42: #{conv3_forward.1} parent=11 // pred_check_branch
        %295 = sbr.rel (%p293) target = $region44
      $region43: #{conv3_forward.1} parent=11 // pred_region
        _
      $region44: #{conv3_forward.1} parent=11 // pred_fallthru
        _
      // Predicated region
      $region45: #{conv3_forward.1} parent=11 // pred_check
        %p296 = pneg %p231
      $region46: #{conv3_forward.1} parent=11 // pred_check_branch
        %298 = sbr.rel (%p296) target = $region48
      $region47: #{conv3_forward.1} parent=11 // pred_region
        _
      $region48: #{conv3_forward.1} parent=11 // pred_fallthru
        _
    $region12: #{conv3_forward.1} parent=5 // pred_fallthru
      _
    %p299 = scmp.lt.s32.totalorder %s16, 2
    // Predicated region
    $region49: #{conv3_forward.1} parent=5 // pred_check
      %p300 = pneg %p299
    $region50: #{conv3_forward.1} parent=5 // pred_check_branch
      %302 = sbr.rel (%p300) target = $region52
    $region51: #{conv3_forward.1} parent=5 // pred_region
      // Predicated region
      $region53: #{conv3_forward.1} parent=51 // pred_check
        %p303 = pneg %p36
      $region54: #{conv3_forward.1} parent=51 // pred_check_branch
        %305 = sbr.rel (%p303) target = $region56
      $region55: #{conv3_forward.1} parent=51 // pred_region
        %p306 = scmp.lt.s32.totalorder %s16, 1
        %s307 = scalar_select %p306, %s16, 1
        %s308 = smul.addr %s307, 41
        %s309 = smul.addr %s308, 4
        %s310 = scalar_lea.vmem %s0, %s309
      $region56: #{conv3_forward.1} parent=51 // pred_fallthru
        _
    $region52: #{conv3_forward.1} parent=5 // pred_fallthru
      _
    %p311 = scmp.le.s32.totalorder 1, %s16
    %p312 = scmp.lt.s32.totalorder %s16, 3
    %p313 = pnand %p311, %p312
    %p314 = pneg %p313
    // Predicated region
    $region57: #{conv3_forward.1} parent=5 // pred_check
      _
    $region58: #{conv3_forward.1} parent=5 // pred_check_branch
      %316 = sbr.rel (%p313) target = $region60
    $region59: #{conv3_forward.1} parent=5 // pred_region
      %s317 = ssub.s32 %s16, 1
      %p318 = scmp.lt.s32.totalorder %s21, 1
      %s319 = scalar_select %p318, %s21, 1
      %s320 = smul.addr %s319, 41
      %s321 = smul.addr %s320, 4
      %s322 = scalar_lea.vmem %s0, %s321
      %p323 = pneg %p42
      %p324 = pneg %p39
      %p325 = pneg %p63
      %p326 = pneg %p60
      %p327 = pneg %p84
      %p328 = pneg %p81
      %p329 = pneg %p105
      %p330 = pneg %p102
      %p331 = pneg %p126
      %p332 = pneg %p123
      %p333 = pneg %p147
      %p334 = pneg %p144
      %p335 = pneg %p168
      %p336 = pneg %p165
      %p337 = pneg %p189
      %p338 = pneg %p186
      %p339 = pneg %p210
      %p340 = pneg %p207
      %p341 = pneg %p231
      %p342 = pneg %p228
      %p343 = pneg %p257
      %p344 = pneg %p254
      %p345 = scmp.lt.s32.totalorder %s21, 1
      %s346 = scalar_select %p345, %s21, 1
      %s347 = smul.addr %s346, 36
      %s348 = smul.addr %s347, 8
      %s349 = scalar_lea.vmem %s10, %s348
      %p350 = scmp.lt.s32.totalorder %s21, 1
      %s351 = scalar_select %p350, %s21, 1
      %s352 = smul.addr %s351, 41
      %s353 = smul.addr %s352, 4
      %s354 = scalar_lea.vmem %s0, %s353
      %p355 = scmp.lt.s32.totalorder %s21, 1
      %s356 = scalar_select %p355, %s21, 1
      %s357 = smul.addr %s356, 36
      %s358 = smul.addr %s357, 8
      %s359 = scalar_lea.vmem %s10, %s358
      %v361 = vld [vmem:[%s354] sm:$0xf]
      %v362 = vld [vmem:[%s354 + $0x4] sm:$0xf]
      %v363 = vld [vmem:[%s354 + $0x8] sm:$0xf]
      %v364 = vld [vmem:[%s354 + $0xc] sm:$0xf]
      %v365 = vld [vmem:[%s354 + $0x10] sm:$0xf]
      %v366 = vld [vmem:[%s354 + $0x14] sm:$0xf]
      %v367 = vld [vmem:[%s354 + $0x18] sm:$0xf]
      %v368 = vld [vmem:[%s354 + $0x1c] sm:$0xf]
      %v369 = vld [vmem:[%s354 + $0x20] sm:$0xf]
      %v370 = vld [vmem:[%s354 + $0x24] sm:$0xf]
      %v371 = vld [vmem:[%s354 + $0x28] sm:$0xf]
      %v372 = vld [vmem:[%s354 + $0x2c] sm:$0xf]
      %v373 = vld [vmem:[%s354 + $0x30] sm:$0xf]
      %v374 = vld [vmem:[%s354 + $0x34] sm:$0xf]
      %v375 = vld [vmem:[%s354 + $0x38] sm:$0xf]
      %v376 = vld [vmem:[%s354 + $0x3c] sm:$0xf]
      %v377 = vld [vmem:[%s354 + $0x40] sm:$0xf]
      %v378 = vld [vmem:[%s354 + $0x44] sm:$0xf]
      %v379 = vld [vmem:[%s354 + $0x48] sm:$0xf]
      %v380 = vld [vmem:[%s354 + $0x4c] sm:$0xf]
      %v381 = vld [vmem:[%s354 + $0x50] sm:$0xf]
      %v382 = vld [vmem:[%s354 + $0x54] sm:$0xf]
      %v383 = vld [vmem:[%s354 + $0x58] sm:$0xf]
      %v384 = vld [vmem:[%s354 + $0x5c] sm:$0xf]
      %v385 = vld [vmem:[%s354 + $0x60] sm:$0xf]
      %v386 = vld [vmem:[%s354 + $0x64] sm:$0xf]
      %v387 = vld [vmem:[%s354 + $0x68] sm:$0xf]
      %v388 = vld [vmem:[%s354 + $0x6c] sm:$0xf]
      %v389 = vld [vmem:[%s354 + $0x70] sm:$0xf]
      %v390 = vld [vmem:[%s354 + $0x74] sm:$0xf]
      %v391 = vld [vmem:[%s354 + $0x78] sm:$0xf]
      %v392 = vld [vmem:[%s354 + $0x7c] sm:$0xf]
      %v393 = vld [vmem:[%s354 + $0x80] sm:$0xf]
      %v394 = vld [vmem:[%s354 + $0x84] sm:$0xf]
      %v395 = vld [vmem:[%s354 + $0x88] sm:$0xf]
      %v396 = vld [vmem:[%s354 + $0x8c] sm:$0xf]
      %v397 = vld [vmem:[%s354 + $0x90] sm:$0xf]
      %v398 = vld [vmem:[%s354 + $0x94] sm:$0xf]
      %v399 = vld [vmem:[%s354 + $0x98] sm:$0xf]
      %v400 = vld [vmem:[%s354 + $0x9c] sm:$0xf]
      %v401 = vld [vmem:[%s354 + $0xa0] sm:$0xf]
      %v402 = vld [vmem:[%s1] sm:$0xf]
      %v444 = vunpack.c.l.b16 %v361
      %v445 = vunpack.c.l.b16 %v362
      %v446 = vunpack.c.l.b16 %v363
      %v447 = vunpack.c.l.b16 %v364
      %v448 = vunpack.c.l.b16 %v365
      %v449 = vunpack.c.l.b16 %v366
      %v450 = vunpack.c.l.b16 %v367
      %v451 = vunpack.c.l.b16 %v368
      %v452 = vunpack.c.l.b16 %v369
      %v453 = vunpack.c.l.b16 %v370
      %v454 = vunpack.c.l.b16 %v371
      %v455 = vunpack.c.l.b16 %v372
      %v456 = vunpack.c.l.b16 %v373
      %v457 = vunpack.c.l.b16 %v374
      %v458 = vunpack.c.l.b16 %v375
      %v459 = vunpack.c.l.b16 %v376
      %v460 = vunpack.c.l.b16 %v377
      %v461 = vunpack.c.l.b16 %v378
      %v462 = vunpack.c.l.b16 %v379
      %v463 = vunpack.c.l.b16 %v380
      %v464 = vunpack.c.l.b16 %v381
      %v465 = vunpack.c.l.b16 %v382
      %v466 = vunpack.c.l.b16 %v383
      %v467 = vunpack.c.l.b16 %v384
      %v468 = vunpack.c.l.b16 %v385
      %v469 = vunpack.c.l.b16 %v386
      %v470 = vunpack.c.l.b16 %v387
      %v471 = vunpack.c.l.b16 %v388
      %v472 = vunpack.c.l.b16 %v389
      %v473 = vunpack.c.l.b16 %v390
      %v474 = vunpack.c.l.b16 %v391
      %v475 = vunpack.c.l.b16 %v392
      %v476 = vunpack.c.l.b16 %v393
      %v477 = vunpack.c.l.b16 %v394
      %v478 = vunpack.c.l.b16 %v395
      %v479 = vunpack.c.l.b16 %v396
      %v480 = vunpack.c.l.b16 %v397
      %v481 = vunpack.c.l.b16 %v398
      %v482 = vunpack.c.l.b16 %v399
      %v483 = vunpack.c.l.b16 %v400
      %v484 = vunpack.c.l.b16 %v401
      %v485 = vpack.c.b16 %v445, %v444
      %v486 = vpack.c.b16 %v447, %v446
      %v487 = vpack.c.b16 %v449, %v448
      %v488 = vpack.c.b16 %v451, %v450
      %v489 = vpack.c.b16 %v453, %v452
      %v490 = vpack.c.b16 %v455, %v454
      %v491 = vpack.c.b16 %v457, %v456
      %v492 = vpack.c.b16 %v459, %v458
      %v493 = vpack.c.b16 %v461, %v460
      %v494 = vpack.c.b16 %v463, %v462
      %v495 = vpack.c.b16 %v465, %v464
      %v496 = vpack.c.b16 %v467, %v466
      %v497 = vpack.c.b16 %v469, %v468
      %v498 = vpack.c.b16 %v471, %v470
      %v499 = vpack.c.b16 %v473, %v472
      %v500 = vpack.c.b16 %v475, %v474
      %v501 = vpack.c.b16 %v477, %v476
      %v502 = vpack.c.b16 %v479, %v478
      %v503 = vpack.c.b16 %v481, %v480
      %v504 = vpack.c.b16 %v483, %v482
      %v505 = vpack.c.b16 %v484, %v484
      %vm506 = vcmask 64512
      %v508 = vsel %vm506, %v485, 0
      %v511 = vsel %vm506, %v486, 0
      %v514 = vsel %vm506, %v487, 0
      %v517 = vsel %vm506, %v488, 0
      %v520 = vsel %vm506, %v489, 0
      %v523 = vsel %vm506, %v490, 0
      %v526 = vsel %vm506, %v491, 0
      %v529 = vsel %vm506, %v492, 0
      %v532 = vsel %vm506, %v493, 0
      %v535 = vsel %vm506, %v494, 0
      %v538 = vsel %vm506, %v495, 0
      %v541 = vsel %vm506, %v496, 0
      %v544 = vsel %vm506, %v497, 0
      %v547 = vsel %vm506, %v498, 0
      %v550 = vsel %vm506, %v499, 0
      %v553 = vsel %vm506, %v500, 0
      %v556 = vsel %vm506, %v501, 0
      %v559 = vsel %vm506, %v502, 0
      %v562 = vsel %vm506, %v503, 0
      %v565 = vsel %vm506, %v504, 0
      %v568 = vsel %vm506, %v505, 0
      %vm570 = vcmask 1043456
      %v572 = vsel %vm570, %v402, 0
      %574 = vmatprep.subr.bf16.mxu0 0
      %575 = vmatpush1.bf16.msra.mxu0 %v572
      %576 = vmatprep.subr.bf16.mxu0 0
      %577 = vmatpush1.bf16.msra.mxu0 0
      %578 = vmatprep.subr.bf16.mxu0 0
      %579 = vmatpush1.bf16.msra.mxu0 0
      %580 = vmatprep.subr.bf16.mxu0 0
      %581 = vmatpush1.bf16.msra.mxu0 0
      %582 = vmatprep.subr.bf16.mxu0 0
      %583 = vmatpush1.bf16.msra.mxu0 0
      %584 = vmatprep.subr.bf16.mxu0 0
      %585 = vmatpush1.bf16.msra.mxu0 0
      %586 = vmatprep.subr.bf16.mxu0 0
      %587 = vmatpush1.bf16.msra.mxu0 0
      %588 = vmatprep.subr.bf16.mxu0 0
      %589 = vmatpush1.bf16.msra.mxu0 0
      %590 = vmatprep.subr.bf16.mxu0 0
      %591 = vmatpush1.bf16.msra.mxu0 0
      %592 = vmatprep.subr.bf16.mxu0 0
      %593 = vmatpush1.bf16.msra.mxu0 0
      %594 = vmatprep.subr.bf16.mxu0 0
      %595 = vmatpush1.bf16.msra.mxu0 0
      %596 = vmatprep.subr.bf16.mxu0 0
      %597 = vmatpush1.bf16.msra.mxu0 0
      %598 = vmatprep.subr.bf16.mxu0 0
      %599 = vmatpush1.bf16.msra.mxu0 0
      %600 = vmatprep.subr.bf16.mxu0 0
      %601 = vmatpush1.bf16.msra.mxu0 0
      %602 = vmatprep.subr.bf16.mxu0 0
      %603 = vmatpush1.bf16.msra.mxu0 0
      %604 = vmatprep.subr.bf16.mxu0 0
      %605 = vmatpush1.bf16.msra.mxu0 0
      %606 = vmatprep.mubr.bf16.mxu0 0
      %607 = vmatmul.mubr.bf16.gmra.mrb[0].mxu0 %v508
      %v608 = vpop.f32.mrb[0].mxu0
      %v609 = vadd.f32 0.0, %v608
      %v610 = vpop.f32.mrb[0].mxu0
      %v611 = vpop.f32.mrb[0].mxu0
      %v612 = vadd.f32 0.0, %v611
      %v613 = vpop.f32.mrb[0].mxu0
      %614 = vmatprep.mubr.bf16.mxu0 0
      %615 = vmatmul.mubr.bf16.gmra.mrb[0].mxu0 %v511
      %v616 = vpop.f32.mrb[0].mxu0
      %v617 = vadd.f32 0.0, %v616
      %v618 = vpop.f32.mrb[0].mxu0
      %v619 = vpop.f32.mrb[0].mxu0
      %v620 = vadd.f32 0.0, %v619
      %v621 = vpop.f32.mrb[0].mxu0
      %622 = vmatprep.mubr.bf16.mxu0 0
      %623 = vmatmul.mubr.bf16.gmra.mrb[0].mxu0 %v514
      %v624 = vpop.f32.mrb[0].mxu0
      %v625 = vadd.f32 0.0, %v624
      %v626 = vpop.f32.mrb[0].mxu0
      %v627 = vpop.f32.mrb[0].mxu0
      %v628 = vadd.f32 0.0, %v627
      %v629 = vpop.f32.mrb[0].mxu0
      %630 = vmatprep.mubr.bf16.mxu0 0
      %631 = vmatmul.mubr.bf16.gmra.mrb[0].mxu0 %v517
      %v632 = vpop.f32.mrb[0].mxu0
      %v633 = vadd.f32 0.0, %v632
      %v634 = vpop.f32.mrb[0].mxu0
      %v635 = vpop.f32.mrb[0].mxu0
      %v636 = vadd.f32 0.0, %v635
      %v637 = vpop.f32.mrb[0].mxu0
      %638 = vmatprep.mubr.bf16.mxu0 0
      %639 = vmatmul.mubr.bf16.gmra.mrb[0].mxu0 %v520
      %v640 = vpop.f32.mrb[0].mxu0
      %v641 = vadd.f32 0.0, %v640
      %v642 = vpop.f32.mrb[0].mxu0
      %v643 = vpop.f32.mrb[0].mxu0
      %v644 = vadd.f32 0.0, %v643
      %v645 = vpop.f32.mrb[0].mxu0
      %646 = vmatprep.mubr.bf16.mxu0 0
      %647 = vmatmul.mubr.bf16.gmra.mrb[0].mxu0 %v523
      %v648 = vpop.f32.mrb[0].mxu0
      %v649 = vadd.f32 0.0, %v648
      %v650 = vpop.f32.mrb[0].mxu0
      %v651 = vpop.f32.mrb[0].mxu0
      %v652 = vadd.f32 0.0, %v651
      %v653 = vpop.f32.mrb[0].mxu0
      %654 = vmatprep.mubr.bf16.mxu0 0
      %655 = vmatmul.mubr.bf16.gmra.mrb[0].mxu0 %v526
      %v656 = vpop.f32.mrb[0].mxu0
      %v657 = vadd.f32 0.0, %v656
      %v658 = vpop.f32.mrb[0].mxu0
      %v659 = vpop.f32.mrb[0].mxu0
      %v660 = vadd.f32 0.0, %v659
      %v661 = vpop.f32.mrb[0].mxu0
      %662 = vmatprep.mubr.bf16.mxu0 0
      %663 = vmatmul.mubr.bf16.gmra.mrb[0].mxu0 %v529
      %v664 = vpop.f32.mrb[0].mxu0
      %v665 = vadd.f32 0.0, %v664
      %v666 = vpop.f32.mrb[0].mxu0
      %v667 = vpop.f32.mrb[0].mxu0
      %v668 = vadd.f32 0.0, %v667
      %v669 = vpop.f32.mrb[0].mxu0
      %670 = vmatprep.mubr.bf16.mxu0 0
      %671 = vmatmul.mubr.bf16.gmra.mrb[0].mxu0 %v532
      %v672 = vpop.f32.mrb[0].mxu0
      %v673 = vadd.f32 0.0, %v672
      %v674 = vpop.f32.mrb[0].mxu0
      %v675 = vpop.f32.mrb[0].mxu0
      %v676 = vadd.f32 0.0, %v675
      %v677 = vpop.f32.mrb[0].mxu0
      %678 = vmatprep.mubr.bf16.mxu0 0
      %679 = vmatmul.mubr.bf16.gmra.mrb[0].mxu0 %v535
      %v680 = vpop.f32.mrb[0].mxu0
      %v681 = vadd.f32 0.0, %v680
      %v682 = vpop.f32.mrb[0].mxu0
      %v683 = vpop.f32.mrb[0].mxu0
      %v684 = vadd.f32 0.0, %v683
      %v685 = vpop.f32.mrb[0].mxu0
      %686 = vmatprep.mubr.bf16.mxu0 0
      %687 = vmatmul.mubr.bf16.gmra.mrb[0].mxu0 %v538
      %v688 = vpop.f32.mrb[0].mxu0
      %v689 = vadd.f32 0.0, %v688
      %v690 = vpop.f32.mrb[0].mxu0
      %v691 = vpop.f32.mrb[0].mxu0
      %v692 = vadd.f32 0.0, %v691
      %v693 = vpop.f32.mrb[0].mxu0
      %694 = vmatprep.mubr.bf16.mxu0 0
      %695 = vmatmul.mubr.bf16.gmra.mrb[0].mxu0 %v541
      %v696 = vpop.f32.mrb[0].mxu0
      %v697 = vadd.f32 0.0, %v696
      %v698 = vpop.f32.mrb[0].mxu0
      %v699 = vpop.f32.mrb[0].mxu0
      %v700 = vadd.f32 0.0, %v699
      %v701 = vpop.f32.mrb[0].mxu0
      %702 = vmatprep.mubr.bf16.mxu0 0
      %703 = vmatmul.mubr.bf16.gmra.mrb[0].mxu0 %v544
      %v704 = vpop.f32.mrb[0].mxu0
      %v705 = vadd.f32 0.0, %v704
      %v706 = vpop.f32.mrb[0].mxu0
      %v707 = vpop.f32.mrb[0].mxu0
      %v708 = vadd.f32 0.0, %v707
      %v709 = vpop.f32.mrb[0].mxu0
      %710 = vmatprep.mubr.bf16.mxu0 0
      %711 = vmatmul.mubr.bf16.gmra.mrb[0].mxu0 %v547
      %v712 = vpop.f32.mrb[0].mxu0
      %v713 = vadd.f32 0.0, %v712
      %v714 = vpop.f32.mrb[0].mxu0
      %v715 = vpop.f32.mrb[0].mxu0
      %v716 = vadd.f32 0.0, %v715
      %v717 = vpop.f32.mrb[0].mxu0
      %718 = vmatprep.mubr.bf16.mxu0 0
      %719 = vmatmul.mubr.bf16.gmra.mrb[0].mxu0 %v550
      %v720 = vpop.f32.mrb[0].mxu0
      %v721 = vadd.f32 0.0, %v720
      %v722 = vpop.f32.mrb[0].mxu0
      %v723 = vpop.f32.mrb[0].mxu0
      %v724 = vadd.f32 0.0, %v723
      %v725 = vpop.f32.mrb[0].mxu0
      %726 = vmatprep.mubr.bf16.mxu0 0
      %727 = vmatmul.mubr.bf16.gmra.mrb[0].mxu0 %v553
      %v728 = vpop.f32.mrb[0].mxu0
      %v729 = vadd.f32 0.0, %v728
      %v730 = vpop.f32.mrb[0].mxu0
      %v731 = vpop.f32.mrb[0].mxu0
      %v732 = vadd.f32 0.0, %v731
      %v733 = vpop.f32.mrb[0].mxu0
      %734 = vmatprep.mubr.bf16.mxu0 0
      %735 = vmatmul.mubr.bf16.gmra.mrb[0].mxu0 %v556
      %v736 = vpop.f32.mrb[0].mxu0
      %v737 = vadd.f32 0.0, %v736
      %v738 = vpop.f32.mrb[0].mxu0
      %v739 = vpop.f32.mrb[0].mxu0
      %v740 = vadd.f32 0.0, %v739
      %v741 = vpop.f32.mrb[0].mxu0
      %742 = vmatprep.mubr.bf16.mxu0 0
      %743 = vmatmul.mubr.bf16.gmra.mrb[0].mxu0 %v559
      %v744 = vpop.f32.mrb[0].mxu0
      %v745 = vadd.f32 0.0, %v744
      %v746 = vpop.f32.mrb[0].mxu0
      %v747 = vpop.f32.mrb[0].mxu0
      %v748 = vadd.f32 0.0, %v747
      %v749 = vpop.f32.mrb[0].mxu0
      %750 = vmatprep.mubr.bf16.mxu0 0
      %751 = vmatmul.mubr.bf16.gmra.mrb[0].mxu0 %v562
      %v752 = vpop.f32.mrb[0].mxu0
      %v753 = vadd.f32 0.0, %v752
      %v754 = vpop.f32.mrb[0].mxu0
      %v755 = vpop.f32.mrb[0].mxu0
      %v756 = vadd.f32 0.0, %v755
      %v757 = vpop.f32.mrb[0].mxu0
      %758 = vmatprep.mubr.bf16.mxu0 0
      %759 = vmatmul.mubr.bf16.gmra.mrb[0].mxu0 %v565
      %v760 = vpop.f32.mrb[0].mxu0
      %v761 = vadd.f32 0.0, %v760
      %v762 = vpop.f32.mrb[0].mxu0
      %v763 = vpop.f32.mrb[0].mxu0
      %v764 = vadd.f32 0.0, %v763
      %v765 = vpop.f32.mrb[0].mxu0
      %766 = vmatprep.mubr.bf16.mxu0 0
      %767 = vmatmul.mubr.bf16.gmra.mrb[0].mxu0 %v568
      %v768 = vpop.f32.mrb[0].mxu0
      %v769 = vadd.f32 0.0, %v768
      %v770 = vpop.f32.mrb[0].mxu0
      %v771 = vpop.f32.mrb[0].mxu0
      %v772 = vpop.f32.mrb[0].mxu0
      %773 = vdwg.mxu0
      %774 = vst [vmem:[#allocation2] sm:$0xff] %v609
      %775 = vst [vmem:[#allocation2 + $0x8] sm:$0xff] %v612
      %776 = vst [vmem:[#allocation2 + $0x10] sm:$0xff] %v617
      %777 = vst [vmem:[#allocation2 + $0x18] sm:$0xff] %v620
      %778 = vst [vmem:[#allocation2 + $0x20] sm:$0xff] %v625
      %779 = vst [vmem:[#allocation2 + $0x28] sm:$0xff] %v628
      %780 = vst [vmem:[#allocation2 + $0x30] sm:$0xff] %v633
      %781 = vst [vmem:[#allocation2 + $0x38] sm:$0xff] %v636
      %782 = vst [vmem:[#allocation2 + $0x40] sm:$0xff] %v641
      %783 = vst [vmem:[#allocation2 + $0x48] sm:$0xff] %v644
      %784 = vst [vmem:[#allocation2 + $0x50] sm:$0xff] %v649
      %785 = vst [vmem:[#allocation2 + $0x58] sm:$0xff] %v652
      %786 = vst [vmem:[#allocation2 + $0x60] sm:$0xff] %v657
      %787 = vst [vmem:[#allocation2 + $0x68] sm:$0xff] %v660
      %788 = vst [vmem:[#allocation2 + $0x70] sm:$0xff] %v665
      %789 = vst [vmem:[#allocation2 + $0x78] sm:$0xff] %v668
      %790 = vst [vmem:[#allocation2 + $0x80] sm:$0xff] %v673
      %791 = vst [vmem:[#allocation2 + $0x88] sm:$0xff] %v676
      %792 = vst [vmem:[#allocation2 + $0x90] sm:$0xff] %v681
      %793 = vst [vmem:[#allocation2 + $0x98] sm:$0xff] %v684
      %794 = vst [vmem:[#allocation2 + $0xa0] sm:$0xff] %v689
      %795 = vst [vmem:[#allocation2 + $0xa8] sm:$0xff] %v692
      %796 = vst [vmem:[#allocation2 + $0xb0] sm:$0xff] %v697
      %797 = vst [vmem:[#allocation2 + $0xb8] sm:$0xff] %v700
      %798 = vst [vmem:[#allocation2 + $0xc0] sm:$0xff] %v705
      %799 = vst [vmem:[#allocation2 + $0xc8] sm:$0xff] %v708
      %800 = vst [vmem:[#allocation2 + $0xd0] sm:$0xff] %v713
      %801 = vst [vmem:[#allocation2 + $0xd8] sm:$0xff] %v716
      %802 = vst [vmem:[#allocation2 + $0xe0] sm:$0xff] %v721
      %803 = vst [vmem:[#allocation2 + $0xe8] sm:$0xff] %v724
      %804 = vst [vmem:[#allocation2 + $0xf0] sm:$0xff] %v729
      %805 = vst [vmem:[#allocation2 + $0xf8] sm:$0xff] %v732
      %806 = vst [vmem:[#allocation2 + $0x100] sm:$0xff] %v737
      %807 = vst [vmem:[#allocation2 + $0x108] sm:$0xff] %v740
      %808 = vst [vmem:[#allocation2 + $0x110] sm:$0xff] %v745
      %809 = vst [vmem:[#allocation2 + $0x118] sm:$0xff] %v748
      %810 = vst [vmem:[#allocation2 + $0x120] sm:$0xff] %v753
      %811 = vst [vmem:[#allocation2 + $0x128] sm:$0xff] %v756
      %812 = vst [vmem:[#allocation2 + $0x130] sm:$0xff] %v761
      %813 = vst [vmem:[#allocation2 + $0x138] sm:$0xff] %v764
      %814 = vst [vmem:[#allocation2 + $0x140] sm:$0xff] %v769
      %v815 = vld [vmem:[%s9] sm:$0xff]
      %v816 = vld [vmem:[%s9 + $0x8] sm:$0xff]
      %v817 = vld [vmem:[%s9 + $0x10] sm:$0xff]
      %v818 = vld [vmem:[%s9 + $0x18] sm:$0xff]
      %v819 = vld [vmem:[%s9 + $0x20] sm:$0xff]
      %v820 = vld [vmem:[%s9 + $0x28] sm:$0xff]
      %v821 = vld [vmem:[%s9 + $0x30] sm:$0xff]
      %v822 = vld [vmem:[%s9 + $0x38] sm:$0xff]
      %v823 = vld [vmem:[%s9 + $0x40] sm:$0xff]
      %v824 = vld [vmem:[%s9 + $0x48] sm:$0xff]
      %v825 = vld [vmem:[%s9 + $0x50] sm:$0xff]
      %v826 = vld [vmem:[%s9 + $0x58] sm:$0xff]
      %v827 = vld [vmem:[%s9 + $0x60] sm:$0xff]
      %v828 = vld [vmem:[%s9 + $0x68] sm:$0xff]
      %v829 = vld [vmem:[%s9 + $0x70] sm:$0xff]
      %v830 = vld [vmem:[%s9 + $0x78] sm:$0xff]
      %v831 = vld [vmem:[%s9 + $0x80] sm:$0xff]
      %v832 = vld [vmem:[%s9 + $0x88] sm:$0xff]
      %v833 = vld [vmem:[%s9 + $0x90] sm:$0xff]
      %v834 = vld [vmem:[%s9 + $0x98] sm:$0xff]
      %v835 = vld [vmem:[%s9 + $0xa0] sm:$0xff]
      %v836 = vld [vmem:[%s9 + $0xa8] sm:$0xff]
      %v837 = vld [vmem:[%s9 + $0xb0] sm:$0xff]
      %v838 = vld [vmem:[%s9 + $0xb8] sm:$0xff]
      %v839 = vld [vmem:[%s9 + $0xc0] sm:$0xff]
      %v840 = vld [vmem:[%s9 + $0xc8] sm:$0xff]
      %v841 = vld [vmem:[%s9 + $0xd0] sm:$0xff]
      %v842 = vld [vmem:[%s9 + $0xd8] sm:$0xff]
      %v843 = vld [vmem:[%s9 + $0xe0] sm:$0xff]
      %v844 = vld [vmem:[%s9 + $0xe8] sm:$0xff]
      %v845 = vld [vmem:[%s9 + $0xf0] sm:$0xff]
      %v846 = vld [vmem:[%s9 + $0xf8] sm:$0xff]
      %v847 = vld [vmem:[%s9 + $0x100] sm:$0xff]
      %v848 = vld [vmem:[%s9 + $0x108] sm:$0xff]
      %v849 = vld [vmem:[%s9 + $0x110] sm:$0xff]
      %v850 = vld [vmem:[%s9 + $0x118] sm:$0xff]
      %v851 = vld [vmem:[#allocation2] sm:$0xff]
      %v852 = vld [vmem:[#allocation2 + $0x8] sm:$0xff]
      %v853 = vld [vmem:[#allocation2 + $0x10] sm:$0xff]
      %v854 = vld [vmem:[#allocation2 + $0x18] sm:$0xff]
      %v855 = vld [vmem:[#allocation2 + $0x20] sm:$0xff]
      %v856 = vld [vmem:[#allocation2 + $0x28] sm:$0xff]
      %v857 = vld [vmem:[#allocation2 + $0x30] sm:$0xff]
      %v858 = vld [vmem:[#allocation2 + $0x38] sm:$0xff]
      %v859 = vld [vmem:[#allocation2 + $0x40] sm:$0xff]
      %v860 = vld [vmem:[#allocation2 + $0x48] sm:$0xff]
      %v861 = vld [vmem:[#allocation2 + $0x50] sm:$0xff]
      %v862 = vld [vmem:[#allocation2 + $0x58] sm:$0xff]
      %v863 = vld [vmem:[#allocation2 + $0x60] sm:$0xff]
      %v864 = vld [vmem:[#allocation2 + $0x68] sm:$0xff]
      %v865 = vld [vmem:[#allocation2 + $0x70] sm:$0xff]
      %v866 = vld [vmem:[#allocation2 + $0x78] sm:$0xff]
      %v867 = vld [vmem:[#allocation2 + $0x80] sm:$0xff]
      %v868 = vld [vmem:[#allocation2 + $0x88] sm:$0xff]
      %v869 = vld [vmem:[#allocation2 + $0x90] sm:$0xff]
      %v870 = vld [vmem:[#allocation2 + $0x98] sm:$0xff]
      %v871 = vld [vmem:[#allocation2 + $0xa0] sm:$0xff]
      %v872 = vld [vmem:[#allocation2 + $0xa8] sm:$0xff]
      %v873 = vld [vmem:[#allocation2 + $0xb0] sm:$0xff]
      %v874 = vld [vmem:[#allocation2 + $0xb8] sm:$0xff]
      %v875 = vld [vmem:[#allocation2 + $0xc0] sm:$0xff]
      %v876 = vld [vmem:[#allocation2 + $0xc8] sm:$0xff]
      %v877 = vld [vmem:[#allocation2 + $0xd0] sm:$0xff]
      %v878 = vld [vmem:[#allocation2 + $0xd8] sm:$0xff]
      %v879 = vld [vmem:[#allocation2 + $0xe0] sm:$0xff]
      %v880 = vld [vmem:[#allocation2 + $0xe8] sm:$0xff]
      %v881 = vld [vmem:[#allocation2 + $0xf0] sm:$0xff]
      %v882 = vld [vmem:[#allocation2 + $0xf8] sm:$0xff]
      %v883 = vld [vmem:[#allocation2 + $0x100] sm:$0xff]
      %v884 = vld [vmem:[#allocation2 + $0x108] sm:$0xff]
      %v885 = vld [vmem:[#allocation2 + $0x110] sm:$0xff]
      %v886 = vld [vmem:[#allocation2 + $0x118] sm:$0xff]
      %v887 = vld [vmem:[#allocation2 + $0x1] sm:$0xff]
      %v888 = vld [vmem:[#allocation2 + $0x9] sm:$0xff]
      %v889 = vld [vmem:[#allocation2 + $0x11] sm:$0xff]
      %v890 = vld [vmem:[#allocation2 + $0x19] sm:$0xff]
      %v891 = vld [vmem:[#allocation2 + $0x21] sm:$0xff]
      %v892 = vld [vmem:[#allocation2 + $0x29] sm:$0xff]
      %v893 = vld [vmem:[#allocation2 + $0x31] sm:$0xff]
      %v894 = vld [vmem:[#allocation2 + $0x39] sm:$0xff]
      %v895 = vld [vmem:[#allocation2 + $0x41] sm:$0xff]
      %v896 = vld [vmem:[#allocation2 + $0x49] sm:$0xff]
      %v897 = vld [vmem:[#allocation2 + $0x51] sm:$0xff]
      %v898 = vld [vmem:[#allocation2 + $0x59] sm:$0xff]
      %v899 = vld [vmem:[#allocation2 + $0x61] sm:$0xff]
      %v900 = vld [vmem:[#allocation2 + $0x69] sm:$0xff]
      %v901 = vld [vmem:[#allocation2 + $0x71] sm:$0xff]
      %v902 = vld [vmem:[#allocation2 + $0x79] sm:$0xff]
      %v903 = vld [vmem:[#allocation2 + $0x81] sm:$0xff]
      %v904 = vld [vmem:[#allocation2 + $0x89] sm:$0xff]
      %v905 = vld [vmem:[#allocation2 + $0x91] sm:$0xff]
      %v906 = vld [vmem:[#allocation2 + $0x99] sm:$0xff]
      %v907 = vld [vmem:[#allocation2 + $0xa1] sm:$0xff]
      %v908 = vld [vmem:[#allocation2 + $0xa9] sm:$0xff]
      %v909 = vld [vmem:[#allocation2 + $0xb1] sm:$0xff]
      %v910 = vld [vmem:[#allocation2 + $0xb9] sm:$0xff]
      %v911 = vld [vmem:[#allocation2 + $0xc1] sm:$0xff]
      %v912 = vld [vmem:[#allocation2 + $0xc9] sm:$0xff]
      %v913 = vld [vmem:[#allocation2 + $0xd1] sm:$0xff]
      %v914 = vld [vmem:[#allocation2 + $0xd9] sm:$0xff]
      %v915 = vld [vmem:[#allocation2 + $0xe1] sm:$0xff]
      %v916 = vld [vmem:[#allocation2 + $0xe9] sm:$0xff]
      %v917 = vld [vmem:[#allocation2 + $0xf1] sm:$0xff]
      %v918 = vld [vmem:[#allocation2 + $0xf9] sm:$0xff]
      %v919 = vld [vmem:[#allocation2 + $0x101] sm:$0xff]
      %v920 = vld [vmem:[#allocation2 + $0x109] sm:$0xff]
      %v921 = vld [vmem:[#allocation2 + $0x111] sm:$0xff]
      %v922 = vld [vmem:[#allocation2 + $0x119] sm:$0xff]
      %923 = vrot.lane.b32.xlu0 %v887, 4
      %v924 = vpop.permute.xlu0 %923
      %925 = vrot.lane.b32.xlu0 %v888, 4
      %v926 = vpop.permute.xlu0 %925
      %927 = vrot.lane.b32.xlu0 %v889, 4
      %v928 = vpop.permute.xlu0 %927
      %929 = vrot.lane.b32.xlu0 %v890, 4
      %v930 = vpop.permute.xlu0 %929
      %931 = vrot.lane.b32.xlu0 %v891, 4
      %v932 = vpop.permute.xlu0 %931
      %933 = vrot.lane.b32.xlu0 %v892, 4
      %v934 = vpop.permute.xlu0 %933
      %935 = vrot.lane.b32.xlu0 %v893, 4
      %v936 = vpop.permute.xlu0 %935
      %937 = vrot.lane.b32.xlu0 %v894, 4
      %v938 = vpop.permute.xlu0 %937
      %939 = vrot.lane.b32.xlu0 %v895, 4
      %v940 = vpop.permute.xlu0 %939
      %941 = vrot.lane.b32.xlu0 %v896, 4
      %v942 = vpop.permute.xlu0 %941
      %943 = vrot.lane.b32.xlu0 %v897, 4
      %v944 = vpop.permute.xlu0 %943
      %945 = vrot.lane.b32.xlu0 %v898, 4
      %v946 = vpop.permute.xlu0 %945
      %947 = vrot.lane.b32.xlu0 %v899, 4
      %v948 = vpop.permute.xlu0 %947
      %949 = vrot.lane.b32.xlu0 %v900, 4
      %v950 = vpop.permute.xlu0 %949
      %951 = vrot.lane.b32.xlu0 %v901, 4
      %v952 = vpop.permute.xlu0 %951
      %953 = vrot.lane.b32.xlu0 %v902, 4
      %v954 = vpop.permute.xlu0 %953
      %955 = vrot.lane.b32.xlu0 %v903, 4
      %v956 = vpop.permute.xlu0 %955
      %957 = vrot.lane.b32.xlu0 %v904, 4
      %v958 = vpop.permute.xlu0 %957
      %959 = vrot.lane.b32.xlu0 %v905, 4
      %v960 = vpop.permute.xlu0 %959
      %961 = vrot.lane.b32.xlu0 %v906, 4
      %v962 = vpop.permute.xlu0 %961
      %963 = vrot.lane.b32.xlu0 %v907, 4
      %v964 = vpop.permute.xlu0 %963
      %965 = vrot.lane.b32.xlu0 %v908, 4
      %v966 = vpop.permute.xlu0 %965
      %967 = vrot.lane.b32.xlu0 %v909, 4
      %v968 = vpop.permute.xlu0 %967
      %969 = vrot.lane.b32.xlu0 %v910, 4
      %v970 = vpop.permute.xlu0 %969
      %971 = vrot.lane.b32.xlu0 %v911, 4
      %v972 = vpop.permute.xlu0 %971
      %973 = vrot.lane.b32.xlu0 %v912, 4
      %v974 = vpop.permute.xlu0 %973
      %975 = vrot.lane.b32.xlu0 %v913, 4
      %v976 = vpop.permute.xlu0 %975
      %977 = vrot.lane.b32.xlu0 %v914, 4
      %v978 = vpop.permute.xlu0 %977
      %979 = vrot.lane.b32.xlu0 %v915, 4
      %v980 = vpop.permute.xlu0 %979
      %981 = vrot.lane.b32.xlu0 %v916, 4
      %v982 = vpop.permute.xlu0 %981
      %983 = vrot.lane.b32.xlu0 %v917, 4
      %v984 = vpop.permute.xlu0 %983
      %985 = vrot.lane.b32.xlu0 %v918, 4
      %v986 = vpop.permute.xlu0 %985
      %987 = vrot.lane.b32.xlu0 %v919, 4
      %v988 = vpop.permute.xlu0 %987
      %989 = vrot.lane.b32.xlu0 %v920, 4
      %v990 = vpop.permute.xlu0 %989
      %991 = vrot.lane.b32.xlu0 %v921, 4
      %v992 = vpop.permute.xlu0 %991
      %993 = vrot.lane.b32.xlu0 %v922, 4
      %v994 = vpop.permute.xlu0 %993
      %v995 = vadd.f32 %v851, %v924
      %v996 = vadd.f32 %v852, %v926
      %v997 = vadd.f32 %v853, %v928
      %v998 = vadd.f32 %v854, %v930
      %v999 = vadd.f32 %v855, %v932
      %v1000 = vadd.f32 %v856, %v934
      %v1001 = vadd.f32 %v857, %v936
      %v1002 = vadd.f32 %v858, %v938
      %v1003 = vadd.f32 %v859, %v940
      %v1004 = vadd.f32 %v860, %v942
      %v1005 = vadd.f32 %v861, %v944
      %v1006 = vadd.f32 %v862, %v946
      %v1007 = vadd.f32 %v863, %v948
      %v1008 = vadd.f32 %v864, %v950
      %v1009 = vadd.f32 %v865, %v952
      %v1010 = vadd.f32 %v866, %v954
      %v1011 = vadd.f32 %v867, %v956
      %v1012 = vadd.f32 %v868, %v958
      %v1013 = vadd.f32 %v869, %v960
      %v1014 = vadd.f32 %v870, %v962
      %v1015 = vadd.f32 %v871, %v964
      %v1016 = vadd.f32 %v872, %v966
      %v1017 = vadd.f32 %v873, %v968
      %v1018 = vadd.f32 %v874, %v970
      %v1019 = vadd.f32 %v875, %v972
      %v1020 = vadd.f32 %v876, %v974
      %v1021 = vadd.f32 %v877, %v976
      %v1022 = vadd.f32 %v878, %v978
      %v1023 = vadd.f32 %v879, %v980
      %v1024 = vadd.f32 %v880, %v982
      %v1025 = vadd.f32 %v881, %v984
      %v1026 = vadd.f32 %v882, %v986
      %v1027 = vadd.f32 %v883, %v988
      %v1028 = vadd.f32 %v884, %v990
      %v1029 = vadd.f32 %v885, %v992
      %v1030 = vadd.f32 %v886, %v994
      %v1031 = vld [vmem:[#allocation2 + $0x2] sm:$0xff]
      %v1032 = vld [vmem:[#allocation2 + $0xa] sm:$0xff]
      %v1033 = vld [vmem:[#allocation2 + $0x12] sm:$0xff]
      %v1034 = vld [vmem:[#allocation2 + $0x1a] sm:$0xff]
      %v1035 = vld [vmem:[#allocation2 + $0x22] sm:$0xff]
      %v1036 = vld [vmem:[#allocation2 + $0x2a] sm:$0xff]
      %v1037 = vld [vmem:[#allocation2 + $0x32] sm:$0xff]
      %v1038 = vld [vmem:[#allocation2 + $0x3a] sm:$0xff]
      %v1039 = vld [vmem:[#allocation2 + $0x42] sm:$0xff]
      %v1040 = vld [vmem:[#allocation2 + $0x4a] sm:$0xff]
      %v1041 = vld [vmem:[#allocation2 + $0x52] sm:$0xff]
      %v1042 = vld [vmem:[#allocation2 + $0x5a] sm:$0xff]
      %v1043 = vld [vmem:[#allocation2 + $0x62] sm:$0xff]
      %v1044 = vld [vmem:[#allocation2 + $0x6a] sm:$0xff]
      %v1045 = vld [vmem:[#allocation2 + $0x72] sm:$0xff]
      %v1046 = vld [vmem:[#allocation2 + $0x7a] sm:$0xff]
      %v1047 = vld [vmem:[#allocation2 + $0x82] sm:$0xff]
      %v1048 = vld [vmem:[#allocation2 + $0x8a] sm:$0xff]
      %v1049 = vld [vmem:[#allocation2 + $0x92] sm:$0xff]
      %v1050 = vld [vmem:[#allocation2 + $0x9a] sm:$0xff]
      %v1051 = vld [vmem:[#allocation2 + $0xa2] sm:$0xff]
      %v1052 = vld [vmem:[#allocation2 + $0xaa] sm:$0xff]
      %v1053 = vld [vmem:[#allocation2 + $0xb2] sm:$0xff]
      %v1054 = vld [vmem:[#allocation2 + $0xba] sm:$0xff]
      %v1055 = vld [vmem:[#allocation2 + $0xc2] sm:$0xff]
      %v1056 = vld [vmem:[#allocation2 + $0xca] sm:$0xff]
      %v1057 = vld [vmem:[#allocation2 + $0xd2] sm:$0xff]
      %v1058 = vld [vmem:[#allocation2 + $0xda] sm:$0xff]
      %v1059 = vld [vmem:[#allocation2 + $0xe2] sm:$0xff]
      %v1060 = vld [vmem:[#allocation2 + $0xea] sm:$0xff]
      %v1061 = vld [vmem:[#allocation2 + $0xf2] sm:$0xff]
      %v1062 = vld [vmem:[#allocation2 + $0xfa] sm:$0xff]
      %v1063 = vld [vmem:[#allocation2 + $0x102] sm:$0xff]
      %v1064 = vld [vmem:[#allocation2 + $0x10a] sm:$0xff]
      %v1065 = vld [vmem:[#allocation2 + $0x112] sm:$0xff]
      %v1066 = vld [vmem:[#allocation2 + $0x11a] sm:$0xff]
      %1067 = vrot.lane.b32.xlu0 %v1031, 8
      %v1068 = vpop.permute.xlu0 %1067
      %1069 = vrot.lane.b32.xlu0 %v1032, 8
      %v1070 = vpop.permute.xlu0 %1069
      %1071 = vrot.lane.b32.xlu0 %v1033, 8
      %v1072 = vpop.permute.xlu0 %1071
      %1073 = vrot.lane.b32.xlu0 %v1034, 8
      %v1074 = vpop.permute.xlu0 %1073
      %1075 = vrot.lane.b32.xlu0 %v1035, 8
      %v1076 = vpop.permute.xlu0 %1075
      %1077 = vrot.lane.b32.xlu0 %v1036, 8
      %v1078 = vpop.permute.xlu0 %1077
      %1079 = vrot.lane.b32.xlu0 %v1037, 8
      %v1080 = vpop.permute.xlu0 %1079
      %1081 = vrot.lane.b32.xlu0 %v1038, 8
      %v1082 = vpop.permute.xlu0 %1081
      %1083 = vrot.lane.b32.xlu0 %v1039, 8
      %v1084 = vpop.permute.xlu0 %1083
      %1085 = vrot.lane.b32.xlu0 %v1040, 8
      %v1086 = vpop.permute.xlu0 %1085
      %1087 = vrot.lane.b32.xlu0 %v1041, 8
      %v1088 = vpop.permute.xlu0 %1087
      %1089 = vrot.lane.b32.xlu0 %v1042, 8
      %v1090 = vpop.permute.xlu0 %1089
      %1091 = vrot.lane.b32.xlu0 %v1043, 8
      %v1092 = vpop.permute.xlu0 %1091
      %1093 = vrot.lane.b32.xlu0 %v1044, 8
      %v1094 = vpop.permute.xlu0 %1093
      %1095 = vrot.lane.b32.xlu0 %v1045, 8
      %v1096 = vpop.permute.xlu0 %1095
      %1097 = vrot.lane.b32.xlu0 %v1046, 8
      %v1098 = vpop.permute.xlu0 %1097
      %1099 = vrot.lane.b32.xlu0 %v1047, 8
      %v1100 = vpop.permute.xlu0 %1099
      %1101 = vrot.lane.b32.xlu0 %v1048, 8
      %v1102 = vpop.permute.xlu0 %1101
      %1103 = vrot.lane.b32.xlu0 %v1049, 8
      %v1104 = vpop.permute.xlu0 %1103
      %1105 = vrot.lane.b32.xlu0 %v1050, 8
      %v1106 = vpop.permute.xlu0 %1105
      %1107 = vrot.lane.b32.xlu0 %v1051, 8
      %v1108 = vpop.permute.xlu0 %1107
      %1109 = vrot.lane.b32.xlu0 %v1052, 8
      %v1110 = vpop.permute.xlu0 %1109
      %1111 = vrot.lane.b32.xlu0 %v1053, 8
      %v1112 = vpop.permute.xlu0 %1111
      %1113 = vrot.lane.b32.xlu0 %v1054, 8
      %v1114 = vpop.permute.xlu0 %1113
      %1115 = vrot.lane.b32.xlu0 %v1055, 8
      %v1116 = vpop.permute.xlu0 %1115
      %1117 = vrot.lane.b32.xlu0 %v1056, 8
      %v1118 = vpop.permute.xlu0 %1117
      %1119 = vrot.lane.b32.xlu0 %v1057, 8
      %v1120 = vpop.permute.xlu0 %1119
      %1121 = vrot.lane.b32.xlu0 %v1058, 8
      %v1122 = vpop.permute.xlu0 %1121
      %1123 = vrot.lane.b32.xlu0 %v1059, 8
      %v1124 = vpop.permute.xlu0 %1123
      %1125 = vrot.lane.b32.xlu0 %v1060, 8
      %v1126 = vpop.permute.xlu0 %1125
      %1127 = vrot.lane.b32.xlu0 %v1061, 8
      %v1128 = vpop.permute.xlu0 %1127
      %1129 = vrot.lane.b32.xlu0 %v1062, 8
      %v1130 = vpop.permute.xlu0 %1129
      %1131 = vrot.lane.b32.xlu0 %v1063, 8
      %v1132 = vpop.permute.xlu0 %1131
      %1133 = vrot.lane.b32.xlu0 %v1064, 8
      %v1134 = vpop.permute.xlu0 %1133
      %1135 = vrot.lane.b32.xlu0 %v1065, 8
      %v1136 = vpop.permute.xlu0 %1135
      %1137 = vrot.lane.b32.xlu0 %v1066, 8
      %v1138 = vpop.permute.xlu0 %1137
      %v1139 = vadd.f32 %v995, %v1068
      %v1140 = vadd.f32 %v996, %v1070
      %v1141 = vadd.f32 %v997, %v1072
      %v1142 = vadd.f32 %v998, %v1074
      %v1143 = vadd.f32 %v999, %v1076
      %v1144 = vadd.f32 %v1000, %v1078
      %v1145 = vadd.f32 %v1001, %v1080
      %v1146 = vadd.f32 %v1002, %v1082
      %v1147 = vadd.f32 %v1003, %v1084
      %v1148 = vadd.f32 %v1004, %v1086
      %v1149 = vadd.f32 %v1005, %v1088
      %v1150 = vadd.f32 %v1006, %v1090
      %v1151 = vadd.f32 %v1007, %v1092
      %v1152 = vadd.f32 %v1008, %v1094
      %v1153 = vadd.f32 %v1009, %v1096
      %v1154 = vadd.f32 %v1010, %v1098
      %v1155 = vadd.f32 %v1011, %v1100
      %v1156 = vadd.f32 %v1012, %v1102
      %v1157 = vadd.f32 %v1013, %v1104
      %v1158 = vadd.f32 %v1014, %v1106
      %v1159 = vadd.f32 %v1015, %v1108
      %v1160 = vadd.f32 %v1016, %v1110
      %v1161 = vadd.f32 %v1017, %v1112
      %v1162 = vadd.f32 %v1018, %v1114
      %v1163 = vadd.f32 %v1019, %v1116
      %v1164 = vadd.f32 %v1020, %v1118
      %v1165 = vadd.f32 %v1021, %v1120
      %v1166 = vadd.f32 %v1022, %v1122
      %v1167 = vadd.f32 %v1023, %v1124
      %v1168 = vadd.f32 %v1024, %v1126
      %v1169 = vadd.f32 %v1025, %v1128
      %v1170 = vadd.f32 %v1026, %v1130
      %v1171 = vadd.f32 %v1027, %v1132
      %v1172 = vadd.f32 %v1028, %v1134
      %v1173 = vadd.f32 %v1029, %v1136
      %v1174 = vadd.f32 %v1030, %v1138
      %v1175 = vld [vmem:[#allocation2 + $0x122] sm:$0xff]
      %v1176 = vld [vmem:[#allocation2 + $0x12a] sm:$0xff]
      %1177 = vrot.lane.b32.xlu0 %v1033, 12
      %v1178 = vpop.permute.xlu0 %1177
      %1179 = vrot.lane.b32.xlu0 %v1034, 12
      %v1180 = vpop.permute.xlu0 %1179
      %1181 = vrot.lane.b32.xlu0 %v1035, 12
      %v1182 = vpop.permute.xlu0 %1181
      %1183 = vrot.lane.b32.xlu0 %v1036, 12
      %v1184 = vpop.permute.xlu0 %1183
      %1185 = vrot.lane.b32.xlu0 %v1037, 12
      %v1186 = vpop.permute.xlu0 %1185
      %1187 = vrot.lane.b32.xlu0 %v1038, 12
      %v1188 = vpop.permute.xlu0 %1187
      %1189 = vrot.lane.b32.xlu0 %v1039, 12
      %v1190 = vpop.permute.xlu0 %1189
      %1191 = vrot.lane.b32.xlu0 %v1040, 12
      %v1192 = vpop.permute.xlu0 %1191
      %1193 = vrot.lane.b32.xlu0 %v1041, 12
      %v1194 = vpop.permute.xlu0 %1193
      %1195 = vrot.lane.b32.xlu0 %v1042, 12
      %v1196 = vpop.permute.xlu0 %1195
      %1197 = vrot.lane.b32.xlu0 %v1043, 12
      %v1198 = vpop.permute.xlu0 %1197
      %1199 = vrot.lane.b32.xlu0 %v1044, 12
      %v1200 = vpop.permute.xlu0 %1199
      %1201 = vrot.lane.b32.xlu0 %v1045, 12
      %v1202 = vpop.permute.xlu0 %1201
      %1203 = vrot.lane.b32.xlu0 %v1046, 12
      %v1204 = vpop.permute.xlu0 %1203
      %1205 = vrot.lane.b32.xlu0 %v1047, 12
      %v1206 = vpop.permute.xlu0 %1205
      %1207 = vrot.lane.b32.xlu0 %v1048, 12
      %v1208 = vpop.permute.xlu0 %1207
      %1209 = vrot.lane.b32.xlu0 %v1049, 12
      %v1210 = vpop.permute.xlu0 %1209
      %1211 = vrot.lane.b32.xlu0 %v1050, 12
      %v1212 = vpop.permute.xlu0 %1211
      %1213 = vrot.lane.b32.xlu0 %v1051, 12
      %v1214 = vpop.permute.xlu0 %1213
      %1215 = vrot.lane.b32.xlu0 %v1052, 12
      %v1216 = vpop.permute.xlu0 %1215
      %1217 = vrot.lane.b32.xlu0 %v1053, 12
      %v1218 = vpop.permute.xlu0 %1217
      %1219 = vrot.lane.b32.xlu0 %v1054, 12
      %v1220 = vpop.permute.xlu0 %1219
      %1221 = vrot.lane.b32.xlu0 %v1055, 12
      %v1222 = vpop.permute.xlu0 %1221
      %1223 = vrot.lane.b32.xlu0 %v1056, 12
      %v1224 = vpop.permute.xlu0 %1223
      %1225 = vrot.lane.b32.xlu0 %v1057, 12
      %v1226 = vpop.permute.xlu0 %1225
      %1227 = vrot.lane.b32.xlu0 %v1058, 12
      %v1228 = vpop.permute.xlu0 %1227
      %1229 = vrot.lane.b32.xlu0 %v1059, 12
      %v1230 = vpop.permute.xlu0 %1229
      %1231 = vrot.lane.b32.xlu0 %v1060, 12
      %v1232 = vpop.permute.xlu0 %1231
      %1233 = vrot.lane.b32.xlu0 %v1061, 12
      %v1234 = vpop.permute.xlu0 %1233
      %1235 = vrot.lane.b32.xlu0 %v1062, 12
      %v1236 = vpop.permute.xlu0 %1235
      %1237 = vrot.lane.b32.xlu0 %v1063, 12
      %v1238 = vpop.permute.xlu0 %1237
      %1239 = vrot.lane.b32.xlu0 %v1064, 12
      %v1240 = vpop.permute.xlu0 %1239
      %1241 = vrot.lane.b32.xlu0 %v1065, 12
      %v1242 = vpop.permute.xlu0 %1241
      %1243 = vrot.lane.b32.xlu0 %v1066, 12
      %v1244 = vpop.permute.xlu0 %1243
      %1245 = vrot.lane.b32.xlu0 %v1175, 12
      %v1246 = vpop.permute.xlu0 %1245
      %1247 = vrot.lane.b32.xlu0 %v1176, 12
      %v1248 = vpop.permute.xlu0 %1247
      %v1249 = vadd.f32 %v1139, %v1178
      %v1250 = vadd.f32 %v1140, %v1180
      %v1251 = vadd.f32 %v1141, %v1182
      %v1252 = vadd.f32 %v1142, %v1184
      %v1253 = vadd.f32 %v1143, %v1186
      %v1254 = vadd.f32 %v1144, %v1188
      %v1255 = vadd.f32 %v1145, %v1190
      %v1256 = vadd.f32 %v1146, %v1192
      %v1257 = vadd.f32 %v1147, %v1194
      %v1258 = vadd.f32 %v1148, %v1196
      %v1259 = vadd.f32 %v1149, %v1198
      %v1260 = vadd.f32 %v1150, %v1200
      %v1261 = vadd.f32 %v1151, %v1202
      %v1262 = vadd.f32 %v1152, %v1204
      %v1263 = vadd.f32 %v1153, %v1206
      %v1264 = vadd.f32 %v1154, %v1208
      %v1265 = vadd.f32 %v1155, %v1210
      %v1266 = vadd.f32 %v1156, %v1212
      %v1267 = vadd.f32 %v1157, %v1214
      %v1268 = vadd.f32 %v1158, %v1216
      %v1269 = vadd.f32 %v1159, %v1218
      %v1270 = vadd.f32 %v1160, %v1220
      %v1271 = vadd.f32 %v1161, %v1222
      %v1272 = vadd.f32 %v1162, %v1224
      %v1273 = vadd.f32 %v1163, %v1226
      %v1274 = vadd.f32 %v1164, %v1228
      %v1275 = vadd.f32 %v1165, %v1230
      %v1276 = vadd.f32 %v1166, %v1232
      %v1277 = vadd.f32 %v1167, %v1234
      %v1278 = vadd.f32 %v1168, %v1236
      %v1279 = vadd.f32 %v1169, %v1238
      %v1280 = vadd.f32 %v1170, %v1240
      %v1281 = vadd.f32 %v1171, %v1242
      %v1282 = vadd.f32 %v1172, %v1244
      %v1283 = vadd.f32 %v1173, %v1246
      %v1284 = vadd.f32 %v1174, %v1248
      %v1285 = vld [vmem:[#allocation2 + $0x13] sm:$0xff]
      %v1286 = vld [vmem:[#allocation2 + $0x1b] sm:$0xff]
      %v1287 = vld [vmem:[#allocation2 + $0x23] sm:$0xff]
      %v1288 = vld [vmem:[#allocation2 + $0x2b] sm:$0xff]
      %v1289 = vld [vmem:[#allocation2 + $0x33] sm:$0xff]
      %v1290 = vld [vmem:[#allocation2 + $0x3b] sm:$0xff]
      %v1291 = vld [vmem:[#allocation2 + $0x43] sm:$0xff]
      %v1292 = vld [vmem:[#allocation2 + $0x4b] sm:$0xff]
      %v1293 = vld [vmem:[#allocation2 + $0x53] sm:$0xff]
      %v1294 = vld [vmem:[#allocation2 + $0x5b] sm:$0xff]
      %v1295 = vld [vmem:[#allocation2 + $0x63] sm:$0xff]
      %v1296 = vld [vmem:[#allocation2 + $0x6b] sm:$0xff]
      %v1297 = vld [vmem:[#allocation2 + $0x73] sm:$0xff]
      %v1298 = vld [vmem:[#allocation2 + $0x7b] sm:$0xff]
      %v1299 = vld [vmem:[#allocation2 + $0x83] sm:$0xff]
      %v1300 = vld [vmem:[#allocation2 + $0x8b] sm:$0xff]
      %v1301 = vld [vmem:[#allocation2 + $0x93] sm:$0xff]
      %v1302 = vld [vmem:[#allocation2 + $0x9b] sm:$0xff]
      %v1303 = vld [vmem:[#allocation2 + $0xa3] sm:$0xff]
      %v1304 = vld [vmem:[#allocation2 + $0xab] sm:$0xff]
      %v1305 = vld [vmem:[#allocation2 + $0xb3] sm:$0xff]
      %v1306 = vld [vmem:[#allocation2 + $0xbb] sm:$0xff]
      %v1307 = vld [vmem:[#allocation2 + $0xc3] sm:$0xff]
      %v1308 = vld [vmem:[#allocation2 + $0xcb] sm:$0xff]
      %v1309 = vld [vmem:[#allocation2 + $0xd3] sm:$0xff]
      %v1310 = vld [vmem:[#allocation2 + $0xdb] sm:$0xff]
      %v1311 = vld [vmem:[#allocation2 + $0xe3] sm:$0xff]
      %v1312 = vld [vmem:[#allocation2 + $0xeb] sm:$0xff]
      %v1313 = vld [vmem:[#allocation2 + $0xf3] sm:$0xff]
      %v1314 = vld [vmem:[#allocation2 + $0xfb] sm:$0xff]
      %v1315 = vld [vmem:[#allocation2 + $0x103] sm:$0xff]
      %v1316 = vld [vmem:[#allocation2 + $0x10b] sm:$0xff]
      %v1317 = vld [vmem:[#allocation2 + $0x113] sm:$0xff]
      %v1318 = vld [vmem:[#allocation2 + $0x11b] sm:$0xff]
      %v1319 = vld [vmem:[#allocation2 + $0x123] sm:$0xff]
      %v1320 = vld [vmem:[#allocation2 + $0x12b] sm:$0xff]
      %1321 = vrot.lane.b32.xlu0 %v1285, 16
      %v1322 = vpop.permute.xlu0 %1321
      %1323 = vrot.lane.b32.xlu0 %v1286, 16
      %v1324 = vpop.permute.xlu0 %1323
      %1325 = vrot.lane.b32.xlu0 %v1287, 16
      %v1326 = vpop.permute.xlu0 %1325
      %1327 = vrot.lane.b32.xlu0 %v1288, 16
      %v1328 = vpop.permute.xlu0 %1327
      %1329 = vrot.lane.b32.xlu0 %v1289, 16
      %v1330 = vpop.permute.xlu0 %1329
      %1331 = vrot.lane.b32.xlu0 %v1290, 16
      %v1332 = vpop.permute.xlu0 %1331
      %1333 = vrot.lane.b32.xlu0 %v1291, 16
      %v1334 = vpop.permute.xlu0 %1333
      %1335 = vrot.lane.b32.xlu0 %v1292, 16
      %v1336 = vpop.permute.xlu0 %1335
      %1337 = vrot.lane.b32.xlu0 %v1293, 16
      %v1338 = vpop.permute.xlu0 %1337
      %1339 = vrot.lane.b32.xlu0 %v1294, 16
      %v1340 = vpop.permute.xlu0 %1339
      %1341 = vrot.lane.b32.xlu0 %v1295, 16
      %v1342 = vpop.permute.xlu0 %1341
      %1343 = vrot.lane.b32.xlu0 %v1296, 16
      %v1344 = vpop.permute.xlu0 %1343
      %1345 = vrot.lane.b32.xlu0 %v1297, 16
      %v1346 = vpop.permute.xlu0 %1345
      %1347 = vrot.lane.b32.xlu0 %v1298, 16
      %v1348 = vpop.permute.xlu0 %1347
      %1349 = vrot.lane.b32.xlu0 %v1299, 16
      %v1350 = vpop.permute.xlu0 %1349
      %1351 = vrot.lane.b32.xlu0 %v1300, 16
      %v1352 = vpop.permute.xlu0 %1351
      %1353 = vrot.lane.b32.xlu0 %v1301, 16
      %v1354 = vpop.permute.xlu0 %1353
      %1355 = vrot.lane.b32.xlu0 %v1302, 16
      %v1356 = vpop.permute.xlu0 %1355
      %1357 = vrot.lane.b32.xlu0 %v1303, 16
      %v1358 = vpop.permute.xlu0 %1357
      %1359 = vrot.lane.b32.xlu0 %v1304, 16
      %v1360 = vpop.permute.xlu0 %1359
      %1361 = vrot.lane.b32.xlu0 %v1305, 16
      %v1362 = vpop.permute.xlu0 %1361
      %1363 = vrot.lane.b32.xlu0 %v1306, 16
      %v1364 = vpop.permute.xlu0 %1363
      %1365 = vrot.lane.b32.xlu0 %v1307, 16
      %v1366 = vpop.permute.xlu0 %1365
      %1367 = vrot.lane.b32.xlu0 %v1308, 16
      %v1368 = vpop.permute.xlu0 %1367
      %1369 = vrot.lane.b32.xlu0 %v1309, 16
      %v1370 = vpop.permute.xlu0 %1369
      %1371 = vrot.lane.b32.xlu0 %v1310, 16
      %v1372 = vpop.permute.xlu0 %1371
      %1373 = vrot.lane.b32.xlu0 %v1311, 16
      %v1374 = vpop.permute.xlu0 %1373
      %1375 = vrot.lane.b32.xlu0 %v1312, 16
      %v1376 = vpop.permute.xlu0 %1375
      %1377 = vrot.lane.b32.xlu0 %v1313, 16
      %v1378 = vpop.permute.xlu0 %1377
      %1379 = vrot.lane.b32.xlu0 %v1314, 16
      %v1380 = vpop.permute.xlu0 %1379
      %1381 = vrot.lane.b32.xlu0 %v1315, 16
      %v1382 = vpop.permute.xlu0 %1381
      %1383 = vrot.lane.b32.xlu0 %v1316, 16
      %v1384 = vpop.permute.xlu0 %1383
      %1385 = vrot.lane.b32.xlu0 %v1317, 16
      %v1386 = vpop.permute.xlu0 %1385
      %1387 = vrot.lane.b32.xlu0 %v1318, 16
      %v1388 = vpop.permute.xlu0 %1387
      %1389 = vrot.lane.b32.xlu0 %v1319, 16
      %v1390 = vpop.permute.xlu0 %1389
      %1391 = vrot.lane.b32.xlu0 %v1320, 16
      %v1392 = vpop.permute.xlu0 %1391
      %v1393 = vadd.f32 %v1249, %v1322
      %v1394 = vadd.f32 %v1250, %v1324
      %v1395 = vadd.f32 %v1251, %v1326
      %v1396 = vadd.f32 %v1252, %v1328
      %v1397 = vadd.f32 %v1253, %v1330
      %v1398 = vadd.f32 %v1254, %v1332
      %v1399 = vadd.f32 %v1255, %v1334
      %v1400 = vadd.f32 %v1256, %v1336
      %v1401 = vadd.f32 %v1257, %v1338
      %v1402 = vadd.f32 %v1258, %v1340
      %v1403 = vadd.f32 %v1259, %v1342
      %v1404 = vadd.f32 %v1260, %v1344
      %v1405 = vadd.f32 %v1261, %v1346
      %v1406 = vadd.f32 %v1262, %v1348
      %v1407 = vadd.f32 %v1263, %v1350
      %v1408 = vadd.f32 %v1264, %v1352
      %v1409 = vadd.f32 %v1265, %v1354
      %v1410 = vadd.f32 %v1266, %v1356
      %v1411 = vadd.f32 %v1267, %v1358
      %v1412 = vadd.f32 %v1268, %v1360
      %v1413 = vadd.f32 %v1269, %v1362
      %v1414 = vadd.f32 %v1270, %v1364
      %v1415 = vadd.f32 %v1271, %v1366
      %v1416 = vadd.f32 %v1272, %v1368
      %v1417 = vadd.f32 %v1273, %v1370
      %v1418 = vadd.f32 %v1274, %v1372
      %v1419 = vadd.f32 %v1275, %v1374
      %v1420 = vadd.f32 %v1276, %v1376
      %v1421 = vadd.f32 %v1277, %v1378
      %v1422 = vadd.f32 %v1278, %v1380
      %v1423 = vadd.f32 %v1279, %v1382
      %v1424 = vadd.f32 %v1280, %v1384
      %v1425 = vadd.f32 %v1281, %v1386
      %v1426 = vadd.f32 %v1282, %v1388
      %v1427 = vadd.f32 %v1283, %v1390
      %v1428 = vadd.f32 %v1284, %v1392
      %v1429 = vld [vmem:[#allocation2 + $0x14] sm:$0xff]
      %v1430 = vld [vmem:[#allocation2 + $0x1c] sm:$0xff]
      %v1431 = vld [vmem:[#allocation2 + $0x24] sm:$0xff]
      %v1432 = vld [vmem:[#allocation2 + $0x2c] sm:$0xff]
      %v1433 = vld [vmem:[#allocation2 + $0x34] sm:$0xff]
      %v1434 = vld [vmem:[#allocation2 + $0x3c] sm:$0xff]
      %v1435 = vld [vmem:[#allocation2 + $0x44] sm:$0xff]
      %v1436 = vld [vmem:[#allocation2 + $0x4c] sm:$0xff]
      %v1437 = vld [vmem:[#allocation2 + $0x54] sm:$0xff]
      %v1438 = vld [vmem:[#allocation2 + $0x5c] sm:$0xff]
      %v1439 = vld [vmem:[#allocation2 + $0x64] sm:$0xff]
      %v1440 = vld [vmem:[#allocation2 + $0x6c] sm:$0xff]
      %v1441 = vld [vmem:[#allocation2 + $0x74] sm:$0xff]
      %v1442 = vld [vmem:[#allocation2 + $0x7c] sm:$0xff]
      %v1443 = vld [vmem:[#allocation2 + $0x84] sm:$0xff]
      %v1444 = vld [vmem:[#allocation2 + $0x8c] sm:$0xff]
      %v1445 = vld [vmem:[#allocation2 + $0x94] sm:$0xff]
      %v1446 = vld [vmem:[#allocation2 + $0x9c] sm:$0xff]
      %v1447 = vld [vmem:[#allocation2 + $0xa4] sm:$0xff]
      %v1448 = vld [vmem:[#allocation2 + $0xac] sm:$0xff]
      %v1449 = vld [vmem:[#allocation2 + $0xb4] sm:$0xff]
      %v1450 = vld [vmem:[#allocation2 + $0xbc] sm:$0xff]
      %v1451 = vld [vmem:[#allocation2 + $0xc4] sm:$0xff]
      %v1452 = vld [vmem:[#allocation2 + $0xcc] sm:$0xff]
      %v1453 = vld [vmem:[#allocation2 + $0xd4] sm:$0xff]
      %v1454 = vld [vmem:[#allocation2 + $0xdc] sm:$0xff]
      %v1455 = vld [vmem:[#allocation2 + $0xe4] sm:$0xff]
      %v1456 = vld [vmem:[#allocation2 + $0xec] sm:$0xff]
      %v1457 = vld [vmem:[#allocation2 + $0xf4] sm:$0xff]
      %v1458 = vld [vmem:[#allocation2 + $0xfc] sm:$0xff]
      %v1459 = vld [vmem:[#allocation2 + $0x104] sm:$0xff]
      %v1460 = vld [vmem:[#allocation2 + $0x10c] sm:$0xff]
      %v1461 = vld [vmem:[#allocation2 + $0x114] sm:$0xff]
      %v1462 = vld [vmem:[#allocation2 + $0x11c] sm:$0xff]
      %v1463 = vld [vmem:[#allocation2 + $0x124] sm:$0xff]
      %v1464 = vld [vmem:[#allocation2 + $0x12c] sm:$0xff]
      %1465 = vrot.lane.b32.xlu0 %v1429, 20
      %v1466 = vpop.permute.xlu0 %1465
      %1467 = vrot.lane.b32.xlu0 %v1430, 20
      %v1468 = vpop.permute.xlu0 %1467
      %1469 = vrot.lane.b32.xlu0 %v1431, 20
      %v1470 = vpop.permute.xlu0 %1469
      %1471 = vrot.lane.b32.xlu0 %v1432, 20
      %v1472 = vpop.permute.xlu0 %1471
      %1473 = vrot.lane.b32.xlu0 %v1433, 20
      %v1474 = vpop.permute.xlu0 %1473
      %1475 = vrot.lane.b32.xlu0 %v1434, 20
      %v1476 = vpop.permute.xlu0 %1475
      %1477 = vrot.lane.b32.xlu0 %v1435, 20
      %v1478 = vpop.permute.xlu0 %1477
      %1479 = vrot.lane.b32.xlu0 %v1436, 20
      %v1480 = vpop.permute.xlu0 %1479
      %1481 = vrot.lane.b32.xlu0 %v1437, 20
      %v1482 = vpop.permute.xlu0 %1481
      %1483 = vrot.lane.b32.xlu0 %v1438, 20
      %v1484 = vpop.permute.xlu0 %1483
      %1485 = vrot.lane.b32.xlu0 %v1439, 20
      %v1486 = vpop.permute.xlu0 %1485
      %1487 = vrot.lane.b32.xlu0 %v1440, 20
      %v1488 = vpop.permute.xlu0 %1487
      %1489 = vrot.lane.b32.xlu0 %v1441, 20
      %v1490 = vpop.permute.xlu0 %1489
      %1491 = vrot.lane.b32.xlu0 %v1442, 20
      %v1492 = vpop.permute.xlu0 %1491
      %1493 = vrot.lane.b32.xlu0 %v1443, 20
      %v1494 = vpop.permute.xlu0 %1493
      %1495 = vrot.lane.b32.xlu0 %v1444, 20
      %v1496 = vpop.permute.xlu0 %1495
      %1497 = vrot.lane.b32.xlu0 %v1445, 20
      %v1498 = vpop.permute.xlu0 %1497
      %1499 = vrot.lane.b32.xlu0 %v1446, 20
      %v1500 = vpop.permute.xlu0 %1499
      %1501 = vrot.lane.b32.xlu0 %v1447, 20
      %v1502 = vpop.permute.xlu0 %1501
      %1503 = vrot.lane.b32.xlu0 %v1448, 20
      %v1504 = vpop.permute.xlu0 %1503
      %1505 = vrot.lane.b32.xlu0 %v1449, 20
      %v1506 = vpop.permute.xlu0 %1505
      %1507 = vrot.lane.b32.xlu0 %v1450, 20
      %v1508 = vpop.permute.xlu0 %1507
      %1509 = vrot.lane.b32.xlu0 %v1451, 20
      %v1510 = vpop.permute.xlu0 %1509
      %1511 = vrot.lane.b32.xlu0 %v1452, 20
      %v1512 = vpop.permute.xlu0 %1511
      %1513 = vrot.lane.b32.xlu0 %v1453, 20
      %v1514 = vpop.permute.xlu0 %1513
      %1515 = vrot.lane.b32.xlu0 %v1454, 20
      %v1516 = vpop.permute.xlu0 %1515
      %1517 = vrot.lane.b32.xlu0 %v1455, 20
      %v1518 = vpop.permute.xlu0 %1517
      %1519 = vrot.lane.b32.xlu0 %v1456, 20
      %v1520 = vpop.permute.xlu0 %1519
      %1521 = vrot.lane.b32.xlu0 %v1457, 20
      %v1522 = vpop.permute.xlu0 %1521
      %1523 = vrot.lane.b32.xlu0 %v1458, 20
      %v1524 = vpop.permute.xlu0 %1523
      %1525 = vrot.lane.b32.xlu0 %v1459, 20
      %v1526 = vpop.permute.xlu0 %1525
      %1527 = vrot.lane.b32.xlu0 %v1460, 20
      %v1528 = vpop.permute.xlu0 %1527
      %1529 = vrot.lane.b32.xlu0 %v1461, 20
      %v1530 = vpop.permute.xlu0 %1529
      %1531 = vrot.lane.b32.xlu0 %v1462, 20
      %v1532 = vpop.permute.xlu0 %1531
      %1533 = vrot.lane.b32.xlu0 %v1463, 20
      %v1534 = vpop.permute.xlu0 %1533
      %1535 = vrot.lane.b32.xlu0 %v1464, 20
      %v1536 = vpop.permute.xlu0 %1535
      %v1537 = vadd.f32 %v1393, %v1466
      %v1538 = vadd.f32 %v1394, %v1468
      %v1539 = vadd.f32 %v1395, %v1470
      %v1540 = vadd.f32 %v1396, %v1472
      %v1541 = vadd.f32 %v1397, %v1474
      %v1542 = vadd.f32 %v1398, %v1476
      %v1543 = vadd.f32 %v1399, %v1478
      %v1544 = vadd.f32 %v1400, %v1480
      %v1545 = vadd.f32 %v1401, %v1482
      %v1546 = vadd.f32 %v1402, %v1484
      %v1547 = vadd.f32 %v1403, %v1486
      %v1548 = vadd.f32 %v1404, %v1488
      %v1549 = vadd.f32 %v1405, %v1490
      %v1550 = vadd.f32 %v1406, %v1492
      %v1551 = vadd.f32 %v1407, %v1494
      %v1552 = vadd.f32 %v1408, %v1496
      %v1553 = vadd.f32 %v1409, %v1498
      %v1554 = vadd.f32 %v1410, %v1500
      %v1555 = vadd.f32 %v1411, %v1502
      %v1556 = vadd.f32 %v1412, %v1504
      %v1557 = vadd.f32 %v1413, %v1506
      %v1558 = vadd.f32 %v1414, %v1508
      %v1559 = vadd.f32 %v1415, %v1510
      %v1560 = vadd.f32 %v1416, %v1512
      %v1561 = vadd.f32 %v1417, %v1514
      %v1562 = vadd.f32 %v1418, %v1516
      %v1563 = vadd.f32 %v1419, %v1518
      %v1564 = vadd.f32 %v1420, %v1520
      %v1565 = vadd.f32 %v1421, %v1522
      %v1566 = vadd.f32 %v1422, %v1524
      %v1567 = vadd.f32 %v1423, %v1526
      %v1568 = vadd.f32 %v1424, %v1528
      %v1569 = vadd.f32 %v1425, %v1530
      %v1570 = vadd.f32 %v1426, %v1532
      %v1571 = vadd.f32 %v1427, %v1534
      %v1572 = vadd.f32 %v1428, %v1536
      %v1573 = vld [vmem:[#allocation2 + $0x134] sm:$0xff]
      %v1574 = vld [vmem:[#allocation2 + $0x13c] sm:$0xff]
      %1575 = vrot.lane.b32.xlu0 %v1431, 24
      %v1576 = vpop.permute.xlu0 %1575
      %1577 = vrot.lane.b32.xlu0 %v1432, 24
      %v1578 = vpop.permute.xlu0 %1577
      %1579 = vrot.lane.b32.xlu0 %v1433, 24
      %v1580 = vpop.permute.xlu0 %1579
      %1581 = vrot.lane.b32.xlu0 %v1434, 24
      %v1582 = vpop.permute.xlu0 %1581
      %1583 = vrot.lane.b32.xlu0 %v1435, 24
      %v1584 = vpop.permute.xlu0 %1583
      %1585 = vrot.lane.b32.xlu0 %v1436, 24
      %v1586 = vpop.permute.xlu0 %1585
      %1587 = vrot.lane.b32.xlu0 %v1437, 24
      %v1588 = vpop.permute.xlu0 %1587
      %1589 = vrot.lane.b32.xlu0 %v1438, 24
      %v1590 = vpop.permute.xlu0 %1589
      %1591 = vrot.lane.b32.xlu0 %v1439, 24
      %v1592 = vpop.permute.xlu0 %1591
      %1593 = vrot.lane.b32.xlu0 %v1440, 24
      %v1594 = vpop.permute.xlu0 %1593
      %1595 = vrot.lane.b32.xlu0 %v1441, 24
      %v1596 = vpop.permute.xlu0 %1595
      %1597 = vrot.lane.b32.xlu0 %v1442, 24
      %v1598 = vpop.permute.xlu0 %1597
      %1599 = vrot.lane.b32.xlu0 %v1443, 24
      %v1600 = vpop.permute.xlu0 %1599
      %1601 = vrot.lane.b32.xlu0 %v1444, 24
      %v1602 = vpop.permute.xlu0 %1601
      %1603 = vrot.lane.b32.xlu0 %v1445, 24
      %v1604 = vpop.permute.xlu0 %1603
      %1605 = vrot.lane.b32.xlu0 %v1446, 24
      %v1606 = vpop.permute.xlu0 %1605
      %1607 = vrot.lane.b32.xlu0 %v1447, 24
      %v1608 = vpop.permute.xlu0 %1607
      %1609 = vrot.lane.b32.xlu0 %v1448, 24
      %v1610 = vpop.permute.xlu0 %1609
      %1611 = vrot.lane.b32.xlu0 %v1449, 24
      %v1612 = vpop.permute.xlu0 %1611
      %1613 = vrot.lane.b32.xlu0 %v1450, 24
      %v1614 = vpop.permute.xlu0 %1613
      %1615 = vrot.lane.b32.xlu0 %v1451, 24
      %v1616 = vpop.permute.xlu0 %1615
      %1617 = vrot.lane.b32.xlu0 %v1452, 24
      %v1618 = vpop.permute.xlu0 %1617
      %1619 = vrot.lane.b32.xlu0 %v1453, 24
      %v1620 = vpop.permute.xlu0 %1619
      %1621 = vrot.lane.b32.xlu0 %v1454, 24
      %v1622 = vpop.permute.xlu0 %1621
      %1623 = vrot.lane.b32.xlu0 %v1455, 24
      %v1624 = vpop.permute.xlu0 %1623
      %1625 = vrot.lane.b32.xlu0 %v1456, 24
      %v1626 = vpop.permute.xlu0 %1625
      %1627 = vrot.lane.b32.xlu0 %v1457, 24
      %v1628 = vpop.permute.xlu0 %1627
      %1629 = vrot.lane.b32.xlu0 %v1458, 24
      %v1630 = vpop.permute.xlu0 %1629
      %1631 = vrot.lane.b32.xlu0 %v1459, 24
      %v1632 = vpop.permute.xlu0 %1631
      %1633 = vrot.lane.b32.xlu0 %v1460, 24
      %v1634 = vpop.permute.xlu0 %1633
      %1635 = vrot.lane.b32.xlu0 %v1461, 24
      %v1636 = vpop.permute.xlu0 %1635
      %1637 = vrot.lane.b32.xlu0 %v1462, 24
      %v1638 = vpop.permute.xlu0 %1637
      %1639 = vrot.lane.b32.xlu0 %v1463, 24
      %v1640 = vpop.permute.xlu0 %1639
      %1641 = vrot.lane.b32.xlu0 %v1464, 24
      %v1642 = vpop.permute.xlu0 %1641
      %1643 = vrot.lane.b32.xlu0 %v1573, 24
      %v1644 = vpop.permute.xlu0 %1643
      %1645 = vrot.lane.b32.xlu0 %v1574, 24
      %v1646 = vpop.permute.xlu0 %1645
      %v1647 = vadd.f32 %v1537, %v1576
      %v1648 = vadd.f32 %v1538, %v1578
      %v1649 = vadd.f32 %v1539, %v1580
      %v1650 = vadd.f32 %v1540, %v1582
      %v1651 = vadd.f32 %v1541, %v1584
      %v1652 = vadd.f32 %v1542, %v1586
      %v1653 = vadd.f32 %v1543, %v1588
      %v1654 = vadd.f32 %v1544, %v1590
      %v1655 = vadd.f32 %v1545, %v1592
      %v1656 = vadd.f32 %v1546, %v1594
      %v1657 = vadd.f32 %v1547, %v1596
      %v1658 = vadd.f32 %v1548, %v1598
      %v1659 = vadd.f32 %v1549, %v1600
      %v1660 = vadd.f32 %v1550, %v1602
      %v1661 = vadd.f32 %v1551, %v1604
      %v1662 = vadd.f32 %v1552, %v1606
      %v1663 = vadd.f32 %v1553, %v1608
      %v1664 = vadd.f32 %v1554, %v1610
      %v1665 = vadd.f32 %v1555, %v1612
      %v1666 = vadd.f32 %v1556, %v1614
      %v1667 = vadd.f32 %v1557, %v1616
      %v1668 = vadd.f32 %v1558, %v1618
      %v1669 = vadd.f32 %v1559, %v1620
      %v1670 = vadd.f32 %v1560, %v1622
      %v1671 = vadd.f32 %v1561, %v1624
      %v1672 = vadd.f32 %v1562, %v1626
      %v1673 = vadd.f32 %v1563, %v1628
      %v1674 = vadd.f32 %v1564, %v1630
      %v1675 = vadd.f32 %v1565, %v1632
      %v1676 = vadd.f32 %v1566, %v1634
      %v1677 = vadd.f32 %v1567, %v1636
      %v1678 = vadd.f32 %v1568, %v1638
      %v1679 = vadd.f32 %v1569, %v1640
      %v1680 = vadd.f32 %v1570, %v1642
      %v1681 = vadd.f32 %v1571, %v1644
      %v1682 = vadd.f32 %v1572, %v1646
      %v1683 = vld [vmem:[#allocation2 + $0x25] sm:$0xff]
      %v1684 = vld [vmem:[#allocation2 + $0x2d] sm:$0xff]
      %v1685 = vld [vmem:[#allocation2 + $0x35] sm:$0xff]
      %v1686 = vld [vmem:[#allocation2 + $0x3d] sm:$0xff]
      %v1687 = vld [vmem:[#allocation2 + $0x45] sm:$0xff]
      %v1688 = vld [vmem:[#allocation2 + $0x4d] sm:$0xff]
      %v1689 = vld [vmem:[#allocation2 + $0x55] sm:$0xff]
      %v1690 = vld [vmem:[#allocation2 + $0x5d] sm:$0xff]
      %v1691 = vld [vmem:[#allocation2 + $0x65] sm:$0xff]
      %v1692 = vld [vmem:[#allocation2 + $0x6d] sm:$0xff]
      %v1693 = vld [vmem:[#allocation2 + $0x75] sm:$0xff]
      %v1694 = vld [vmem:[#allocation2 + $0x7d] sm:$0xff]
      %v1695 = vld [vmem:[#allocation2 + $0x85] sm:$0xff]
      %v1696 = vld [vmem:[#allocation2 + $0x8d] sm:$0xff]
      %v1697 = vld [vmem:[#allocation2 + $0x95] sm:$0xff]
      %v1698 = vld [vmem:[#allocation2 + $0x9d] sm:$0xff]
      %v1699 = vld [vmem:[#allocation2 + $0xa5] sm:$0xff]
      %v1700 = vld [vmem:[#allocation2 + $0xad] sm:$0xff]
      %v1701 = vld [vmem:[#allocation2 + $0xb5] sm:$0xff]
      %v1702 = vld [vmem:[#allocation2 + $0xbd] sm:$0xff]
      %v1703 = vld [vmem:[#allocation2 + $0xc5] sm:$0xff]
      %v1704 = vld [vmem:[#allocation2 + $0xcd] sm:$0xff]
      %v1705 = vld [vmem:[#allocation2 + $0xd5] sm:$0xff]
      %v1706 = vld [vmem:[#allocation2 + $0xdd] sm:$0xff]
      %v1707 = vld [vmem:[#allocation2 + $0xe5] sm:$0xff]
      %v1708 = vld [vmem:[#allocation2 + $0xed] sm:$0xff]
      %v1709 = vld [vmem:[#allocation2 + $0xf5] sm:$0xff]
      %v1710 = vld [vmem:[#allocation2 + $0xfd] sm:$0xff]
      %v1711 = vld [vmem:[#allocation2 + $0x105] sm:$0xff]
      %v1712 = vld [vmem:[#allocation2 + $0x10d] sm:$0xff]
      %v1713 = vld [vmem:[#allocation2 + $0x115] sm:$0xff]
      %v1714 = vld [vmem:[#allocation2 + $0x11d] sm:$0xff]
      %v1715 = vld [vmem:[#allocation2 + $0x125] sm:$0xff]
      %v1716 = vld [vmem:[#allocation2 + $0x12d] sm:$0xff]
      %v1717 = vld [vmem:[#allocation2 + $0x135] sm:$0xff]
      %v1718 = vld [vmem:[#allocation2 + $0x13d] sm:$0xff]
      %1719 = vrot.lane.b32.xlu0 %v1683, 28
      %v1720 = vpop.permute.xlu0 %1719
      %1721 = vrot.lane.b32.xlu0 %v1684, 28
      %v1722 = vpop.permute.xlu0 %1721
      %1723 = vrot.lane.b32.xlu0 %v1685, 28
      %v1724 = vpop.permute.xlu0 %1723
      %1725 = vrot.lane.b32.xlu0 %v1686, 28
      %v1726 = vpop.permute.xlu0 %1725
      %1727 = vrot.lane.b32.xlu0 %v1687, 28
      %v1728 = vpop.permute.xlu0 %1727
      %1729 = vrot.lane.b32.xlu0 %v1688, 28
      %v1730 = vpop.permute.xlu0 %1729
      %1731 = vrot.lane.b32.xlu0 %v1689, 28
      %v1732 = vpop.permute.xlu0 %1731
      %1733 = vrot.lane.b32.xlu0 %v1690, 28
      %v1734 = vpop.permute.xlu0 %1733
      %1735 = vrot.lane.b32.xlu0 %v1691, 28
      %v1736 = vpop.permute.xlu0 %1735
      %1737 = vrot.lane.b32.xlu0 %v1692, 28
      %v1738 = vpop.permute.xlu0 %1737
      %1739 = vrot.lane.b32.xlu0 %v1693, 28
      %v1740 = vpop.permute.xlu0 %1739
      %1741 = vrot.lane.b32.xlu0 %v1694, 28
      %v1742 = vpop.permute.xlu0 %1741
      %1743 = vrot.lane.b32.xlu0 %v1695, 28
      %v1744 = vpop.permute.xlu0 %1743
      %1745 = vrot.lane.b32.xlu0 %v1696, 28
      %v1746 = vpop.permute.xlu0 %1745
      %1747 = vrot.lane.b32.xlu0 %v1697, 28
      %v1748 = vpop.permute.xlu0 %1747
      %1749 = vrot.lane.b32.xlu0 %v1698, 28
      %v1750 = vpop.permute.xlu0 %1749
      %1751 = vrot.lane.b32.xlu0 %v1699, 28
      %v1752 = vpop.permute.xlu0 %1751
      %1753 = vrot.lane.b32.xlu0 %v1700, 28
      %v1754 = vpop.permute.xlu0 %1753
      %1755 = vrot.lane.b32.xlu0 %v1701, 28
      %v1756 = vpop.permute.xlu0 %1755
      %1757 = vrot.lane.b32.xlu0 %v1702, 28
      %v1758 = vpop.permute.xlu0 %1757
      %1759 = vrot.lane.b32.xlu0 %v1703, 28
      %v1760 = vpop.permute.xlu0 %1759
      %1761 = vrot.lane.b32.xlu0 %v1704, 28
      %v1762 = vpop.permute.xlu0 %1761
      %1763 = vrot.lane.b32.xlu0 %v1705, 28
      %v1764 = vpop.permute.xlu0 %1763
      %1765 = vrot.lane.b32.xlu0 %v1706, 28
      %v1766 = vpop.permute.xlu0 %1765
      %1767 = vrot.lane.b32.xlu0 %v1707, 28
      %v1768 = vpop.permute.xlu0 %1767
      %1769 = vrot.lane.b32.xlu0 %v1708, 28
      %v1770 = vpop.permute.xlu0 %1769
      %1771 = vrot.lane.b32.xlu0 %v1709, 28
      %v1772 = vpop.permute.xlu0 %1771
      %1773 = vrot.lane.b32.xlu0 %v1710, 28
      %v1774 = vpop.permute.xlu0 %1773
      %1775 = vrot.lane.b32.xlu0 %v1711, 28
      %v1776 = vpop.permute.xlu0 %1775
      %1777 = vrot.lane.b32.xlu0 %v1712, 28
      %v1778 = vpop.permute.xlu0 %1777
      %1779 = vrot.lane.b32.xlu0 %v1713, 28
      %v1780 = vpop.permute.xlu0 %1779
      %1781 = vrot.lane.b32.xlu0 %v1714, 28
      %v1782 = vpop.permute.xlu0 %1781
      %1783 = vrot.lane.b32.xlu0 %v1715, 28
      %v1784 = vpop.permute.xlu0 %1783
      %1785 = vrot.lane.b32.xlu0 %v1716, 28
      %v1786 = vpop.permute.xlu0 %1785
      %1787 = vrot.lane.b32.xlu0 %v1717, 28
      %v1788 = vpop.permute.xlu0 %1787
      %1789 = vrot.lane.b32.xlu0 %v1718, 28
      %v1790 = vpop.permute.xlu0 %1789
      %v1791 = vadd.f32 %v1647, %v1720
      %v1792 = vadd.f32 %v1648, %v1722
      %v1793 = vadd.f32 %v1649, %v1724
      %v1794 = vadd.f32 %v1650, %v1726
      %v1795 = vadd.f32 %v1651, %v1728
      %v1796 = vadd.f32 %v1652, %v1730
      %v1797 = vadd.f32 %v1653, %v1732
      %v1798 = vadd.f32 %v1654, %v1734
      %v1799 = vadd.f32 %v1655, %v1736
      %v1800 = vadd.f32 %v1656, %v1738
      %v1801 = vadd.f32 %v1657, %v1740
      %v1802 = vadd.f32 %v1658, %v1742
      %v1803 = vadd.f32 %v1659, %v1744
      %v1804 = vadd.f32 %v1660, %v1746
      %v1805 = vadd.f32 %v1661, %v1748
      %v1806 = vadd.f32 %v1662, %v1750
      %v1807 = vadd.f32 %v1663, %v1752
      %v1808 = vadd.f32 %v1664, %v1754
      %v1809 = vadd.f32 %v1665, %v1756
      %v1810 = vadd.f32 %v1666, %v1758
      %v1811 = vadd.f32 %v1667, %v1760
      %v1812 = vadd.f32 %v1668, %v1762
      %v1813 = vadd.f32 %v1669, %v1764
      %v1814 = vadd.f32 %v1670, %v1766
      %v1815 = vadd.f32 %v1671, %v1768
      %v1816 = vadd.f32 %v1672, %v1770
      %v1817 = vadd.f32 %v1673, %v1772
      %v1818 = vadd.f32 %v1674, %v1774
      %v1819 = vadd.f32 %v1675, %v1776
      %v1820 = vadd.f32 %v1676, %v1778
      %v1821 = vadd.f32 %v1677, %v1780
      %v1822 = vadd.f32 %v1678, %v1782
      %v1823 = vadd.f32 %v1679, %v1784
      %v1824 = vadd.f32 %v1680, %v1786
      %v1825 = vadd.f32 %v1681, %v1788
      %v1826 = vadd.f32 %v1682, %v1790
      %v1827 = vld [vmem:[#allocation2 + $0x26] sm:$0xff]
      %v1828 = vld [vmem:[#allocation2 + $0x2e] sm:$0xff]
      %v1829 = vld [vmem:[#allocation2 + $0x36] sm:$0xff]
      %v1830 = vld [vmem:[#allocation2 + $0x3e] sm:$0xff]
      %v1831 = vld [vmem:[#allocation2 + $0x46] sm:$0xff]
      %v1832 = vld [vmem:[#allocation2 + $0x4e] sm:$0xff]
      %v1833 = vld [vmem:[#allocation2 + $0x56] sm:$0xff]
      %v1834 = vld [vmem:[#allocation2 + $0x5e] sm:$0xff]
      %v1835 = vld [vmem:[#allocation2 + $0x66] sm:$0xff]
      %v1836 = vld [vmem:[#allocation2 + $0x6e] sm:$0xff]
      %v1837 = vld [vmem:[#allocation2 + $0x76] sm:$0xff]
      %v1838 = vld [vmem:[#allocation2 + $0x7e] sm:$0xff]
      %v1839 = vld [vmem:[#allocation2 + $0x86] sm:$0xff]
      %v1840 = vld [vmem:[#allocation2 + $0x8e] sm:$0xff]
      %v1841 = vld [vmem:[#allocation2 + $0x96] sm:$0xff]
      %v1842 = vld [vmem:[#allocation2 + $0x9e] sm:$0xff]
      %v1843 = vld [vmem:[#allocation2 + $0xa6] sm:$0xff]
      %v1844 = vld [vmem:[#allocation2 + $0xae] sm:$0xff]
      %v1845 = vld [vmem:[#allocation2 + $0xb6] sm:$0xff]
      %v1846 = vld [vmem:[#allocation2 + $0xbe] sm:$0xff]
      %v1847 = vld [vmem:[#allocation2 + $0xc6] sm:$0xff]
      %v1848 = vld [vmem:[#allocation2 + $0xce] sm:$0xff]
      %v1849 = vld [vmem:[#allocation2 + $0xd6] sm:$0xff]
      %v1850 = vld [vmem:[#allocation2 + $0xde] sm:$0xff]
      %v1851 = vld [vmem:[#allocation2 + $0xe6] sm:$0xff]
      %v1852 = vld [vmem:[#allocation2 + $0xee] sm:$0xff]
      %v1853 = vld [vmem:[#allocation2 + $0xf6] sm:$0xff]
      %v1854 = vld [vmem:[#allocation2 + $0xfe] sm:$0xff]
      %v1855 = vld [vmem:[#allocation2 + $0x106] sm:$0xff]
      %v1856 = vld [vmem:[#allocation2 + $0x10e] sm:$0xff]
      %v1857 = vld [vmem:[#allocation2 + $0x116] sm:$0xff]
      %v1858 = vld [vmem:[#allocation2 + $0x11e] sm:$0xff]
      %v1859 = vld [vmem:[#allocation2 + $0x126] sm:$0xff]
      %v1860 = vld [vmem:[#allocation2 + $0x12e] sm:$0xff]
      %v1861 = vld [vmem:[#allocation2 + $0x136] sm:$0xff]
      %v1862 = vld [vmem:[#allocation2 + $0x13e] sm:$0xff]
      %1863 = vrot.lane.b32.xlu0 %v1827, 32
      %v1864 = vpop.permute.xlu0 %1863
      %1865 = vrot.lane.b32.xlu0 %v1828, 32
      %v1866 = vpop.permute.xlu0 %1865
      %1867 = vrot.lane.b32.xlu0 %v1829, 32
      %v1868 = vpop.permute.xlu0 %1867
      %1869 = vrot.lane.b32.xlu0 %v1830, 32
      %v1870 = vpop.permute.xlu0 %1869
      %1871 = vrot.lane.b32.xlu0 %v1831, 32
      %v1872 = vpop.permute.xlu0 %1871
      %1873 = vrot.lane.b32.xlu0 %v1832, 32
      %v1874 = vpop.permute.xlu0 %1873
      %1875 = vrot.lane.b32.xlu0 %v1833, 32
      %v1876 = vpop.permute.xlu0 %1875
      %1877 = vrot.lane.b32.xlu0 %v1834, 32
      %v1878 = vpop.permute.xlu0 %1877
      %1879 = vrot.lane.b32.xlu0 %v1835, 32
      %v1880 = vpop.permute.xlu0 %1879
      %1881 = vrot.lane.b32.xlu0 %v1836, 32
      %v1882 = vpop.permute.xlu0 %1881
      %1883 = vrot.lane.b32.xlu0 %v1837, 32
      %v1884 = vpop.permute.xlu0 %1883
      %1885 = vrot.lane.b32.xlu0 %v1838, 32
      %v1886 = vpop.permute.xlu0 %1885
      %1887 = vrot.lane.b32.xlu0 %v1839, 32
      %v1888 = vpop.permute.xlu0 %1887
      %1889 = vrot.lane.b32.xlu0 %v1840, 32
      %v1890 = vpop.permute.xlu0 %1889
      %1891 = vrot.lane.b32.xlu0 %v1841, 32
      %v1892 = vpop.permute.xlu0 %1891
      %1893 = vrot.lane.b32.xlu0 %v1842, 32
      %v1894 = vpop.permute.xlu0 %1893
      %1895 = vrot.lane.b32.xlu0 %v1843, 32
      %v1896 = vpop.permute.xlu0 %1895
      %1897 = vrot.lane.b32.xlu0 %v1844, 32
      %v1898 = vpop.permute.xlu0 %1897
      %1899 = vrot.lane.b32.xlu0 %v1845, 32
      %v1900 = vpop.permute.xlu0 %1899
      %1901 = vrot.lane.b32.xlu0 %v1846, 32
      %v1902 = vpop.permute.xlu0 %1901
      %1903 = vrot.lane.b32.xlu0 %v1847, 32
      %v1904 = vpop.permute.xlu0 %1903
      %1905 = vrot.lane.b32.xlu0 %v1848, 32
      %v1906 = vpop.permute.xlu0 %1905
      %1907 = vrot.lane.b32.xlu0 %v1849, 32
      %v1908 = vpop.permute.xlu0 %1907
      %1909 = vrot.lane.b32.xlu0 %v1850, 32
      %v1910 = vpop.permute.xlu0 %1909
      %1911 = vrot.lane.b32.xlu0 %v1851, 32
      %v1912 = vpop.permute.xlu0 %1911
      %1913 = vrot.lane.b32.xlu0 %v1852, 32
      %v1914 = vpop.permute.xlu0 %1913
      %1915 = vrot.lane.b32.xlu0 %v1853, 32
      %v1916 = vpop.permute.xlu0 %1915
      %1917 = vrot.lane.b32.xlu0 %v1854, 32
      %v1918 = vpop.permute.xlu0 %1917
      %1919 = vrot.lane.b32.xlu0 %v1855, 32
      %v1920 = vpop.permute.xlu0 %1919
      %1921 = vrot.lane.b32.xlu0 %v1856, 32
      %v1922 = vpop.permute.xlu0 %1921
      %1923 = vrot.lane.b32.xlu0 %v1857, 32
      %v1924 = vpop.permute.xlu0 %1923
      %1925 = vrot.lane.b32.xlu0 %v1858, 32
      %v1926 = vpop.permute.xlu0 %1925
      %1927 = vrot.lane.b32.xlu0 %v1859, 32
      %v1928 = vpop.permute.xlu0 %1927
      %1929 = vrot.lane.b32.xlu0 %v1860, 32
      %v1930 = vpop.permute.xlu0 %1929
      %1931 = vrot.lane.b32.xlu0 %v1861, 32
      %v1932 = vpop.permute.xlu0 %1931
      %1933 = vrot.lane.b32.xlu0 %v1862, 32
      %v1934 = vpop.permute.xlu0 %1933
      %v1935 = vadd.f32 %v1791, %v1864
      %v1936 = vadd.f32 %v1792, %v1866
      %v1937 = vadd.f32 %v1793, %v1868
      %v1938 = vadd.f32 %v1794, %v1870
      %v1939 = vadd.f32 %v1795, %v1872
      %v1940 = vadd.f32 %v1796, %v1874
      %v1941 = vadd.f32 %v1797, %v1876
      %v1942 = vadd.f32 %v1798, %v1878
      %v1943 = vadd.f32 %v1799, %v1880
      %v1944 = vadd.f32 %v1800, %v1882
      %v1945 = vadd.f32 %v1801, %v1884
      %v1946 = vadd.f32 %v1802, %v1886
      %v1947 = vadd.f32 %v1803, %v1888
      %v1948 = vadd.f32 %v1804, %v1890
      %v1949 = vadd.f32 %v1805, %v1892
      %v1950 = vadd.f32 %v1806, %v1894
      %v1951 = vadd.f32 %v1807, %v1896
      %v1952 = vadd.f32 %v1808, %v1898
      %v1953 = vadd.f32 %v1809, %v1900
      %v1954 = vadd.f32 %v1810, %v1902
      %v1955 = vadd.f32 %v1811, %v1904
      %v1956 = vadd.f32 %v1812, %v1906
      %v1957 = vadd.f32 %v1813, %v1908
      %v1958 = vadd.f32 %v1814, %v1910
      %v1959 = vadd.f32 %v1815, %v1912
      %v1960 = vadd.f32 %v1816, %v1914
      %v1961 = vadd.f32 %v1817, %v1916
      %v1962 = vadd.f32 %v1818, %v1918
      %v1963 = vadd.f32 %v1819, %v1920
      %v1964 = vadd.f32 %v1820, %v1922
      %v1965 = vadd.f32 %v1821, %v1924
      %v1966 = vadd.f32 %v1822, %v1926
      %v1967 = vadd.f32 %v1823, %v1928
      %v1968 = vadd.f32 %v1824, %v1930
      %v1969 = vadd.f32 %v1825, %v1932
      %v1970 = vadd.f32 %v1826, %v1934
      %v1971 = vpack.c.bf16 %v1936, %v1935
      %v1972 = vpack.c.bf16 %v1938, %v1937
      %v1973 = vpack.c.bf16 %v1940, %v1939
      %v1974 = vpack.c.bf16 %v1942, %v1941
      %v1975 = vpack.c.bf16 %v1944, %v1943
      %v1976 = vpack.c.bf16 %v1946, %v1945
      %v1977 = vpack.c.bf16 %v1948, %v1947
      %v1978 = vpack.c.bf16 %v1950, %v1949
      %v1979 = vpack.c.bf16 %v1952, %v1951
      %v1980 = vpack.c.bf16 %v1954, %v1953
      %v1981 = vpack.c.bf16 %v1956, %v1955
      %v1982 = vpack.c.bf16 %v1958, %v1957
      %v1983 = vpack.c.bf16 %v1960, %v1959
      %v1984 = vpack.c.bf16 %v1962, %v1961
      %v1985 = vpack.c.bf16 %v1964, %v1963
      %v1986 = vpack.c.bf16 %v1966, %v1965
      %v1987 = vpack.c.bf16 %v1968, %v1967
      %v1988 = vpack.c.bf16 %v1970, %v1969
      %v1989 = vld [vmem:[%s2] sm:$0xf]
      %v1990 = vld [vmem:[%s2 + $0x4] sm:$0xf]
      %v1991 = vld [vmem:[%s2 + $0x8] sm:$0xf]
      %v1992 = vld [vmem:[%s2 + $0xc] sm:$0xf]
      %v1993 = vld [vmem:[%s2 + $0x10] sm:$0xf]
      %v1994 = vld [vmem:[%s2 + $0x14] sm:$0xf]
      %v1995 = vld [vmem:[%s2 + $0x18] sm:$0xf]
      %v1996 = vld [vmem:[%s2 + $0x1c] sm:$0xf]
      %v1997 = vld [vmem:[%s2 + $0x20] sm:$0xf]
      %v1998 = vld [vmem:[%s2 + $0x24] sm:$0xf]
      %v1999 = vld [vmem:[%s2 + $0x28] sm:$0xf]
      %v2000 = vld [vmem:[%s2 + $0x2c] sm:$0xf]
      %v2001 = vld [vmem:[%s2 + $0x30] sm:$0xf]
      %v2002 = vld [vmem:[%s2 + $0x34] sm:$0xf]
      %v2003 = vld [vmem:[%s2 + $0x38] sm:$0xf]
      %v2004 = vld [vmem:[%s2 + $0x3c] sm:$0xf]
      %v2005 = vld [vmem:[%s5] sm:$0x1]
      %v2006 = vlaneseq
      %v2007 = vshrl.u32 %v2006, 7
      %v2008 = vsub.s32 0, %v2007
      %v2009 = vrot.slane %v2005, %v2008
      %v2026 = vunpack.c.l.b16 %v1989
      %v2027 = vunpack.c.l.b16 %v1990
      %v2028 = vunpack.c.l.b16 %v1991
      %v2029 = vunpack.c.l.b16 %v1992
      %v2030 = vunpack.c.l.b16 %v1993
      %v2031 = vunpack.c.l.b16 %v1994
      %v2032 = vunpack.c.l.b16 %v1995
      %v2033 = vunpack.c.l.b16 %v1996
      %v2034 = vunpack.c.l.b16 %v1997
      %v2035 = vunpack.c.l.b16 %v1998
      %v2036 = vunpack.c.l.b16 %v1999
      %v2037 = vunpack.c.l.b16 %v2000
      %v2038 = vunpack.c.l.b16 %v2001
      %v2039 = vunpack.c.l.b16 %v2002
      %v2040 = vunpack.c.l.b16 %v2003
      %v2041 = vunpack.c.l.b16 %v2004
      %v2042 = vpack.c.b16 %v2027, %v2026
      %v2043 = vpack.c.b16 %v2029, %v2028
      %v2044 = vpack.c.b16 %v2031, %v2030
      %v2045 = vpack.c.b16 %v2033, %v2032
      %v2046 = vpack.c.b16 %v2035, %v2034
      %v2047 = vpack.c.b16 %v2037, %v2036
      %v2048 = vpack.c.b16 %v2039, %v2038
      %v2049 = vpack.c.b16 %v2041, %v2040
      %2058 = vmatprep.subr.bf16.mxu0 0
      %2059 = vmatpush1.bf16.msra.mxu0 %v2042
      %2060 = vmatprep.subr.bf16.mxu0 0
      %2061 = vmatpush1.bf16.msra.mxu0 %v2043
      %2062 = vmatprep.subr.bf16.mxu0 0
      %2063 = vmatpush1.bf16.msra.mxu0 %v2044
      %2064 = vmatprep.subr.bf16.mxu0 0
      %2065 = vmatpush1.bf16.msra.mxu0 %v2045
      %2066 = vmatprep.subr.bf16.mxu0 0
      %2067 = vmatpush1.bf16.msra.mxu0 %v2046
      %2068 = vmatprep.subr.bf16.mxu0 0
      %2069 = vmatpush1.bf16.msra.mxu0 %v2047
      %2070 = vmatprep.subr.bf16.mxu0 0
      %2071 = vmatpush1.bf16.msra.mxu0 %v2048
      %2072 = vmatprep.subr.bf16.mxu0 0
      %2073 = vmatpush1.bf16.msra.mxu0 %v2049
      %2074 = vmatprep.subr.bf16.mxu0 0
      %2075 = vmatpush1.bf16.msra.mxu0 0
      %2076 = vmatprep.subr.bf16.mxu0 0
      %2077 = vmatpush1.bf16.msra.mxu0 0
      %2078 = vmatprep.subr.bf16.mxu0 0
      %2079 = vmatpush1.bf16.msra.mxu0 0
      %2080 = vmatprep.subr.bf16.mxu0 0
      %2081 = vmatpush1.bf16.msra.mxu0 0
      %2082 = vmatprep.subr.bf16.mxu0 0
      %2083 = vmatpush1.bf16.msra.mxu0 0
      %2084 = vmatprep.subr.bf16.mxu0 0
      %2085 = vmatpush1.bf16.msra.mxu0 0
      %2086 = vmatprep.subr.bf16.mxu0 0
      %2087 = vmatpush1.bf16.msra.mxu0 0
      %2088 = vmatprep.subr.bf16.mxu0 0
      %2089 = vmatpush1.bf16.msra.mxu0 0
      %2090 = vmatprep.mubr.bf16.mxu0 0
      %2091 = vmatmul.mubr.bf16.gmra.mrb[0].mxu0 %v1971
      %v2092 = vpop.f32.mrb[0].mxu0
      %v2093 = vadd.f32 %v2009, %v2092
      %v2094 = vpop.f32.mrb[0].mxu0
      %v2095 = vpop.f32.mrb[0].mxu0
      %v2096 = vadd.f32 %v2009, %v2095
      %v2097 = vpop.f32.mrb[0].mxu0
      %2098 = vmatprep.mubr.bf16.mxu0 0
      %2099 = vmatmul.mubr.bf16.gmra.mrb[0].mxu0 %v1972
      %v2100 = vpop.f32.mrb[0].mxu0
      %v2101 = vadd.f32 %v2009, %v2100
      %v2102 = vpop.f32.mrb[0].mxu0
      %v2103 = vpop.f32.mrb[0].mxu0
      %v2104 = vadd.f32 %v2009, %v2103
      %v2105 = vpop.f32.mrb[0].mxu0
      %2106 = vmatprep.mubr.bf16.mxu0 0
      %2107 = vmatmul.mubr.bf16.gmra.mrb[0].mxu0 %v1973
      %v2108 = vpop.f32.mrb[0].mxu0
      %v2109 = vadd.f32 %v2009, %v2108
      %v2110 = vpop.f32.mrb[0].mxu0
      %v2111 = vpop.f32.mrb[0].mxu0
      %v2112 = vadd.f32 %v2009, %v2111
      %v2113 = vpop.f32.mrb[0].mxu0
      %2114 = vmatprep.mubr.bf16.mxu0 0
      %2115 = vmatmul.mubr.bf16.gmra.mrb[0].mxu0 %v1974
      %v2116 = vpop.f32.mrb[0].mxu0
      %v2117 = vadd.f32 %v2009, %v2116
      %v2118 = vpop.f32.mrb[0].mxu0
      %v2119 = vpop.f32.mrb[0].mxu0
      %v2120 = vadd.f32 %v2009, %v2119
      %v2121 = vpop.f32.mrb[0].mxu0
      %2122 = vmatprep.mubr.bf16.mxu0 0
      %2123 = vmatmul.mubr.bf16.gmra.mrb[0].mxu0 %v1975
      %v2124 = vpop.f32.mrb[0].mxu0
      %v2125 = vadd.f32 %v2009, %v2124
      %v2126 = vpop.f32.mrb[0].mxu0
      %v2127 = vpop.f32.mrb[0].mxu0
      %v2128 = vadd.f32 %v2009, %v2127
      %v2129 = vpop.f32.mrb[0].mxu0
      %2130 = vmatprep.mubr.bf16.mxu0 0
      %2131 = vmatmul.mubr.bf16.gmra.mrb[0].mxu0 %v1976
      %v2132 = vpop.f32.mrb[0].mxu0
      %v2133 = vadd.f32 %v2009, %v2132
      %v2134 = vpop.f32.mrb[0].mxu0
      %v2135 = vpop.f32.mrb[0].mxu0
      %v2136 = vadd.f32 %v2009, %v2135
      %v2137 = vpop.f32.mrb[0].mxu0
      %2138 = vmatprep.mubr.bf16.mxu0 0
      %2139 = vmatmul.mubr.bf16.gmra.mrb[0].mxu0 %v1977
      %v2140 = vpop.f32.mrb[0].mxu0
      %v2141 = vadd.f32 %v2009, %v2140
      %v2142 = vpop.f32.mrb[0].mxu0
      %v2143 = vpop.f32.mrb[0].mxu0
      %v2144 = vadd.f32 %v2009, %v2143
      %v2145 = vpop.f32.mrb[0].mxu0
      %2146 = vmatprep.mubr.bf16.mxu0 0
      %2147 = vmatmul.mubr.bf16.gmra.mrb[0].mxu0 %v1978
      %v2148 = vpop.f32.mrb[0].mxu0
      %v2149 = vadd.f32 %v2009, %v2148
      %v2150 = vpop.f32.mrb[0].mxu0
      %v2151 = vpop.f32.mrb[0].mxu0
      %v2152 = vadd.f32 %v2009, %v2151
      %v2153 = vpop.f32.mrb[0].mxu0
      %2154 = vmatprep.mubr.bf16.mxu0 0
      %2155 = vmatmul.mubr.bf16.gmra.mrb[0].mxu0 %v1979
      %v2156 = vpop.f32.mrb[0].mxu0
      %v2157 = vadd.f32 %v2009, %v2156
      %v2158 = vpop.f32.mrb[0].mxu0
      %v2159 = vpop.f32.mrb[0].mxu0
      %v2160 = vadd.f32 %v2009, %v2159
      %v2161 = vpop.f32.mrb[0].mxu0
      %2162 = vmatprep.mubr.bf16.mxu0 0
      %2163 = vmatmul.mubr.bf16.gmra.mrb[0].mxu0 %v1980
      %v2164 = vpop.f32.mrb[0].mxu0
      %v2165 = vadd.f32 %v2009, %v2164
      %v2166 = vpop.f32.mrb[0].mxu0
      %v2167 = vpop.f32.mrb[0].mxu0
      %v2168 = vadd.f32 %v2009, %v2167
      %v2169 = vpop.f32.mrb[0].mxu0
      %2170 = vmatprep.mubr.bf16.mxu0 0
      %2171 = vmatmul.mubr.bf16.gmra.mrb[0].mxu0 %v1981
      %v2172 = vpop.f32.mrb[0].mxu0
      %v2173 = vadd.f32 %v2009, %v2172
      %v2174 = vpop.f32.mrb[0].mxu0
      %v2175 = vpop.f32.mrb[0].mxu0
      %v2176 = vadd.f32 %v2009, %v2175
      %v2177 = vpop.f32.mrb[0].mxu0
      %2178 = vmatprep.mubr.bf16.mxu0 0
      %2179 = vmatmul.mubr.bf16.gmra.mrb[0].mxu0 %v1982
      %v2180 = vpop.f32.mrb[0].mxu0
      %v2181 = vadd.f32 %v2009, %v2180
      %v2182 = vpop.f32.mrb[0].mxu0
      %v2183 = vpop.f32.mrb[0].mxu0
      %v2184 = vadd.f32 %v2009, %v2183
      %v2185 = vpop.f32.mrb[0].mxu0
      %2186 = vmatprep.mubr.bf16.mxu0 0
      %2187 = vmatmul.mubr.bf16.gmra.mrb[0].mxu0 %v1983
      %v2188 = vpop.f32.mrb[0].mxu0
      %v2189 = vadd.f32 %v2009, %v2188
      %v2190 = vpop.f32.mrb[0].mxu0
      %v2191 = vpop.f32.mrb[0].mxu0
      %v2192 = vadd.f32 %v2009, %v2191
      %v2193 = vpop.f32.mrb[0].mxu0
      %2194 = vmatprep.mubr.bf16.mxu0 0
      %2195 = vmatmul.mubr.bf16.gmra.mrb[0].mxu0 %v1984
      %v2196 = vpop.f32.mrb[0].mxu0
      %v2197 = vadd.f32 %v2009, %v2196
      %v2198 = vpop.f32.mrb[0].mxu0
      %v2199 = vpop.f32.mrb[0].mxu0
      %v2200 = vadd.f32 %v2009, %v2199
      %v2201 = vpop.f32.mrb[0].mxu0
      %2202 = vmatprep.mubr.bf16.mxu0 0
      %2203 = vmatmul.mubr.bf16.gmra.mrb[0].mxu0 %v1985
      %v2204 = vpop.f32.mrb[0].mxu0
      %v2205 = vadd.f32 %v2009, %v2204
      %v2206 = vpop.f32.mrb[0].mxu0
      %v2207 = vpop.f32.mrb[0].mxu0
      %v2208 = vadd.f32 %v2009, %v2207
      %v2209 = vpop.f32.mrb[0].mxu0
      %2210 = vmatprep.mubr.bf16.mxu0 0
      %2211 = vmatmul.mubr.bf16.gmra.mrb[0].mxu0 %v1986
      %v2212 = vpop.f32.mrb[0].mxu0
      %v2213 = vadd.f32 %v2009, %v2212
      %v2214 = vpop.f32.mrb[0].mxu0
      %v2215 = vpop.f32.mrb[0].mxu0
      %v2216 = vadd.f32 %v2009, %v2215
      %v2217 = vpop.f32.mrb[0].mxu0
      %2218 = vmatprep.mubr.bf16.mxu0 0
      %2219 = vmatmul.mubr.bf16.gmra.mrb[0].mxu0 %v1987
      %v2220 = vpop.f32.mrb[0].mxu0
      %v2221 = vadd.f32 %v2009, %v2220
      %v2222 = vpop.f32.mrb[0].mxu0
      %v2223 = vpop.f32.mrb[0].mxu0
      %v2224 = vadd.f32 %v2009, %v2223
      %v2225 = vpop.f32.mrb[0].mxu0
      %2226 = vmatprep.mubr.bf16.mxu0 0
      %2227 = vmatmul.mubr.bf16.gmra.mrb[0].mxu0 %v1988
      %v2228 = vpop.f32.mrb[0].mxu0
      %v2229 = vadd.f32 %v2009, %v2228
      %v2230 = vpop.f32.mrb[0].mxu0
      %v2231 = vpop.f32.mrb[0].mxu0
      %v2232 = vadd.f32 %v2009, %v2231
      %v2233 = vpop.f32.mrb[0].mxu0
      %2234 = vdwg.mxu0
      %2236 = vset.pattern.permute.xlu0 0
      %2237 = vperm.xlu0 %2236, %v815
      %v2238 = vpop.permute.xlu0 %2237
      %2241 = vset.pattern.permute.xlu0 0
      %2242 = vperm.xlu0 %2241, %v816
      %v2243 = vpop.permute.xlu0 %2242
      %2246 = vset.pattern.permute.xlu0 0
      %2247 = vperm.xlu0 %2246, %v817
      %v2248 = vpop.permute.xlu0 %2247
      %2251 = vset.pattern.permute.xlu0 0
      %2252 = vperm.xlu0 %2251, %v818
      %v2253 = vpop.permute.xlu0 %2252
      %2256 = vset.pattern.permute.xlu0 0
      %2257 = vperm.xlu0 %2256, %v819
      %v2258 = vpop.permute.xlu0 %2257
      %2261 = vset.pattern.permute.xlu0 0
      %2262 = vperm.xlu0 %2261, %v820
      %v2263 = vpop.permute.xlu0 %2262
      %2266 = vset.pattern.permute.xlu0 0
      %2267 = vperm.xlu0 %2266, %v821
      %v2268 = vpop.permute.xlu0 %2267
      %2271 = vset.pattern.permute.xlu0 0
      %2272 = vperm.xlu0 %2271, %v822
      %v2273 = vpop.permute.xlu0 %2272
      %2276 = vset.pattern.permute.xlu0 0
      %2277 = vperm.xlu0 %2276, %v823
      %v2278 = vpop.permute.xlu0 %2277
      %2281 = vset.pattern.permute.xlu0 0
      %2282 = vperm.xlu0 %2281, %v824
      %v2283 = vpop.permute.xlu0 %2282
      %2286 = vset.pattern.permute.xlu0 0
      %2287 = vperm.xlu0 %2286, %v825
      %v2288 = vpop.permute.xlu0 %2287
      %2291 = vset.pattern.permute.xlu0 0
      %2292 = vperm.xlu0 %2291, %v826
      %v2293 = vpop.permute.xlu0 %2292
      %2296 = vset.pattern.permute.xlu0 0
      %2297 = vperm.xlu0 %2296, %v827
      %v2298 = vpop.permute.xlu0 %2297
      %2301 = vset.pattern.permute.xlu0 0
      %2302 = vperm.xlu0 %2301, %v828
      %v2303 = vpop.permute.xlu0 %2302
      %2306 = vset.pattern.permute.xlu0 0
      %2307 = vperm.xlu0 %2306, %v829
      %v2308 = vpop.permute.xlu0 %2307
      %2311 = vset.pattern.permute.xlu0 0
      %2312 = vperm.xlu0 %2311, %v830
      %v2313 = vpop.permute.xlu0 %2312
      %2316 = vset.pattern.permute.xlu0 0
      %2317 = vperm.xlu0 %2316, %v831
      %v2318 = vpop.permute.xlu0 %2317
      %2321 = vset.pattern.permute.xlu0 0
      %2322 = vperm.xlu0 %2321, %v832
      %v2323 = vpop.permute.xlu0 %2322
      %2326 = vset.pattern.permute.xlu0 0
      %2327 = vperm.xlu0 %2326, %v833
      %v2328 = vpop.permute.xlu0 %2327
      %2331 = vset.pattern.permute.xlu0 0
      %2332 = vperm.xlu0 %2331, %v834
      %v2333 = vpop.permute.xlu0 %2332
      %2336 = vset.pattern.permute.xlu0 0
      %2337 = vperm.xlu0 %2336, %v835
      %v2338 = vpop.permute.xlu0 %2337
      %2341 = vset.pattern.permute.xlu0 0
      %2342 = vperm.xlu0 %2341, %v836
      %v2343 = vpop.permute.xlu0 %2342
      %2346 = vset.pattern.permute.xlu0 0
      %2347 = vperm.xlu0 %2346, %v837
      %v2348 = vpop.permute.xlu0 %2347
      %2351 = vset.pattern.permute.xlu0 0
      %2352 = vperm.xlu0 %2351, %v838
      %v2353 = vpop.permute.xlu0 %2352
      %2356 = vset.pattern.permute.xlu0 0
      %2357 = vperm.xlu0 %2356, %v839
      %v2358 = vpop.permute.xlu0 %2357
      %2361 = vset.pattern.permute.xlu0 0
      %2362 = vperm.xlu0 %2361, %v840
      %v2363 = vpop.permute.xlu0 %2362
      %2366 = vset.pattern.permute.xlu0 0
      %2367 = vperm.xlu0 %2366, %v841
      %v2368 = vpop.permute.xlu0 %2367
      %2371 = vset.pattern.permute.xlu0 0
      %2372 = vperm.xlu0 %2371, %v842
      %v2373 = vpop.permute.xlu0 %2372
      %2376 = vset.pattern.permute.xlu0 0
      %2377 = vperm.xlu0 %2376, %v843
      %v2378 = vpop.permute.xlu0 %2377
      %2381 = vset.pattern.permute.xlu0 0
      %2382 = vperm.xlu0 %2381, %v844
      %v2383 = vpop.permute.xlu0 %2382
      %2386 = vset.pattern.permute.xlu0 0
      %2387 = vperm.xlu0 %2386, %v845
      %v2388 = vpop.permute.xlu0 %2387
      %2391 = vset.pattern.permute.xlu0 0
      %2392 = vperm.xlu0 %2391, %v846
      %v2393 = vpop.permute.xlu0 %2392
      %2396 = vset.pattern.permute.xlu0 0
      %2397 = vperm.xlu0 %2396, %v847
      %v2398 = vpop.permute.xlu0 %2397
      %2401 = vset.pattern.permute.xlu0 0
      %2402 = vperm.xlu0 %2401, %v848
      %v2403 = vpop.permute.xlu0 %2402
      %2406 = vset.pattern.permute.xlu0 0
      %2407 = vperm.xlu0 %2406, %v849
      %v2408 = vpop.permute.xlu0 %2407
      %2411 = vset.pattern.permute.xlu0 0
      %2412 = vperm.xlu0 %2411, %v850
      %v2413 = vpop.permute.xlu0 %2412
      %v2415 = vmul.f32 %v2093, %v2238
      %v2416 = vmul.f32 %v2096, %v2243
      %v2417 = vmul.f32 %v2101, %v2248
      %v2418 = vmul.f32 %v2104, %v2253
      %v2419 = vmul.f32 %v2109, %v2258
      %v2420 = vmul.f32 %v2112, %v2263
      %v2421 = vmul.f32 %v2117, %v2268
      %v2422 = vmul.f32 %v2120, %v2273
      %v2423 = vmul.f32 %v2125, %v2278
      %v2424 = vmul.f32 %v2128, %v2283
      %v2425 = vmul.f32 %v2133, %v2288
      %v2426 = vmul.f32 %v2136, %v2293
      %v2427 = vmul.f32 %v2141, %v2298
      %v2428 = vmul.f32 %v2144, %v2303
      %v2429 = vmul.f32 %v2149, %v2308
      %v2430 = vmul.f32 %v2152, %v2313
      %v2431 = vmul.f32 %v2157, %v2318
      %v2432 = vmul.f32 %v2160, %v2323
      %v2433 = vmul.f32 %v2165, %v2328
      %v2434 = vmul.f32 %v2168, %v2333
      %v2435 = vmul.f32 %v2173, %v2338
      %v2436 = vmul.f32 %v2176, %v2343
      %v2437 = vmul.f32 %v2181, %v2348
      %v2438 = vmul.f32 %v2184, %v2353
      %v2439 = vmul.f32 %v2189, %v2358
      %v2440 = vmul.f32 %v2192, %v2363
      %v2441 = vmul.f32 %v2197, %v2368
      %v2442 = vmul.f32 %v2200, %v2373
      %v2443 = vmul.f32 %v2205, %v2378
      %v2444 = vmul.f32 %v2208, %v2383
      %v2445 = vmul.f32 %v2213, %v2388
      %v2446 = vmul.f32 %v2216, %v2393
      %v2447 = vmul.f32 %v2221, %v2398
      %v2448 = vmul.f32 %v2224, %v2403
      %v2449 = vmul.f32 %v2229, %v2408
      %v2450 = vmul.f32 %v2232, %v2413
      %v2451 = vadd.f32 %v2415, %v2416
      %v2452 = vadd.f32 %v2451, %v2417
      %v2453 = vadd.f32 %v2452, %v2418
      %v2454 = vadd.f32 %v2453, %v2419
      %v2455 = vadd.f32 %v2454, %v2420
      %v2456 = vadd.f32 %v2455, %v2421
      %v2457 = vadd.f32 %v2456, %v2422
      %v2458 = vadd.f32 %v2457, %v2423
      %v2459 = vadd.f32 %v2458, %v2424
      %v2460 = vadd.f32 %v2459, %v2425
      %v2461 = vadd.f32 %v2460, %v2426
      %v2462 = vadd.f32 %v2461, %v2427
      %v2463 = vadd.f32 %v2462, %v2428
      %v2464 = vadd.f32 %v2463, %v2429
      %v2465 = vadd.f32 %v2464, %v2430
      %v2466 = vadd.f32 %v2465, %v2431
      %v2467 = vadd.f32 %v2466, %v2432
      %v2468 = vadd.f32 %v2467, %v2433
      %v2469 = vadd.f32 %v2468, %v2434
      %v2470 = vadd.f32 %v2469, %v2435
      %v2471 = vadd.f32 %v2470, %v2436
      %v2472 = vadd.f32 %v2471, %v2437
      %v2473 = vadd.f32 %v2472, %v2438
      %v2474 = vadd.f32 %v2473, %v2439
      %v2475 = vadd.f32 %v2474, %v2440
      %v2476 = vadd.f32 %v2475, %v2441
      %v2477 = vadd.f32 %v2476, %v2442
      %v2478 = vadd.f32 %v2477, %v2443
      %v2479 = vadd.f32 %v2478, %v2444
      %v2480 = vadd.f32 %v2479, %v2445
      %v2481 = vadd.f32 %v2480, %v2446
      %v2482 = vadd.f32 %v2481, %v2447
      %v2483 = vadd.f32 %v2482, %v2448
      %v2484 = vadd.f32 %v2483, %v2449
      %v2485 = vadd.f32 %v2484, %v2450
      %v2486 = vrot.slane %v2485, 4
      %v2487 = vadd.f32 %v2485, %v2486
      %v2488 = vrot.slane %v2487, 2
      %v2489 = vadd.f32 %v2487, %v2488
      %v2490 = vrot.slane %v2489, 1
      %v2491 = vadd.f32 %v2489, %v2490
      %v2492 = vmul.f32 %v2415, %v2415
      %v2493 = vmul.f32 %v2416, %v2416
      %v2494 = vmul.f32 %v2417, %v2417
      %v2495 = vmul.f32 %v2418, %v2418
      %v2496 = vmul.f32 %v2419, %v2419
      %v2497 = vmul.f32 %v2420, %v2420
      %v2498 = vmul.f32 %v2421, %v2421
      %v2499 = vmul.f32 %v2422, %v2422
      %v2500 = vmul.f32 %v2423, %v2423
      %v2501 = vmul.f32 %v2424, %v2424
      %v2502 = vmul.f32 %v2425, %v2425
      %v2503 = vmul.f32 %v2426, %v2426
      %v2504 = vmul.f32 %v2427, %v2427
      %v2505 = vmul.f32 %v2428, %v2428
      %v2506 = vmul.f32 %v2429, %v2429
      %v2507 = vmul.f32 %v2430, %v2430
      %v2508 = vmul.f32 %v2431, %v2431
      %v2509 = vmul.f32 %v2432, %v2432
      %v2510 = vmul.f32 %v2433, %v2433
      %v2511 = vmul.f32 %v2434, %v2434
      %v2512 = vmul.f32 %v2435, %v2435
      %v2513 = vmul.f32 %v2436, %v2436
      %v2514 = vmul.f32 %v2437, %v2437
      %v2515 = vmul.f32 %v2438, %v2438
      %v2516 = vmul.f32 %v2439, %v2439
      %v2517 = vmul.f32 %v2440, %v2440
      %v2518 = vmul.f32 %v2441, %v2441
      %v2519 = vmul.f32 %v2442, %v2442
      %v2520 = vmul.f32 %v2443, %v2443
      %v2521 = vmul.f32 %v2444, %v2444
      %v2522 = vmul.f32 %v2445, %v2445
      %v2523 = vmul.f32 %v2446, %v2446
      %v2524 = vmul.f32 %v2447, %v2447
      %v2525 = vmul.f32 %v2448, %v2448
      %v2526 = vmul.f32 %v2449, %v2449
      %v2527 = vmul.f32 %v2450, %v2450
      %v2528 = vadd.f32 %v2492, %v2493
      %v2529 = vadd.f32 %v2528, %v2494
      %v2530 = vadd.f32 %v2529, %v2495
      %v2531 = vadd.f32 %v2530, %v2496
      %v2532 = vadd.f32 %v2531, %v2497
      %v2533 = vadd.f32 %v2532, %v2498
      %v2534 = vadd.f32 %v2533, %v2499
      %v2535 = vadd.f32 %v2534, %v2500
      %v2536 = vadd.f32 %v2535, %v2501
      %v2537 = vadd.f32 %v2536, %v2502
      %v2538 = vadd.f32 %v2537, %v2503
      %v2539 = vadd.f32 %v2538, %v2504
      %v2540 = vadd.f32 %v2539, %v2505
      %v2541 = vadd.f32 %v2540, %v2506
      %v2542 = vadd.f32 %v2541, %v2507
      %v2543 = vadd.f32 %v2542, %v2508
      %v2544 = vadd.f32 %v2543, %v2509
      %v2545 = vadd.f32 %v2544, %v2510
      %v2546 = vadd.f32 %v2545, %v2511
      %v2547 = vadd.f32 %v2546, %v2512
      %v2548 = vadd.f32 %v2547, %v2513
      %v2549 = vadd.f32 %v2548, %v2514
      %v2550 = vadd.f32 %v2549, %v2515
      %v2551 = vadd.f32 %v2550, %v2516
      %v2552 = vadd.f32 %v2551, %v2517
      %v2553 = vadd.f32 %v2552, %v2518
      %v2554 = vadd.f32 %v2553, %v2519
      %v2555 = vadd.f32 %v2554, %v2520
      %v2556 = vadd.f32 %v2555, %v2521
      %v2557 = vadd.f32 %v2556, %v2522
      %v2558 = vadd.f32 %v2557, %v2523
      %v2559 = vadd.f32 %v2558, %v2524
      %v2560 = vadd.f32 %v2559, %v2525
      %v2561 = vadd.f32 %v2560, %v2526
      %v2562 = vadd.f32 %v2561, %v2527
      %v2563 = vrot.slane %v2562, 4
      %v2564 = vadd.f32 %v2562, %v2563
      %v2565 = vrot.slane %v2564, 2
      %v2566 = vadd.f32 %v2564, %v2565
      %v2567 = vrot.slane %v2566, 1
      %v2568 = vadd.f32 %v2566, %v2567
      %vm2569 = vcmask 1040384
      %v2570 = vsel %vm2569, %v2491, %v2568
      %v2571 = vld [vmem:[%s8] sm:$0xff]
      %v2572 = vld [vmem:[%s8 + $0x8] sm:$0xff]
      %v2573 = vld [vmem:[%s8 + $0x10] sm:$0xff]
      %v2574 = vld [vmem:[%s8 + $0x18] sm:$0xff]
      %v2575 = vld [vmem:[%s8 + $0x20] sm:$0xff]
      %v2576 = vld [vmem:[%s8 + $0x28] sm:$0xff]
      %v2577 = vld [vmem:[%s8 + $0x30] sm:$0xff]
      %v2578 = vld [vmem:[%s8 + $0x38] sm:$0xff]
      %v2579 = vld [vmem:[%s8 + $0x40] sm:$0xff]
      %v2580 = vld [vmem:[%s8 + $0x48] sm:$0xff]
      %v2581 = vld [vmem:[%s8 + $0x50] sm:$0xff]
      %v2582 = vld [vmem:[%s8 + $0x58] sm:$0xff]
      %v2583 = vld [vmem:[%s8 + $0x60] sm:$0xff]
      %v2584 = vld [vmem:[%s8 + $0x68] sm:$0xff]
      %v2585 = vld [vmem:[%s8 + $0x70] sm:$0xff]
      %v2586 = vld [vmem:[%s8 + $0x78] sm:$0xff]
      %2587 = vmatprep.subr.mxu0 0.0
      %2588 = vmatpush1.msra.mxu0 %v2571
      %2589 = vmatprep.subr.mxu0 0.0
      %2590 = vmatpush1.msra.mxu0 %v2572
      %2591 = vmatprep.subr.mxu0 0.0
      %2592 = vmatpush1.msra.mxu0 %v2573
      %2593 = vmatprep.subr.mxu0 0.0
      %2594 = vmatpush1.msra.mxu0 %v2574
      %2595 = vmatprep.subr.mxu0 0.0
      %2596 = vmatpush1.msra.mxu0 %v2575
      %2597 = vmatprep.subr.mxu0 0.0
      %2598 = vmatpush1.msra.mxu0 %v2576
      %2599 = vmatprep.subr.mxu0 0.0
      %2600 = vmatpush1.msra.mxu0 %v2577
      %2601 = vmatprep.subr.mxu0 0.0
      %2602 = vmatpush1.msra.mxu0 %v2578
      %2603 = vmatprep.subr.mxu0 0.0
      %2604 = vmatpush1.msra.mxu0 %v2579
      %2605 = vmatprep.subr.mxu0 0.0
      %2606 = vmatpush1.msra.mxu0 %v2580
      %2607 = vmatprep.subr.mxu0 0.0
      %2608 = vmatpush1.msra.mxu0 %v2581
      %2609 = vmatprep.subr.mxu0 0.0
      %2610 = vmatpush1.msra.mxu0 %v2582
      %2611 = vmatprep.subr.mxu0 0.0
      %2612 = vmatpush1.msra.mxu0 %v2583
      %2613 = vmatprep.subr.mxu0 0.0
      %2614 = vmatpush1.msra.mxu0 %v2584
      %2615 = vmatprep.subr.mxu0 0.0
      %2616 = vmatpush1.msra.mxu0 %v2585
      %2617 = vmatprep.subr.mxu0 0.0
      %2618 = vmatpush1.msra.mxu0 %v2586
      %2619 = vmatprep.subr.mxu0 0.0
      %2620 = vmatpush1.msra.mxu0 0.0
      %2621 = vmatprep.subr.mxu0 0.0
      %2622 = vmatpush1.msra.mxu0 0.0
      %2623 = vmatprep.subr.mxu0 0.0
      %2624 = vmatpush1.msra.mxu0 0.0
      %2625 = vmatprep.subr.mxu0 0.0
      %2626 = vmatpush1.msra.mxu0 0.0
      %2627 = vmatprep.subr.mxu0 0.0
      %2628 = vmatpush1.msra.mxu0 0.0
      %2629 = vmatprep.subr.mxu0 0.0
      %2630 = vmatpush1.msra.mxu0 0.0
      %2631 = vmatprep.subr.mxu0 0.0
      %2632 = vmatpush1.msra.mxu0 0.0
      %2633 = vmatprep.subr.mxu0 0.0
      %2634 = vmatpush1.msra.mxu0 0.0
      %2635 = vmatprep.subr.mxu0 0.0
      %2636 = vmatpush1.msra.mxu0 0.0
      %2637 = vmatprep.subr.mxu0 0.0
      %2638 = vmatpush1.msra.mxu0 0.0
      %2639 = vmatprep.subr.mxu0 0.0
      %2640 = vmatpush1.msra.mxu0 0.0
      %2641 = vmatprep.subr.mxu0 0.0
      %2642 = vmatpush1.msra.mxu0 0.0
      %2643 = vmatprep.subr.mxu0 0.0
      %2644 = vmatpush1.msra.mxu0 0.0
      %2645 = vmatprep.subr.mxu0 0.0
      %2646 = vmatpush1.msra.mxu0 0.0
      %2647 = vmatprep.subr.mxu0 0.0
      %2648 = vmatpush1.msra.mxu0 0.0
      %2649 = vmatprep.subr.mxu0 0.0
      %2650 = vmatpush1.msra.mxu0 0.0
      %2651 = vmatprep.mubr.f32.mxu0 0.0
      %2652 = vmatmul.mubr.f32.gmra.mrb[0].mxu0 %v2570
      %v2653 = vpop.f32.mrb[0].mxu0
      %v2654 = vadd.f32 0.0, %v2653
      %v2655 = vpop.f32.mrb[0].mxu0
      %2656 = vdwg.mxu0
      %v2657 = vmul.f32 %v2654, 0.0009765625
      %v2658 = vmul.f32 %v2657, %v2657
      %v2660 = vrot.slane %v2658, 7
      %v2662 = vsub.f32 %v2657, %v2660
      %v2663 = vmax.f32 %v2662, 0.0
      %v2664 = vlaneseq
      %v2665 = vshrl.u32 %v2664, 7
      %v2666 = vsub.s32 0, %v2665
      %v2667 = vrot.slane %v2657, %v2666
      %v2668 = vsub.f32 %v2093, %v2667
      %v2669 = vsub.f32 %v2096, %v2667
      %v2670 = vsub.f32 %v2101, %v2667
      %v2671 = vsub.f32 %v2104, %v2667
      %v2672 = vsub.f32 %v2109, %v2667
      %v2673 = vsub.f32 %v2112, %v2667
      %v2674 = vsub.f32 %v2117, %v2667
      %v2675 = vsub.f32 %v2120, %v2667
      %v2676 = vsub.f32 %v2125, %v2667
      %v2677 = vsub.f32 %v2128, %v2667
      %v2678 = vsub.f32 %v2133, %v2667
      %v2679 = vsub.f32 %v2136, %v2667
      %v2680 = vsub.f32 %v2141, %v2667
      %v2681 = vsub.f32 %v2144, %v2667
      %v2682 = vsub.f32 %v2149, %v2667
      %v2683 = vsub.f32 %v2152, %v2667
      %v2684 = vsub.f32 %v2157, %v2667
      %v2685 = vsub.f32 %v2160, %v2667
      %v2686 = vsub.f32 %v2165, %v2667
      %v2687 = vsub.f32 %v2168, %v2667
      %v2688 = vsub.f32 %v2173, %v2667
      %v2689 = vsub.f32 %v2176, %v2667
      %v2690 = vsub.f32 %v2181, %v2667
      %v2691 = vsub.f32 %v2184, %v2667
      %v2692 = vsub.f32 %v2189, %v2667
      %v2693 = vsub.f32 %v2192, %v2667
      %v2694 = vsub.f32 %v2197, %v2667
      %v2695 = vsub.f32 %v2200, %v2667
      %v2696 = vsub.f32 %v2205, %v2667
      %v2697 = vsub.f32 %v2208, %v2667
      %v2698 = vsub.f32 %v2213, %v2667
      %v2699 = vsub.f32 %v2216, %v2667
      %v2700 = vsub.f32 %v2221, %v2667
      %v2701 = vsub.f32 %v2224, %v2667
      %v2702 = vsub.f32 %v2229, %v2667
      %v2703 = vsub.f32 %v2232, %v2667
      %v2704 = vadd.f32 %v2663, 1e-05
      %v2705 = vrsqrt.pop %v2704
      %v2706 = vlaneseq
      %v2707 = vshrl.u32 %v2706, 7
      %v2708 = vsub.s32 1, %v2707
      %v2709 = vrot.slane %v2705, %v2708
      %v2710 = vmul.f32 %v2668, %v2709
      %v2711 = vmul.f32 %v2669, %v2709
      %v2712 = vmul.f32 %v2670, %v2709
      %v2713 = vmul.f32 %v2671, %v2709
      %v2714 = vmul.f32 %v2672, %v2709
      %v2715 = vmul.f32 %v2673, %v2709
      %v2716 = vmul.f32 %v2674, %v2709
      %v2717 = vmul.f32 %v2675, %v2709
      %v2718 = vmul.f32 %v2676, %v2709
      %v2719 = vmul.f32 %v2677, %v2709
      %v2720 = vmul.f32 %v2678, %v2709
      %v2721 = vmul.f32 %v2679, %v2709
      %v2722 = vmul.f32 %v2680, %v2709
      %v2723 = vmul.f32 %v2681, %v2709
      %v2724 = vmul.f32 %v2682, %v2709
      %v2725 = vmul.f32 %v2683, %v2709
      %v2726 = vmul.f32 %v2684, %v2709
      %v2727 = vmul.f32 %v2685, %v2709
      %v2728 = vmul.f32 %v2686, %v2709
      %v2729 = vmul.f32 %v2687, %v2709
      %v2730 = vmul.f32 %v2688, %v2709
      %v2731 = vmul.f32 %v2689, %v2709
      %v2732 = vmul.f32 %v2690, %v2709
      %v2733 = vmul.f32 %v2691, %v2709
      %v2734 = vmul.f32 %v2692, %v2709
      %v2735 = vmul.f32 %v2693, %v2709
      %v2736 = vmul.f32 %v2694, %v2709
      %v2737 = vmul.f32 %v2695, %v2709
      %v2738 = vmul.f32 %v2696, %v2709
      %v2739 = vmul.f32 %v2697, %v2709
      %v2740 = vmul.f32 %v2698, %v2709
      %v2741 = vmul.f32 %v2699, %v2709
      %v2742 = vmul.f32 %v2700, %v2709
      %v2743 = vmul.f32 %v2701, %v2709
      %v2744 = vmul.f32 %v2702, %v2709
      %v2745 = vmul.f32 %v2703, %v2709
      %v2746 = vld [vmem:[%s6] sm:$0x1]
      %v2747 = vlaneseq
      %v2748 = vshrl.u32 %v2747, 7
      %v2749 = vsub.s32 0, %v2748
      %v2750 = vrot.slane %v2746, %v2749
      %v2751 = vmul.f32 %v2710, %v2750
      %v2752 = vmul.f32 %v2711, %v2750
      %v2753 = vmul.f32 %v2712, %v2750
      %v2754 = vmul.f32 %v2713, %v2750
      %v2755 = vmul.f32 %v2714, %v2750
      %v2756 = vmul.f32 %v2715, %v2750
      %v2757 = vmul.f32 %v2716, %v2750
      %v2758 = vmul.f32 %v2717, %v2750
      %v2759 = vmul.f32 %v2718, %v2750
      %v2760 = vmul.f32 %v2719, %v2750
      %v2761 = vmul.f32 %v2720, %v2750
      %v2762 = vmul.f32 %v2721, %v2750
      %v2763 = vmul.f32 %v2722, %v2750
      %v2764 = vmul.f32 %v2723, %v2750
      %v2765 = vmul.f32 %v2724, %v2750
      %v2766 = vmul.f32 %v2725, %v2750
      %v2767 = vmul.f32 %v2726, %v2750
      %v2768 = vmul.f32 %v2727, %v2750
      %v2769 = vmul.f32 %v2728, %v2750
      %v2770 = vmul.f32 %v2729, %v2750
      %v2771 = vmul.f32 %v2730, %v2750
      %v2772 = vmul.f32 %v2731, %v2750
      %v2773 = vmul.f32 %v2732, %v2750
      %v2774 = vmul.f32 %v2733, %v2750
      %v2775 = vmul.f32 %v2734, %v2750
      %v2776 = vmul.f32 %v2735, %v2750
      %v2777 = vmul.f32 %v2736, %v2750
      %v2778 = vmul.f32 %v2737, %v2750
      %v2779 = vmul.f32 %v2738, %v2750
      %v2780 = vmul.f32 %v2739, %v2750
      %v2781 = vmul.f32 %v2740, %v2750
      %v2782 = vmul.f32 %v2741, %v2750
      %v2783 = vmul.f32 %v2742, %v2750
      %v2784 = vmul.f32 %v2743, %v2750
      %v2785 = vmul.f32 %v2744, %v2750
      %v2786 = vmul.f32 %v2745, %v2750
      %v2787 = vld [vmem:[%s7] sm:$0x1]
      %v2788 = vlaneseq
      %v2789 = vshrl.u32 %v2788, 7
      %v2790 = vsub.s32 0, %v2789
      %v2791 = vrot.slane %v2787, %v2790
      %v2792 = vadd.f32 %v2751, %v2791
      %v2793 = vadd.f32 %v2752, %v2791
      %v2794 = vadd.f32 %v2753, %v2791
      %v2795 = vadd.f32 %v2754, %v2791
      %v2796 = vadd.f32 %v2755, %v2791
      %v2797 = vadd.f32 %v2756, %v2791
      %v2798 = vadd.f32 %v2757, %v2791
      %v2799 = vadd.f32 %v2758, %v2791
      %v2800 = vadd.f32 %v2759, %v2791
      %v2801 = vadd.f32 %v2760, %v2791
      %v2802 = vadd.f32 %v2761, %v2791
      %v2803 = vadd.f32 %v2762, %v2791
      %v2804 = vadd.f32 %v2763, %v2791
      %v2805 = vadd.f32 %v2764, %v2791
      %v2806 = vadd.f32 %v2765, %v2791
      %v2807 = vadd.f32 %v2766, %v2791
      %v2808 = vadd.f32 %v2767, %v2791
      %v2809 = vadd.f32 %v2768, %v2791
      %v2810 = vadd.f32 %v2769, %v2791
      %v2811 = vadd.f32 %v2770, %v2791
      %v2812 = vadd.f32 %v2771, %v2791
      %v2813 = vadd.f32 %v2772, %v2791
      %v2814 = vadd.f32 %v2773, %v2791
      %v2815 = vadd.f32 %v2774, %v2791
      %v2816 = vadd.f32 %v2775, %v2791
      %v2817 = vadd.f32 %v2776, %v2791
      %v2818 = vadd.f32 %v2777, %v2791
      %v2819 = vadd.f32 %v2778, %v2791
      %v2820 = vadd.f32 %v2779, %v2791
      %v2821 = vadd.f32 %v2780, %v2791
      %v2822 = vadd.f32 %v2781, %v2791
      %v2823 = vadd.f32 %v2782, %v2791
      %v2824 = vadd.f32 %v2783, %v2791
      %v2825 = vadd.f32 %v2784, %v2791
      %v2826 = vadd.f32 %v2785, %v2791
      %v2827 = vadd.f32 %v2786, %v2791
      %v2828 = vmax.f32 %v2792, 0.0
      %v2829 = vmax.f32 %v2793, 0.0
      %v2830 = vmax.f32 %v2794, 0.0
      %v2831 = vmax.f32 %v2795, 0.0
      %v2832 = vmax.f32 %v2796, 0.0
      %v2833 = vmax.f32 %v2797, 0.0
      %v2834 = vmax.f32 %v2798, 0.0
      %v2835 = vmax.f32 %v2799, 0.0
      %v2836 = vmax.f32 %v2800, 0.0
      %v2837 = vmax.f32 %v2801, 0.0
      %v2838 = vmax.f32 %v2802, 0.0
      %v2839 = vmax.f32 %v2803, 0.0
      %v2840 = vmax.f32 %v2804, 0.0
      %v2841 = vmax.f32 %v2805, 0.0
      %v2842 = vmax.f32 %v2806, 0.0
      %v2843 = vmax.f32 %v2807, 0.0
      %v2844 = vmax.f32 %v2808, 0.0
      %v2845 = vmax.f32 %v2809, 0.0
      %v2846 = vmax.f32 %v2810, 0.0
      %v2847 = vmax.f32 %v2811, 0.0
      %v2848 = vmax.f32 %v2812, 0.0
      %v2849 = vmax.f32 %v2813, 0.0
      %v2850 = vmax.f32 %v2814, 0.0
      %v2851 = vmax.f32 %v2815, 0.0
      %v2852 = vmax.f32 %v2816, 0.0
      %v2853 = vmax.f32 %v2817, 0.0
      %v2854 = vmax.f32 %v2818, 0.0
      %v2855 = vmax.f32 %v2819, 0.0
      %v2856 = vmax.f32 %v2820, 0.0
      %v2857 = vmax.f32 %v2821, 0.0
      %v2858 = vmax.f32 %v2822, 0.0
      %v2859 = vmax.f32 %v2823, 0.0
      %v2860 = vmax.f32 %v2824, 0.0
      %v2861 = vmax.f32 %v2825, 0.0
      %v2862 = vmax.f32 %v2826, 0.0
      %v2863 = vmax.f32 %v2827, 0.0
      %vm2864 = vcmask 261120
      %2865 = vst.msk [vmem:[%s359] sm:$0xff] %vm2864, %v2828
      %2866 = vst.msk [vmem:[%s359 + $0x8] sm:$0xff] %vm2864, %v2829
      %2867 = vst.msk [vmem:[%s359 + $0x10] sm:$0xff] %vm2864, %v2830
      %2868 = vst.msk [vmem:[%s359 + $0x18] sm:$0xff] %vm2864, %v2831
      %2869 = vst.msk [vmem:[%s359 + $0x20] sm:$0xff] %vm2864, %v2832
      %2870 = vst.msk [vmem:[%s359 + $0x28] sm:$0xff] %vm2864, %v2833
      %2871 = vst.msk [vmem:[%s359 + $0x30] sm:$0xff] %vm2864, %v2834
      %2872 = vst.msk [vmem:[%s359 + $0x38] sm:$0xff] %vm2864, %v2835
      %2873 = vst.msk [vmem:[%s359 + $0x40] sm:$0xff] %vm2864, %v2836
      %2874 = vst.msk [vmem:[%s359 + $0x48] sm:$0xff] %vm2864, %v2837
      %2875 = vst.msk [vmem:[%s359 + $0x50] sm:$0xff] %vm2864, %v2838
      %2876 = vst.msk [vmem:[%s359 + $0x58] sm:$0xff] %vm2864, %v2839
      %2877 = vst.msk [vmem:[%s359 + $0x60] sm:$0xff] %vm2864, %v2840
      %2878 = vst.msk [vmem:[%s359 + $0x68] sm:$0xff] %vm2864, %v2841
      %2879 = vst.msk [vmem:[%s359 + $0x70] sm:$0xff] %vm2864, %v2842
      %2880 = vst.msk [vmem:[%s359 + $0x78] sm:$0xff] %vm2864, %v2843
      %2881 = vst.msk [vmem:[%s359 + $0x80] sm:$0xff] %vm2864, %v2844
      %2882 = vst.msk [vmem:[%s359 + $0x88] sm:$0xff] %vm2864, %v2845
      %2883 = vst.msk [vmem:[%s359 + $0x90] sm:$0xff] %vm2864, %v2846
      %2884 = vst.msk [vmem:[%s359 + $0x98] sm:$0xff] %vm2864, %v2847
      %2885 = vst.msk [vmem:[%s359 + $0xa0] sm:$0xff] %vm2864, %v2848
      %2886 = vst.msk [vmem:[%s359 + $0xa8] sm:$0xff] %vm2864, %v2849
      %2887 = vst.msk [vmem:[%s359 + $0xb0] sm:$0xff] %vm2864, %v2850
      %2888 = vst.msk [vmem:[%s359 + $0xb8] sm:$0xff] %vm2864, %v2851
      %2889 = vst.msk [vmem:[%s359 + $0xc0] sm:$0xff] %vm2864, %v2852
      %2890 = vst.msk [vmem:[%s359 + $0xc8] sm:$0xff] %vm2864, %v2853
      %2891 = vst.msk [vmem:[%s359 + $0xd0] sm:$0xff] %vm2864, %v2854
      %2892 = vst.msk [vmem:[%s359 + $0xd8] sm:$0xff] %vm2864, %v2855
      %2893 = vst.msk [vmem:[%s359 + $0xe0] sm:$0xff] %vm2864, %v2856
      %2894 = vst.msk [vmem:[%s359 + $0xe8] sm:$0xff] %vm2864, %v2857
      %2895 = vst.msk [vmem:[%s359 + $0xf0] sm:$0xff] %vm2864, %v2858
      %2896 = vst.msk [vmem:[%s359 + $0xf8] sm:$0xff] %vm2864, %v2859
      %2897 = vst.msk [vmem:[%s359 + $0x100] sm:$0xff] %vm2864, %v2860
      %2898 = vst.msk [vmem:[%s359 + $0x108] sm:$0xff] %vm2864, %v2861
      %2899 = vst.msk [vmem:[%s359 + $0x110] sm:$0xff] %vm2864, %v2862
      %2900 = vst.msk [vmem:[%s359 + $0x118] sm:$0xff] %vm2864, %v2863
      %v2901 = vmul.f32 %v2828, %v2238
      %v2902 = vmul.f32 %v2829, %v2243
      %v2903 = vmul.f32 %v2830, %v2248
      %v2904 = vmul.f32 %v2831, %v2253
      %v2905 = vmul.f32 %v2832, %v2258
      %v2906 = vmul.f32 %v2833, %v2263
      %v2907 = vmul.f32 %v2834, %v2268
      %v2908 = vmul.f32 %v2835, %v2273
      %v2909 = vmul.f32 %v2836, %v2278
      %v2910 = vmul.f32 %v2837, %v2283
      %v2911 = vmul.f32 %v2838, %v2288
      %v2912 = vmul.f32 %v2839, %v2293
      %v2913 = vmul.f32 %v2840, %v2298
      %v2914 = vmul.f32 %v2841, %v2303
      %v2915 = vmul.f32 %v2842, %v2308
      %v2916 = vmul.f32 %v2843, %v2313
      %v2917 = vmul.f32 %v2844, %v2318
      %v2918 = vmul.f32 %v2845, %v2323
      %v2919 = vmul.f32 %v2846, %v2328
      %v2920 = vmul.f32 %v2847, %v2333
      %v2921 = vmul.f32 %v2848, %v2338
      %v2922 = vmul.f32 %v2849, %v2343
      %v2923 = vmul.f32 %v2850, %v2348
      %v2924 = vmul.f32 %v2851, %v2353
      %v2925 = vmul.f32 %v2852, %v2358
      %v2926 = vmul.f32 %v2853, %v2363
      %v2927 = vmul.f32 %v2854, %v2368
      %v2928 = vmul.f32 %v2855, %v2373
      %v2929 = vmul.f32 %v2856, %v2378
      %v2930 = vmul.f32 %v2857, %v2383
      %v2931 = vmul.f32 %v2858, %v2388
      %v2932 = vmul.f32 %v2859, %v2393
      %v2933 = vmul.f32 %v2860, %v2398
      %v2934 = vmul.f32 %v2861, %v2403
      %v2935 = vmul.f32 %v2862, %v2408
      %v2936 = vmul.f32 %v2863, %v2413
      %2937 = vst [vmem:[#allocation2 + $0x13] sm:$0xff] %v2901
      %2938 = vst [vmem:[#allocation2 + $0x1b] sm:$0xff] %v2902
      %2939 = vst [vmem:[#allocation2 + $0x23] sm:$0xff] %v2903
      %2940 = vst [vmem:[#allocation2 + $0x2b] sm:$0xff] %v2904
      %2941 = vst [vmem:[#allocation2 + $0x33] sm:$0xff] %v2905
      %2942 = vst [vmem:[#allocation2 + $0x3b] sm:$0xff] %v2906
      %2943 = vst [vmem:[#allocation2 + $0x43] sm:$0xff] %v2907
      %2944 = vst [vmem:[#allocation2 + $0x4b] sm:$0xff] %v2908
      %2945 = vst [vmem:[#allocation2 + $0x53] sm:$0xff] %v2909
      %2946 = vst [vmem:[#allocation2 + $0x5b] sm:$0xff] %v2910
      %2947 = vst [vmem:[#allocation2 + $0x63] sm:$0xff] %v2911
      %2948 = vst [vmem:[#allocation2 + $0x6b] sm:$0xff] %v2912
      %2949 = vst [vmem:[#allocation2 + $0x73] sm:$0xff] %v2913
      %2950 = vst [vmem:[#allocation2 + $0x7b] sm:$0xff] %v2914
      %2951 = vst [vmem:[#allocation2 + $0x83] sm:$0xff] %v2915
      %2952 = vst [vmem:[#allocation2 + $0x8b] sm:$0xff] %v2916
      %2953 = vst [vmem:[#allocation2 + $0x93] sm:$0xff] %v2917
      %2954 = vst [vmem:[#allocation2 + $0x9b] sm:$0xff] %v2918
      %2955 = vst [vmem:[#allocation2 + $0xa3] sm:$0xff] %v2919
      %2956 = vst [vmem:[#allocation2 + $0xab] sm:$0xff] %v2920
      %2957 = vst [vmem:[#allocation2 + $0xb3] sm:$0xff] %v2921
      %2958 = vst [vmem:[#allocation2 + $0xbb] sm:$0xff] %v2922
      %2959 = vst [vmem:[#allocation2 + $0xc3] sm:$0xff] %v2923
      %2960 = vst [vmem:[#allocation2 + $0xcb] sm:$0xff] %v2924
      %2961 = vst [vmem:[#allocation2 + $0xd3] sm:$0xff] %v2925
      %2962 = vst [vmem:[#allocation2 + $0xdb] sm:$0xff] %v2926
      %2963 = vst [vmem:[#allocation2 + $0xe3] sm:$0xff] %v2927
      %2964 = vst [vmem:[#allocation2 + $0xeb] sm:$0xff] %v2928
      %2965 = vst [vmem:[#allocation2 + $0xf3] sm:$0xff] %v2929
      %2966 = vst [vmem:[#allocation2 + $0xfb] sm:$0xff] %v2930
      %2967 = vst [vmem:[#allocation2 + $0x103] sm:$0xff] %v2931
      %2968 = vst [vmem:[#allocation2 + $0x10b] sm:$0xff] %v2932
      %2969 = vst [vmem:[#allocation2 + $0x113] sm:$0xff] %v2933
      %2970 = vst [vmem:[#allocation2 + $0x11b] sm:$0xff] %v2934
      %2971 = vst [vmem:[#allocation2 + $0x123] sm:$0xff] %v2935
      %2972 = vst [vmem:[#allocation2 + $0x12b] sm:$0xff] %v2936
      %v2973 = vld [vmem:[#allocation2] sm:$0xff]
      %v2974 = vld [vmem:[#allocation2 + $0x8] sm:$0xff]
      %v2975 = vld [vmem:[#allocation2 + $0x10] sm:$0xff]
      %v2976 = vld [vmem:[#allocation2 + $0x18] sm:$0xff]
      %v2977 = vld [vmem:[#allocation2 + $0x20] sm:$0xff]
      %v2978 = vld [vmem:[#allocation2 + $0x28] sm:$0xff]
      %v2979 = vld [vmem:[#allocation2 + $0x30] sm:$0xff]
      %v2980 = vld [vmem:[#allocation2 + $0x38] sm:$0xff]
      %v2981 = vld [vmem:[#allocation2 + $0x40] sm:$0xff]
      %v2982 = vld [vmem:[#allocation2 + $0x48] sm:$0xff]
      %v2983 = vld [vmem:[#allocation2 + $0x50] sm:$0xff]
      %v2984 = vld [vmem:[#allocation2 + $0x58] sm:$0xff]
      %v2985 = vld [vmem:[#allocation2 + $0x60] sm:$0xff]
      %v2986 = vld [vmem:[#allocation2 + $0x68] sm:$0xff]
      %v2987 = vld [vmem:[#allocation2 + $0x70] sm:$0xff]
      %v2988 = vld [vmem:[#allocation2 + $0x78] sm:$0xff]
      %v2989 = vld [vmem:[#allocation2 + $0x80] sm:$0xff]
      %v2990 = vld [vmem:[#allocation2 + $0x88] sm:$0xff]
      %v2991 = vld [vmem:[#allocation2 + $0x90] sm:$0xff]
      %v2992 = vld [vmem:[#allocation2 + $0x98] sm:$0xff]
      %v2993 = vld [vmem:[#allocation2 + $0xa0] sm:$0xff]
      %v2994 = vld [vmem:[#allocation2 + $0xa8] sm:$0xff]
      %v2995 = vld [vmem:[#allocation2 + $0xb0] sm:$0xff]
      %v2996 = vld [vmem:[#allocation2 + $0xb8] sm:$0xff]
      %v2997 = vld [vmem:[#allocation2 + $0xc0] sm:$0xff]
      %v2998 = vld [vmem:[#allocation2 + $0xc8] sm:$0xff]
      %v2999 = vld [vmem:[#allocation2 + $0xd0] sm:$0xff]
      %v3000 = vld [vmem:[#allocation2 + $0xd8] sm:$0xff]
      %v3001 = vld [vmem:[#allocation2 + $0xe0] sm:$0xff]
      %v3002 = vld [vmem:[#allocation2 + $0xe8] sm:$0xff]
      %v3003 = vld [vmem:[#allocation2 + $0xf0] sm:$0xff]
      %v3004 = vld [vmem:[#allocation2 + $0xf8] sm:$0xff]
      %v3005 = vld [vmem:[#allocation2 + $0x100] sm:$0xff]
      %v3006 = vld [vmem:[#allocation2 + $0x108] sm:$0xff]
      %v3007 = vld [vmem:[#allocation2 + $0x110] sm:$0xff]
      %v3008 = vld [vmem:[#allocation2 + $0x118] sm:$0xff]
      %v3009 = vld [vmem:[#allocation2 + $0x1] sm:$0xff]
      %v3010 = vld [vmem:[#allocation2 + $0x9] sm:$0xff]
      %v3011 = vld [vmem:[#allocation2 + $0x11] sm:$0xff]
      %v3012 = vld [vmem:[#allocation2 + $0x19] sm:$0xff]
      %v3013 = vld [vmem:[#allocation2 + $0x21] sm:$0xff]
      %v3014 = vld [vmem:[#allocation2 + $0x29] sm:$0xff]
      %v3015 = vld [vmem:[#allocation2 + $0x31] sm:$0xff]
      %v3016 = vld [vmem:[#allocation2 + $0x39] sm:$0xff]
      %v3017 = vld [vmem:[#allocation2 + $0x41] sm:$0xff]
      %v3018 = vld [vmem:[#allocation2 + $0x49] sm:$0xff]
      %v3019 = vld [vmem:[#allocation2 + $0x51] sm:$0xff]
      %v3020 = vld [vmem:[#allocation2 + $0x59] sm:$0xff]
      %v3021 = vld [vmem:[#allocation2 + $0x61] sm:$0xff]
      %v3022 = vld [vmem:[#allocation2 + $0x69] sm:$0xff]
      %v3023 = vld [vmem:[#allocation2 + $0x71] sm:$0xff]
      %v3024 = vld [vmem:[#allocation2 + $0x79] sm:$0xff]
      %v3025 = vld [vmem:[#allocation2 + $0x81] sm:$0xff]
      %v3026 = vld [vmem:[#allocation2 + $0x89] sm:$0xff]
      %v3027 = vld [vmem:[#allocation2 + $0x91] sm:$0xff]
      %v3028 = vld [vmem:[#allocation2 + $0x99] sm:$0xff]
      %v3029 = vld [vmem:[#allocation2 + $0xa1] sm:$0xff]
      %v3030 = vld [vmem:[#allocation2 + $0xa9] sm:$0xff]
      %v3031 = vld [vmem:[#allocation2 + $0xb1] sm:$0xff]
      %v3032 = vld [vmem:[#allocation2 + $0xb9] sm:$0xff]
      %v3033 = vld [vmem:[#allocation2 + $0xc1] sm:$0xff]
      %v3034 = vld [vmem:[#allocation2 + $0xc9] sm:$0xff]
      %v3035 = vld [vmem:[#allocation2 + $0xd1] sm:$0xff]
      %v3036 = vld [vmem:[#allocation2 + $0xd9] sm:$0xff]
      %v3037 = vld [vmem:[#allocation2 + $0xe1] sm:$0xff]
      %v3038 = vld [vmem:[#allocation2 + $0xe9] sm:$0xff]
      %v3039 = vld [vmem:[#allocation2 + $0xf1] sm:$0xff]
      %v3040 = vld [vmem:[#allocation2 + $0xf9] sm:$0xff]
      %v3041 = vld [vmem:[#allocation2 + $0x101] sm:$0xff]
      %v3042 = vld [vmem:[#allocation2 + $0x109] sm:$0xff]
      %v3043 = vld [vmem:[#allocation2 + $0x111] sm:$0xff]
      %v3044 = vld [vmem:[#allocation2 + $0x119] sm:$0xff]
      %3045 = vrot.lane.b32.xlu0 %v3009, 32
      %v3046 = vpop.permute.xlu0 %3045
      %3047 = vrot.lane.b32.xlu0 %v3010, 32
      %v3048 = vpop.permute.xlu0 %3047
      %3049 = vrot.lane.b32.xlu0 %v3011, 32
      %v3050 = vpop.permute.xlu0 %3049
      %3051 = vrot.lane.b32.xlu0 %v3012, 32
      %v3052 = vpop.permute.xlu0 %3051
      %3053 = vrot.lane.b32.xlu0 %v3013, 32
      %v3054 = vpop.permute.xlu0 %3053
      %3055 = vrot.lane.b32.xlu0 %v3014, 32
      %v3056 = vpop.permute.xlu0 %3055
      %3057 = vrot.lane.b32.xlu0 %v3015, 32
      %v3058 = vpop.permute.xlu0 %3057
      %3059 = vrot.lane.b32.xlu0 %v3016, 32
      %v3060 = vpop.permute.xlu0 %3059
      %3061 = vrot.lane.b32.xlu0 %v3017, 32
      %v3062 = vpop.permute.xlu0 %3061
      %3063 = vrot.lane.b32.xlu0 %v3018, 32
      %v3064 = vpop.permute.xlu0 %3063
      %3065 = vrot.lane.b32.xlu0 %v3019, 32
      %v3066 = vpop.permute.xlu0 %3065
      %3067 = vrot.lane.b32.xlu0 %v3020, 32
      %v3068 = vpop.permute.xlu0 %3067
      %3069 = vrot.lane.b32.xlu0 %v3021, 32
      %v3070 = vpop.permute.xlu0 %3069
      %3071 = vrot.lane.b32.xlu0 %v3022, 32
      %v3072 = vpop.permute.xlu0 %3071
      %3073 = vrot.lane.b32.xlu0 %v3023, 32
      %v3074 = vpop.permute.xlu0 %3073
      %3075 = vrot.lane.b32.xlu0 %v3024, 32
      %v3076 = vpop.permute.xlu0 %3075
      %3077 = vrot.lane.b32.xlu0 %v3025, 32
      %v3078 = vpop.permute.xlu0 %3077
      %3079 = vrot.lane.b32.xlu0 %v3026, 32
      %v3080 = vpop.permute.xlu0 %3079
      %3081 = vrot.lane.b32.xlu0 %v3027, 32
      %v3082 = vpop.permute.xlu0 %3081
      %3083 = vrot.lane.b32.xlu0 %v3028, 32
      %v3084 = vpop.permute.xlu0 %3083
      %3085 = vrot.lane.b32.xlu0 %v3029, 32
      %v3086 = vpop.permute.xlu0 %3085
      %3087 = vrot.lane.b32.xlu0 %v3030, 32
      %v3088 = vpop.permute.xlu0 %3087
      %3089 = vrot.lane.b32.xlu0 %v3031, 32
      %v3090 = vpop.permute.xlu0 %3089
      %3091 = vrot.lane.b32.xlu0 %v3032, 32
      %v3092 = vpop.permute.xlu0 %3091
      %3093 = vrot.lane.b32.xlu0 %v3033, 32
      %v3094 = vpop.permute.xlu0 %3093
      %3095 = vrot.lane.b32.xlu0 %v3034, 32
      %v3096 = vpop.permute.xlu0 %3095
      %3097 = vrot.lane.b32.xlu0 %v3035, 32
      %v3098 = vpop.permute.xlu0 %3097
      %3099 = vrot.lane.b32.xlu0 %v3036, 32
      %v3100 = vpop.permute.xlu0 %3099
      %3101 = vrot.lane.b32.xlu0 %v3037, 32
      %v3102 = vpop.permute.xlu0 %3101
      %3103 = vrot.lane.b32.xlu0 %v3038, 32
      %v3104 = vpop.permute.xlu0 %3103
      %3105 = vrot.lane.b32.xlu0 %v3039, 32
      %v3106 = vpop.permute.xlu0 %3105
      %3107 = vrot.lane.b32.xlu0 %v3040, 32
      %v3108 = vpop.permute.xlu0 %3107
      %3109 = vrot.lane.b32.xlu0 %v3041, 32
      %v3110 = vpop.permute.xlu0 %3109
      %3111 = vrot.lane.b32.xlu0 %v3042, 32
      %v3112 = vpop.permute.xlu0 %3111
      %3113 = vrot.lane.b32.xlu0 %v3043, 32
      %v3114 = vpop.permute.xlu0 %3113
      %3115 = vrot.lane.b32.xlu0 %v3044, 32
      %v3116 = vpop.permute.xlu0 %3115
      %v3117 = vadd.f32 %v2973, %v3046
      %v3118 = vadd.f32 %v2974, %v3048
      %v3119 = vadd.f32 %v2975, %v3050
      %v3120 = vadd.f32 %v2976, %v3052
      %v3121 = vadd.f32 %v2977, %v3054
      %v3122 = vadd.f32 %v2978, %v3056
      %v3123 = vadd.f32 %v2979, %v3058
      %v3124 = vadd.f32 %v2980, %v3060
      %v3125 = vadd.f32 %v2981, %v3062
      %v3126 = vadd.f32 %v2982, %v3064
      %v3127 = vadd.f32 %v2983, %v3066
      %v3128 = vadd.f32 %v2984, %v3068
      %v3129 = vadd.f32 %v2985, %v3070
      %v3130 = vadd.f32 %v2986, %v3072
      %v3131 = vadd.f32 %v2987, %v3074
      %v3132 = vadd.f32 %v2988, %v3076
      %v3133 = vadd.f32 %v2989, %v3078
      %v3134 = vadd.f32 %v2990, %v3080
      %v3135 = vadd.f32 %v2991, %v3082
      %v3136 = vadd.f32 %v2992, %v3084
      %v3137 = vadd.f32 %v2993, %v3086
      %v3138 = vadd.f32 %v2994, %v3088
      %v3139 = vadd.f32 %v2995, %v3090
      %v3140 = vadd.f32 %v2996, %v3092
      %v3141 = vadd.f32 %v2997, %v3094
      %v3142 = vadd.f32 %v2998, %v3096
      %v3143 = vadd.f32 %v2999, %v3098
      %v3144 = vadd.f32 %v3000, %v3100
      %v3145 = vadd.f32 %v3001, %v3102
      %v3146 = vadd.f32 %v3002, %v3104
      %v3147 = vadd.f32 %v3003, %v3106
      %v3148 = vadd.f32 %v3004, %v3108
      %v3149 = vadd.f32 %v3005, %v3110
      %v3150 = vadd.f32 %v3006, %v3112
      %v3151 = vadd.f32 %v3007, %v3114
      %v3152 = vadd.f32 %v3008, %v3116
      %v3153 = vld [vmem:[#allocation2 + $0x2] sm:$0xff]
      %v3154 = vld [vmem:[#allocation2 + $0xa] sm:$0xff]
      %v3155 = vld [vmem:[#allocation2 + $0x12] sm:$0xff]
      %v3156 = vld [vmem:[#allocation2 + $0x1a] sm:$0xff]
      %v3157 = vld [vmem:[#allocation2 + $0x22] sm:$0xff]
      %v3158 = vld [vmem:[#allocation2 + $0x2a] sm:$0xff]
      %v3159 = vld [vmem:[#allocation2 + $0x32] sm:$0xff]
      %v3160 = vld [vmem:[#allocation2 + $0x3a] sm:$0xff]
      %v3161 = vld [vmem:[#allocation2 + $0x42] sm:$0xff]
      %v3162 = vld [vmem:[#allocation2 + $0x4a] sm:$0xff]
      %v3163 = vld [vmem:[#allocation2 + $0x52] sm:$0xff]
      %v3164 = vld [vmem:[#allocation2 + $0x5a] sm:$0xff]
      %v3165 = vld [vmem:[#allocation2 + $0x62] sm:$0xff]
      %v3166 = vld [vmem:[#allocation2 + $0x6a] sm:$0xff]
      %v3167 = vld [vmem:[#allocation2 + $0x72] sm:$0xff]
      %v3168 = vld [vmem:[#allocation2 + $0x7a] sm:$0xff]
      %v3169 = vld [vmem:[#allocation2 + $0x82] sm:$0xff]
      %v3170 = vld [vmem:[#allocation2 + $0x8a] sm:$0xff]
      %v3171 = vld [vmem:[#allocation2 + $0x92] sm:$0xff]
      %v3172 = vld [vmem:[#allocation2 + $0x9a] sm:$0xff]
      %v3173 = vld [vmem:[#allocation2 + $0xa2] sm:$0xff]
      %v3174 = vld [vmem:[#allocation2 + $0xaa] sm:$0xff]
      %v3175 = vld [vmem:[#allocation2 + $0xb2] sm:$0xff]
      %v3176 = vld [vmem:[#allocation2 + $0xba] sm:$0xff]
      %v3177 = vld [vmem:[#allocation2 + $0xc2] sm:$0xff]
      %v3178 = vld [vmem:[#allocation2 + $0xca] sm:$0xff]
      %v3179 = vld [vmem:[#allocation2 + $0xd2] sm:$0xff]
      %v3180 = vld [vmem:[#allocation2 + $0xda] sm:$0xff]
      %v3181 = vld [vmem:[#allocation2 + $0xe2] sm:$0xff]
      %v3182 = vld [vmem:[#allocation2 + $0xea] sm:$0xff]
      %v3183 = vld [vmem:[#allocation2 + $0xf2] sm:$0xff]
      %v3184 = vld [vmem:[#allocation2 + $0xfa] sm:$0xff]
      %v3185 = vld [vmem:[#allocation2 + $0x102] sm:$0xff]
      %v3186 = vld [vmem:[#allocation2 + $0x10a] sm:$0xff]
      %v3187 = vld [vmem:[#allocation2 + $0x112] sm:$0xff]
      %v3188 = vld [vmem:[#allocation2 + $0x11a] sm:$0xff]
      %3189 = vrot.lane.b32.xlu0 %v3153, 64
      %v3190 = vpop.permute.xlu0 %3189
      %3191 = vrot.lane.b32.xlu0 %v3154, 64
      %v3192 = vpop.permute.xlu0 %3191
      %3193 = vrot.lane.b32.xlu0 %v3155, 64
      %v3194 = vpop.permute.xlu0 %3193
      %3195 = vrot.lane.b32.xlu0 %v3156, 64
      %v3196 = vpop.permute.xlu0 %3195
      %3197 = vrot.lane.b32.xlu0 %v3157, 64
      %v3198 = vpop.permute.xlu0 %3197
      %3199 = vrot.lane.b32.xlu0 %v3158, 64
      %v3200 = vpop.permute.xlu0 %3199
      %3201 = vrot.lane.b32.xlu0 %v3159, 64
      %v3202 = vpop.permute.xlu0 %3201
      %3203 = vrot.lane.b32.xlu0 %v3160, 64
      %v3204 = vpop.permute.xlu0 %3203
      %3205 = vrot.lane.b32.xlu0 %v3161, 64
      %v3206 = vpop.permute.xlu0 %3205
      %3207 = vrot.lane.b32.xlu0 %v3162, 64
      %v3208 = vpop.permute.xlu0 %3207
      %3209 = vrot.lane.b32.xlu0 %v3163, 64
      %v3210 = vpop.permute.xlu0 %3209
      %3211 = vrot.lane.b32.xlu0 %v3164, 64
      %v3212 = vpop.permute.xlu0 %3211
      %3213 = vrot.lane.b32.xlu0 %v3165, 64
      %v3214 = vpop.permute.xlu0 %3213
      %3215 = vrot.lane.b32.xlu0 %v3166, 64
      %v3216 = vpop.permute.xlu0 %3215
      %3217 = vrot.lane.b32.xlu0 %v3167, 64
      %v3218 = vpop.permute.xlu0 %3217
      %3219 = vrot.lane.b32.xlu0 %v3168, 64
      %v3220 = vpop.permute.xlu0 %3219
      %3221 = vrot.lane.b32.xlu0 %v3169, 64
      %v3222 = vpop.permute.xlu0 %3221
      %3223 = vrot.lane.b32.xlu0 %v3170, 64
      %v3224 = vpop.permute.xlu0 %3223
      %3225 = vrot.lane.b32.xlu0 %v3171, 64
      %v3226 = vpop.permute.xlu0 %3225
      %3227 = vrot.lane.b32.xlu0 %v3172, 64
      %v3228 = vpop.permute.xlu0 %3227
      %3229 = vrot.lane.b32.xlu0 %v3173, 64
      %v3230 = vpop.permute.xlu0 %3229
      %3231 = vrot.lane.b32.xlu0 %v3174, 64
      %v3232 = vpop.permute.xlu0 %3231
      %3233 = vrot.lane.b32.xlu0 %v3175, 64
      %v3234 = vpop.permute.xlu0 %3233
      %3235 = vrot.lane.b32.xlu0 %v3176, 64
      %v3236 = vpop.permute.xlu0 %3235
      %3237 = vrot.lane.b32.xlu0 %v3177, 64
      %v3238 = vpop.permute.xlu0 %3237
      %3239 = vrot.lane.b32.xlu0 %v3178, 64
      %v3240 = vpop.permute.xlu0 %3239
      %3241 = vrot.lane.b32.xlu0 %v3179, 64
      %v3242 = vpop.permute.xlu0 %3241
      %3243 = vrot.lane.b32.xlu0 %v3180, 64
      %v3244 = vpop.permute.xlu0 %3243
      %3245 = vrot.lane.b32.xlu0 %v3181, 64
      %v3246 = vpop.permute.xlu0 %3245
      %3247 = vrot.lane.b32.xlu0 %v3182, 64
      %v3248 = vpop.permute.xlu0 %3247
      %3249 = vrot.lane.b32.xlu0 %v3183, 64
      %v3250 = vpop.permute.xlu0 %3249
      %3251 = vrot.lane.b32.xlu0 %v3184, 64
      %v3252 = vpop.permute.xlu0 %3251
      %3253 = vrot.lane.b32.xlu0 %v3185, 64
      %v3254 = vpop.permute.xlu0 %3253
      %3255 = vrot.lane.b32.xlu0 %v3186, 64
      %v3256 = vpop.permute.xlu0 %3255
      %3257 = vrot.lane.b32.xlu0 %v3187, 64
      %v3258 = vpop.permute.xlu0 %3257
      %3259 = vrot.lane.b32.xlu0 %v3188, 64
      %v3260 = vpop.permute.xlu0 %3259
      %v3261 = vadd.f32 %v3117, %v3190
      %v3262 = vadd.f32 %v3118, %v3192
      %v3263 = vadd.f32 %v3119, %v3194
      %v3264 = vadd.f32 %v3120, %v3196
      %v3265 = vadd.f32 %v3121, %v3198
      %v3266 = vadd.f32 %v3122, %v3200
      %v3267 = vadd.f32 %v3123, %v3202
      %v3268 = vadd.f32 %v3124, %v3204
      %v3269 = vadd.f32 %v3125, %v3206
      %v3270 = vadd.f32 %v3126, %v3208
      %v3271 = vadd.f32 %v3127, %v3210
      %v3272 = vadd.f32 %v3128, %v3212
      %v3273 = vadd.f32 %v3129, %v3214
      %v3274 = vadd.f32 %v3130, %v3216
      %v3275 = vadd.f32 %v3131, %v3218
      %v3276 = vadd.f32 %v3132, %v3220
      %v3277 = vadd.f32 %v3133, %v3222
      %v3278 = vadd.f32 %v3134, %v3224
      %v3279 = vadd.f32 %v3135, %v3226
      %v3280 = vadd.f32 %v3136, %v3228
      %v3281 = vadd.f32 %v3137, %v3230
      %v3282 = vadd.f32 %v3138, %v3232
      %v3283 = vadd.f32 %v3139, %v3234
      %v3284 = vadd.f32 %v3140, %v3236
      %v3285 = vadd.f32 %v3141, %v3238
      %v3286 = vadd.f32 %v3142, %v3240
      %v3287 = vadd.f32 %v3143, %v3242
      %v3288 = vadd.f32 %v3144, %v3244
      %v3289 = vadd.f32 %v3145, %v3246
      %v3290 = vadd.f32 %v3146, %v3248
      %v3291 = vadd.f32 %v3147, %v3250
      %v3292 = vadd.f32 %v3148, %v3252
      %v3293 = vadd.f32 %v3149, %v3254
      %v3294 = vadd.f32 %v3150, %v3256
      %v3295 = vadd.f32 %v3151, %v3258
      %v3296 = vadd.f32 %v3152, %v3260
      %v3297 = vld [vmem:[#allocation2 + $0x122] sm:$0xff]
      %v3298 = vld [vmem:[#allocation2 + $0x12a] sm:$0xff]
      %3299 = vrot.lane.b32.xlu0 %v3155, 96
      %v3300 = vpop.permute.xlu0 %3299
      %3301 = vrot.lane.b32.xlu0 %v3156, 96
      %v3302 = vpop.permute.xlu0 %3301
      %3303 = vrot.lane.b32.xlu0 %v3157, 96
      %v3304 = vpop.permute.xlu0 %3303
      %3305 = vrot.lane.b32.xlu0 %v3158, 96
      %v3306 = vpop.permute.xlu0 %3305
      %3307 = vrot.lane.b32.xlu0 %v3159, 96
      %v3308 = vpop.permute.xlu0 %3307
      %3309 = vrot.lane.b32.xlu0 %v3160, 96
      %v3310 = vpop.permute.xlu0 %3309
      %3311 = vrot.lane.b32.xlu0 %v3161, 96
      %v3312 = vpop.permute.xlu0 %3311
      %3313 = vrot.lane.b32.xlu0 %v3162, 96
      %v3314 = vpop.permute.xlu0 %3313
      %3315 = vrot.lane.b32.xlu0 %v3163, 96
      %v3316 = vpop.permute.xlu0 %3315
      %3317 = vrot.lane.b32.xlu0 %v3164, 96
      %v3318 = vpop.permute.xlu0 %3317
      %3319 = vrot.lane.b32.xlu0 %v3165, 96
      %v3320 = vpop.permute.xlu0 %3319
      %3321 = vrot.lane.b32.xlu0 %v3166, 96
      %v3322 = vpop.permute.xlu0 %3321
      %3323 = vrot.lane.b32.xlu0 %v3167, 96
      %v3324 = vpop.permute.xlu0 %3323
      %3325 = vrot.lane.b32.xlu0 %v3168, 96
      %v3326 = vpop.permute.xlu0 %3325
      %3327 = vrot.lane.b32.xlu0 %v3169, 96
      %v3328 = vpop.permute.xlu0 %3327
      %3329 = vrot.lane.b32.xlu0 %v3170, 96
      %v3330 = vpop.permute.xlu0 %3329
      %3331 = vrot.lane.b32.xlu0 %v3171, 96
      %v3332 = vpop.permute.xlu0 %3331
      %3333 = vrot.lane.b32.xlu0 %v3172, 96
      %v3334 = vpop.permute.xlu0 %3333
      %3335 = vrot.lane.b32.xlu0 %v3173, 96
      %v3336 = vpop.permute.xlu0 %3335
      %3337 = vrot.lane.b32.xlu0 %v3174, 96
      %v3338 = vpop.permute.xlu0 %3337
      %3339 = vrot.lane.b32.xlu0 %v3175, 96
      %v3340 = vpop.permute.xlu0 %3339
      %3341 = vrot.lane.b32.xlu0 %v3176, 96
      %v3342 = vpop.permute.xlu0 %3341
      %3343 = vrot.lane.b32.xlu0 %v3177, 96
      %v3344 = vpop.permute.xlu0 %3343
      %3345 = vrot.lane.b32.xlu0 %v3178, 96
      %v3346 = vpop.permute.xlu0 %3345
      %3347 = vrot.lane.b32.xlu0 %v3179, 96
      %v3348 = vpop.permute.xlu0 %3347
      %3349 = vrot.lane.b32.xlu0 %v3180, 96
      %v3350 = vpop.permute.xlu0 %3349
      %3351 = vrot.lane.b32.xlu0 %v3181, 96
      %v3352 = vpop.permute.xlu0 %3351
      %3353 = vrot.lane.b32.xlu0 %v3182, 96
      %v3354 = vpop.permute.xlu0 %3353
      %3355 = vrot.lane.b32.xlu0 %v3183, 96
      %v3356 = vpop.permute.xlu0 %3355
      %3357 = vrot.lane.b32.xlu0 %v3184, 96
      %v3358 = vpop.permute.xlu0 %3357
      %3359 = vrot.lane.b32.xlu0 %v3185, 96
      %v3360 = vpop.permute.xlu0 %3359
      %3361 = vrot.lane.b32.xlu0 %v3186, 96
      %v3362 = vpop.permute.xlu0 %3361
      %3363 = vrot.lane.b32.xlu0 %v3187, 96
      %v3364 = vpop.permute.xlu0 %3363
      %3365 = vrot.lane.b32.xlu0 %v3188, 96
      %v3366 = vpop.permute.xlu0 %3365
      %3367 = vrot.lane.b32.xlu0 %v3297, 96
      %v3368 = vpop.permute.xlu0 %3367
      %3369 = vrot.lane.b32.xlu0 %v3298, 96
      %v3370 = vpop.permute.xlu0 %3369
      %v3371 = vadd.f32 %v3261, %v3300
      %v3372 = vadd.f32 %v3262, %v3302
      %v3373 = vadd.f32 %v3263, %v3304
      %v3374 = vadd.f32 %v3264, %v3306
      %v3375 = vadd.f32 %v3265, %v3308
      %v3376 = vadd.f32 %v3266, %v3310
      %v3377 = vadd.f32 %v3267, %v3312
      %v3378 = vadd.f32 %v3268, %v3314
      %v3379 = vadd.f32 %v3269, %v3316
      %v3380 = vadd.f32 %v3270, %v3318
      %v3381 = vadd.f32 %v3271, %v3320
      %v3382 = vadd.f32 %v3272, %v3322
      %v3383 = vadd.f32 %v3273, %v3324
      %v3384 = vadd.f32 %v3274, %v3326
      %v3385 = vadd.f32 %v3275, %v3328
      %v3386 = vadd.f32 %v3276, %v3330
      %v3387 = vadd.f32 %v3277, %v3332
      %v3388 = vadd.f32 %v3278, %v3334
      %v3389 = vadd.f32 %v3279, %v3336
      %v3390 = vadd.f32 %v3280, %v3338
      %v3391 = vadd.f32 %v3281, %v3340
      %v3392 = vadd.f32 %v3282, %v3342
      %v3393 = vadd.f32 %v3283, %v3344
      %v3394 = vadd.f32 %v3284, %v3346
      %v3395 = vadd.f32 %v3285, %v3348
      %v3396 = vadd.f32 %v3286, %v3350
      %v3397 = vadd.f32 %v3287, %v3352
      %v3398 = vadd.f32 %v3288, %v3354
      %v3399 = vadd.f32 %v3289, %v3356
      %v3400 = vadd.f32 %v3290, %v3358
      %v3401 = vadd.f32 %v3291, %v3360
      %v3402 = vadd.f32 %v3292, %v3362
      %v3403 = vadd.f32 %v3293, %v3364
      %v3404 = vadd.f32 %v3294, %v3366
      %v3405 = vadd.f32 %v3295, %v3368
      %v3406 = vadd.f32 %v3296, %v3370
      %v3407 = vld [vmem:[#allocation2 + $0x13] sm:$0xff]
      %v3408 = vld [vmem:[#allocation2 + $0x1b] sm:$0xff]
      %v3409 = vld [vmem:[#allocation2 + $0x23] sm:$0xff]
      %v3410 = vld [vmem:[#allocation2 + $0x2b] sm:$0xff]
      %v3411 = vld [vmem:[#allocation2 + $0x33] sm:$0xff]
      %v3412 = vld [vmem:[#allocation2 + $0x3b] sm:$0xff]
      %v3413 = vld [vmem:[#allocation2 + $0x43] sm:$0xff]
      %v3414 = vld [vmem:[#allocation2 + $0x4b] sm:$0xff]
      %v3415 = vld [vmem:[#allocation2 + $0x53] sm:$0xff]
      %v3416 = vld [vmem:[#allocation2 + $0x5b] sm:$0xff]
      %v3417 = vld [vmem:[#allocation2 + $0x63] sm:$0xff]
      %v3418 = vld [vmem:[#allocation2 + $0x6b] sm:$0xff]
      %v3419 = vld [vmem:[#allocation2 + $0x73] sm:$0xff]
      %v3420 = vld [vmem:[#allocation2 + $0x7b] sm:$0xff]
      %v3421 = vld [vmem:[#allocation2 + $0x83] sm:$0xff]
      %v3422 = vld [vmem:[#allocation2 + $0x8b] sm:$0xff]
      %v3423 = vld [vmem:[#allocation2 + $0x93] sm:$0xff]
      %v3424 = vld [vmem:[#allocation2 + $0x9b] sm:$0xff]
      %v3425 = vld [vmem:[#allocation2 + $0xa3] sm:$0xff]
      %v3426 = vld [vmem:[#allocation2 + $0xab] sm:$0xff]
      %v3427 = vld [vmem:[#allocation2 + $0xb3] sm:$0xff]
      %v3428 = vld [vmem:[#allocation2 + $0xbb] sm:$0xff]
      %v3429 = vld [vmem:[#allocation2 + $0xc3] sm:$0xff]
      %v3430 = vld [vmem:[#allocation2 + $0xcb] sm:$0xff]
      %v3431 = vld [vmem:[#allocation2 + $0xd3] sm:$0xff]
      %v3432 = vld [vmem:[#allocation2 + $0xdb] sm:$0xff]
      %v3433 = vld [vmem:[#allocation2 + $0xe3] sm:$0xff]
      %v3434 = vld [vmem:[#allocation2 + $0xeb] sm:$0xff]
      %v3435 = vld [vmem:[#allocation2 + $0xf3] sm:$0xff]
      %v3436 = vld [vmem:[#allocation2 + $0xfb] sm:$0xff]
      %v3437 = vld [vmem:[#allocation2 + $0x103] sm:$0xff]
      %v3438 = vld [vmem:[#allocation2 + $0x10b] sm:$0xff]
      %v3439 = vld [vmem:[#allocation2 + $0x113] sm:$0xff]
      %v3440 = vld [vmem:[#allocation2 + $0x11b] sm:$0xff]
      %v3441 = vld [vmem:[#allocation2 + $0x123] sm:$0xff]
      %v3442 = vld [vmem:[#allocation2 + $0x12b] sm:$0xff]
      %v3443 = vld [vmem:[#allocation2 + $0x14] sm:$0xff]
      %v3444 = vld [vmem:[#allocation2 + $0x1c] sm:$0xff]
      %v3445 = vld [vmem:[#allocation2 + $0x24] sm:$0xff]
      %v3446 = vld [vmem:[#allocation2 + $0x2c] sm:$0xff]
      %v3447 = vld [vmem:[#allocation2 + $0x34] sm:$0xff]
      %v3448 = vld [vmem:[#allocation2 + $0x3c] sm:$0xff]
      %v3449 = vld [vmem:[#allocation2 + $0x44] sm:$0xff]
      %v3450 = vld [vmem:[#allocation2 + $0x4c] sm:$0xff]
      %v3451 = vld [vmem:[#allocation2 + $0x54] sm:$0xff]
      %v3452 = vld [vmem:[#allocation2 + $0x5c] sm:$0xff]
      %v3453 = vld [vmem:[#allocation2 + $0x64] sm:$0xff]
      %v3454 = vld [vmem:[#allocation2 + $0x6c] sm:$0xff]
      %v3455 = vld [vmem:[#allocation2 + $0x74] sm:$0xff]
      %v3456 = vld [vmem:[#allocation2 + $0x7c] sm:$0xff]
      %v3457 = vld [vmem:[#allocation2 + $0x84] sm:$0xff]
      %v3458 = vld [vmem:[#allocation2 + $0x8c] sm:$0xff]
      %v3459 = vld [vmem:[#allocation2 + $0x94] sm:$0xff]
      %v3460 = vld [vmem:[#allocation2 + $0x9c] sm:$0xff]
      %v3461 = vld [vmem:[#allocation2 + $0xa4] sm:$0xff]
      %v3462 = vld [vmem:[#allocation2 + $0xac] sm:$0xff]
      %v3463 = vld [vmem:[#allocation2 + $0xb4] sm:$0xff]
      %v3464 = vld [vmem:[#allocation2 + $0xbc] sm:$0xff]
      %v3465 = vld [vmem:[#allocation2 + $0xc4] sm:$0xff]
      %v3466 = vld [vmem:[#allocation2 + $0xcc] sm:$0xff]
      %v3467 = vld [vmem:[#allocation2 + $0xd4] sm:$0xff]
      %v3468 = vld [vmem:[#allocation2 + $0xdc] sm:$0xff]
      %v3469 = vld [vmem:[#allocation2 + $0xe4] sm:$0xff]
      %v3470 = vld [vmem:[#allocation2 + $0xec] sm:$0xff]
      %v3471 = vld [vmem:[#allocation2 + $0xf4] sm:$0xff]
      %v3472 = vld [vmem:[#allocation2 + $0xfc] sm:$0xff]
      %v3473 = vld [vmem:[#allocation2 + $0x104] sm:$0xff]
      %v3474 = vld [vmem:[#allocation2 + $0x10c] sm:$0xff]
      %v3475 = vld [vmem:[#allocation2 + $0x114] sm:$0xff]
      %v3476 = vld [vmem:[#allocation2 + $0x11c] sm:$0xff]
      %v3477 = vld [vmem:[#allocation2 + $0x124] sm:$0xff]
      %v3478 = vld [vmem:[#allocation2 + $0x12c] sm:$0xff]
      %3479 = vrot.lane.b32.xlu0 %v3443, 32
      %v3480 = vpop.permute.xlu0 %3479
      %3481 = vrot.lane.b32.xlu0 %v3444, 32
      %v3482 = vpop.permute.xlu0 %3481
      %3483 = vrot.lane.b32.xlu0 %v3445, 32
      %v3484 = vpop.permute.xlu0 %3483
      %3485 = vrot.lane.b32.xlu0 %v3446, 32
      %v3486 = vpop.permute.xlu0 %3485
      %3487 = vrot.lane.b32.xlu0 %v3447, 32
      %v3488 = vpop.permute.xlu0 %3487
      %3489 = vrot.lane.b32.xlu0 %v3448, 32
      %v3490 = vpop.permute.xlu0 %3489
      %3491 = vrot.lane.b32.xlu0 %v3449, 32
      %v3492 = vpop.permute.xlu0 %3491
      %3493 = vrot.lane.b32.xlu0 %v3450, 32
      %v3494 = vpop.permute.xlu0 %3493
      %3495 = vrot.lane.b32.xlu0 %v3451, 32
      %v3496 = vpop.permute.xlu0 %3495
      %3497 = vrot.lane.b32.xlu0 %v3452, 32
      %v3498 = vpop.permute.xlu0 %3497
      %3499 = vrot.lane.b32.xlu0 %v3453, 32
      %v3500 = vpop.permute.xlu0 %3499
      %3501 = vrot.lane.b32.xlu0 %v3454, 32
      %v3502 = vpop.permute.xlu0 %3501
      %3503 = vrot.lane.b32.xlu0 %v3455, 32
      %v3504 = vpop.permute.xlu0 %3503
      %3505 = vrot.lane.b32.xlu0 %v3456, 32
      %v3506 = vpop.permute.xlu0 %3505
      %3507 = vrot.lane.b32.xlu0 %v3457, 32
      %v3508 = vpop.permute.xlu0 %3507
      %3509 = vrot.lane.b32.xlu0 %v3458, 32
      %v3510 = vpop.permute.xlu0 %3509
      %3511 = vrot.lane.b32.xlu0 %v3459, 32
      %v3512 = vpop.permute.xlu0 %3511
      %3513 = vrot.lane.b32.xlu0 %v3460, 32
      %v3514 = vpop.permute.xlu0 %3513
      %3515 = vrot.lane.b32.xlu0 %v3461, 32
      %v3516 = vpop.permute.xlu0 %3515
      %3517 = vrot.lane.b32.xlu0 %v3462, 32
      %v3518 = vpop.permute.xlu0 %3517
      %3519 = vrot.lane.b32.xlu0 %v3463, 32
      %v3520 = vpop.permute.xlu0 %3519
      %3521 = vrot.lane.b32.xlu0 %v3464, 32
      %v3522 = vpop.permute.xlu0 %3521
      %3523 = vrot.lane.b32.xlu0 %v3465, 32
      %v3524 = vpop.permute.xlu0 %3523
      %3525 = vrot.lane.b32.xlu0 %v3466, 32
      %v3526 = vpop.permute.xlu0 %3525
      %3527 = vrot.lane.b32.xlu0 %v3467, 32
      %v3528 = vpop.permute.xlu0 %3527
      %3529 = vrot.lane.b32.xlu0 %v3468, 32
      %v3530 = vpop.permute.xlu0 %3529
      %3531 = vrot.lane.b32.xlu0 %v3469, 32
      %v3532 = vpop.permute.xlu0 %3531
      %3533 = vrot.lane.b32.xlu0 %v3470, 32
      %v3534 = vpop.permute.xlu0 %3533
      %3535 = vrot.lane.b32.xlu0 %v3471, 32
      %v3536 = vpop.permute.xlu0 %3535
      %3537 = vrot.lane.b32.xlu0 %v3472, 32
      %v3538 = vpop.permute.xlu0 %3537
      %3539 = vrot.lane.b32.xlu0 %v3473, 32
      %v3540 = vpop.permute.xlu0 %3539
      %3541 = vrot.lane.b32.xlu0 %v3474, 32
      %v3542 = vpop.permute.xlu0 %3541
      %3543 = vrot.lane.b32.xlu0 %v3475, 32
      %v3544 = vpop.permute.xlu0 %3543
      %3545 = vrot.lane.b32.xlu0 %v3476, 32
      %v3546 = vpop.permute.xlu0 %3545
      %3547 = vrot.lane.b32.xlu0 %v3477, 32
      %v3548 = vpop.permute.xlu0 %3547
      %3549 = vrot.lane.b32.xlu0 %v3478, 32
      %v3550 = vpop.permute.xlu0 %3549
      %v3551 = vadd.f32 %v3407, %v3480
      %v3552 = vadd.f32 %v3408, %v3482
      %v3553 = vadd.f32 %v3409, %v3484
      %v3554 = vadd.f32 %v3410, %v3486
      %v3555 = vadd.f32 %v3411, %v3488
      %v3556 = vadd.f32 %v3412, %v3490
      %v3557 = vadd.f32 %v3413, %v3492
      %v3558 = vadd.f32 %v3414, %v3494
      %v3559 = vadd.f32 %v3415, %v3496
      %v3560 = vadd.f32 %v3416, %v3498
      %v3561 = vadd.f32 %v3417, %v3500
      %v3562 = vadd.f32 %v3418, %v3502
      %v3563 = vadd.f32 %v3419, %v3504
      %v3564 = vadd.f32 %v3420, %v3506
      %v3565 = vadd.f32 %v3421, %v3508
      %v3566 = vadd.f32 %v3422, %v3510
      %v3567 = vadd.f32 %v3423, %v3512
      %v3568 = vadd.f32 %v3424, %v3514
      %v3569 = vadd.f32 %v3425, %v3516
      %v3570 = vadd.f32 %v3426, %v3518
      %v3571 = vadd.f32 %v3427, %v3520
      %v3572 = vadd.f32 %v3428, %v3522
      %v3573 = vadd.f32 %v3429, %v3524
      %v3574 = vadd.f32 %v3430, %v3526
      %v3575 = vadd.f32 %v3431, %v3528
      %v3576 = vadd.f32 %v3432, %v3530
      %v3577 = vadd.f32 %v3433, %v3532
      %v3578 = vadd.f32 %v3434, %v3534
      %v3579 = vadd.f32 %v3435, %v3536
      %v3580 = vadd.f32 %v3436, %v3538
      %v3581 = vadd.f32 %v3437, %v3540
      %v3582 = vadd.f32 %v3438, %v3542
      %v3583 = vadd.f32 %v3439, %v3544
      %v3584 = vadd.f32 %v3440, %v3546
      %v3585 = vadd.f32 %v3441, %v3548
      %v3586 = vadd.f32 %v3442, %v3550
      %v3587 = vld [vmem:[#allocation2 + $0x134] sm:$0xff]
      %v3588 = vld [vmem:[#allocation2 + $0x13c] sm:$0xff]
      %3589 = vrot.lane.b32.xlu0 %v3445, 64
      %v3590 = vpop.permute.xlu0 %3589
      %3591 = vrot.lane.b32.xlu0 %v3446, 64
      %v3592 = vpop.permute.xlu0 %3591
      %3593 = vrot.lane.b32.xlu0 %v3447, 64
      %v3594 = vpop.permute.xlu0 %3593
      %3595 = vrot.lane.b32.xlu0 %v3448, 64
      %v3596 = vpop.permute.xlu0 %3595
      %3597 = vrot.lane.b32.xlu0 %v3449, 64
      %v3598 = vpop.permute.xlu0 %3597
      %3599 = vrot.lane.b32.xlu0 %v3450, 64
      %v3600 = vpop.permute.xlu0 %3599
      %3601 = vrot.lane.b32.xlu0 %v3451, 64
      %v3602 = vpop.permute.xlu0 %3601
      %3603 = vrot.lane.b32.xlu0 %v3452, 64
      %v3604 = vpop.permute.xlu0 %3603
      %3605 = vrot.lane.b32.xlu0 %v3453, 64
      %v3606 = vpop.permute.xlu0 %3605
      %3607 = vrot.lane.b32.xlu0 %v3454, 64
      %v3608 = vpop.permute.xlu0 %3607
      %3609 = vrot.lane.b32.xlu0 %v3455, 64
      %v3610 = vpop.permute.xlu0 %3609
      %3611 = vrot.lane.b32.xlu0 %v3456, 64
      %v3612 = vpop.permute.xlu0 %3611
      %3613 = vrot.lane.b32.xlu0 %v3457, 64
      %v3614 = vpop.permute.xlu0 %3613
      %3615 = vrot.lane.b32.xlu0 %v3458, 64
      %v3616 = vpop.permute.xlu0 %3615
      %3617 = vrot.lane.b32.xlu0 %v3459, 64
      %v3618 = vpop.permute.xlu0 %3617
      %3619 = vrot.lane.b32.xlu0 %v3460, 64
      %v3620 = vpop.permute.xlu0 %3619
      %3621 = vrot.lane.b32.xlu0 %v3461, 64
      %v3622 = vpop.permute.xlu0 %3621
      %3623 = vrot.lane.b32.xlu0 %v3462, 64
      %v3624 = vpop.permute.xlu0 %3623
      %3625 = vrot.lane.b32.xlu0 %v3463, 64
      %v3626 = vpop.permute.xlu0 %3625
      %3627 = vrot.lane.b32.xlu0 %v3464, 64
      %v3628 = vpop.permute.xlu0 %3627
      %3629 = vrot.lane.b32.xlu0 %v3465, 64
      %v3630 = vpop.permute.xlu0 %3629
      %3631 = vrot.lane.b32.xlu0 %v3466, 64
      %v3632 = vpop.permute.xlu0 %3631
      %3633 = vrot.lane.b32.xlu0 %v3467, 64
      %v3634 = vpop.permute.xlu0 %3633
      %3635 = vrot.lane.b32.xlu0 %v3468, 64
      %v3636 = vpop.permute.xlu0 %3635
      %3637 = vrot.lane.b32.xlu0 %v3469, 64
      %v3638 = vpop.permute.xlu0 %3637
      %3639 = vrot.lane.b32.xlu0 %v3470, 64
      %v3640 = vpop.permute.xlu0 %3639
      %3641 = vrot.lane.b32.xlu0 %v3471, 64
      %v3642 = vpop.permute.xlu0 %3641
      %3643 = vrot.lane.b32.xlu0 %v3472, 64
      %v3644 = vpop.permute.xlu0 %3643
      %3645 = vrot.lane.b32.xlu0 %v3473, 64
      %v3646 = vpop.permute.xlu0 %3645
      %3647 = vrot.lane.b32.xlu0 %v3474, 64
      %v3648 = vpop.permute.xlu0 %3647
      %3649 = vrot.lane.b32.xlu0 %v3475, 64
      %v3650 = vpop.permute.xlu0 %3649
      %3651 = vrot.lane.b32.xlu0 %v3476, 64
      %v3652 = vpop.permute.xlu0 %3651
      %3653 = vrot.lane.b32.xlu0 %v3477, 64
      %v3654 = vpop.permute.xlu0 %3653
      %3655 = vrot.lane.b32.xlu0 %v3478, 64
      %v3656 = vpop.permute.xlu0 %3655
      %3657 = vrot.lane.b32.xlu0 %v3587, 64
      %v3658 = vpop.permute.xlu0 %3657
      %3659 = vrot.lane.b32.xlu0 %v3588, 64
      %v3660 = vpop.permute.xlu0 %3659
      %v3661 = vadd.f32 %v3551, %v3590
      %v3662 = vadd.f32 %v3552, %v3592
      %v3663 = vadd.f32 %v3553, %v3594
      %v3664 = vadd.f32 %v3554, %v3596
      %v3665 = vadd.f32 %v3555, %v3598
      %v3666 = vadd.f32 %v3556, %v3600
      %v3667 = vadd.f32 %v3557, %v3602
      %v3668 = vadd.f32 %v3558, %v3604
      %v3669 = vadd.f32 %v3559, %v3606
      %v3670 = vadd.f32 %v3560, %v3608
      %v3671 = vadd.f32 %v3561, %v3610
      %v3672 = vadd.f32 %v3562, %v3612
      %v3673 = vadd.f32 %v3563, %v3614
      %v3674 = vadd.f32 %v3564, %v3616
      %v3675 = vadd.f32 %v3565, %v3618
      %v3676 = vadd.f32 %v3566, %v3620
      %v3677 = vadd.f32 %v3567, %v3622
      %v3678 = vadd.f32 %v3568, %v3624
      %v3679 = vadd.f32 %v3569, %v3626
      %v3680 = vadd.f32 %v3570, %v3628
      %v3681 = vadd.f32 %v3571, %v3630
      %v3682 = vadd.f32 %v3572, %v3632
      %v3683 = vadd.f32 %v3573, %v3634
      %v3684 = vadd.f32 %v3574, %v3636
      %v3685 = vadd.f32 %v3575, %v3638
      %v3686 = vadd.f32 %v3576, %v3640
      %v3687 = vadd.f32 %v3577, %v3642
      %v3688 = vadd.f32 %v3578, %v3644
      %v3689 = vadd.f32 %v3579, %v3646
      %v3690 = vadd.f32 %v3580, %v3648
      %v3691 = vadd.f32 %v3581, %v3650
      %v3692 = vadd.f32 %v3582, %v3652
      %v3693 = vadd.f32 %v3583, %v3654
      %v3694 = vadd.f32 %v3584, %v3656
      %v3695 = vadd.f32 %v3585, %v3658
      %v3696 = vadd.f32 %v3586, %v3660
      %v3697 = vld [vmem:[#allocation2 + $0x25] sm:$0xff]
      %v3698 = vld [vmem:[#allocation2 + $0x2d] sm:$0xff]
      %v3699 = vld [vmem:[#allocation2 + $0x35] sm:$0xff]
      %v3700 = vld [vmem:[#allocation2 + $0x3d] sm:$0xff]
      %v3701 = vld [vmem:[#allocation2 + $0x45] sm:$0xff]
      %v3702 = vld [vmem:[#allocation2 + $0x4d] sm:$0xff]
      %v3703 = vld [vmem:[#allocation2 + $0x55] sm:$0xff]
      %v3704 = vld [vmem:[#allocation2 + $0x5d] sm:$0xff]
      %v3705 = vld [vmem:[#allocation2 + $0x65] sm:$0xff]
      %v3706 = vld [vmem:[#allocation2 + $0x6d] sm:$0xff]
      %v3707 = vld [vmem:[#allocation2 + $0x75] sm:$0xff]
      %v3708 = vld [vmem:[#allocation2 + $0x7d] sm:$0xff]
      %v3709 = vld [vmem:[#allocation2 + $0x85] sm:$0xff]
      %v3710 = vld [vmem:[#allocation2 + $0x8d] sm:$0xff]
      %v3711 = vld [vmem:[#allocation2 + $0x95] sm:$0xff]
      %v3712 = vld [vmem:[#allocation2 + $0x9d] sm:$0xff]
      %v3713 = vld [vmem:[#allocation2 + $0xa5] sm:$0xff]
      %v3714 = vld [vmem:[#allocation2 + $0xad] sm:$0xff]
      %v3715 = vld [vmem:[#allocation2 + $0xb5] sm:$0xff]
      %v3716 = vld [vmem:[#allocation2 + $0xbd] sm:$0xff]
      %v3717 = vld [vmem:[#allocation2 + $0xc5] sm:$0xff]
      %v3718 = vld [vmem:[#allocation2 + $0xcd] sm:$0xff]
      %v3719 = vld [vmem:[#allocation2 + $0xd5] sm:$0xff]
      %v3720 = vld [vmem:[#allocation2 + $0xdd] sm:$0xff]
      %v3721 = vld [vmem:[#allocation2 + $0xe5] sm:$0xff]
      %v3722 = vld [vmem:[#allocation2 + $0xed] sm:$0xff]
      %v3723 = vld [vmem:[#allocation2 + $0xf5] sm:$0xff]
      %v3724 = vld [vmem:[#allocation2 + $0xfd] sm:$0xff]
      %v3725 = vld [vmem:[#allocation2 + $0x105] sm:$0xff]
      %v3726 = vld [vmem:[#allocation2 + $0x10d] sm:$0xff]
      %v3727 = vld [vmem:[#allocation2 + $0x115] sm:$0xff]
      %v3728 = vld [vmem:[#allocation2 + $0x11d] sm:$0xff]
      %v3729 = vld [vmem:[#allocation2 + $0x125] sm:$0xff]
      %v3730 = vld [vmem:[#allocation2 + $0x12d] sm:$0xff]
      %v3731 = vld [vmem:[#allocation2 + $0x135] sm:$0xff]
      %v3732 = vld [vmem:[#allocation2 + $0x13d] sm:$0xff]
      %3733 = vrot.lane.b32.xlu0 %v3697, 96
      %v3734 = vpop.permute.xlu0 %3733
      %3735 = vrot.lane.b32.xlu0 %v3698, 96
      %v3736 = vpop.permute.xlu0 %3735
      %3737 = vrot.lane.b32.xlu0 %v3699, 96
      %v3738 = vpop.permute.xlu0 %3737
      %3739 = vrot.lane.b32.xlu0 %v3700, 96
      %v3740 = vpop.permute.xlu0 %3739
      %3741 = vrot.lane.b32.xlu0 %v3701, 96
      %v3742 = vpop.permute.xlu0 %3741
      %3743 = vrot.lane.b32.xlu0 %v3702, 96
      %v3744 = vpop.permute.xlu0 %3743
      %3745 = vrot.lane.b32.xlu0 %v3703, 96
      %v3746 = vpop.permute.xlu0 %3745
      %3747 = vrot.lane.b32.xlu0 %v3704, 96
      %v3748 = vpop.permute.xlu0 %3747
      %3749 = vrot.lane.b32.xlu0 %v3705, 96
      %v3750 = vpop.permute.xlu0 %3749
      %3751 = vrot.lane.b32.xlu0 %v3706, 96
      %v3752 = vpop.permute.xlu0 %3751
      %3753 = vrot.lane.b32.xlu0 %v3707, 96
      %v3754 = vpop.permute.xlu0 %3753
      %3755 = vrot.lane.b32.xlu0 %v3708, 96
      %v3756 = vpop.permute.xlu0 %3755
      %3757 = vrot.lane.b32.xlu0 %v3709, 96
      %v3758 = vpop.permute.xlu0 %3757
      %3759 = vrot.lane.b32.xlu0 %v3710, 96
      %v3760 = vpop.permute.xlu0 %3759
      %3761 = vrot.lane.b32.xlu0 %v3711, 96
      %v3762 = vpop.permute.xlu0 %3761
      %3763 = vrot.lane.b32.xlu0 %v3712, 96
      %v3764 = vpop.permute.xlu0 %3763
      %3765 = vrot.lane.b32.xlu0 %v3713, 96
      %v3766 = vpop.permute.xlu0 %3765
      %3767 = vrot.lane.b32.xlu0 %v3714, 96
      %v3768 = vpop.permute.xlu0 %3767
      %3769 = vrot.lane.b32.xlu0 %v3715, 96
      %v3770 = vpop.permute.xlu0 %3769
      %3771 = vrot.lane.b32.xlu0 %v3716, 96
      %v3772 = vpop.permute.xlu0 %3771
      %3773 = vrot.lane.b32.xlu0 %v3717, 96
      %v3774 = vpop.permute.xlu0 %3773
      %3775 = vrot.lane.b32.xlu0 %v3718, 96
      %v3776 = vpop.permute.xlu0 %3775
      %3777 = vrot.lane.b32.xlu0 %v3719, 96
      %v3778 = vpop.permute.xlu0 %3777
      %3779 = vrot.lane.b32.xlu0 %v3720, 96
      %v3780 = vpop.permute.xlu0 %3779
      %3781 = vrot.lane.b32.xlu0 %v3721, 96
      %v3782 = vpop.permute.xlu0 %3781
      %3783 = vrot.lane.b32.xlu0 %v3722, 96
      %v3784 = vpop.permute.xlu0 %3783
      %3785 = vrot.lane.b32.xlu0 %v3723, 96
      %v3786 = vpop.permute.xlu0 %3785
      %3787 = vrot.lane.b32.xlu0 %v3724, 96
      %v3788 = vpop.permute.xlu0 %3787
      %3789 = vrot.lane.b32.xlu0 %v3725, 96
      %v3790 = vpop.permute.xlu0 %3789
      %3791 = vrot.lane.b32.xlu0 %v3726, 96
      %v3792 = vpop.permute.xlu0 %3791
      %3793 = vrot.lane.b32.xlu0 %v3727, 96
      %v3794 = vpop.permute.xlu0 %3793
      %3795 = vrot.lane.b32.xlu0 %v3728, 96
      %v3796 = vpop.permute.xlu0 %3795
      %3797 = vrot.lane.b32.xlu0 %v3729, 96
      %v3798 = vpop.permute.xlu0 %3797
      %3799 = vrot.lane.b32.xlu0 %v3730, 96
      %v3800 = vpop.permute.xlu0 %3799
      %3801 = vrot.lane.b32.xlu0 %v3731, 96
      %v3802 = vpop.permute.xlu0 %3801
      %3803 = vrot.lane.b32.xlu0 %v3732, 96
      %v3804 = vpop.permute.xlu0 %3803
      %v3805 = vadd.f32 %v3661, %v3734
      %v3806 = vadd.f32 %v3662, %v3736
      %v3807 = vadd.f32 %v3663, %v3738
      %v3808 = vadd.f32 %v3664, %v3740
      %v3809 = vadd.f32 %v3665, %v3742
      %v3810 = vadd.f32 %v3666, %v3744
      %v3811 = vadd.f32 %v3667, %v3746
      %v3812 = vadd.f32 %v3668, %v3748
      %v3813 = vadd.f32 %v3669, %v3750
      %v3814 = vadd.f32 %v3670, %v3752
      %v3815 = vadd.f32 %v3671, %v3754
      %v3816 = vadd.f32 %v3672, %v3756
      %v3817 = vadd.f32 %v3673, %v3758
      %v3818 = vadd.f32 %v3674, %v3760
      %v3819 = vadd.f32 %v3675, %v3762
      %v3820 = vadd.f32 %v3676, %v3764
      %v3821 = vadd.f32 %v3677, %v3766
      %v3822 = vadd.f32 %v3678, %v3768
      %v3823 = vadd.f32 %v3679, %v3770
      %v3824 = vadd.f32 %v3680, %v3772
      %v3825 = vadd.f32 %v3681, %v3774
      %v3826 = vadd.f32 %v3682, %v3776
      %v3827 = vadd.f32 %v3683, %v3778
      %v3828 = vadd.f32 %v3684, %v3780
      %v3829 = vadd.f32 %v3685, %v3782
      %v3830 = vadd.f32 %v3686, %v3784
      %v3831 = vadd.f32 %v3687, %v3786
      %v3832 = vadd.f32 %v3688, %v3788
      %v3833 = vadd.f32 %v3689, %v3790
      %v3834 = vadd.f32 %v3690, %v3792
      %v3835 = vadd.f32 %v3691, %v3794
      %v3836 = vadd.f32 %v3692, %v3796
      %v3837 = vadd.f32 %v3693, %v3798
      %v3838 = vadd.f32 %v3694, %v3800
      %v3839 = vadd.f32 %v3695, %v3802
      %v3840 = vadd.f32 %v3696, %v3804
      %v3841 = vld [vmem:[#allocation2 + $0x26] sm:$0xff]
      %v3842 = vld [vmem:[#allocation2 + $0x2e] sm:$0xff]
      %v3843 = vld [vmem:[#allocation2 + $0x36] sm:$0xff]
      %v3844 = vld [vmem:[#allocation2 + $0x3e] sm:$0xff]
      %v3845 = vld [vmem:[#allocation2 + $0x46] sm:$0xff]
      %v3846 = vld [vmem:[#allocation2 + $0x4e] sm:$0xff]
      %v3847 = vld [vmem:[#allocation2 + $0x56] sm:$0xff]
      %v3848 = vld [vmem:[#allocation2 + $0x5e] sm:$0xff]
      %v3849 = vld [vmem:[#allocation2 + $0x66] sm:$0xff]
      %v3850 = vld [vmem:[#allocation2 + $0x6e] sm:$0xff]
      %v3851 = vld [vmem:[#allocation2 + $0x76] sm:$0xff]
      %v3852 = vld [vmem:[#allocation2 + $0x7e] sm:$0xff]
      %v3853 = vld [vmem:[#allocation2 + $0x86] sm:$0xff]
      %v3854 = vld [vmem:[#allocation2 + $0x8e] sm:$0xff]
      %v3855 = vld [vmem:[#allocation2 + $0x96] sm:$0xff]
      %v3856 = vld [vmem:[#allocation2 + $0x9e] sm:$0xff]
      %v3857 = vld [vmem:[#allocation2 + $0xa6] sm:$0xff]
      %v3858 = vld [vmem:[#allocation2 + $0xae] sm:$0xff]
      %v3859 = vld [vmem:[#allocation2 + $0xb6] sm:$0xff]
      %v3860 = vld [vmem:[#allocation2 + $0xbe] sm:$0xff]
      %v3861 = vld [vmem:[#allocation2 + $0xc6] sm:$0xff]
      %v3862 = vld [vmem:[#allocation2 + $0xce] sm:$0xff]
      %v3863 = vld [vmem:[#allocation2 + $0xd6] sm:$0xff]
      %v3864 = vld [vmem:[#allocation2 + $0xde] sm:$0xff]
      %v3865 = vld [vmem:[#allocation2 + $0xe6] sm:$0xff]
      %v3866 = vld [vmem:[#allocation2 + $0xee] sm:$0xff]
      %v3867 = vld [vmem:[#allocation2 + $0xf6] sm:$0xff]
      %v3868 = vld [vmem:[#allocation2 + $0xfe] sm:$0xff]
      %v3869 = vld [vmem:[#allocation2 + $0x106] sm:$0xff]
      %v3870 = vld [vmem:[#allocation2 + $0x10e] sm:$0xff]
      %v3871 = vld [vmem:[#allocation2 + $0x116] sm:$0xff]
      %v3872 = vld [vmem:[#allocation2 + $0x11e] sm:$0xff]
      %v3873 = vld [vmem:[#allocation2 + $0x126] sm:$0xff]
      %v3874 = vld [vmem:[#allocation2 + $0x12e] sm:$0xff]
      %v3875 = vld [vmem:[#allocation2 + $0x136] sm:$0xff]
      %v3876 = vld [vmem:[#allocation2 + $0x13e] sm:$0xff]
      %v3877 = vpack.c.bf16 %v3372, %v3371
      %v3878 = vpack.c.bf16 %v3806, %v3805
      %v3879 = vpack.c.bf16 %v3842, %v3841
      %v3880 = vpack.c.bf16 %v3374, %v3373
      %v3881 = vpack.c.bf16 %v3808, %v3807
      %v3882 = vpack.c.bf16 %v3844, %v3843
      %v3883 = vpack.c.bf16 %v3376, %v3375
      %v3884 = vpack.c.bf16 %v3810, %v3809
      %v3885 = vpack.c.bf16 %v3846, %v3845
      %v3886 = vpack.c.bf16 %v3378, %v3377
      %v3887 = vpack.c.bf16 %v3812, %v3811
      %v3888 = vpack.c.bf16 %v3848, %v3847
      %v3889 = vpack.c.bf16 %v3380, %v3379
      %v3890 = vpack.c.bf16 %v3814, %v3813
      %v3891 = vpack.c.bf16 %v3850, %v3849
      %v3892 = vpack.c.bf16 %v3382, %v3381
      %v3893 = vpack.c.bf16 %v3816, %v3815
      %v3894 = vpack.c.bf16 %v3852, %v3851
      %v3895 = vpack.c.bf16 %v3384, %v3383
      %v3896 = vpack.c.bf16 %v3818, %v3817
      %v3897 = vpack.c.bf16 %v3854, %v3853
      %v3898 = vpack.c.bf16 %v3386, %v3385
      %v3899 = vpack.c.bf16 %v3820, %v3819
      %v3900 = vpack.c.bf16 %v3856, %v3855
      %v3901 = vpack.c.bf16 %v3388, %v3387
      %v3902 = vpack.c.bf16 %v3822, %v3821
      %v3903 = vpack.c.bf16 %v3858, %v3857
      %v3904 = vpack.c.bf16 %v3390, %v3389
      %v3905 = vpack.c.bf16 %v3824, %v3823
      %v3906 = vpack.c.bf16 %v3860, %v3859
      %v3907 = vpack.c.bf16 %v3392, %v3391
      %v3908 = vpack.c.bf16 %v3826, %v3825
      %v3909 = vpack.c.bf16 %v3862, %v3861
      %v3910 = vpack.c.bf16 %v3394, %v3393
      %v3911 = vpack.c.bf16 %v3828, %v3827
      %v3912 = vpack.c.bf16 %v3864, %v3863
      %v3913 = vpack.c.bf16 %v3396, %v3395
      %v3914 = vpack.c.bf16 %v3830, %v3829
      %v3915 = vpack.c.bf16 %v3866, %v3865
      %v3916 = vpack.c.bf16 %v3398, %v3397
      %v3917 = vpack.c.bf16 %v3832, %v3831
      %v3918 = vpack.c.bf16 %v3868, %v3867
      %v3919 = vpack.c.bf16 %v3400, %v3399
      %v3920 = vpack.c.bf16 %v3834, %v3833
      %v3921 = vpack.c.bf16 %v3870, %v3869
      %v3922 = vpack.c.bf16 %v3402, %v3401
      %v3923 = vpack.c.bf16 %v3836, %v3835
      %v3924 = vpack.c.bf16 %v3872, %v3871
      %v3925 = vpack.c.bf16 %v3404, %v3403
      %v3926 = vpack.c.bf16 %v3838, %v3837
      %v3927 = vpack.c.bf16 %v3874, %v3873
      %v3928 = vpack.c.bf16 %v3406, %v3405
      %v3929 = vpack.c.bf16 %v3840, %v3839
      %v3930 = vpack.c.bf16 %v3876, %v3875
      %v3931 = vld [vmem:[%s3] sm:$0xf]
      %v3932 = vld [vmem:[%s3 + $0x4] sm:$0xf]
      %v3933 = vld [vmem:[%s3 + $0x8] sm:$0xf]
      %v3934 = vld [vmem:[%s3 + $0xc] sm:$0xf]
      %v3935 = vld [vmem:[%s3 + $0x10] sm:$0xf]
      %v3936 = vld [vmem:[%s3 + $0x14] sm:$0xf]
      %v3937 = vld [vmem:[%s3 + $0x18] sm:$0xf]
      %v3938 = vld [vmem:[%s3 + $0x1c] sm:$0xf]
      %v3939 = vld [vmem:[%s3 + $0x20] sm:$0xf]
      %v3940 = vld [vmem:[%s3 + $0x24] sm:$0xf]
      %v3941 = vld [vmem:[%s3 + $0x28] sm:$0xf]
      %v3942 = vld [vmem:[%s3 + $0x2c] sm:$0xf]
      %v3943 = vld [vmem:[%s3 + $0x30] sm:$0xf]
      %v3944 = vld [vmem:[%s3 + $0x34] sm:$0xf]
      %v3945 = vld [vmem:[%s3 + $0x38] sm:$0xf]
      %v3946 = vld [vmem:[%s3 + $0x3c] sm:$0xf]
      %v3947 = vld [vmem:[%s3 + $0x40] sm:$0xf]
      %v3948 = vld [vmem:[%s3 + $0x44] sm:$0xf]
      %v3949 = vld [vmem:[%s3 + $0x48] sm:$0xf]
      %v3950 = vld [vmem:[%s3 + $0x4c] sm:$0xf]
      %v3951 = vld [vmem:[%s3 + $0x50] sm:$0xf]
      %v3952 = vld [vmem:[%s3 + $0x54] sm:$0xf]
      %v3953 = vld [vmem:[%s3 + $0x58] sm:$0xf]
      %v3954 = vld [vmem:[%s3 + $0x5c] sm:$0xf]
      %v3955 = vld [vmem:[%s3 + $0x60] sm:$0xf]
      %v3956 = vld [vmem:[%s3 + $0x64] sm:$0xf]
      %v3957 = vld [vmem:[%s3 + $0x68] sm:$0xf]
      %v3958 = vld [vmem:[%s3 + $0x6c] sm:$0xf]
      %v3959 = vld [vmem:[%s3 + $0x70] sm:$0xf]
      %v3960 = vld [vmem:[%s3 + $0x74] sm:$0xf]
      %v3961 = vld [vmem:[%s3 + $0x78] sm:$0xf]
      %v3962 = vld [vmem:[%s3 + $0x7c] sm:$0xf]
      %v3963 = vld [vmem:[%s3 + $0x80] sm:$0xf]
      %v3964 = vld [vmem:[%s3 + $0x84] sm:$0xf]
      %v3965 = vld [vmem:[%s3 + $0x88] sm:$0xf]
      %v3966 = vld [vmem:[%s3 + $0x8c] sm:$0xf]
      %v3967 = vld [vmem:[%s3 + $0x90] sm:$0xf]
      %v3968 = vld [vmem:[%s3 + $0x94] sm:$0xf]
      %v3969 = vld [vmem:[%s3 + $0x98] sm:$0xf]
      %v3970 = vld [vmem:[%s3 + $0x9c] sm:$0xf]
      %v3971 = vld [vmem:[%s3 + $0xa0] sm:$0xf]
      %v3972 = vld [vmem:[%s3 + $0xa4] sm:$0xf]
      %v3973 = vld [vmem:[%s3 + $0xa8] sm:$0xf]
      %v3974 = vld [vmem:[%s3 + $0xac] sm:$0xf]
      %v3975 = vld [vmem:[%s3 + $0xb0] sm:$0xf]
      %v3976 = vld [vmem:[%s3 + $0xb4] sm:$0xf]
      %v3977 = vld [vmem:[%s3 + $0xb8] sm:$0xf]
      %v3978 = vld [vmem:[%s3 + $0xbc] sm:$0xf]
      %v3979 = vld [vmem:[%s5 + $0x1] sm:$0x1]
      %v3980 = vlaneseq
      %v3981 = vshrl.u32 %v3980, 7
      %v3982 = vsub.s32 0, %v3981
      %v3983 = vrot.slane %v3979, %v3982
      %v4032 = vunpack.c.l.b16 %v3931
      %v4033 = vunpack.c.l.b16 %v3932
      %v4034 = vunpack.c.l.b16 %v3933
      %v4035 = vunpack.c.l.b16 %v3934
      %v4036 = vunpack.c.l.b16 %v3935
      %v4037 = vunpack.c.l.b16 %v3936
      %v4038 = vunpack.c.l.b16 %v3937
      %v4039 = vunpack.c.l.b16 %v3938
      %v4040 = vunpack.c.l.b16 %v3939
      %v4041 = vunpack.c.l.b16 %v3940
      %v4042 = vunpack.c.l.b16 %v3941
      %v4043 = vunpack.c.l.b16 %v3942
      %v4044 = vunpack.c.l.b16 %v3943
      %v4045 = vunpack.c.l.b16 %v3944
      %v4046 = vunpack.c.l.b16 %v3945
      %v4047 = vunpack.c.l.b16 %v3946
      %v4048 = vunpack.c.l.b16 %v3947
      %v4049 = vunpack.c.l.b16 %v3948
      %v4050 = vunpack.c.l.b16 %v3949
      %v4051 = vunpack.c.l.b16 %v3950
      %v4052 = vunpack.c.l.b16 %v3951
      %v4053 = vunpack.c.l.b16 %v3952
      %v4054 = vunpack.c.l.b16 %v3953
      %v4055 = vunpack.c.l.b16 %v3954
      %v4056 = vunpack.c.l.b16 %v3955
      %v4057 = vunpack.c.l.b16 %v3956
      %v4058 = vunpack.c.l.b16 %v3957
      %v4059 = vunpack.c.l.b16 %v3958
      %v4060 = vunpack.c.l.b16 %v3959
      %v4061 = vunpack.c.l.b16 %v3960
      %v4062 = vunpack.c.l.b16 %v3961
      %v4063 = vunpack.c.l.b16 %v3962
      %v4064 = vunpack.c.l.b16 %v3963
      %v4065 = vunpack.c.l.b16 %v3964
      %v4066 = vunpack.c.l.b16 %v3965
      %v4067 = vunpack.c.l.b16 %v3966
      %v4068 = vunpack.c.l.b16 %v3967
      %v4069 = vunpack.c.l.b16 %v3968
      %v4070 = vunpack.c.l.b16 %v3969
      %v4071 = vunpack.c.l.b16 %v3970
      %v4072 = vunpack.c.l.b16 %v3971
      %v4073 = vunpack.c.l.b16 %v3972
      %v4074 = vunpack.c.l.b16 %v3973
      %v4075 = vunpack.c.l.b16 %v3974
      %v4076 = vunpack.c.l.b16 %v3975
      %v4077 = vunpack.c.l.b16 %v3976
      %v4078 = vunpack.c.l.b16 %v3977
      %v4079 = vunpack.c.l.b16 %v3978
      %v4080 = vpack.c.b16 %v4033, %v4032
      %v4081 = vpack.c.b16 %v4035, %v4034
      %v4082 = vpack.c.b16 %v4037, %v4036
      %v4083 = vpack.c.b16 %v4039, %v4038
      %v4084 = vpack.c.b16 %v4041, %v4040
      %v4085 = vpack.c.b16 %v4043, %v4042
      %v4086 = vpack.c.b16 %v4045, %v4044
      %v4087 = vpack.c.b16 %v4047, %v4046
      %v4088 = vpack.c.b16 %v4049, %v4048
      %v4089 = vpack.c.b16 %v4051, %v4050
      %v4090 = vpack.c.b16 %v4053, %v4052
      %v4091 = vpack.c.b16 %v4055, %v4054
      %v4092 = vpack.c.b16 %v4057, %v4056
      %v4093 = vpack.c.b16 %v4059, %v4058
      %v4094 = vpack.c.b16 %v4061, %v4060
      %v4095 = vpack.c.b16 %v4063, %v4062
      %v4096 = vpack.c.b16 %v4065, %v4064
      %v4097 = vpack.c.b16 %v4067, %v4066
      %v4098 = vpack.c.b16 %v4069, %v4068
      %v4099 = vpack.c.b16 %v4071, %v4070
      %v4100 = vpack.c.b16 %v4073, %v4072
      %v4101 = vpack.c.b16 %v4075, %v4074
      %v4102 = vpack.c.b16 %v4077, %v4076
      %v4103 = vpack.c.b16 %v4079, %v4078
      %4128 = vmatprep.subr.bf16.mxu0 0
      %4129 = vmatpush1.bf16.msra.mxu0 %v4080
      %4130 = vmatprep.subr.bf16.mxu0 0
      %4131 = vmatpush1.bf16.msra.mxu0 %v4081
      %4132 = vmatprep.subr.bf16.mxu0 0
      %4133 = vmatpush1.bf16.msra.mxu0 %v4082
      %4134 = vmatprep.subr.bf16.mxu0 0
      %4135 = vmatpush1.bf16.msra.mxu0 %v4083
      %4136 = vmatprep.subr.bf16.mxu0 0
      %4137 = vmatpush1.bf16.msra.mxu0 %v4084
      %4138 = vmatprep.subr.bf16.mxu0 0
      %4139 = vmatpush1.bf16.msra.mxu0 %v4085
      %4140 = vmatprep.subr.bf16.mxu0 0
      %4141 = vmatpush1.bf16.msra.mxu0 %v4086
      %4142 = vmatprep.subr.bf16.mxu0 0
      %4143 = vmatpush1.bf16.msra.mxu0 %v4087
      %4144 = vmatprep.subr.bf16.mxu0 0
      %4145 = vmatpush1.bf16.msra.mxu0 %v4088
      %4146 = vmatprep.subr.bf16.mxu0 0
      %4147 = vmatpush1.bf16.msra.mxu0 %v4089
      %4148 = vmatprep.subr.bf16.mxu0 0
      %4149 = vmatpush1.bf16.msra.mxu0 %v4090
      %4150 = vmatprep.subr.bf16.mxu0 0
      %4151 = vmatpush1.bf16.msra.mxu0 %v4091
      %4152 = vmatprep.subr.bf16.mxu0 0
      %4153 = vmatpush1.bf16.msra.mxu0 %v4092
      %4154 = vmatprep.subr.bf16.mxu0 0
      %4155 = vmatpush1.bf16.msra.mxu0 %v4093
      %4156 = vmatprep.subr.bf16.mxu0 0
      %4157 = vmatpush1.bf16.msra.mxu0 %v4094
      %4158 = vmatprep.subr.bf16.mxu0 0
      %4159 = vmatpush1.bf16.msra.mxu0 %v4095
      %4160 = vmatprep.mubr.bf16.mxu0 %v3878
      %4161 = vmatmul.mubr.bf16.gmra.mrb[0].mxu0 %v3877
      %v4162 = vpop.f32.mrb[0].mxu0
      %v4163 = vadd.f32 %v3983, %v4162
      %v4164 = vpop.f32.mrb[0].mxu0
      %v4165 = vpop.f32.mrb[0].mxu0
      %v4166 = vadd.f32 %v3983, %v4165
      %v4167 = vpop.f32.mrb[0].mxu0
      %4168 = vmatprep.mubr.bf16.mxu0 %v3881
      %4169 = vmatmul.mubr.bf16.gmra.mrb[0].mxu0 %v3880
      %v4170 = vpop.f32.mrb[0].mxu0
      %v4171 = vadd.f32 %v3983, %v4170
      %v4172 = vpop.f32.mrb[0].mxu0
      %v4173 = vpop.f32.mrb[0].mxu0
      %v4174 = vadd.f32 %v3983, %v4173
      %v4175 = vpop.f32.mrb[0].mxu0
      %4176 = vmatprep.mubr.bf16.mxu0 %v3884
      %4177 = vmatmul.mubr.bf16.gmra.mrb[0].mxu0 %v3883
      %v4178 = vpop.f32.mrb[0].mxu0
      %v4179 = vadd.f32 %v3983, %v4178
      %v4180 = vpop.f32.mrb[0].mxu0
      %v4181 = vpop.f32.mrb[0].mxu0
      %v4182 = vadd.f32 %v3983, %v4181
      %v4183 = vpop.f32.mrb[0].mxu0
      %4184 = vmatprep.mubr.bf16.mxu0 %v3887
      %4185 = vmatmul.mubr.bf16.gmra.mrb[0].mxu0 %v3886
      %v4186 = vpop.f32.mrb[0].mxu0
      %v4187 = vadd.f32 %v3983, %v4186
      %v4188 = vpop.f32.mrb[0].mxu0
      %v4189 = vpop.f32.mrb[0].mxu0
      %v4190 = vadd.f32 %v3983, %v4189
      %v4191 = vpop.f32.mrb[0].mxu0
      %4192 = vmatprep.mubr.bf16.mxu0 %v3890
      %4193 = vmatmul.mubr.bf16.gmra.mrb[0].mxu0 %v3889
      %v4194 = vpop.f32.mrb[0].mxu0
      %v4195 = vadd.f32 %v3983, %v4194
      %v4196 = vpop.f32.mrb[0].mxu0
      %v4197 = vpop.f32.mrb[0].mxu0
      %v4198 = vadd.f32 %v3983, %v4197
      %v4199 = vpop.f32.mrb[0].mxu0
      %4200 = vmatprep.mubr.bf16.mxu0 %v3893
      %4201 = vmatmul.mubr.bf16.gmra.mrb[0].mxu0 %v3892
      %v4202 = vpop.f32.mrb[0].mxu0
      %v4203 = vadd.f32 %v3983, %v4202
      %v4204 = vpop.f32.mrb[0].mxu0
      %v4205 = vpop.f32.mrb[0].mxu0
      %v4206 = vadd.f32 %v3983, %v4205
      %v4207 = vpop.f32.mrb[0].mxu0
      %4208 = vmatprep.mubr.bf16.mxu0 %v3896
      %4209 = vmatmul.mubr.bf16.gmra.mrb[0].mxu0 %v3895
      %v4210 = vpop.f32.mrb[0].mxu0
      %v4211 = vadd.f32 %v3983, %v4210
      %v4212 = vpop.f32.mrb[0].mxu0
      %v4213 = vpop.f32.mrb[0].mxu0
      %v4214 = vadd.f32 %v3983, %v4213
      %v4215 = vpop.f32.mrb[0].mxu0
      %4216 = vmatprep.mubr.bf16.mxu0 %v3899
      %4217 = vmatmul.mubr.bf16.gmra.mrb[0].mxu0 %v3898
      %v4218 = vpop.f32.mrb[0].mxu0
      %v4219 = vadd.f32 %v3983, %v4218
      %v4220 = vpop.f32.mrb[0].mxu0
      %v4221 = vpop.f32.mrb[0].mxu0
      %v4222 = vadd.f32 %v3983, %v4221
      %v4223 = vpop.f32.mrb[0].mxu0
      %4224 = vmatprep.mubr.bf16.mxu0 %v3902
      %4225 = vmatmul.mubr.bf16.gmra.mrb[0].mxu0 %v3901
      %v4226 = vpop.f32.mrb[0].mxu0
      %v4227 = vadd.f32 %v3983, %v4226
      %v4228 = vpop.f32.mrb[0].mxu0
      %v4229 = vpop.f32.mrb[0].mxu0
      %v4230 = vadd.f32 %v3983, %v4229
      %v4231 = vpop.f32.mrb[0].mxu0
      %4232 = vmatprep.mubr.bf16.mxu0 %v3905
      %4233 = vmatmul.mubr.bf16.gmra.mrb[0].mxu0 %v3904
      %v4234 = vpop.f32.mrb[0].mxu0
      %v4235 = vadd.f32 %v3983, %v4234
      %v4236 = vpop.f32.mrb[0].mxu0
      %v4237 = vpop.f32.mrb[0].mxu0
      %v4238 = vadd.f32 %v3983, %v4237
      %v4239 = vpop.f32.mrb[0].mxu0
      %4240 = vmatprep.mubr.bf16.mxu0 %v3908
      %4241 = vmatmul.mubr.bf16.gmra.mrb[0].mxu0 %v3907
      %v4242 = vpop.f32.mrb[0].mxu0
      %v4243 = vadd.f32 %v3983, %v4242
      %v4244 = vpop.f32.mrb[0].mxu0
      %v4245 = vpop.f32.mrb[0].mxu0
      %v4246 = vadd.f32 %v3983, %v4245
      %v4247 = vpop.f32.mrb[0].mxu0
      %4248 = vmatprep.mubr.bf16.mxu0 %v3911
      %4249 = vmatmul.mubr.bf16.gmra.mrb[0].mxu0 %v3910
      %v4250 = vpop.f32.mrb[0].mxu0
      %v4251 = vadd.f32 %v3983, %v4250
      %v4252 = vpop.f32.mrb[0].mxu0
      %v4253 = vpop.f32.mrb[0].mxu0
      %v4254 = vadd.f32 %v3983, %v4253
      %v4255 = vpop.f32.mrb[0].mxu0
      %4256 = vmatprep.mubr.bf16.mxu0 %v3914
      %4257 = vmatmul.mubr.bf16.gmra.mrb[0].mxu0 %v3913
      %v4258 = vpop.f32.mrb[0].mxu0
      %v4259 = vadd.f32 %v3983, %v4258
      %v4260 = vpop.f32.mrb[0].mxu0
      %v4261 = vpop.f32.mrb[0].mxu0
      %v4262 = vadd.f32 %v3983, %v4261
      %v4263 = vpop.f32.mrb[0].mxu0
      %4264 = vmatprep.mubr.bf16.mxu0 %v3917
      %4265 = vmatmul.mubr.bf16.gmra.mrb[0].mxu0 %v3916
      %v4266 = vpop.f32.mrb[0].mxu0
      %v4267 = vadd.f32 %v3983, %v4266
      %v4268 = vpop.f32.mrb[0].mxu0
      %v4269 = vpop.f32.mrb[0].mxu0
      %v4270 = vadd.f32 %v3983, %v4269
      %v4271 = vpop.f32.mrb[0].mxu0
      %4272 = vmatprep.mubr.bf16.mxu0 %v3920
      %4273 = vmatmul.mubr.bf16.gmra.mrb[0].mxu0 %v3919
      %v4274 = vpop.f32.mrb[0].mxu0
      %v4275 = vadd.f32 %v3983, %v4274
      %v4276 = vpop.f32.mrb[0].mxu0
      %v4277 = vpop.f32.mrb[0].mxu0
      %v4278 = vadd.f32 %v3983, %v4277
      %v4279 = vpop.f32.mrb[0].mxu0
      %4280 = vmatprep.mubr.bf16.mxu0 %v3923
      %4281 = vmatmul.mubr.bf16.gmra.mrb[0].mxu0 %v3922
      %v4282 = vpop.f32.mrb[0].mxu0
      %v4283 = vadd.f32 %v3983, %v4282
      %v4284 = vpop.f32.mrb[0].mxu0
      %v4285 = vpop.f32.mrb[0].mxu0
      %v4286 = vadd.f32 %v3983, %v4285
      %v4287 = vpop.f32.mrb[0].mxu0
      %4288 = vmatprep.mubr.bf16.mxu0 %v3926
      %4289 = vmatmul.mubr.bf16.gmra.mrb[0].mxu0 %v3925
      %v4290 = vpop.f32.mrb[0].mxu0
      %v4291 = vadd.f32 %v3983, %v4290
      %v4292 = vpop.f32.mrb[0].mxu0
      %v4293 = vpop.f32.mrb[0].mxu0
      %v4294 = vadd.f32 %v3983, %v4293
      %v4295 = vpop.f32.mrb[0].mxu0
      %4296 = vmatprep.mubr.bf16.mxu0 %v3929
      %4297 = vmatmul.mubr.bf16.gmra.mrb[0].mxu0 %v3928
      %v4298 = vpop.f32.mrb[0].mxu0
      %v4299 = vadd.f32 %v3983, %v4298
      %v4300 = vpop.f32.mrb[0].mxu0
      %v4301 = vpop.f32.mrb[0].mxu0
      %v4302 = vadd.f32 %v3983, %v4301
      %v4303 = vpop.f32.mrb[0].mxu0
      %4304 = vdwg.mxu0
      %4305 = vmatprep.subr.bf16.mxu0 0
      %4306 = vmatpush1.bf16.msra.mxu0 %v4096
      %4307 = vmatprep.subr.bf16.mxu0 0
      %4308 = vmatpush1.bf16.msra.mxu0 %v4097
      %4309 = vmatprep.subr.bf16.mxu0 0
      %4310 = vmatpush1.bf16.msra.mxu0 %v4098
      %4311 = vmatprep.subr.bf16.mxu0 0
      %4312 = vmatpush1.bf16.msra.mxu0 %v4099
      %4313 = vmatprep.subr.bf16.mxu0 0
      %4314 = vmatpush1.bf16.msra.mxu0 %v4100
      %4315 = vmatprep.subr.bf16.mxu0 0
      %4316 = vmatpush1.bf16.msra.mxu0 %v4101
      %4317 = vmatprep.subr.bf16.mxu0 0
      %4318 = vmatpush1.bf16.msra.mxu0 %v4102
      %4319 = vmatprep.subr.bf16.mxu0 0
      %4320 = vmatpush1.bf16.msra.mxu0 %v4103
      %4321 = vmatprep.subr.bf16.mxu0 0
      %4322 = vmatpush1.bf16.msra.mxu0 0
      %4323 = vmatprep.subr.bf16.mxu0 0
      %4324 = vmatpush1.bf16.msra.mxu0 0
      %4325 = vmatprep.subr.bf16.mxu0 0
      %4326 = vmatpush1.bf16.msra.mxu0 0
      %4327 = vmatprep.subr.bf16.mxu0 0
      %4328 = vmatpush1.bf16.msra.mxu0 0
      %4329 = vmatprep.subr.bf16.mxu0 0
      %4330 = vmatpush1.bf16.msra.mxu0 0
      %4331 = vmatprep.subr.bf16.mxu0 0
      %4332 = vmatpush1.bf16.msra.mxu0 0
      %4333 = vmatprep.subr.bf16.mxu0 0
      %4334 = vmatpush1.bf16.msra.mxu0 0
      %4335 = vmatprep.subr.bf16.mxu0 0
      %4336 = vmatpush1.bf16.msra.mxu0 0
      %4337 = vmatprep.mubr.bf16.mxu0 0
      %4338 = vmatmul.mubr.bf16.gmra.mrb[0].mxu0 %v3879
      %v4339 = vpop.f32.mrb[0].mxu0
      %v4340 = vadd.f32 %v4163, %v4339
      %v4341 = vpop.f32.mrb[0].mxu0
      %v4342 = vpop.f32.mrb[0].mxu0
      %v4343 = vadd.f32 %v4166, %v4342
      %v4344 = vpop.f32.mrb[0].mxu0
      %4345 = vmatprep.mubr.bf16.mxu0 0
      %4346 = vmatmul.mubr.bf16.gmra.mrb[0].mxu0 %v3882
      %v4347 = vpop.f32.mrb[0].mxu0
      %v4348 = vadd.f32 %v4171, %v4347
      %v4349 = vpop.f32.mrb[0].mxu0
      %v4350 = vpop.f32.mrb[0].mxu0
      %v4351 = vadd.f32 %v4174, %v4350
      %v4352 = vpop.f32.mrb[0].mxu0
      %4353 = vmatprep.mubr.bf16.mxu0 0
      %4354 = vmatmul.mubr.bf16.gmra.mrb[0].mxu0 %v3885
      %v4355 = vpop.f32.mrb[0].mxu0
      %v4356 = vadd.f32 %v4179, %v4355
      %v4357 = vpop.f32.mrb[0].mxu0
      %v4358 = vpop.f32.mrb[0].mxu0
      %v4359 = vadd.f32 %v4182, %v4358
      %v4360 = vpop.f32.mrb[0].mxu0
      %4361 = vmatprep.mubr.bf16.mxu0 0
      %4362 = vmatmul.mubr.bf16.gmra.mrb[0].mxu0 %v3888
      %v4363 = vpop.f32.mrb[0].mxu0
      %v4364 = vadd.f32 %v4187, %v4363
      %v4365 = vpop.f32.mrb[0].mxu0
      %v4366 = vpop.f32.mrb[0].mxu0
      %v4367 = vadd.f32 %v4190, %v4366
      %v4368 = vpop.f32.mrb[0].mxu0
      %4369 = vmatprep.mubr.bf16.mxu0 0
      %4370 = vmatmul.mubr.bf16.gmra.mrb[0].mxu0 %v3891
      %v4371 = vpop.f32.mrb[0].mxu0
      %v4372 = vadd.f32 %v4195, %v4371
      %v4373 = vpop.f32.mrb[0].mxu0
      %v4374 = vpop.f32.mrb[0].mxu0
      %v4375 = vadd.f32 %v4198, %v4374
      %v4376 = vpop.f32.mrb[0].mxu0
      %4377 = vmatprep.mubr.bf16.mxu0 0
      %4378 = vmatmul.mubr.bf16.gmra.mrb[0].mxu0 %v3894
      %v4379 = vpop.f32.mrb[0].mxu0
      %v4380 = vadd.f32 %v4203, %v4379
      %v4381 = vpop.f32.mrb[0].mxu0
      %v4382 = vpop.f32.mrb[0].mxu0
      %v4383 = vadd.f32 %v4206, %v4382
      %v4384 = vpop.f32.mrb[0].mxu0
      %4385 = vmatprep.mubr.bf16.mxu0 0
      %4386 = vmatmul.mubr.bf16.gmra.mrb[0].mxu0 %v3897
      %v4387 = vpop.f32.mrb[0].mxu0
      %v4388 = vadd.f32 %v4211, %v4387
      %v4389 = vpop.f32.mrb[0].mxu0
      %v4390 = vpop.f32.mrb[0].mxu0
      %v4391 = vadd.f32 %v4214, %v4390
      %v4392 = vpop.f32.mrb[0].mxu0
      %4393 = vmatprep.mubr.bf16.mxu0 0
      %4394 = vmatmul.mubr.bf16.gmra.mrb[0].mxu0 %v3900
      %v4395 = vpop.f32.mrb[0].mxu0
      %v4396 = vadd.f32 %v4219, %v4395
      %v4397 = vpop.f32.mrb[0].mxu0
      %v4398 = vpop.f32.mrb[0].mxu0
      %v4399 = vadd.f32 %v4222, %v4398
      %v4400 = vpop.f32.mrb[0].mxu0
      %4401 = vmatprep.mubr.bf16.mxu0 0
      %4402 = vmatmul.mubr.bf16.gmra.mrb[0].mxu0 %v3903
      %v4403 = vpop.f32.mrb[0].mxu0
      %v4404 = vadd.f32 %v4227, %v4403
      %v4405 = vpop.f32.mrb[0].mxu0
      %v4406 = vpop.f32.mrb[0].mxu0
      %v4407 = vadd.f32 %v4230, %v4406
      %v4408 = vpop.f32.mrb[0].mxu0
      %4409 = vmatprep.mubr.bf16.mxu0 0
      %4410 = vmatmul.mubr.bf16.gmra.mrb[0].mxu0 %v3906
      %v4411 = vpop.f32.mrb[0].mxu0
      %v4412 = vadd.f32 %v4235, %v4411
      %v4413 = vpop.f32.mrb[0].mxu0
      %v4414 = vpop.f32.mrb[0].mxu0
      %v4415 = vadd.f32 %v4238, %v4414
      %v4416 = vpop.f32.mrb[0].mxu0
      %4417 = vmatprep.mubr.bf16.mxu0 0
      %4418 = vmatmul.mubr.bf16.gmra.mrb[0].mxu0 %v3909
      %v4419 = vpop.f32.mrb[0].mxu0
      %v4420 = vadd.f32 %v4243, %v4419
      %v4421 = vpop.f32.mrb[0].mxu0
      %v4422 = vpop.f32.mrb[0].mxu0
      %v4423 = vadd.f32 %v4246, %v4422
      %v4424 = vpop.f32.mrb[0].mxu0
      %4425 = vmatprep.mubr.bf16.mxu0 0
      %4426 = vmatmul.mubr.bf16.gmra.mrb[0].mxu0 %v3912
      %v4427 = vpop.f32.mrb[0].mxu0
      %v4428 = vadd.f32 %v4251, %v4427
      %v4429 = vpop.f32.mrb[0].mxu0
      %v4430 = vpop.f32.mrb[0].mxu0
      %v4431 = vadd.f32 %v4254, %v4430
      %v4432 = vpop.f32.mrb[0].mxu0
      %4433 = vmatprep.mubr.bf16.mxu0 0
      %4434 = vmatmul.mubr.bf16.gmra.mrb[0].mxu0 %v3915
      %v4435 = vpop.f32.mrb[0].mxu0
      %v4436 = vadd.f32 %v4259, %v4435
      %v4437 = vpop.f32.mrb[0].mxu0
      %v4438 = vpop.f32.mrb[0].mxu0
      %v4439 = vadd.f32 %v4262, %v4438
      %v4440 = vpop.f32.mrb[0].mxu0
      %4441 = vmatprep.mubr.bf16.mxu0 0
      %4442 = vmatmul.mubr.bf16.gmra.mrb[0].mxu0 %v3918
      %v4443 = vpop.f32.mrb[0].mxu0
      %v4444 = vadd.f32 %v4267, %v4443
      %v4445 = vpop.f32.mrb[0].mxu0
      %v4446 = vpop.f32.mrb[0].mxu0
      %v4447 = vadd.f32 %v4270, %v4446
      %v4448 = vpop.f32.mrb[0].mxu0
      %4449 = vmatprep.mubr.bf16.mxu0 0
      %4450 = vmatmul.mubr.bf16.gmra.mrb[0].mxu0 %v3921
      %v4451 = vpop.f32.mrb[0].mxu0
      %v4452 = vadd.f32 %v4275, %v4451
      %v4453 = vpop.f32.mrb[0].mxu0
      %v4454 = vpop.f32.mrb[0].mxu0
      %v4455 = vadd.f32 %v4278, %v4454
      %v4456 = vpop.f32.mrb[0].mxu0
      %4457 = vmatprep.mubr.bf16.mxu0 0
      %4458 = vmatmul.mubr.bf16.gmra.mrb[0].mxu0 %v3924
      %v4459 = vpop.f32.mrb[0].mxu0
      %v4460 = vadd.f32 %v4283, %v4459
      %v4461 = vpop.f32.mrb[0].mxu0
      %v4462 = vpop.f32.mrb[0].mxu0
      %v4463 = vadd.f32 %v4286, %v4462
      %v4464 = vpop.f32.mrb[0].mxu0
      %4465 = vmatprep.mubr.bf16.mxu0 0
      %4466 = vmatmul.mubr.bf16.gmra.mrb[0].mxu0 %v3927
      %v4467 = vpop.f32.mrb[0].mxu0
      %v4468 = vadd.f32 %v4291, %v4467
      %v4469 = vpop.f32.mrb[0].mxu0
      %v4470 = vpop.f32.mrb[0].mxu0
      %v4471 = vadd.f32 %v4294, %v4470
      %v4472 = vpop.f32.mrb[0].mxu0
      %4473 = vmatprep.mubr.bf16.mxu0 0
      %4474 = vmatmul.mubr.bf16.gmra.mrb[0].mxu0 %v3930
      %v4475 = vpop.f32.mrb[0].mxu0
      %v4476 = vadd.f32 %v4299, %v4475
      %v4477 = vpop.f32.mrb[0].mxu0
      %v4478 = vpop.f32.mrb[0].mxu0
      %v4479 = vadd.f32 %v4302, %v4478
      %v4480 = vpop.f32.mrb[0].mxu0
      %4481 = vdwg.mxu0
      %v4482 = vmul.f32 %v4340, %v2238
      %v4483 = vmul.f32 %v4343, %v2243
      %v4484 = vmul.f32 %v4348, %v2248
      %v4485 = vmul.f32 %v4351, %v2253
      %v4486 = vmul.f32 %v4356, %v2258
      %v4487 = vmul.f32 %v4359, %v2263
      %v4488 = vmul.f32 %v4364, %v2268
      %v4489 = vmul.f32 %v4367, %v2273
      %v4490 = vmul.f32 %v4372, %v2278
      %v4491 = vmul.f32 %v4375, %v2283
      %v4492 = vmul.f32 %v4380, %v2288
      %v4493 = vmul.f32 %v4383, %v2293
      %v4494 = vmul.f32 %v4388, %v2298
      %v4495 = vmul.f32 %v4391, %v2303
      %v4496 = vmul.f32 %v4396, %v2308
      %v4497 = vmul.f32 %v4399, %v2313
      %v4498 = vmul.f32 %v4404, %v2318
      %v4499 = vmul.f32 %v4407, %v2323
      %v4500 = vmul.f32 %v4412, %v2328
      %v4501 = vmul.f32 %v4415, %v2333
      %v4502 = vmul.f32 %v4420, %v2338
      %v4503 = vmul.f32 %v4423, %v2343
      %v4504 = vmul.f32 %v4428, %v2348
      %v4505 = vmul.f32 %v4431, %v2353
      %v4506 = vmul.f32 %v4436, %v2358
      %v4507 = vmul.f32 %v4439, %v2363
      %v4508 = vmul.f32 %v4444, %v2368
      %v4509 = vmul.f32 %v4447, %v2373
      %v4510 = vmul.f32 %v4452, %v2378
      %v4511 = vmul.f32 %v4455, %v2383
      %v4512 = vmul.f32 %v4460, %v2388
      %v4513 = vmul.f32 %v4463, %v2393
      %v4514 = vmul.f32 %v4468, %v2398
      %v4515 = vmul.f32 %v4471, %v2403
      %v4516 = vmul.f32 %v4476, %v2408
      %v4517 = vmul.f32 %v4479, %v2413
      %v4518 = vadd.f32 %v4482, %v4483
      %v4519 = vadd.f32 %v4518, %v4484
      %v4520 = vadd.f32 %v4519, %v4485
      %v4521 = vadd.f32 %v4520, %v4486
      %v4522 = vadd.f32 %v4521, %v4487
      %v4523 = vadd.f32 %v4522, %v4488
      %v4524 = vadd.f32 %v4523, %v4489
      %v4525 = vadd.f32 %v4524, %v4490
      %v4526 = vadd.f32 %v4525, %v4491
      %v4527 = vadd.f32 %v4526, %v4492
      %v4528 = vadd.f32 %v4527, %v4493
      %v4529 = vadd.f32 %v4528, %v4494
      %v4530 = vadd.f32 %v4529, %v4495
      %v4531 = vadd.f32 %v4530, %v4496
      %v4532 = vadd.f32 %v4531, %v4497
      %v4533 = vadd.f32 %v4532, %v4498
      %v4534 = vadd.f32 %v4533, %v4499
      %v4535 = vadd.f32 %v4534, %v4500
      %v4536 = vadd.f32 %v4535, %v4501
      %v4537 = vadd.f32 %v4536, %v4502
      %v4538 = vadd.f32 %v4537, %v4503
      %v4539 = vadd.f32 %v4538, %v4504
      %v4540 = vadd.f32 %v4539, %v4505
      %v4541 = vadd.f32 %v4540, %v4506
      %v4542 = vadd.f32 %v4541, %v4507
      %v4543 = vadd.f32 %v4542, %v4508
      %v4544 = vadd.f32 %v4543, %v4509
      %v4545 = vadd.f32 %v4544, %v4510
      %v4546 = vadd.f32 %v4545, %v4511
      %v4547 = vadd.f32 %v4546, %v4512
      %v4548 = vadd.f32 %v4547, %v4513
      %v4549 = vadd.f32 %v4548, %v4514
      %v4550 = vadd.f32 %v4549, %v4515
      %v4551 = vadd.f32 %v4550, %v4516
      %v4552 = vadd.f32 %v4551, %v4517
      %v4553 = vrot.slane %v4552, 4
      %v4554 = vadd.f32 %v4552, %v4553
      %v4555 = vrot.slane %v4554, 2
      %v4556 = vadd.f32 %v4554, %v4555
      %v4557 = vrot.slane %v4556, 1
      %v4558 = vadd.f32 %v4556, %v4557
      %v4559 = vmul.f32 %v4482, %v4482
      %v4560 = vmul.f32 %v4483, %v4483
      %v4561 = vmul.f32 %v4484, %v4484
      %v4562 = vmul.f32 %v4485, %v4485
      %v4563 = vmul.f32 %v4486, %v4486
      %v4564 = vmul.f32 %v4487, %v4487
      %v4565 = vmul.f32 %v4488, %v4488
      %v4566 = vmul.f32 %v4489, %v4489
      %v4567 = vmul.f32 %v4490, %v4490
      %v4568 = vmul.f32 %v4491, %v4491
      %v4569 = vmul.f32 %v4492, %v4492
      %v4570 = vmul.f32 %v4493, %v4493
      %v4571 = vmul.f32 %v4494, %v4494
      %v4572 = vmul.f32 %v4495, %v4495
      %v4573 = vmul.f32 %v4496, %v4496
      %v4574 = vmul.f32 %v4497, %v4497
      %v4575 = vmul.f32 %v4498, %v4498
      %v4576 = vmul.f32 %v4499, %v4499
      %v4577 = vmul.f32 %v4500, %v4500
      %v4578 = vmul.f32 %v4501, %v4501
      %v4579 = vmul.f32 %v4502, %v4502
      %v4580 = vmul.f32 %v4503, %v4503
      %v4581 = vmul.f32 %v4504, %v4504
      %v4582 = vmul.f32 %v4505, %v4505
      %v4583 = vmul.f32 %v4506, %v4506
      %v4584 = vmul.f32 %v4507, %v4507
      %v4585 = vmul.f32 %v4508, %v4508
      %v4586 = vmul.f32 %v4509, %v4509
      %v4587 = vmul.f32 %v4510, %v4510
      %v4588 = vmul.f32 %v4511, %v4511
      %v4589 = vmul.f32 %v4512, %v4512
      %v4590 = vmul.f32 %v4513, %v4513
      %v4591 = vmul.f32 %v4514, %v4514
      %v4592 = vmul.f32 %v4515, %v4515
      %v4593 = vmul.f32 %v4516, %v4516
      %v4594 = vmul.f32 %v4517, %v4517
      %v4595 = vadd.f32 %v4559, %v4560
      %v4596 = vadd.f32 %v4595, %v4561
      %v4597 = vadd.f32 %v4596, %v4562
      %v4598 = vadd.f32 %v4597, %v4563
      %v4599 = vadd.f32 %v4598, %v4564
      %v4600 = vadd.f32 %v4599, %v4565
      %v4601 = vadd.f32 %v4600, %v4566
      %v4602 = vadd.f32 %v4601, %v4567
      %v4603 = vadd.f32 %v4602, %v4568
      %v4604 = vadd.f32 %v4603, %v4569
      %v4605 = vadd.f32 %v4604, %v4570
      %v4606 = vadd.f32 %v4605, %v4571
      %v4607 = vadd.f32 %v4606, %v4572
      %v4608 = vadd.f32 %v4607, %v4573
      %v4609 = vadd.f32 %v4608, %v4574
      %v4610 = vadd.f32 %v4609, %v4575
      %v4611 = vadd.f32 %v4610, %v4576
      %v4612 = vadd.f32 %v4611, %v4577
      %v4613 = vadd.f32 %v4612, %v4578
      %v4614 = vadd.f32 %v4613, %v4579
      %v4615 = vadd.f32 %v4614, %v4580
      %v4616 = vadd.f32 %v4615, %v4581
      %v4617 = vadd.f32 %v4616, %v4582
      %v4618 = vadd.f32 %v4617, %v4583
      %v4619 = vadd.f32 %v4618, %v4584
      %v4620 = vadd.f32 %v4619, %v4585
      %v4621 = vadd.f32 %v4620, %v4586
      %v4622 = vadd.f32 %v4621, %v4587
      %v4623 = vadd.f32 %v4622, %v4588
      %v4624 = vadd.f32 %v4623, %v4589
      %v4625 = vadd.f32 %v4624, %v4590
      %v4626 = vadd.f32 %v4625, %v4591
      %v4627 = vadd.f32 %v4626, %v4592
      %v4628 = vadd.f32 %v4627, %v4593
      %v4629 = vadd.f32 %v4628, %v4594
      %v4630 = vrot.slane %v4629, 4
      %v4631 = vadd.f32 %v4629, %v4630
      %v4632 = vrot.slane %v4631, 2
      %v4633 = vadd.f32 %v4631, %v4632
      %v4634 = vrot.slane %v4633, 1
      %v4635 = vadd.f32 %v4633, %v4634
      %v4636 = vsel %vm2569, %v4558, %v4635
      %v4637 = vld [vmem:[%s8] sm:$0xff]
      %v4638 = vld [vmem:[%s8 + $0x8] sm:$0xff]
      %v4639 = vld [vmem:[%s8 + $0x10] sm:$0xff]
      %v4640 = vld [vmem:[%s8 + $0x18] sm:$0xff]
      %v4641 = vld [vmem:[%s8 + $0x20] sm:$0xff]
      %v4642 = vld [vmem:[%s8 + $0x28] sm:$0xff]
      %v4643 = vld [vmem:[%s8 + $0x30] sm:$0xff]
      %v4644 = vld [vmem:[%s8 + $0x38] sm:$0xff]
      %v4645 = vld [vmem:[%s8 + $0x40] sm:$0xff]
      %v4646 = vld [vmem:[%s8 + $0x48] sm:$0xff]
      %v4647 = vld [vmem:[%s8 + $0x50] sm:$0xff]
      %v4648 = vld [vmem:[%s8 + $0x58] sm:$0xff]
      %v4649 = vld [vmem:[%s8 + $0x60] sm:$0xff]
      %v4650 = vld [vmem:[%s8 + $0x68] sm:$0xff]
      %v4651 = vld [vmem:[%s8 + $0x70] sm:$0xff]
      %v4652 = vld [vmem:[%s8 + $0x78] sm:$0xff]
      %4653 = vmatprep.subr.mxu0 0.0
      %4654 = vmatpush1.msra.mxu0 %v4637
      %4655 = vmatprep.subr.mxu0 0.0
      %4656 = vmatpush1.msra.mxu0 %v4638
      %4657 = vmatprep.subr.mxu0 0.0
      %4658 = vmatpush1.msra.mxu0 %v4639
      %4659 = vmatprep.subr.mxu0 0.0
      %4660 = vmatpush1.msra.mxu0 %v4640
      %4661 = vmatprep.subr.mxu0 0.0
      %4662 = vmatpush1.msra.mxu0 %v4641
      %4663 = vmatprep.subr.mxu0 0.0
      %4664 = vmatpush1.msra.mxu0 %v4642
      %4665 = vmatprep.subr.mxu0 0.0
      %4666 = vmatpush1.msra.mxu0 %v4643
      %4667 = vmatprep.subr.mxu0 0.0
      %4668 = vmatpush1.msra.mxu0 %v4644
      %4669 = vmatprep.subr.mxu0 0.0
      %4670 = vmatpush1.msra.mxu0 %v4645
      %4671 = vmatprep.subr.mxu0 0.0
      %4672 = vmatpush1.msra.mxu0 %v4646
      %4673 = vmatprep.subr.mxu0 0.0
      %4674 = vmatpush1.msra.mxu0 %v4647
      %4675 = vmatprep.subr.mxu0 0.0
      %4676 = vmatpush1.msra.mxu0 %v4648
      %4677 = vmatprep.subr.mxu0 0.0
      %4678 = vmatpush1.msra.mxu0 %v4649
      %4679 = vmatprep.subr.mxu0 0.0
      %4680 = vmatpush1.msra.mxu0 %v4650
      %4681 = vmatprep.subr.mxu0 0.0
      %4682 = vmatpush1.msra.mxu0 %v4651
      %4683 = vmatprep.subr.mxu0 0.0
      %4684 = vmatpush1.msra.mxu0 %v4652
      %4685 = vmatprep.subr.mxu0 0.0
      %4686 = vmatpush1.msra.mxu0 0.0
      %4687 = vmatprep.subr.mxu0 0.0
      %4688 = vmatpush1.msra.mxu0 0.0
      %4689 = vmatprep.subr.mxu0 0.0
      %4690 = vmatpush1.msra.mxu0 0.0
      %4691 = vmatprep.subr.mxu0 0.0
      %4692 = vmatpush1.msra.mxu0 0.0
      %4693 = vmatprep.subr.mxu0 0.0
      %4694 = vmatpush1.msra.mxu0 0.0
      %4695 = vmatprep.subr.mxu0 0.0
      %4696 = vmatpush1.msra.mxu0 0.0
      %4697 = vmatprep.subr.mxu0 0.0
      %4698 = vmatpush1.msra.mxu0 0.0
      %4699 = vmatprep.subr.mxu0 0.0
      %4700 = vmatpush1.msra.mxu0 0.0
      %4701 = vmatprep.subr.mxu0 0.0
      %4702 = vmatpush1.msra.mxu0 0.0
      %4703 = vmatprep.subr.mxu0 0.0
      %4704 = vmatpush1.msra.mxu0 0.0
      %4705 = vmatprep.subr.mxu0 0.0
      %4706 = vmatpush1.msra.mxu0 0.0
      %4707 = vmatprep.subr.mxu0 0.0
      %4708 = vmatpush1.msra.mxu0 0.0
      %4709 = vmatprep.subr.mxu0 0.0
      %4710 = vmatpush1.msra.mxu0 0.0
      %4711 = vmatprep.subr.mxu0 0.0
      %4712 = vmatpush1.msra.mxu0 0.0
      %4713 = vmatprep.subr.mxu0 0.0
      %4714 = vmatpush1.msra.mxu0 0.0
      %4715 = vmatprep.subr.mxu0 0.0
      %4716 = vmatpush1.msra.mxu0 0.0
      %4717 = vmatprep.mubr.f32.mxu0 0.0
      %4718 = vmatmul.mubr.f32.gmra.mrb[0].mxu0 %v4636
      %v4719 = vpop.f32.mrb[0].mxu0
      %v4720 = vadd.f32 0.0, %v4719
      %v4721 = vpop.f32.mrb[0].mxu0
      %4722 = vdwg.mxu0
      %v4723 = vmul.f32 %v4720, 0.0009765625
      %v4724 = vmul.f32 %v4723, %v4723
      %v4726 = vrot.slane %v4724, 7
      %v4728 = vsub.f32 %v4723, %v4726
      %v4729 = vmax.f32 %v4728, 0.0
      %v4730 = vlaneseq
      %v4731 = vshrl.u32 %v4730, 7
      %v4732 = vsub.s32 0, %v4731
      %v4733 = vrot.slane %v4723, %v4732
      %v4734 = vsub.f32 %v4340, %v4733
      %v4735 = vsub.f32 %v4343, %v4733
      %v4736 = vsub.f32 %v4348, %v4733
      %v4737 = vsub.f32 %v4351, %v4733
      %v4738 = vsub.f32 %v4356, %v4733
      %v4739 = vsub.f32 %v4359, %v4733
      %v4740 = vsub.f32 %v4364, %v4733
      %v4741 = vsub.f32 %v4367, %v4733
      %v4742 = vsub.f32 %v4372, %v4733
      %v4743 = vsub.f32 %v4375, %v4733
      %v4744 = vsub.f32 %v4380, %v4733
      %v4745 = vsub.f32 %v4383, %v4733
      %v4746 = vsub.f32 %v4388, %v4733
      %v4747 = vsub.f32 %v4391, %v4733
      %v4748 = vsub.f32 %v4396, %v4733
      %v4749 = vsub.f32 %v4399, %v4733
      %v4750 = vsub.f32 %v4404, %v4733
      %v4751 = vsub.f32 %v4407, %v4733
      %v4752 = vsub.f32 %v4412, %v4733
      %v4753 = vsub.f32 %v4415, %v4733
      %v4754 = vsub.f32 %v4420, %v4733
      %v4755 = vsub.f32 %v4423, %v4733
      %v4756 = vsub.f32 %v4428, %v4733
      %v4757 = vsub.f32 %v4431, %v4733
      %v4758 = vsub.f32 %v4436, %v4733
      %v4759 = vsub.f32 %v4439, %v4733
      %v4760 = vsub.f32 %v4444, %v4733
      %v4761 = vsub.f32 %v4447, %v4733
      %v4762 = vsub.f32 %v4452, %v4733
      %v4763 = vsub.f32 %v4455, %v4733
      %v4764 = vsub.f32 %v4460, %v4733
      %v4765 = vsub.f32 %v4463, %v4733
      %v4766 = vsub.f32 %v4468, %v4733
      %v4767 = vsub.f32 %v4471, %v4733
      %v4768 = vsub.f32 %v4476, %v4733
      %v4769 = vsub.f32 %v4479, %v4733
      %v4770 = vadd.f32 %v4729, 1e-05
      %v4771 = vrsqrt.pop %v4770
      %v4772 = vlaneseq
      %v4773 = vshrl.u32 %v4772, 7
      %v4774 = vsub.s32 1, %v4773
      %v4775 = vrot.slane %v4771, %v4774
      %v4776 = vmul.f32 %v4734, %v4775
      %v4777 = vmul.f32 %v4735, %v4775
      %v4778 = vmul.f32 %v4736, %v4775
      %v4779 = vmul.f32 %v4737, %v4775
      %v4780 = vmul.f32 %v4738, %v4775
      %v4781 = vmul.f32 %v4739, %v4775
      %v4782 = vmul.f32 %v4740, %v4775
      %v4783 = vmul.f32 %v4741, %v4775
      %v4784 = vmul.f32 %v4742, %v4775
      %v4785 = vmul.f32 %v4743, %v4775
      %v4786 = vmul.f32 %v4744, %v4775
      %v4787 = vmul.f32 %v4745, %v4775
      %v4788 = vmul.f32 %v4746, %v4775
      %v4789 = vmul.f32 %v4747, %v4775
      %v4790 = vmul.f32 %v4748, %v4775
      %v4791 = vmul.f32 %v4749, %v4775
      %v4792 = vmul.f32 %v4750, %v4775
      %v4793 = vmul.f32 %v4751, %v4775
      %v4794 = vmul.f32 %v4752, %v4775
      %v4795 = vmul.f32 %v4753, %v4775
      %v4796 = vmul.f32 %v4754, %v4775
      %v4797 = vmul.f32 %v4755, %v4775
      %v4798 = vmul.f32 %v4756, %v4775
      %v4799 = vmul.f32 %v4757, %v4775
      %v4800 = vmul.f32 %v4758, %v4775
      %v4801 = vmul.f32 %v4759, %v4775
      %v4802 = vmul.f32 %v4760, %v4775
      %v4803 = vmul.f32 %v4761, %v4775
      %v4804 = vmul.f32 %v4762, %v4775
      %v4805 = vmul.f32 %v4763, %v4775
      %v4806 = vmul.f32 %v4764, %v4775
      %v4807 = vmul.f32 %v4765, %v4775
      %v4808 = vmul.f32 %v4766, %v4775
      %v4809 = vmul.f32 %v4767, %v4775
      %v4810 = vmul.f32 %v4768, %v4775
      %v4811 = vmul.f32 %v4769, %v4775
      %v4812 = vld [vmem:[%s6 + $0x1] sm:$0x1]
      %v4813 = vlaneseq
      %v4814 = vshrl.u32 %v4813, 7
      %v4815 = vsub.s32 0, %v4814
      %v4816 = vrot.slane %v4812, %v4815
      %v4817 = vmul.f32 %v4776, %v4816
      %v4818 = vmul.f32 %v4777, %v4816
      %v4819 = vmul.f32 %v4778, %v4816
      %v4820 = vmul.f32 %v4779, %v4816
      %v4821 = vmul.f32 %v4780, %v4816
      %v4822 = vmul.f32 %v4781, %v4816
      %v4823 = vmul.f32 %v4782, %v4816
      %v4824 = vmul.f32 %v4783, %v4816
      %v4825 = vmul.f32 %v4784, %v4816
      %v4826 = vmul.f32 %v4785, %v4816
      %v4827 = vmul.f32 %v4786, %v4816
      %v4828 = vmul.f32 %v4787, %v4816
      %v4829 = vmul.f32 %v4788, %v4816
      %v4830 = vmul.f32 %v4789, %v4816
      %v4831 = vmul.f32 %v4790, %v4816
      %v4832 = vmul.f32 %v4791, %v4816
      %v4833 = vmul.f32 %v4792, %v4816
      %v4834 = vmul.f32 %v4793, %v4816
      %v4835 = vmul.f32 %v4794, %v4816
      %v4836 = vmul.f32 %v4795, %v4816
      %v4837 = vmul.f32 %v4796, %v4816
      %v4838 = vmul.f32 %v4797, %v4816
      %v4839 = vmul.f32 %v4798, %v4816
      %v4840 = vmul.f32 %v4799, %v4816
      %v4841 = vmul.f32 %v4800, %v4816
      %v4842 = vmul.f32 %v4801, %v4816
      %v4843 = vmul.f32 %v4802, %v4816
      %v4844 = vmul.f32 %v4803, %v4816
      %v4845 = vmul.f32 %v4804, %v4816
      %v4846 = vmul.f32 %v4805, %v4816
      %v4847 = vmul.f32 %v4806, %v4816
      %v4848 = vmul.f32 %v4807, %v4816
      %v4849 = vmul.f32 %v4808, %v4816
      %v4850 = vmul.f32 %v4809, %v4816
      %v4851 = vmul.f32 %v4810, %v4816
      %v4852 = vmul.f32 %v4811, %v4816
      %v4853 = vld [vmem:[%s7 + $0x1] sm:$0x1]
      %v4854 = vlaneseq
      %v4855 = vshrl.u32 %v4854, 7
      %v4856 = vsub.s32 0, %v4855
      %v4857 = vrot.slane %v4853, %v4856
      %v4858 = vadd.f32 %v4817, %v4857
      %v4859 = vadd.f32 %v4818, %v4857
      %v4860 = vadd.f32 %v4819, %v4857
      %v4861 = vadd.f32 %v4820, %v4857
      %v4862 = vadd.f32 %v4821, %v4857
      %v4863 = vadd.f32 %v4822, %v4857
      %v4864 = vadd.f32 %v4823, %v4857
      %v4865 = vadd.f32 %v4824, %v4857
      %v4866 = vadd.f32 %v4825, %v4857
      %v4867 = vadd.f32 %v4826, %v4857
      %v4868 = vadd.f32 %v4827, %v4857
      %v4869 = vadd.f32 %v4828, %v4857
      %v4870 = vadd.f32 %v4829, %v4857
      %v4871 = vadd.f32 %v4830, %v4857
      %v4872 = vadd.f32 %v4831, %v4857
      %v4873 = vadd.f32 %v4832, %v4857
      %v4874 = vadd.f32 %v4833, %v4857
      %v4875 = vadd.f32 %v4834, %v4857
      %v4876 = vadd.f32 %v4835, %v4857
      %v4877 = vadd.f32 %v4836, %v4857
      %v4878 = vadd.f32 %v4837, %v4857
      %v4879 = vadd.f32 %v4838, %v4857
      %v4880 = vadd.f32 %v4839, %v4857
      %v4881 = vadd.f32 %v4840, %v4857
      %v4882 = vadd.f32 %v4841, %v4857
      %v4883 = vadd.f32 %v4842, %v4857
      %v4884 = vadd.f32 %v4843, %v4857
      %v4885 = vadd.f32 %v4844, %v4857
      %v4886 = vadd.f32 %v4845, %v4857
      %v4887 = vadd.f32 %v4846, %v4857
      %v4888 = vadd.f32 %v4847, %v4857
      %v4889 = vadd.f32 %v4848, %v4857
      %v4890 = vadd.f32 %v4849, %v4857
      %v4891 = vadd.f32 %v4850, %v4857
      %v4892 = vadd.f32 %v4851, %v4857
      %v4893 = vadd.f32 %v4852, %v4857
      %v4894 = vmax.f32 %v4858, 0.0
      %v4895 = vmax.f32 %v4859, 0.0
      %v4896 = vmax.f32 %v4860, 0.0
      %v4897 = vmax.f32 %v4861, 0.0
      %v4898 = vmax.f32 %v4862, 0.0
      %v4899 = vmax.f32 %v4863, 0.0
      %v4900 = vmax.f32 %v4864, 0.0
      %v4901 = vmax.f32 %v4865, 0.0
      %v4902 = vmax.f32 %v4866, 0.0
      %v4903 = vmax.f32 %v4867, 0.0
      %v4904 = vmax.f32 %v4868, 0.0
      %v4905 = vmax.f32 %v4869, 0.0
      %v4906 = vmax.f32 %v4870, 0.0
      %v4907 = vmax.f32 %v4871, 0.0
      %v4908 = vmax.f32 %v4872, 0.0
      %v4909 = vmax.f32 %v4873, 0.0
      %v4910 = vmax.f32 %v4874, 0.0
      %v4911 = vmax.f32 %v4875, 0.0
      %v4912 = vmax.f32 %v4876, 0.0
      %v4913 = vmax.f32 %v4877, 0.0
      %v4914 = vmax.f32 %v4878, 0.0
      %v4915 = vmax.f32 %v4879, 0.0
      %v4916 = vmax.f32 %v4880, 0.0
      %v4917 = vmax.f32 %v4881, 0.0
      %v4918 = vmax.f32 %v4882, 0.0
      %v4919 = vmax.f32 %v4883, 0.0
      %v4920 = vmax.f32 %v4884, 0.0
      %v4921 = vmax.f32 %v4885, 0.0
      %v4922 = vmax.f32 %v4886, 0.0
      %v4923 = vmax.f32 %v4887, 0.0
      %v4924 = vmax.f32 %v4888, 0.0
      %v4925 = vmax.f32 %v4889, 0.0
      %v4926 = vmax.f32 %v4890, 0.0
      %v4927 = vmax.f32 %v4891, 0.0
      %v4928 = vmax.f32 %v4892, 0.0
      %v4929 = vmax.f32 %v4893, 0.0
      %v4930 = vmul.f32 %v4894, %v2238
      %v4931 = vmul.f32 %v4895, %v2243
      %v4932 = vmul.f32 %v4896, %v2248
      %v4933 = vmul.f32 %v4897, %v2253
      %v4934 = vmul.f32 %v4898, %v2258
      %v4935 = vmul.f32 %v4899, %v2263
      %v4936 = vmul.f32 %v4900, %v2268
      %v4937 = vmul.f32 %v4901, %v2273
      %v4938 = vmul.f32 %v4902, %v2278
      %v4939 = vmul.f32 %v4903, %v2283
      %v4940 = vmul.f32 %v4904, %v2288
      %v4941 = vmul.f32 %v4905, %v2293
      %v4942 = vmul.f32 %v4906, %v2298
      %v4943 = vmul.f32 %v4907, %v2303
      %v4944 = vmul.f32 %v4908, %v2308
      %v4945 = vmul.f32 %v4909, %v2313
      %v4946 = vmul.f32 %v4910, %v2318
      %v4947 = vmul.f32 %v4911, %v2323
      %v4948 = vmul.f32 %v4912, %v2328
      %v4949 = vmul.f32 %v4913, %v2333
      %v4950 = vmul.f32 %v4914, %v2338
      %v4951 = vmul.f32 %v4915, %v2343
      %v4952 = vmul.f32 %v4916, %v2348
      %v4953 = vmul.f32 %v4917, %v2353
      %v4954 = vmul.f32 %v4918, %v2358
      %v4955 = vmul.f32 %v4919, %v2363
      %v4956 = vmul.f32 %v4920, %v2368
      %v4957 = vmul.f32 %v4921, %v2373
      %v4958 = vmul.f32 %v4922, %v2378
      %v4959 = vmul.f32 %v4923, %v2383
      %v4960 = vmul.f32 %v4924, %v2388
      %v4961 = vmul.f32 %v4925, %v2393
      %v4962 = vmul.f32 %v4926, %v2398
      %v4963 = vmul.f32 %v4927, %v2403
      %v4964 = vmul.f32 %v4928, %v2408
      %v4965 = vmul.f32 %v4929, %v2413
      %4966 = vst [vmem:[#allocation2 + $0x13] sm:$0xff] %v4930
      %4967 = vst [vmem:[#allocation2 + $0x1b] sm:$0xff] %v4931
      %4968 = vst [vmem:[#allocation2 + $0x23] sm:$0xff] %v4932
      %4969 = vst [vmem:[#allocation2 + $0x2b] sm:$0xff] %v4933
      %4970 = vst [vmem:[#allocation2 + $0x33] sm:$0xff] %v4934
      %4971 = vst [vmem:[#allocation2 + $0x3b] sm:$0xff] %v4935
      %4972 = vst [vmem:[#allocation2 + $0x43] sm:$0xff] %v4936
      %4973 = vst [vmem:[#allocation2 + $0x4b] sm:$0xff] %v4937
      %4974 = vst [vmem:[#allocation2 + $0x53] sm:$0xff] %v4938
      %4975 = vst [vmem:[#allocation2 + $0x5b] sm:$0xff] %v4939
      %4976 = vst [vmem:[#allocation2 + $0x63] sm:$0xff] %v4940
      %4977 = vst [vmem:[#allocation2 + $0x6b] sm:$0xff] %v4941
      %4978 = vst [vmem:[#allocation2 + $0x73] sm:$0xff] %v4942
      %4979 = vst [vmem:[#allocation2 + $0x7b] sm:$0xff] %v4943
      %4980 = vst [vmem:[#allocation2 + $0x83] sm:$0xff] %v4944
      %4981 = vst [vmem:[#allocation2 + $0x8b] sm:$0xff] %v4945
      %4982 = vst [vmem:[#allocation2 + $0x93] sm:$0xff] %v4946
      %4983 = vst [vmem:[#allocation2 + $0x9b] sm:$0xff] %v4947
      %4984 = vst [vmem:[#allocation2 + $0xa3] sm:$0xff] %v4948
      %4985 = vst [vmem:[#allocation2 + $0xab] sm:$0xff] %v4949
      %4986 = vst [vmem:[#allocation2 + $0xb3] sm:$0xff] %v4950
      %4987 = vst [vmem:[#allocation2 + $0xbb] sm:$0xff] %v4951
      %4988 = vst [vmem:[#allocation2 + $0xc3] sm:$0xff] %v4952
      %4989 = vst [vmem:[#allocation2 + $0xcb] sm:$0xff] %v4953
      %4990 = vst [vmem:[#allocation2 + $0xd3] sm:$0xff] %v4954
      %4991 = vst [vmem:[#allocation2 + $0xdb] sm:$0xff] %v4955
      %4992 = vst [vmem:[#allocation2 + $0xe3] sm:$0xff] %v4956
      %4993 = vst [vmem:[#allocation2 + $0xeb] sm:$0xff] %v4957
      %4994 = vst [vmem:[#allocation2 + $0xf3] sm:$0xff] %v4958
      %4995 = vst [vmem:[#allocation2 + $0xfb] sm:$0xff] %v4959
      %4996 = vst [vmem:[#allocation2 + $0x103] sm:$0xff] %v4960
      %4997 = vst [vmem:[#allocation2 + $0x10b] sm:$0xff] %v4961
      %4998 = vst [vmem:[#allocation2 + $0x113] sm:$0xff] %v4962
      %4999 = vst [vmem:[#allocation2 + $0x11b] sm:$0xff] %v4963
      %5000 = vst [vmem:[#allocation2 + $0x123] sm:$0xff] %v4964
      %5001 = vst [vmem:[#allocation2 + $0x12b] sm:$0xff] %v4965
      %v5002 = vld [vmem:[#allocation2] sm:$0xff]
      %v5003 = vld [vmem:[#allocation2 + $0x8] sm:$0xff]
      %v5004 = vld [vmem:[#allocation2 + $0x10] sm:$0xff]
      %v5005 = vld [vmem:[#allocation2 + $0x18] sm:$0xff]
      %v5006 = vld [vmem:[#allocation2 + $0x20] sm:$0xff]
      %v5007 = vld [vmem:[#allocation2 + $0x28] sm:$0xff]
      %v5008 = vld [vmem:[#allocation2 + $0x30] sm:$0xff]
      %v5009 = vld [vmem:[#allocation2 + $0x38] sm:$0xff]
      %v5010 = vld [vmem:[#allocation2 + $0x40] sm:$0xff]
      %v5011 = vld [vmem:[#allocation2 + $0x48] sm:$0xff]
      %v5012 = vld [vmem:[#allocation2 + $0x50] sm:$0xff]
      %v5013 = vld [vmem:[#allocation2 + $0x58] sm:$0xff]
      %v5014 = vld [vmem:[#allocation2 + $0x60] sm:$0xff]
      %v5015 = vld [vmem:[#allocation2 + $0x68] sm:$0xff]
      %v5016 = vld [vmem:[#allocation2 + $0x70] sm:$0xff]
      %v5017 = vld [vmem:[#allocation2 + $0x78] sm:$0xff]
      %v5018 = vld [vmem:[#allocation2 + $0x80] sm:$0xff]
      %v5019 = vld [vmem:[#allocation2 + $0x88] sm:$0xff]
      %v5020 = vld [vmem:[#allocation2 + $0x90] sm:$0xff]
      %v5021 = vld [vmem:[#allocation2 + $0x98] sm:$0xff]
      %v5022 = vld [vmem:[#allocation2 + $0xa0] sm:$0xff]
      %v5023 = vld [vmem:[#allocation2 + $0xa8] sm:$0xff]
      %v5024 = vld [vmem:[#allocation2 + $0xb0] sm:$0xff]
      %v5025 = vld [vmem:[#allocation2 + $0xb8] sm:$0xff]
      %v5026 = vld [vmem:[#allocation2 + $0xc0] sm:$0xff]
      %v5027 = vld [vmem:[#allocation2 + $0xc8] sm:$0xff]
      %v5028 = vld [vmem:[#allocation2 + $0xd0] sm:$0xff]
      %v5029 = vld [vmem:[#allocation2 + $0xd8] sm:$0xff]
      %v5030 = vld [vmem:[#allocation2 + $0xe0] sm:$0xff]
      %v5031 = vld [vmem:[#allocation2 + $0xe8] sm:$0xff]
      %v5032 = vld [vmem:[#allocation2 + $0xf0] sm:$0xff]
      %v5033 = vld [vmem:[#allocation2 + $0xf8] sm:$0xff]
      %v5034 = vld [vmem:[#allocation2 + $0x100] sm:$0xff]
      %v5035 = vld [vmem:[#allocation2 + $0x108] sm:$0xff]
      %v5036 = vld [vmem:[#allocation2 + $0x110] sm:$0xff]
      %v5037 = vld [vmem:[#allocation2 + $0x118] sm:$0xff]
      %v5038 = vld [vmem:[#allocation2 + $0x1] sm:$0xff]
      %v5039 = vld [vmem:[#allocation2 + $0x9] sm:$0xff]
      %v5040 = vld [vmem:[#allocation2 + $0x11] sm:$0xff]
      %v5041 = vld [vmem:[#allocation2 + $0x19] sm:$0xff]
      %v5042 = vld [vmem:[#allocation2 + $0x21] sm:$0xff]
      %v5043 = vld [vmem:[#allocation2 + $0x29] sm:$0xff]
      %v5044 = vld [vmem:[#allocation2 + $0x31] sm:$0xff]
      %v5045 = vld [vmem:[#allocation2 + $0x39] sm:$0xff]
      %v5046 = vld [vmem:[#allocation2 + $0x41] sm:$0xff]
      %v5047 = vld [vmem:[#allocation2 + $0x49] sm:$0xff]
      %v5048 = vld [vmem:[#allocation2 + $0x51] sm:$0xff]
      %v5049 = vld [vmem:[#allocation2 + $0x59] sm:$0xff]
      %v5050 = vld [vmem:[#allocation2 + $0x61] sm:$0xff]
      %v5051 = vld [vmem:[#allocation2 + $0x69] sm:$0xff]
      %v5052 = vld [vmem:[#allocation2 + $0x71] sm:$0xff]
      %v5053 = vld [vmem:[#allocation2 + $0x79] sm:$0xff]
      %v5054 = vld [vmem:[#allocation2 + $0x81] sm:$0xff]
      %v5055 = vld [vmem:[#allocation2 + $0x89] sm:$0xff]
      %v5056 = vld [vmem:[#allocation2 + $0x91] sm:$0xff]
      %v5057 = vld [vmem:[#allocation2 + $0x99] sm:$0xff]
      %v5058 = vld [vmem:[#allocation2 + $0xa1] sm:$0xff]
      %v5059 = vld [vmem:[#allocation2 + $0xa9] sm:$0xff]
      %v5060 = vld [vmem:[#allocation2 + $0xb1] sm:$0xff]
      %v5061 = vld [vmem:[#allocation2 + $0xb9] sm:$0xff]
      %v5062 = vld [vmem:[#allocation2 + $0xc1] sm:$0xff]
      %v5063 = vld [vmem:[#allocation2 + $0xc9] sm:$0xff]
      %v5064 = vld [vmem:[#allocation2 + $0xd1] sm:$0xff]
      %v5065 = vld [vmem:[#allocation2 + $0xd9] sm:$0xff]
      %v5066 = vld [vmem:[#allocation2 + $0xe1] sm:$0xff]
      %v5067 = vld [vmem:[#allocation2 + $0xe9] sm:$0xff]
      %v5068 = vld [vmem:[#allocation2 + $0xf1] sm:$0xff]
      %v5069 = vld [vmem:[#allocation2 + $0xf9] sm:$0xff]
      %v5070 = vld [vmem:[#allocation2 + $0x101] sm:$0xff]
      %v5071 = vld [vmem:[#allocation2 + $0x109] sm:$0xff]
      %v5072 = vld [vmem:[#allocation2 + $0x111] sm:$0xff]
      %v5073 = vld [vmem:[#allocation2 + $0x119] sm:$0xff]
      %5074 = vrot.lane.b32.xlu0 %v5038, 32
      %v5075 = vpop.permute.xlu0 %5074
      %5076 = vrot.lane.b32.xlu0 %v5039, 32
      %v5077 = vpop.permute.xlu0 %5076
      %5078 = vrot.lane.b32.xlu0 %v5040, 32
      %v5079 = vpop.permute.xlu0 %5078
      %5080 = vrot.lane.b32.xlu0 %v5041, 32
      %v5081 = vpop.permute.xlu0 %5080
      %5082 = vrot.lane.b32.xlu0 %v5042, 32
      %v5083 = vpop.permute.xlu0 %5082
      %5084 = vrot.lane.b32.xlu0 %v5043, 32
      %v5085 = vpop.permute.xlu0 %5084
      %5086 = vrot.lane.b32.xlu0 %v5044, 32
      %v5087 = vpop.permute.xlu0 %5086
      %5088 = vrot.lane.b32.xlu0 %v5045, 32
      %v5089 = vpop.permute.xlu0 %5088
      %5090 = vrot.lane.b32.xlu0 %v5046, 32
      %v5091 = vpop.permute.xlu0 %5090
      %5092 = vrot.lane.b32.xlu0 %v5047, 32
      %v5093 = vpop.permute.xlu0 %5092
      %5094 = vrot.lane.b32.xlu0 %v5048, 32
      %v5095 = vpop.permute.xlu0 %5094
      %5096 = vrot.lane.b32.xlu0 %v5049, 32
      %v5097 = vpop.permute.xlu0 %5096
      %5098 = vrot.lane.b32.xlu0 %v5050, 32
      %v5099 = vpop.permute.xlu0 %5098
      %5100 = vrot.lane.b32.xlu0 %v5051, 32
      %v5101 = vpop.permute.xlu0 %5100
      %5102 = vrot.lane.b32.xlu0 %v5052, 32
      %v5103 = vpop.permute.xlu0 %5102
      %5104 = vrot.lane.b32.xlu0 %v5053, 32
      %v5105 = vpop.permute.xlu0 %5104
      %5106 = vrot.lane.b32.xlu0 %v5054, 32
      %v5107 = vpop.permute.xlu0 %5106
      %5108 = vrot.lane.b32.xlu0 %v5055, 32
      %v5109 = vpop.permute.xlu0 %5108
      %5110 = vrot.lane.b32.xlu0 %v5056, 32
      %v5111 = vpop.permute.xlu0 %5110
      %5112 = vrot.lane.b32.xlu0 %v5057, 32
      %v5113 = vpop.permute.xlu0 %5112
      %5114 = vrot.lane.b32.xlu0 %v5058, 32
      %v5115 = vpop.permute.xlu0 %5114
      %5116 = vrot.lane.b32.xlu0 %v5059, 32
      %v5117 = vpop.permute.xlu0 %5116
      %5118 = vrot.lane.b32.xlu0 %v5060, 32
      %v5119 = vpop.permute.xlu0 %5118
      %5120 = vrot.lane.b32.xlu0 %v5061, 32
      %v5121 = vpop.permute.xlu0 %5120
      %5122 = vrot.lane.b32.xlu0 %v5062, 32
      %v5123 = vpop.permute.xlu0 %5122
      %5124 = vrot.lane.b32.xlu0 %v5063, 32
      %v5125 = vpop.permute.xlu0 %5124
      %5126 = vrot.lane.b32.xlu0 %v5064, 32
      %v5127 = vpop.permute.xlu0 %5126
      %5128 = vrot.lane.b32.xlu0 %v5065, 32
      %v5129 = vpop.permute.xlu0 %5128
      %5130 = vrot.lane.b32.xlu0 %v5066, 32
      %v5131 = vpop.permute.xlu0 %5130
      %5132 = vrot.lane.b32.xlu0 %v5067, 32
      %v5133 = vpop.permute.xlu0 %5132
      %5134 = vrot.lane.b32.xlu0 %v5068, 32
      %v5135 = vpop.permute.xlu0 %5134
      %5136 = vrot.lane.b32.xlu0 %v5069, 32
      %v5137 = vpop.permute.xlu0 %5136
      %5138 = vrot.lane.b32.xlu0 %v5070, 32
      %v5139 = vpop.permute.xlu0 %5138
      %5140 = vrot.lane.b32.xlu0 %v5071, 32
      %v5141 = vpop.permute.xlu0 %5140
      %5142 = vrot.lane.b32.xlu0 %v5072, 32
      %v5143 = vpop.permute.xlu0 %5142
      %5144 = vrot.lane.b32.xlu0 %v5073, 32
      %v5145 = vpop.permute.xlu0 %5144
      %v5146 = vadd.f32 %v5002, %v5075
      %v5147 = vadd.f32 %v5003, %v5077
      %v5148 = vadd.f32 %v5004, %v5079
      %v5149 = vadd.f32 %v5005, %v5081
      %v5150 = vadd.f32 %v5006, %v5083
      %v5151 = vadd.f32 %v5007, %v5085
      %v5152 = vadd.f32 %v5008, %v5087
      %v5153 = vadd.f32 %v5009, %v5089
      %v5154 = vadd.f32 %v5010, %v5091
      %v5155 = vadd.f32 %v5011, %v5093
      %v5156 = vadd.f32 %v5012, %v5095
      %v5157 = vadd.f32 %v5013, %v5097
      %v5158 = vadd.f32 %v5014, %v5099
      %v5159 = vadd.f32 %v5015, %v5101
      %v5160 = vadd.f32 %v5016, %v5103
      %v5161 = vadd.f32 %v5017, %v5105
      %v5162 = vadd.f32 %v5018, %v5107
      %v5163 = vadd.f32 %v5019, %v5109
      %v5164 = vadd.f32 %v5020, %v5111
      %v5165 = vadd.f32 %v5021, %v5113
      %v5166 = vadd.f32 %v5022, %v5115
      %v5167 = vadd.f32 %v5023, %v5117
      %v5168 = vadd.f32 %v5024, %v5119
      %v5169 = vadd.f32 %v5025, %v5121
      %v5170 = vadd.f32 %v5026, %v5123
      %v5171 = vadd.f32 %v5027, %v5125
      %v5172 = vadd.f32 %v5028, %v5127
      %v5173 = vadd.f32 %v5029, %v5129
      %v5174 = vadd.f32 %v5030, %v5131
      %v5175 = vadd.f32 %v5031, %v5133
      %v5176 = vadd.f32 %v5032, %v5135
      %v5177 = vadd.f32 %v5033, %v5137
      %v5178 = vadd.f32 %v5034, %v5139
      %v5179 = vadd.f32 %v5035, %v5141
      %v5180 = vadd.f32 %v5036, %v5143
      %v5181 = vadd.f32 %v5037, %v5145
      %v5182 = vld [vmem:[#allocation2 + $0x2] sm:$0xff]
      %v5183 = vld [vmem:[#allocation2 + $0xa] sm:$0xff]
      %v5184 = vld [vmem:[#allocation2 + $0x12] sm:$0xff]
      %v5185 = vld [vmem:[#allocation2 + $0x1a] sm:$0xff]
      %v5186 = vld [vmem:[#allocation2 + $0x22] sm:$0xff]
      %v5187 = vld [vmem:[#allocation2 + $0x2a] sm:$0xff]
      %v5188 = vld [vmem:[#allocation2 + $0x32] sm:$0xff]
      %v5189 = vld [vmem:[#allocation2 + $0x3a] sm:$0xff]
      %v5190 = vld [vmem:[#allocation2 + $0x42] sm:$0xff]
      %v5191 = vld [vmem:[#allocation2 + $0x4a] sm:$0xff]
      %v5192 = vld [vmem:[#allocation2 + $0x52] sm:$0xff]
      %v5193 = vld [vmem:[#allocation2 + $0x5a] sm:$0xff]
      %v5194 = vld [vmem:[#allocation2 + $0x62] sm:$0xff]
      %v5195 = vld [vmem:[#allocation2 + $0x6a] sm:$0xff]
      %v5196 = vld [vmem:[#allocation2 + $0x72] sm:$0xff]
      %v5197 = vld [vmem:[#allocation2 + $0x7a] sm:$0xff]
      %v5198 = vld [vmem:[#allocation2 + $0x82] sm:$0xff]
      %v5199 = vld [vmem:[#allocation2 + $0x8a] sm:$0xff]
      %v5200 = vld [vmem:[#allocation2 + $0x92] sm:$0xff]
      %v5201 = vld [vmem:[#allocation2 + $0x9a] sm:$0xff]
      %v5202 = vld [vmem:[#allocation2 + $0xa2] sm:$0xff]
      %v5203 = vld [vmem:[#allocation2 + $0xaa] sm:$0xff]
      %v5204 = vld [vmem:[#allocation2 + $0xb2] sm:$0xff]
      %v5205 = vld [vmem:[#allocation2 + $0xba] sm:$0xff]
      %v5206 = vld [vmem:[#allocation2 + $0xc2] sm:$0xff]
      %v5207 = vld [vmem:[#allocation2 + $0xca] sm:$0xff]
      %v5208 = vld [vmem:[#allocation2 + $0xd2] sm:$0xff]
      %v5209 = vld [vmem:[#allocation2 + $0xda] sm:$0xff]
      %v5210 = vld [vmem:[#allocation2 + $0xe2] sm:$0xff]
      %v5211 = vld [vmem:[#allocation2 + $0xea] sm:$0xff]
      %v5212 = vld [vmem:[#allocation2 + $0xf2] sm:$0xff]
      %v5213 = vld [vmem:[#allocation2 + $0xfa] sm:$0xff]
      %v5214 = vld [vmem:[#allocation2 + $0x102] sm:$0xff]
      %v5215 = vld [vmem:[#allocation2 + $0x10a] sm:$0xff]
      %v5216 = vld [vmem:[#allocation2 + $0x112] sm:$0xff]
      %v5217 = vld [vmem:[#allocation2 + $0x11a] sm:$0xff]
      %5218 = vrot.lane.b32.xlu0 %v5182, 64
      %v5219 = vpop.permute.xlu0 %5218
      %5220 = vrot.lane.b32.xlu0 %v5183, 64
      %v5221 = vpop.permute.xlu0 %5220
      %5222 = vrot.lane.b32.xlu0 %v5184, 64
      %v5223 = vpop.permute.xlu0 %5222
      %5224 = vrot.lane.b32.xlu0 %v5185, 64
      %v5225 = vpop.permute.xlu0 %5224
      %5226 = vrot.lane.b32.xlu0 %v5186, 64
      %v5227 = vpop.permute.xlu0 %5226
      %5228 = vrot.lane.b32.xlu0 %v5187, 64
      %v5229 = vpop.permute.xlu0 %5228
      %5230 = vrot.lane.b32.xlu0 %v5188, 64
      %v5231 = vpop.permute.xlu0 %5230
      %5232 = vrot.lane.b32.xlu0 %v5189, 64
      %v5233 = vpop.permute.xlu0 %5232
      %5234 = vrot.lane.b32.xlu0 %v5190, 64
      %v5235 = vpop.permute.xlu0 %5234
      %5236 = vrot.lane.b32.xlu0 %v5191, 64
      %v5237 = vpop.permute.xlu0 %5236
      %5238 = vrot.lane.b32.xlu0 %v5192, 64
      %v5239 = vpop.permute.xlu0 %5238
      %5240 = vrot.lane.b32.xlu0 %v5193, 64
      %v5241 = vpop.permute.xlu0 %5240
      %5242 = vrot.lane.b32.xlu0 %v5194, 64
      %v5243 = vpop.permute.xlu0 %5242
      %5244 = vrot.lane.b32.xlu0 %v5195, 64
      %v5245 = vpop.permute.xlu0 %5244
      %5246 = vrot.lane.b32.xlu0 %v5196, 64
      %v5247 = vpop.permute.xlu0 %5246
      %5248 = vrot.lane.b32.xlu0 %v5197, 64
      %v5249 = vpop.permute.xlu0 %5248
      %5250 = vrot.lane.b32.xlu0 %v5198, 64
      %v5251 = vpop.permute.xlu0 %5250
      %5252 = vrot.lane.b32.xlu0 %v5199, 64
      %v5253 = vpop.permute.xlu0 %5252
      %5254 = vrot.lane.b32.xlu0 %v5200, 64
      %v5255 = vpop.permute.xlu0 %5254
      %5256 = vrot.lane.b32.xlu0 %v5201, 64
      %v5257 = vpop.permute.xlu0 %5256
      %5258 = vrot.lane.b32.xlu0 %v5202, 64
      %v5259 = vpop.permute.xlu0 %5258
      %5260 = vrot.lane.b32.xlu0 %v5203, 64
      %v5261 = vpop.permute.xlu0 %5260
      %5262 = vrot.lane.b32.xlu0 %v5204, 64
      %v5263 = vpop.permute.xlu0 %5262
      %5264 = vrot.lane.b32.xlu0 %v5205, 64
      %v5265 = vpop.permute.xlu0 %5264
      %5266 = vrot.lane.b32.xlu0 %v5206, 64
      %v5267 = vpop.permute.xlu0 %5266
      %5268 = vrot.lane.b32.xlu0 %v5207, 64
      %v5269 = vpop.permute.xlu0 %5268
      %5270 = vrot.lane.b32.xlu0 %v5208, 64
      %v5271 = vpop.permute.xlu0 %5270
      %5272 = vrot.lane.b32.xlu0 %v5209, 64
      %v5273 = vpop.permute.xlu0 %5272
      %5274 = vrot.lane.b32.xlu0 %v5210, 64
      %v5275 = vpop.permute.xlu0 %5274
      %5276 = vrot.lane.b32.xlu0 %v5211, 64
      %v5277 = vpop.permute.xlu0 %5276
      %5278 = vrot.lane.b32.xlu0 %v5212, 64
      %v5279 = vpop.permute.xlu0 %5278
      %5280 = vrot.lane.b32.xlu0 %v5213, 64
      %v5281 = vpop.permute.xlu0 %5280
      %5282 = vrot.lane.b32.xlu0 %v5214, 64
      %v5283 = vpop.permute.xlu0 %5282
      %5284 = vrot.lane.b32.xlu0 %v5215, 64
      %v5285 = vpop.permute.xlu0 %5284
      %5286 = vrot.lane.b32.xlu0 %v5216, 64
      %v5287 = vpop.permute.xlu0 %5286
      %5288 = vrot.lane.b32.xlu0 %v5217, 64
      %v5289 = vpop.permute.xlu0 %5288
      %v5290 = vadd.f32 %v5146, %v5219
      %v5291 = vadd.f32 %v5147, %v5221
      %v5292 = vadd.f32 %v5148, %v5223
      %v5293 = vadd.f32 %v5149, %v5225
      %v5294 = vadd.f32 %v5150, %v5227
      %v5295 = vadd.f32 %v5151, %v5229
      %v5296 = vadd.f32 %v5152, %v5231
      %v5297 = vadd.f32 %v5153, %v5233
      %v5298 = vadd.f32 %v5154, %v5235
      %v5299 = vadd.f32 %v5155, %v5237
      %v5300 = vadd.f32 %v5156, %v5239
      %v5301 = vadd.f32 %v5157, %v5241
      %v5302 = vadd.f32 %v5158, %v5243
      %v5303 = vadd.f32 %v5159, %v5245
      %v5304 = vadd.f32 %v5160, %v5247
      %v5305 = vadd.f32 %v5161, %v5249
      %v5306 = vadd.f32 %v5162, %v5251
      %v5307 = vadd.f32 %v5163, %v5253
      %v5308 = vadd.f32 %v5164, %v5255
      %v5309 = vadd.f32 %v5165, %v5257
      %v5310 = vadd.f32 %v5166, %v5259
      %v5311 = vadd.f32 %v5167, %v5261
      %v5312 = vadd.f32 %v5168, %v5263
      %v5313 = vadd.f32 %v5169, %v5265
      %v5314 = vadd.f32 %v5170, %v5267
      %v5315 = vadd.f32 %v5171, %v5269
      %v5316 = vadd.f32 %v5172, %v5271
      %v5317 = vadd.f32 %v5173, %v5273
      %v5318 = vadd.f32 %v5174, %v5275
      %v5319 = vadd.f32 %v5175, %v5277
      %v5320 = vadd.f32 %v5176, %v5279
      %v5321 = vadd.f32 %v5177, %v5281
      %v5322 = vadd.f32 %v5178, %v5283
      %v5323 = vadd.f32 %v5179, %v5285
      %v5324 = vadd.f32 %v5180, %v5287
      %v5325 = vadd.f32 %v5181, %v5289
      %v5326 = vld [vmem:[#allocation2 + $0x122] sm:$0xff]
      %v5327 = vld [vmem:[#allocation2 + $0x12a] sm:$0xff]
      %5328 = vrot.lane.b32.xlu0 %v5184, 96
      %v5329 = vpop.permute.xlu0 %5328
      %5330 = vrot.lane.b32.xlu0 %v5185, 96
      %v5331 = vpop.permute.xlu0 %5330
      %5332 = vrot.lane.b32.xlu0 %v5186, 96
      %v5333 = vpop.permute.xlu0 %5332
      %5334 = vrot.lane.b32.xlu0 %v5187, 96
      %v5335 = vpop.permute.xlu0 %5334
      %5336 = vrot.lane.b32.xlu0 %v5188, 96
      %v5337 = vpop.permute.xlu0 %5336
      %5338 = vrot.lane.b32.xlu0 %v5189, 96
      %v5339 = vpop.permute.xlu0 %5338
      %5340 = vrot.lane.b32.xlu0 %v5190, 96
      %v5341 = vpop.permute.xlu0 %5340
      %5342 = vrot.lane.b32.xlu0 %v5191, 96
      %v5343 = vpop.permute.xlu0 %5342
      %5344 = vrot.lane.b32.xlu0 %v5192, 96
      %v5345 = vpop.permute.xlu0 %5344
      %5346 = vrot.lane.b32.xlu0 %v5193, 96
      %v5347 = vpop.permute.xlu0 %5346
      %5348 = vrot.lane.b32.xlu0 %v5194, 96
      %v5349 = vpop.permute.xlu0 %5348
      %5350 = vrot.lane.b32.xlu0 %v5195, 96
      %v5351 = vpop.permute.xlu0 %5350
      %5352 = vrot.lane.b32.xlu0 %v5196, 96
      %v5353 = vpop.permute.xlu0 %5352
      %5354 = vrot.lane.b32.xlu0 %v5197, 96
      %v5355 = vpop.permute.xlu0 %5354
      %5356 = vrot.lane.b32.xlu0 %v5198, 96
      %v5357 = vpop.permute.xlu0 %5356
      %5358 = vrot.lane.b32.xlu0 %v5199, 96
      %v5359 = vpop.permute.xlu0 %5358
      %5360 = vrot.lane.b32.xlu0 %v5200, 96
      %v5361 = vpop.permute.xlu0 %5360
      %5362 = vrot.lane.b32.xlu0 %v5201, 96
      %v5363 = vpop.permute.xlu0 %5362
      %5364 = vrot.lane.b32.xlu0 %v5202, 96
      %v5365 = vpop.permute.xlu0 %5364
      %5366 = vrot.lane.b32.xlu0 %v5203, 96
      %v5367 = vpop.permute.xlu0 %5366
      %5368 = vrot.lane.b32.xlu0 %v5204, 96
      %v5369 = vpop.permute.xlu0 %5368
      %5370 = vrot.lane.b32.xlu0 %v5205, 96
      %v5371 = vpop.permute.xlu0 %5370
      %5372 = vrot.lane.b32.xlu0 %v5206, 96
      %v5373 = vpop.permute.xlu0 %5372
      %5374 = vrot.lane.b32.xlu0 %v5207, 96
      %v5375 = vpop.permute.xlu0 %5374
      %5376 = vrot.lane.b32.xlu0 %v5208, 96
      %v5377 = vpop.permute.xlu0 %5376
      %5378 = vrot.lane.b32.xlu0 %v5209, 96
      %v5379 = vpop.permute.xlu0 %5378
      %5380 = vrot.lane.b32.xlu0 %v5210, 96
      %v5381 = vpop.permute.xlu0 %5380
      %5382 = vrot.lane.b32.xlu0 %v5211, 96
      %v5383 = vpop.permute.xlu0 %5382
      %5384 = vrot.lane.b32.xlu0 %v5212, 96
      %v5385 = vpop.permute.xlu0 %5384
      %5386 = vrot.lane.b32.xlu0 %v5213, 96
      %v5387 = vpop.permute.xlu0 %5386
      %5388 = vrot.lane.b32.xlu0 %v5214, 96
      %v5389 = vpop.permute.xlu0 %5388
      %5390 = vrot.lane.b32.xlu0 %v5215, 96
      %v5391 = vpop.permute.xlu0 %5390
      %5392 = vrot.lane.b32.xlu0 %v5216, 96
      %v5393 = vpop.permute.xlu0 %5392
      %5394 = vrot.lane.b32.xlu0 %v5217, 96
      %v5395 = vpop.permute.xlu0 %5394
      %5396 = vrot.lane.b32.xlu0 %v5326, 96
      %v5397 = vpop.permute.xlu0 %5396
      %5398 = vrot.lane.b32.xlu0 %v5327, 96
      %v5399 = vpop.permute.xlu0 %5398
      %v5400 = vadd.f32 %v5290, %v5329
      %v5401 = vadd.f32 %v5291, %v5331
      %v5402 = vadd.f32 %v5292, %v5333
      %v5403 = vadd.f32 %v5293, %v5335
      %v5404 = vadd.f32 %v5294, %v5337
      %v5405 = vadd.f32 %v5295, %v5339
      %v5406 = vadd.f32 %v5296, %v5341
      %v5407 = vadd.f32 %v5297, %v5343
      %v5408 = vadd.f32 %v5298, %v5345
      %v5409 = vadd.f32 %v5299, %v5347
      %v5410 = vadd.f32 %v5300, %v5349
      %v5411 = vadd.f32 %v5301, %v5351
      %v5412 = vadd.f32 %v5302, %v5353
      %v5413 = vadd.f32 %v5303, %v5355
      %v5414 = vadd.f32 %v5304, %v5357
      %v5415 = vadd.f32 %v5305, %v5359
      %v5416 = vadd.f32 %v5306, %v5361
      %v5417 = vadd.f32 %v5307, %v5363
      %v5418 = vadd.f32 %v5308, %v5365
      %v5419 = vadd.f32 %v5309, %v5367
      %v5420 = vadd.f32 %v5310, %v5369
      %v5421 = vadd.f32 %v5311, %v5371
      %v5422 = vadd.f32 %v5312, %v5373
      %v5423 = vadd.f32 %v5313, %v5375
      %v5424 = vadd.f32 %v5314, %v5377
      %v5425 = vadd.f32 %v5315, %v5379
      %v5426 = vadd.f32 %v5316, %v5381
      %v5427 = vadd.f32 %v5317, %v5383
      %v5428 = vadd.f32 %v5318, %v5385
      %v5429 = vadd.f32 %v5319, %v5387
      %v5430 = vadd.f32 %v5320, %v5389
      %v5431 = vadd.f32 %v5321, %v5391
      %v5432 = vadd.f32 %v5322, %v5393
      %v5433 = vadd.f32 %v5323, %v5395
      %v5434 = vadd.f32 %v5324, %v5397
      %v5435 = vadd.f32 %v5325, %v5399
      %v5436 = vld [vmem:[#allocation2 + $0x13] sm:$0xff]
      %v5437 = vld [vmem:[#allocation2 + $0x1b] sm:$0xff]
      %v5438 = vld [vmem:[#allocation2 + $0x23] sm:$0xff]
      %v5439 = vld [vmem:[#allocation2 + $0x2b] sm:$0xff]
      %v5440 = vld [vmem:[#allocation2 + $0x33] sm:$0xff]
      %v5441 = vld [vmem:[#allocation2 + $0x3b] sm:$0xff]
      %v5442 = vld [vmem:[#allocation2 + $0x43] sm:$0xff]
      %v5443 = vld [vmem:[#allocation2 + $0x4b] sm:$0xff]
      %v5444 = vld [vmem:[#allocation2 + $0x53] sm:$0xff]
      %v5445 = vld [vmem:[#allocation2 + $0x5b] sm:$0xff]
      %v5446 = vld [vmem:[#allocation2 + $0x63] sm:$0xff]
      %v5447 = vld [vmem:[#allocation2 + $0x6b] sm:$0xff]
      %v5448 = vld [vmem:[#allocation2 + $0x73] sm:$0xff]
      %v5449 = vld [vmem:[#allocation2 + $0x7b] sm:$0xff]
      %v5450 = vld [vmem:[#allocation2 + $0x83] sm:$0xff]
      %v5451 = vld [vmem:[#allocation2 + $0x8b] sm:$0xff]
      %v5452 = vld [vmem:[#allocation2 + $0x93] sm:$0xff]
      %v5453 = vld [vmem:[#allocation2 + $0x9b] sm:$0xff]
      %v5454 = vld [vmem:[#allocation2 + $0xa3] sm:$0xff]
      %v5455 = vld [vmem:[#allocation2 + $0xab] sm:$0xff]
      %v5456 = vld [vmem:[#allocation2 + $0xb3] sm:$0xff]
      %v5457 = vld [vmem:[#allocation2 + $0xbb] sm:$0xff]
      %v5458 = vld [vmem:[#allocation2 + $0xc3] sm:$0xff]
      %v5459 = vld [vmem:[#allocation2 + $0xcb] sm:$0xff]
      %v5460 = vld [vmem:[#allocation2 + $0xd3] sm:$0xff]
      %v5461 = vld [vmem:[#allocation2 + $0xdb] sm:$0xff]
      %v5462 = vld [vmem:[#allocation2 + $0xe3] sm:$0xff]
      %v5463 = vld [vmem:[#allocation2 + $0xeb] sm:$0xff]
      %v5464 = vld [vmem:[#allocation2 + $0xf3] sm:$0xff]
      %v5465 = vld [vmem:[#allocation2 + $0xfb] sm:$0xff]
      %v5466 = vld [vmem:[#allocation2 + $0x103] sm:$0xff]
      %v5467 = vld [vmem:[#allocation2 + $0x10b] sm:$0xff]
      %v5468 = vld [vmem:[#allocation2 + $0x113] sm:$0xff]
      %v5469 = vld [vmem:[#allocation2 + $0x11b] sm:$0xff]
      %v5470 = vld [vmem:[#allocation2 + $0x123] sm:$0xff]
      %v5471 = vld [vmem:[#allocation2 + $0x12b] sm:$0xff]
      %v5472 = vld [vmem:[#allocation2 + $0x14] sm:$0xff]
      %v5473 = vld [vmem:[#allocation2 + $0x1c] sm:$0xff]
      %v5474 = vld [vmem:[#allocation2 + $0x24] sm:$0xff]
      %v5475 = vld [vmem:[#allocation2 + $0x2c] sm:$0xff]
      %v5476 = vld [vmem:[#allocation2 + $0x34] sm:$0xff]
      %v5477 = vld [vmem:[#allocation2 + $0x3c] sm:$0xff]
      %v5478 = vld [vmem:[#allocation2 + $0x44] sm:$0xff]
      %v5479 = vld [vmem:[#allocation2 + $0x4c] sm:$0xff]
      %v5480 = vld [vmem:[#allocation2 + $0x54] sm:$0xff]
      %v5481 = vld [vmem:[#allocation2 + $0x5c] sm:$0xff]
      %v5482 = vld [vmem:[#allocation2 + $0x64] sm:$0xff]
      %v5483 = vld [vmem:[#allocation2 + $0x6c] sm:$0xff]
      %v5484 = vld [vmem:[#allocation2 + $0x74] sm:$0xff]
      %v5485 = vld [vmem:[#allocation2 + $0x7c] sm:$0xff]
      %v5486 = vld [vmem:[#allocation2 + $0x84] sm:$0xff]
      %v5487 = vld [vmem:[#allocation2 + $0x8c] sm:$0xff]
      %v5488 = vld [vmem:[#allocation2 + $0x94] sm:$0xff]
      %v5489 = vld [vmem:[#allocation2 + $0x9c] sm:$0xff]
      %v5490 = vld [vmem:[#allocation2 + $0xa4] sm:$0xff]
      %v5491 = vld [vmem:[#allocation2 + $0xac] sm:$0xff]
      %v5492 = vld [vmem:[#allocation2 + $0xb4] sm:$0xff]
      %v5493 = vld [vmem:[#allocation2 + $0xbc] sm:$0xff]
      %v5494 = vld [vmem:[#allocation2 + $0xc4] sm:$0xff]
      %v5495 = vld [vmem:[#allocation2 + $0xcc] sm:$0xff]
      %v5496 = vld [vmem:[#allocation2 + $0xd4] sm:$0xff]
      %v5497 = vld [vmem:[#allocation2 + $0xdc] sm:$0xff]
      %v5498 = vld [vmem:[#allocation2 + $0xe4] sm:$0xff]
      %v5499 = vld [vmem:[#allocation2 + $0xec] sm:$0xff]
      %v5500 = vld [vmem:[#allocation2 + $0xf4] sm:$0xff]
      %v5501 = vld [vmem:[#allocation2 + $0xfc] sm:$0xff]
      %v5502 = vld [vmem:[#allocation2 + $0x104] sm:$0xff]
      %v5503 = vld [vmem:[#allocation2 + $0x10c] sm:$0xff]
      %v5504 = vld [vmem:[#allocation2 + $0x114] sm:$0xff]
      %v5505 = vld [vmem:[#allocation2 + $0x11c] sm:$0xff]
      %v5506 = vld [vmem:[#allocation2 + $0x124] sm:$0xff]
      %v5507 = vld [vmem:[#allocation2 + $0x12c] sm:$0xff]
      %5508 = vrot.lane.b32.xlu0 %v5472, 32
      %v5509 = vpop.permute.xlu0 %5508
      %5510 = vrot.lane.b32.xlu0 %v5473, 32
      %v5511 = vpop.permute.xlu0 %5510
      %5512 = vrot.lane.b32.xlu0 %v5474, 32
      %v5513 = vpop.permute.xlu0 %5512
      %5514 = vrot.lane.b32.xlu0 %v5475, 32
      %v5515 = vpop.permute.xlu0 %5514
      %5516 = vrot.lane.b32.xlu0 %v5476, 32
      %v5517 = vpop.permute.xlu0 %5516
      %5518 = vrot.lane.b32.xlu0 %v5477, 32
      %v5519 = vpop.permute.xlu0 %5518
      %5520 = vrot.lane.b32.xlu0 %v5478, 32
      %v5521 = vpop.permute.xlu0 %5520
      %5522 = vrot.lane.b32.xlu0 %v5479, 32
      %v5523 = vpop.permute.xlu0 %5522
      %5524 = vrot.lane.b32.xlu0 %v5480, 32
      %v5525 = vpop.permute.xlu0 %5524
      %5526 = vrot.lane.b32.xlu0 %v5481, 32
      %v5527 = vpop.permute.xlu0 %5526
      %5528 = vrot.lane.b32.xlu0 %v5482, 32
      %v5529 = vpop.permute.xlu0 %5528
      %5530 = vrot.lane.b32.xlu0 %v5483, 32
      %v5531 = vpop.permute.xlu0 %5530
      %5532 = vrot.lane.b32.xlu0 %v5484, 32
      %v5533 = vpop.permute.xlu0 %5532
      %5534 = vrot.lane.b32.xlu0 %v5485, 32
      %v5535 = vpop.permute.xlu0 %5534
      %5536 = vrot.lane.b32.xlu0 %v5486, 32
      %v5537 = vpop.permute.xlu0 %5536
      %5538 = vrot.lane.b32.xlu0 %v5487, 32
      %v5539 = vpop.permute.xlu0 %5538
      %5540 = vrot.lane.b32.xlu0 %v5488, 32
      %v5541 = vpop.permute.xlu0 %5540
      %5542 = vrot.lane.b32.xlu0 %v5489, 32
      %v5543 = vpop.permute.xlu0 %5542
      %5544 = vrot.lane.b32.xlu0 %v5490, 32
      %v5545 = vpop.permute.xlu0 %5544
      %5546 = vrot.lane.b32.xlu0 %v5491, 32
      %v5547 = vpop.permute.xlu0 %5546
      %5548 = vrot.lane.b32.xlu0 %v5492, 32
      %v5549 = vpop.permute.xlu0 %5548
      %5550 = vrot.lane.b32.xlu0 %v5493, 32
      %v5551 = vpop.permute.xlu0 %5550
      %5552 = vrot.lane.b32.xlu0 %v5494, 32
      %v5553 = vpop.permute.xlu0 %5552
      %5554 = vrot.lane.b32.xlu0 %v5495, 32
      %v5555 = vpop.permute.xlu0 %5554
      %5556 = vrot.lane.b32.xlu0 %v5496, 32
      %v5557 = vpop.permute.xlu0 %5556
      %5558 = vrot.lane.b32.xlu0 %v5497, 32
      %v5559 = vpop.permute.xlu0 %5558
      %5560 = vrot.lane.b32.xlu0 %v5498, 32
      %v5561 = vpop.permute.xlu0 %5560
      %5562 = vrot.lane.b32.xlu0 %v5499, 32
      %v5563 = vpop.permute.xlu0 %5562
      %5564 = vrot.lane.b32.xlu0 %v5500, 32
      %v5565 = vpop.permute.xlu0 %5564
      %5566 = vrot.lane.b32.xlu0 %v5501, 32
      %v5567 = vpop.permute.xlu0 %5566
      %5568 = vrot.lane.b32.xlu0 %v5502, 32
      %v5569 = vpop.permute.xlu0 %5568
      %5570 = vrot.lane.b32.xlu0 %v5503, 32
      %v5571 = vpop.permute.xlu0 %5570
      %5572 = vrot.lane.b32.xlu0 %v5504, 32
      %v5573 = vpop.permute.xlu0 %5572
      %5574 = vrot.lane.b32.xlu0 %v5505, 32
      %v5575 = vpop.permute.xlu0 %5574
      %5576 = vrot.lane.b32.xlu0 %v5506, 32
      %v5577 = vpop.permute.xlu0 %5576
      %5578 = vrot.lane.b32.xlu0 %v5507, 32
      %v5579 = vpop.permute.xlu0 %5578
      %v5580 = vadd.f32 %v5436, %v5509
      %v5581 = vadd.f32 %v5437, %v5511
      %v5582 = vadd.f32 %v5438, %v5513
      %v5583 = vadd.f32 %v5439, %v5515
      %v5584 = vadd.f32 %v5440, %v5517
      %v5585 = vadd.f32 %v5441, %v5519
      %v5586 = vadd.f32 %v5442, %v5521
      %v5587 = vadd.f32 %v5443, %v5523
      %v5588 = vadd.f32 %v5444, %v5525
      %v5589 = vadd.f32 %v5445, %v5527
      %v5590 = vadd.f32 %v5446, %v5529
      %v5591 = vadd.f32 %v5447, %v5531
      %v5592 = vadd.f32 %v5448, %v5533
      %v5593 = vadd.f32 %v5449, %v5535
      %v5594 = vadd.f32 %v5450, %v5537
      %v5595 = vadd.f32 %v5451, %v5539
      %v5596 = vadd.f32 %v5452, %v5541
      %v5597 = vadd.f32 %v5453, %v5543
      %v5598 = vadd.f32 %v5454, %v5545
      %v5599 = vadd.f32 %v5455, %v5547
      %v5600 = vadd.f32 %v5456, %v5549
      %v5601 = vadd.f32 %v5457, %v5551
      %v5602 = vadd.f32 %v5458, %v5553
      %v5603 = vadd.f32 %v5459, %v5555
      %v5604 = vadd.f32 %v5460, %v5557
      %v5605 = vadd.f32 %v5461, %v5559
      %v5606 = vadd.f32 %v5462, %v5561
      %v5607 = vadd.f32 %v5463, %v5563
      %v5608 = vadd.f32 %v5464, %v5565
      %v5609 = vadd.f32 %v5465, %v5567
      %v5610 = vadd.f32 %v5466, %v5569
      %v5611 = vadd.f32 %v5467, %v5571
      %v5612 = vadd.f32 %v5468, %v5573
      %v5613 = vadd.f32 %v5469, %v5575
      %v5614 = vadd.f32 %v5470, %v5577
      %v5615 = vadd.f32 %v5471, %v5579
      %v5616 = vld [vmem:[#allocation2 + $0x134] sm:$0xff]
      %v5617 = vld [vmem:[#allocation2 + $0x13c] sm:$0xff]
      %5618 = vrot.lane.b32.xlu0 %v5474, 64
      %v5619 = vpop.permute.xlu0 %5618
      %5620 = vrot.lane.b32.xlu0 %v5475, 64
      %v5621 = vpop.permute.xlu0 %5620
      %5622 = vrot.lane.b32.xlu0 %v5476, 64
      %v5623 = vpop.permute.xlu0 %5622
      %5624 = vrot.lane.b32.xlu0 %v5477, 64
      %v5625 = vpop.permute.xlu0 %5624
      %5626 = vrot.lane.b32.xlu0 %v5478, 64
      %v5627 = vpop.permute.xlu0 %5626
      %5628 = vrot.lane.b32.xlu0 %v5479, 64
      %v5629 = vpop.permute.xlu0 %5628
      %5630 = vrot.lane.b32.xlu0 %v5480, 64
      %v5631 = vpop.permute.xlu0 %5630
      %5632 = vrot.lane.b32.xlu0 %v5481, 64
      %v5633 = vpop.permute.xlu0 %5632
      %5634 = vrot.lane.b32.xlu0 %v5482, 64
      %v5635 = vpop.permute.xlu0 %5634
      %5636 = vrot.lane.b32.xlu0 %v5483, 64
      %v5637 = vpop.permute.xlu0 %5636
      %5638 = vrot.lane.b32.xlu0 %v5484, 64
      %v5639 = vpop.permute.xlu0 %5638
      %5640 = vrot.lane.b32.xlu0 %v5485, 64
      %v5641 = vpop.permute.xlu0 %5640
      %5642 = vrot.lane.b32.xlu0 %v5486, 64
      %v5643 = vpop.permute.xlu0 %5642
      %5644 = vrot.lane.b32.xlu0 %v5487, 64
      %v5645 = vpop.permute.xlu0 %5644
      %5646 = vrot.lane.b32.xlu0 %v5488, 64
      %v5647 = vpop.permute.xlu0 %5646
      %5648 = vrot.lane.b32.xlu0 %v5489, 64
      %v5649 = vpop.permute.xlu0 %5648
      %5650 = vrot.lane.b32.xlu0 %v5490, 64
      %v5651 = vpop.permute.xlu0 %5650
      %5652 = vrot.lane.b32.xlu0 %v5491, 64
      %v5653 = vpop.permute.xlu0 %5652
      %5654 = vrot.lane.b32.xlu0 %v5492, 64
      %v5655 = vpop.permute.xlu0 %5654
      %5656 = vrot.lane.b32.xlu0 %v5493, 64
      %v5657 = vpop.permute.xlu0 %5656
      %5658 = vrot.lane.b32.xlu0 %v5494, 64
      %v5659 = vpop.permute.xlu0 %5658
      %5660 = vrot.lane.b32.xlu0 %v5495, 64
      %v5661 = vpop.permute.xlu0 %5660
      %5662 = vrot.lane.b32.xlu0 %v5496, 64
      %v5663 = vpop.permute.xlu0 %5662
      %5664 = vrot.lane.b32.xlu0 %v5497, 64
      %v5665 = vpop.permute.xlu0 %5664
      %5666 = vrot.lane.b32.xlu0 %v5498, 64
      %v5667 = vpop.permute.xlu0 %5666
      %5668 = vrot.lane.b32.xlu0 %v5499, 64
      %v5669 = vpop.permute.xlu0 %5668
      %5670 = vrot.lane.b32.xlu0 %v5500, 64
      %v5671 = vpop.permute.xlu0 %5670
      %5672 = vrot.lane.b32.xlu0 %v5501, 64
      %v5673 = vpop.permute.xlu0 %5672
      %5674 = vrot.lane.b32.xlu0 %v5502, 64
      %v5675 = vpop.permute.xlu0 %5674
      %5676 = vrot.lane.b32.xlu0 %v5503, 64
      %v5677 = vpop.permute.xlu0 %5676
      %5678 = vrot.lane.b32.xlu0 %v5504, 64
      %v5679 = vpop.permute.xlu0 %5678
      %5680 = vrot.lane.b32.xlu0 %v5505, 64
      %v5681 = vpop.permute.xlu0 %5680
      %5682 = vrot.lane.b32.xlu0 %v5506, 64
      %v5683 = vpop.permute.xlu0 %5682
      %5684 = vrot.lane.b32.xlu0 %v5507, 64
      %v5685 = vpop.permute.xlu0 %5684
      %5686 = vrot.lane.b32.xlu0 %v5616, 64
      %v5687 = vpop.permute.xlu0 %5686
      %5688 = vrot.lane.b32.xlu0 %v5617, 64
      %v5689 = vpop.permute.xlu0 %5688
      %v5690 = vadd.f32 %v5580, %v5619
      %v5691 = vadd.f32 %v5581, %v5621
      %v5692 = vadd.f32 %v5582, %v5623
      %v5693 = vadd.f32 %v5583, %v5625
      %v5694 = vadd.f32 %v5584, %v5627
      %v5695 = vadd.f32 %v5585, %v5629
      %v5696 = vadd.f32 %v5586, %v5631
      %v5697 = vadd.f32 %v5587, %v5633
      %v5698 = vadd.f32 %v5588, %v5635
      %v5699 = vadd.f32 %v5589, %v5637
      %v5700 = vadd.f32 %v5590, %v5639
      %v5701 = vadd.f32 %v5591, %v5641
      %v5702 = vadd.f32 %v5592, %v5643
      %v5703 = vadd.f32 %v5593, %v5645
      %v5704 = vadd.f32 %v5594, %v5647
      %v5705 = vadd.f32 %v5595, %v5649
      %v5706 = vadd.f32 %v5596, %v5651
      %v5707 = vadd.f32 %v5597, %v5653
      %v5708 = vadd.f32 %v5598, %v5655
      %v5709 = vadd.f32 %v5599, %v5657
      %v5710 = vadd.f32 %v5600, %v5659
      %v5711 = vadd.f32 %v5601, %v5661
      %v5712 = vadd.f32 %v5602, %v5663
      %v5713 = vadd.f32 %v5603, %v5665
      %v5714 = vadd.f32 %v5604, %v5667
      %v5715 = vadd.f32 %v5605, %v5669
      %v5716 = vadd.f32 %v5606, %v5671
      %v5717 = vadd.f32 %v5607, %v5673
      %v5718 = vadd.f32 %v5608, %v5675
      %v5719 = vadd.f32 %v5609, %v5677
      %v5720 = vadd.f32 %v5610, %v5679
      %v5721 = vadd.f32 %v5611, %v5681
      %v5722 = vadd.f32 %v5612, %v5683
      %v5723 = vadd.f32 %v5613, %v5685
      %v5724 = vadd.f32 %v5614, %v5687
      %v5725 = vadd.f32 %v5615, %v5689
      %v5726 = vld [vmem:[#allocation2 + $0x25] sm:$0xff]
      %v5727 = vld [vmem:[#allocation2 + $0x2d] sm:$0xff]
      %v5728 = vld [vmem:[#allocation2 + $0x35] sm:$0xff]
      %v5729 = vld [vmem:[#allocation2 + $0x3d] sm:$0xff]
      %v5730 = vld [vmem:[#allocation2 + $0x45] sm:$0xff]
      %v5731 = vld [vmem:[#allocation2 + $0x4d] sm:$0xff]
      %v5732 = vld [vmem:[#allocation2 + $0x55] sm:$0xff]
      %v5733 = vld [vmem:[#allocation2 + $0x5d] sm:$0xff]
      %v5734 = vld [vmem:[#allocation2 + $0x65] sm:$0xff]
      %v5735 = vld [vmem:[#allocation2 + $0x6d] sm:$0xff]
      %v5736 = vld [vmem:[#allocation2 + $0x75] sm:$0xff]
      %v5737 = vld [vmem:[#allocation2 + $0x7d] sm:$0xff]
      %v5738 = vld [vmem:[#allocation2 + $0x85] sm:$0xff]
      %v5739 = vld [vmem:[#allocation2 + $0x8d] sm:$0xff]
      %v5740 = vld [vmem:[#allocation2 + $0x95] sm:$0xff]
      %v5741 = vld [vmem:[#allocation2 + $0x9d] sm:$0xff]
      %v5742 = vld [vmem:[#allocation2 + $0xa5] sm:$0xff]
      %v5743 = vld [vmem:[#allocation2 + $0xad] sm:$0xff]
      %v5744 = vld [vmem:[#allocation2 + $0xb5] sm:$0xff]
      %v5745 = vld [vmem:[#allocation2 + $0xbd] sm:$0xff]
      %v5746 = vld [vmem:[#allocation2 + $0xc5] sm:$0xff]
      %v5747 = vld [vmem:[#allocation2 + $0xcd] sm:$0xff]
      %v5748 = vld [vmem:[#allocation2 + $0xd5] sm:$0xff]
      %v5749 = vld [vmem:[#allocation2 + $0xdd] sm:$0xff]
      %v5750 = vld [vmem:[#allocation2 + $0xe5] sm:$0xff]
      %v5751 = vld [vmem:[#allocation2 + $0xed] sm:$0xff]
      %v5752 = vld [vmem:[#allocation2 + $0xf5] sm:$0xff]
      %v5753 = vld [vmem:[#allocation2 + $0xfd] sm:$0xff]
      %v5754 = vld [vmem:[#allocation2 + $0x105] sm:$0xff]
      %v5755 = vld [vmem:[#allocation2 + $0x10d] sm:$0xff]
      %v5756 = vld [vmem:[#allocation2 + $0x115] sm:$0xff]
      %v5757 = vld [vmem:[#allocation2 + $0x11d] sm:$0xff]
      %v5758 = vld [vmem:[#allocation2 + $0x125] sm:$0xff]
      %v5759 = vld [vmem:[#allocation2 + $0x12d] sm:$0xff]
      %v5760 = vld [vmem:[#allocation2 + $0x135] sm:$0xff]
      %v5761 = vld [vmem:[#allocation2 + $0x13d] sm:$0xff]
      %5762 = vrot.lane.b32.xlu0 %v5726, 96
      %v5763 = vpop.permute.xlu0 %5762
      %5764 = vrot.lane.b32.xlu0 %v5727, 96
      %v5765 = vpop.permute.xlu0 %5764
      %5766 = vrot.lane.b32.xlu0 %v5728, 96
      %v5767 = vpop.permute.xlu0 %5766
      %5768 = vrot.lane.b32.xlu0 %v5729, 96
      %v5769 = vpop.permute.xlu0 %5768
      %5770 = vrot.lane.b32.xlu0 %v5730, 96
      %v5771 = vpop.permute.xlu0 %5770
      %5772 = vrot.lane.b32.xlu0 %v5731, 96
      %v5773 = vpop.permute.xlu0 %5772
      %5774 = vrot.lane.b32.xlu0 %v5732, 96
      %v5775 = vpop.permute.xlu0 %5774
      %5776 = vrot.lane.b32.xlu0 %v5733, 96
      %v5777 = vpop.permute.xlu0 %5776
      %5778 = vrot.lane.b32.xlu0 %v5734, 96
      %v5779 = vpop.permute.xlu0 %5778
      %5780 = vrot.lane.b32.xlu0 %v5735, 96
      %v5781 = vpop.permute.xlu0 %5780
      %5782 = vrot.lane.b32.xlu0 %v5736, 96
      %v5783 = vpop.permute.xlu0 %5782
      %5784 = vrot.lane.b32.xlu0 %v5737, 96
      %v5785 = vpop.permute.xlu0 %5784
      %5786 = vrot.lane.b32.xlu0 %v5738, 96
      %v5787 = vpop.permute.xlu0 %5786
      %5788 = vrot.lane.b32.xlu0 %v5739, 96
      %v5789 = vpop.permute.xlu0 %5788
      %5790 = vrot.lane.b32.xlu0 %v5740, 96
      %v5791 = vpop.permute.xlu0 %5790
      %5792 = vrot.lane.b32.xlu0 %v5741, 96
      %v5793 = vpop.permute.xlu0 %5792
      %5794 = vrot.lane.b32.xlu0 %v5742, 96
      %v5795 = vpop.permute.xlu0 %5794
      %5796 = vrot.lane.b32.xlu0 %v5743, 96
      %v5797 = vpop.permute.xlu0 %5796
      %5798 = vrot.lane.b32.xlu0 %v5744, 96
      %v5799 = vpop.permute.xlu0 %5798
      %5800 = vrot.lane.b32.xlu0 %v5745, 96
      %v5801 = vpop.permute.xlu0 %5800
      %5802 = vrot.lane.b32.xlu0 %v5746, 96
      %v5803 = vpop.permute.xlu0 %5802
      %5804 = vrot.lane.b32.xlu0 %v5747, 96
      %v5805 = vpop.permute.xlu0 %5804
      %5806 = vrot.lane.b32.xlu0 %v5748, 96
      %v5807 = vpop.permute.xlu0 %5806
      %5808 = vrot.lane.b32.xlu0 %v5749, 96
      %v5809 = vpop.permute.xlu0 %5808
      %5810 = vrot.lane.b32.xlu0 %v5750, 96
      %v5811 = vpop.permute.xlu0 %5810
      %5812 = vrot.lane.b32.xlu0 %v5751, 96
      %v5813 = vpop.permute.xlu0 %5812
      %5814 = vrot.lane.b32.xlu0 %v5752, 96
      %v5815 = vpop.permute.xlu0 %5814
      %5816 = vrot.lane.b32.xlu0 %v5753, 96
      %v5817 = vpop.permute.xlu0 %5816
      %5818 = vrot.lane.b32.xlu0 %v5754, 96
      %v5819 = vpop.permute.xlu0 %5818
      %5820 = vrot.lane.b32.xlu0 %v5755, 96
      %v5821 = vpop.permute.xlu0 %5820
      %5822 = vrot.lane.b32.xlu0 %v5756, 96
      %v5823 = vpop.permute.xlu0 %5822
      %5824 = vrot.lane.b32.xlu0 %v5757, 96
      %v5825 = vpop.permute.xlu0 %5824
      %5826 = vrot.lane.b32.xlu0 %v5758, 96
      %v5827 = vpop.permute.xlu0 %5826
      %5828 = vrot.lane.b32.xlu0 %v5759, 96
      %v5829 = vpop.permute.xlu0 %5828
      %5830 = vrot.lane.b32.xlu0 %v5760, 96
      %v5831 = vpop.permute.xlu0 %5830
      %5832 = vrot.lane.b32.xlu0 %v5761, 96
      %v5833 = vpop.permute.xlu0 %5832
      %v5834 = vadd.f32 %v5690, %v5763
      %v5835 = vadd.f32 %v5691, %v5765
      %v5836 = vadd.f32 %v5692, %v5767
      %v5837 = vadd.f32 %v5693, %v5769
      %v5838 = vadd.f32 %v5694, %v5771
      %v5839 = vadd.f32 %v5695, %v5773
      %v5840 = vadd.f32 %v5696, %v5775
      %v5841 = vadd.f32 %v5697, %v5777
      %v5842 = vadd.f32 %v5698, %v5779
      %v5843 = vadd.f32 %v5699, %v5781
      %v5844 = vadd.f32 %v5700, %v5783
      %v5845 = vadd.f32 %v5701, %v5785
      %v5846 = vadd.f32 %v5702, %v5787
      %v5847 = vadd.f32 %v5703, %v5789
      %v5848 = vadd.f32 %v5704, %v5791
      %v5849 = vadd.f32 %v5705, %v5793
      %v5850 = vadd.f32 %v5706, %v5795
      %v5851 = vadd.f32 %v5707, %v5797
      %v5852 = vadd.f32 %v5708, %v5799
      %v5853 = vadd.f32 %v5709, %v5801
      %v5854 = vadd.f32 %v5710, %v5803
      %v5855 = vadd.f32 %v5711, %v5805
      %v5856 = vadd.f32 %v5712, %v5807
      %v5857 = vadd.f32 %v5713, %v5809
      %v5858 = vadd.f32 %v5714, %v5811
      %v5859 = vadd.f32 %v5715, %v5813
      %v5860 = vadd.f32 %v5716, %v5815
      %v5861 = vadd.f32 %v5717, %v5817
      %v5862 = vadd.f32 %v5718, %v5819
      %v5863 = vadd.f32 %v5719, %v5821
      %v5864 = vadd.f32 %v5720, %v5823
      %v5865 = vadd.f32 %v5721, %v5825
      %v5866 = vadd.f32 %v5722, %v5827
      %v5867 = vadd.f32 %v5723, %v5829
      %v5868 = vadd.f32 %v5724, %v5831
      %v5869 = vadd.f32 %v5725, %v5833
      %v5870 = vld [vmem:[#allocation2 + $0x26] sm:$0xff]
      %v5871 = vld [vmem:[#allocation2 + $0x2e] sm:$0xff]
      %v5872 = vld [vmem:[#allocation2 + $0x36] sm:$0xff]
      %v5873 = vld [vmem:[#allocation2 + $0x3e] sm:$0xff]
      %v5874 = vld [vmem:[#allocation2 + $0x46] sm:$0xff]
      %v5875 = vld [vmem:[#allocation2 + $0x4e] sm:$0xff]
      %v5876 = vld [vmem:[#allocation2 + $0x56] sm:$0xff]
      %v5877 = vld [vmem:[#allocation2 + $0x5e] sm:$0xff]
      %v5878 = vld [vmem:[#allocation2 + $0x66] sm:$0xff]
      %v5879 = vld [vmem:[#allocation2 + $0x6e] sm:$0xff]
      %v5880 = vld [vmem:[#allocation2 + $0x76] sm:$0xff]
      %v5881 = vld [vmem:[#allocation2 + $0x7e] sm:$0xff]
      %v5882 = vld [vmem:[#allocation2 + $0x86] sm:$0xff]
      %v5883 = vld [vmem:[#allocation2 + $0x8e] sm:$0xff]
      %v5884 = vld [vmem:[#allocation2 + $0x96] sm:$0xff]
      %v5885 = vld [vmem:[#allocation2 + $0x9e] sm:$0xff]
      %v5886 = vld [vmem:[#allocation2 + $0xa6] sm:$0xff]
      %v5887 = vld [vmem:[#allocation2 + $0xae] sm:$0xff]
      %v5888 = vld [vmem:[#allocation2 + $0xb6] sm:$0xff]
      %v5889 = vld [vmem:[#allocation2 + $0xbe] sm:$0xff]
      %v5890 = vld [vmem:[#allocation2 + $0xc6] sm:$0xff]
      %v5891 = vld [vmem:[#allocation2 + $0xce] sm:$0xff]
      %v5892 = vld [vmem:[#allocation2 + $0xd6] sm:$0xff]
      %v5893 = vld [vmem:[#allocation2 + $0xde] sm:$0xff]
      %v5894 = vld [vmem:[#allocation2 + $0xe6] sm:$0xff]
      %v5895 = vld [vmem:[#allocation2 + $0xee] sm:$0xff]
      %v5896 = vld [vmem:[#allocation2 + $0xf6] sm:$0xff]
      %v5897 = vld [vmem:[#allocation2 + $0xfe] sm:$0xff]
      %v5898 = vld [vmem:[#allocation2 + $0x106] sm:$0xff]
      %v5899 = vld [vmem:[#allocation2 + $0x10e] sm:$0xff]
      %v5900 = vld [vmem:[#allocation2 + $0x116] sm:$0xff]
      %v5901 = vld [vmem:[#allocation2 + $0x11e] sm:$0xff]
      %v5902 = vld [vmem:[#allocation2 + $0x126] sm:$0xff]
      %v5903 = vld [vmem:[#allocation2 + $0x12e] sm:$0xff]
      %v5904 = vld [vmem:[#allocation2 + $0x136] sm:$0xff]
      %v5905 = vld [vmem:[#allocation2 + $0x13e] sm:$0xff]
      %v5906 = vpack.c.bf16 %v5401, %v5400
      %v5907 = vpack.c.bf16 %v5835, %v5834
      %v5908 = vpack.c.bf16 %v5871, %v5870
      %v5909 = vpack.c.bf16 %v5403, %v5402
      %v5910 = vpack.c.bf16 %v5837, %v5836
      %v5911 = vpack.c.bf16 %v5873, %v5872
      %v5912 = vpack.c.bf16 %v5405, %v5404
      %v5913 = vpack.c.bf16 %v5839, %v5838
      %v5914 = vpack.c.bf16 %v5875, %v5874
      %v5915 = vpack.c.bf16 %v5407, %v5406
      %v5916 = vpack.c.bf16 %v5841, %v5840
      %v5917 = vpack.c.bf16 %v5877, %v5876
      %v5918 = vpack.c.bf16 %v5409, %v5408
      %v5919 = vpack.c.bf16 %v5843, %v5842
      %v5920 = vpack.c.bf16 %v5879, %v5878
      %v5921 = vpack.c.bf16 %v5411, %v5410
      %v5922 = vpack.c.bf16 %v5845, %v5844
      %v5923 = vpack.c.bf16 %v5881, %v5880
      %v5924 = vpack.c.bf16 %v5413, %v5412
      %v5925 = vpack.c.bf16 %v5847, %v5846
      %v5926 = vpack.c.bf16 %v5883, %v5882
      %v5927 = vpack.c.bf16 %v5415, %v5414
      %v5928 = vpack.c.bf16 %v5849, %v5848
      %v5929 = vpack.c.bf16 %v5885, %v5884
      %v5930 = vpack.c.bf16 %v5417, %v5416
      %v5931 = vpack.c.bf16 %v5851, %v5850
      %v5932 = vpack.c.bf16 %v5887, %v5886
      %v5933 = vpack.c.bf16 %v5419, %v5418
      %v5934 = vpack.c.bf16 %v5853, %v5852
      %v5935 = vpack.c.bf16 %v5889, %v5888
      %v5936 = vpack.c.bf16 %v5421, %v5420
      %v5937 = vpack.c.bf16 %v5855, %v5854
      %v5938 = vpack.c.bf16 %v5891, %v5890
      %v5939 = vpack.c.bf16 %v5423, %v5422
      %v5940 = vpack.c.bf16 %v5857, %v5856
      %v5941 = vpack.c.bf16 %v5893, %v5892
      %v5942 = vpack.c.bf16 %v5425, %v5424
      %v5943 = vpack.c.bf16 %v5859, %v5858
      %v5944 = vpack.c.bf16 %v5895, %v5894
      %v5945 = vpack.c.bf16 %v5427, %v5426
      %v5946 = vpack.c.bf16 %v5861, %v5860
      %v5947 = vpack.c.bf16 %v5897, %v5896
      %v5948 = vpack.c.bf16 %v5429, %v5428
      %v5949 = vpack.c.bf16 %v5863, %v5862
      %v5950 = vpack.c.bf16 %v5899, %v5898
      %v5951 = vpack.c.bf16 %v5431, %v5430
      %v5952 = vpack.c.bf16 %v5865, %v5864
      %v5953 = vpack.c.bf16 %v5901, %v5900
      %v5954 = vpack.c.bf16 %v5433, %v5432
      %v5955 = vpack.c.bf16 %v5867, %v5866
      %v5956 = vpack.c.bf16 %v5903, %v5902
      %v5957 = vpack.c.bf16 %v5435, %v5434
      %v5958 = vpack.c.bf16 %v5869, %v5868
      %v5959 = vpack.c.bf16 %v5905, %v5904
      %v5960 = vld [vmem:[%s4] sm:$0xf]
      %v5961 = vld [vmem:[%s4 + $0x4] sm:$0xf]
      %v5962 = vld [vmem:[%s4 + $0x8] sm:$0xf]
      %v5963 = vld [vmem:[%s4 + $0xc] sm:$0xf]
      %v5964 = vld [vmem:[%s4 + $0x10] sm:$0xf]
      %v5965 = vld [vmem:[%s4 + $0x14] sm:$0xf]
      %v5966 = vld [vmem:[%s4 + $0x18] sm:$0xf]
      %v5967 = vld [vmem:[%s4 + $0x1c] sm:$0xf]
      %v5968 = vld [vmem:[%s4 + $0x20] sm:$0xf]
      %v5969 = vld [vmem:[%s4 + $0x24] sm:$0xf]
      %v5970 = vld [vmem:[%s4 + $0x28] sm:$0xf]
      %v5971 = vld [vmem:[%s4 + $0x2c] sm:$0xf]
      %v5972 = vld [vmem:[%s4 + $0x30] sm:$0xf]
      %v5973 = vld [vmem:[%s4 + $0x34] sm:$0xf]
      %v5974 = vld [vmem:[%s4 + $0x38] sm:$0xf]
      %v5975 = vld [vmem:[%s4 + $0x3c] sm:$0xf]
      %v5976 = vld [vmem:[%s4 + $0x40] sm:$0xf]
      %v5977 = vld [vmem:[%s4 + $0x44] sm:$0xf]
      %v5978 = vld [vmem:[%s4 + $0x48] sm:$0xf]
      %v5979 = vld [vmem:[%s4 + $0x4c] sm:$0xf]
      %v5980 = vld [vmem:[%s4 + $0x50] sm:$0xf]
      %v5981 = vld [vmem:[%s4 + $0x54] sm:$0xf]
      %v5982 = vld [vmem:[%s4 + $0x58] sm:$0xf]
      %v5983 = vld [vmem:[%s4 + $0x5c] sm:$0xf]
      %v5984 = vld [vmem:[%s4 + $0x60] sm:$0xf]
      %v5985 = vld [vmem:[%s4 + $0x64] sm:$0xf]
      %v5986 = vld [vmem:[%s4 + $0x68] sm:$0xf]
      %v5987 = vld [vmem:[%s4 + $0x6c] sm:$0xf]
      %v5988 = vld [vmem:[%s4 + $0x70] sm:$0xf]
      %v5989 = vld [vmem:[%s4 + $0x74] sm:$0xf]
      %v5990 = vld [vmem:[%s4 + $0x78] sm:$0xf]
      %v5991 = vld [vmem:[%s4 + $0x7c] sm:$0xf]
      %v5992 = vld [vmem:[%s4 + $0x80] sm:$0xf]
      %v5993 = vld [vmem:[%s4 + $0x84] sm:$0xf]
      %v5994 = vld [vmem:[%s4 + $0x88] sm:$0xf]
      %v5995 = vld [vmem:[%s4 + $0x8c] sm:$0xf]
      %v5996 = vld [vmem:[%s4 + $0x90] sm:$0xf]
      %v5997 = vld [vmem:[%s4 + $0x94] sm:$0xf]
      %v5998 = vld [vmem:[%s4 + $0x98] sm:$0xf]
      %v5999 = vld [vmem:[%s4 + $0x9c] sm:$0xf]
      %v6000 = vld [vmem:[%s4 + $0xa0] sm:$0xf]
      %v6001 = vld [vmem:[%s4 + $0xa4] sm:$0xf]
      %v6002 = vld [vmem:[%s4 + $0xa8] sm:$0xf]
      %v6003 = vld [vmem:[%s4 + $0xac] sm:$0xf]
      %v6004 = vld [vmem:[%s4 + $0xb0] sm:$0xf]
      %v6005 = vld [vmem:[%s4 + $0xb4] sm:$0xf]
      %v6006 = vld [vmem:[%s4 + $0xb8] sm:$0xf]
      %v6007 = vld [vmem:[%s4 + $0xbc] sm:$0xf]
      %v6008 = vld [vmem:[%s5 + $0x2] sm:$0x1]
      %v6009 = vlaneseq
      %v6010 = vshrl.u32 %v6009, 7
      %v6011 = vsub.s32 0, %v6010
      %v6012 = vrot.slane %v6008, %v6011
      %v6061 = vunpack.c.l.b16 %v5960
      %v6062 = vunpack.c.l.b16 %v5961
      %v6063 = vunpack.c.l.b16 %v5962
      %v6064 = vunpack.c.l.b16 %v5963
      %v6065 = vunpack.c.l.b16 %v5964
      %v6066 = vunpack.c.l.b16 %v5965
      %v6067 = vunpack.c.l.b16 %v5966
      %v6068 = vunpack.c.l.b16 %v5967
      %v6069 = vunpack.c.l.b16 %v5968
      %v6070 = vunpack.c.l.b16 %v5969
      %v6071 = vunpack.c.l.b16 %v5970
      %v6072 = vunpack.c.l.b16 %v5971
      %v6073 = vunpack.c.l.b16 %v5972
      %v6074 = vunpack.c.l.b16 %v5973
      %v6075 = vunpack.c.l.b16 %v5974
      %v6076 = vunpack.c.l.b16 %v5975
      %v6077 = vunpack.c.l.b16 %v5976
      %v6078 = vunpack.c.l.b16 %v5977
      %v6079 = vunpack.c.l.b16 %v5978
      %v6080 = vunpack.c.l.b16 %v5979
      %v6081 = vunpack.c.l.b16 %v5980
      %v6082 = vunpack.c.l.b16 %v5981
      %v6083 = vunpack.c.l.b16 %v5982
      %v6084 = vunpack.c.l.b16 %v5983
      %v6085 = vunpack.c.l.b16 %v5984
      %v6086 = vunpack.c.l.b16 %v5985
      %v6087 = vunpack.c.l.b16 %v5986
      %v6088 = vunpack.c.l.b16 %v5987
      %v6089 = vunpack.c.l.b16 %v5988
      %v6090 = vunpack.c.l.b16 %v5989
      %v6091 = vunpack.c.l.b16 %v5990
      %v6092 = vunpack.c.l.b16 %v5991
      %v6093 = vunpack.c.l.b16 %v5992
      %v6094 = vunpack.c.l.b16 %v5993
      %v6095 = vunpack.c.l.b16 %v5994
      %v6096 = vunpack.c.l.b16 %v5995
      %v6097 = vunpack.c.l.b16 %v5996
      %v6098 = vunpack.c.l.b16 %v5997
      %v6099 = vunpack.c.l.b16 %v5998
      %v6100 = vunpack.c.l.b16 %v5999
      %v6101 = vunpack.c.l.b16 %v6000
      %v6102 = vunpack.c.l.b16 %v6001
      %v6103 = vunpack.c.l.b16 %v6002
      %v6104 = vunpack.c.l.b16 %v6003
      %v6105 = vunpack.c.l.b16 %v6004
      %v6106 = vunpack.c.l.b16 %v6005
      %v6107 = vunpack.c.l.b16 %v6006
      %v6108 = vunpack.c.l.b16 %v6007
      %v6109 = vpack.c.b16 %v6062, %v6061
      %v6110 = vpack.c.b16 %v6064, %v6063
      %v6111 = vpack.c.b16 %v6066, %v6065
      %v6112 = vpack.c.b16 %v6068, %v6067
      %v6113 = vpack.c.b16 %v6070, %v6069
      %v6114 = vpack.c.b16 %v6072, %v6071
      %v6115 = vpack.c.b16 %v6074, %v6073
      %v6116 = vpack.c.b16 %v6076, %v6075
      %v6117 = vpack.c.b16 %v6078, %v6077
      %v6118 = vpack.c.b16 %v6080, %v6079
      %v6119 = vpack.c.b16 %v6082, %v6081
      %v6120 = vpack.c.b16 %v6084, %v6083
      %v6121 = vpack.c.b16 %v6086, %v6085
      %v6122 = vpack.c.b16 %v6088, %v6087
      %v6123 = vpack.c.b16 %v6090, %v6089
      %v6124 = vpack.c.b16 %v6092, %v6091
      %v6125 = vpack.c.b16 %v6094, %v6093
      %v6126 = vpack.c.b16 %v6096, %v6095
      %v6127 = vpack.c.b16 %v6098, %v6097
      %v6128 = vpack.c.b16 %v6100, %v6099
      %v6129 = vpack.c.b16 %v6102, %v6101
      %v6130 = vpack.c.b16 %v6104, %v6103
      %v6131 = vpack.c.b16 %v6106, %v6105
      %v6132 = vpack.c.b16 %v6108, %v6107
      %6157 = vmatprep.subr.bf16.mxu0 0
      %6158 = vmatpush1.bf16.msra.mxu0 %v6109
      %6159 = vmatprep.subr.bf16.mxu0 0
      %6160 = vmatpush1.bf16.msra.mxu0 %v6110
      %6161 = vmatprep.subr.bf16.mxu0 0
      %6162 = vmatpush1.bf16.msra.mxu0 %v6111
      %6163 = vmatprep.subr.bf16.mxu0 0
      %6164 = vmatpush1.bf16.msra.mxu0 %v6112
      %6165 = vmatprep.subr.bf16.mxu0 0
      %6166 = vmatpush1.bf16.msra.mxu0 %v6113
      %6167 = vmatprep.subr.bf16.mxu0 0
      %6168 = vmatpush1.bf16.msra.mxu0 %v6114
      %6169 = vmatprep.subr.bf16.mxu0 0
      %6170 = vmatpush1.bf16.msra.mxu0 %v6115
      %6171 = vmatprep.subr.bf16.mxu0 0
      %6172 = vmatpush1.bf16.msra.mxu0 %v6116
      %6173 = vmatprep.subr.bf16.mxu0 0
      %6174 = vmatpush1.bf16.msra.mxu0 %v6117
      %6175 = vmatprep.subr.bf16.mxu0 0
      %6176 = vmatpush1.bf16.msra.mxu0 %v6118
      %6177 = vmatprep.subr.bf16.mxu0 0
      %6178 = vmatpush1.bf16.msra.mxu0 %v6119
      %6179 = vmatprep.subr.bf16.mxu0 0
      %6180 = vmatpush1.bf16.msra.mxu0 %v6120
      %6181 = vmatprep.subr.bf16.mxu0 0
      %6182 = vmatpush1.bf16.msra.mxu0 %v6121
      %6183 = vmatprep.subr.bf16.mxu0 0
      %6184 = vmatpush1.bf16.msra.mxu0 %v6122
      %6185 = vmatprep.subr.bf16.mxu0 0
      %6186 = vmatpush1.bf16.msra.mxu0 %v6123
      %6187 = vmatprep.subr.bf16.mxu0 0
      %6188 = vmatpush1.bf16.msra.mxu0 %v6124
      %6189 = vmatprep.mubr.bf16.mxu0 %v5907
      %6190 = vmatmul.mubr.bf16.gmra.mrb[0].mxu0 %v5906
      %v6191 = vpop.f32.mrb[0].mxu0
      %v6192 = vadd.f32 %v6012, %v6191
      %v6193 = vpop.f32.mrb[0].mxu0
      %v6194 = vpop.f32.mrb[0].mxu0
      %v6195 = vadd.f32 %v6012, %v6194
      %v6196 = vpop.f32.mrb[0].mxu0
      %6197 = vmatprep.mubr.bf16.mxu0 %v5910
      %6198 = vmatmul.mubr.bf16.gmra.mrb[0].mxu0 %v5909
      %v6199 = vpop.f32.mrb[0].mxu0
      %v6200 = vadd.f32 %v6012, %v6199
      %v6201 = vpop.f32.mrb[0].mxu0
      %v6202 = vpop.f32.mrb[0].mxu0
      %v6203 = vadd.f32 %v6012, %v6202
      %v6204 = vpop.f32.mrb[0].mxu0
      %6205 = vmatprep.mubr.bf16.mxu0 %v5913
      %6206 = vmatmul.mubr.bf16.gmra.mrb[0].mxu0 %v5912
      %v6207 = vpop.f32.mrb[0].mxu0
      %v6208 = vadd.f32 %v6012, %v6207
      %v6209 = vpop.f32.mrb[0].mxu0
      %v6210 = vpop.f32.mrb[0].mxu0
      %v6211 = vadd.f32 %v6012, %v6210
      %v6212 = vpop.f32.mrb[0].mxu0
      %6213 = vmatprep.mubr.bf16.mxu0 %v5916
      %6214 = vmatmul.mubr.bf16.gmra.mrb[0].mxu0 %v5915
      %v6215 = vpop.f32.mrb[0].mxu0
      %v6216 = vadd.f32 %v6012, %v6215
      %v6217 = vpop.f32.mrb[0].mxu0
      %v6218 = vpop.f32.mrb[0].mxu0
      %v6219 = vadd.f32 %v6012, %v6218
      %v6220 = vpop.f32.mrb[0].mxu0
      %6221 = vmatprep.mubr.bf16.mxu0 %v5919
      %6222 = vmatmul.mubr.bf16.gmra.mrb[0].mxu0 %v5918
      %v6223 = vpop.f32.mrb[0].mxu0
      %v6224 = vadd.f32 %v6012, %v6223
      %v6225 = vpop.f32.mrb[0].mxu0
      %v6226 = vpop.f32.mrb[0].mxu0
      %v6227 = vadd.f32 %v6012, %v6226
      %v6228 = vpop.f32.mrb[0].mxu0
      %6229 = vmatprep.mubr.bf16.mxu0 %v5922
      %6230 = vmatmul.mubr.bf16.gmra.mrb[0].mxu0 %v5921
      %v6231 = vpop.f32.mrb[0].mxu0
      %v6232 = vadd.f32 %v6012, %v6231
      %v6233 = vpop.f32.mrb[0].mxu0
      %v6234 = vpop.f32.mrb[0].mxu0
      %v6235 = vadd.f32 %v6012, %v6234
      %v6236 = vpop.f32.mrb[0].mxu0
      %6237 = vmatprep.mubr.bf16.mxu0 %v5925
      %6238 = vmatmul.mubr.bf16.gmra.mrb[0].mxu0 %v5924
      %v6239 = vpop.f32.mrb[0].mxu0
      %v6240 = vadd.f32 %v6012, %v6239
      %v6241 = vpop.f32.mrb[0].mxu0
      %v6242 = vpop.f32.mrb[0].mxu0
      %v6243 = vadd.f32 %v6012, %v6242
      %v6244 = vpop.f32.mrb[0].mxu0
      %6245 = vmatprep.mubr.bf16.mxu0 %v5928
      %6246 = vmatmul.mubr.bf16.gmra.mrb[0].mxu0 %v5927
      %v6247 = vpop.f32.mrb[0].mxu0
      %v6248 = vadd.f32 %v6012, %v6247
      %v6249 = vpop.f32.mrb[0].mxu0
      %v6250 = vpop.f32.mrb[0].mxu0
      %v6251 = vadd.f32 %v6012, %v6250
      %v6252 = vpop.f32.mrb[0].mxu0
      %6253 = vmatprep.mubr.bf16.mxu0 %v5931
      %6254 = vmatmul.mubr.bf16.gmra.mrb[0].mxu0 %v5930
      %v6255 = vpop.f32.mrb[0].mxu0
      %v6256 = vadd.f32 %v6012, %v6255
      %v6257 = vpop.f32.mrb[0].mxu0
      %v6258 = vpop.f32.mrb[0].mxu0
      %v6259 = vadd.f32 %v6012, %v6258
      %v6260 = vpop.f32.mrb[0].mxu0
      %6261 = vmatprep.mubr.bf16.mxu0 %v5934
      %6262 = vmatmul.mubr.bf16.gmra.mrb[0].mxu0 %v5933
      %v6263 = vpop.f32.mrb[0].mxu0
      %v6264 = vadd.f32 %v6012, %v6263
      %v6265 = vpop.f32.mrb[0].mxu0
      %v6266 = vpop.f32.mrb[0].mxu0
      %v6267 = vadd.f32 %v6012, %v6266
      %v6268 = vpop.f32.mrb[0].mxu0
      %6269 = vmatprep.mubr.bf16.mxu0 %v5937
      %6270 = vmatmul.mubr.bf16.gmra.mrb[0].mxu0 %v5936
      %v6271 = vpop.f32.mrb[0].mxu0
      %v6272 = vadd.f32 %v6012, %v6271
      %v6273 = vpop.f32.mrb[0].mxu0
      %v6274 = vpop.f32.mrb[0].mxu0
      %v6275 = vadd.f32 %v6012, %v6274
      %v6276 = vpop.f32.mrb[0].mxu0
      %6277 = vmatprep.mubr.bf16.mxu0 %v5940
      %6278 = vmatmul.mubr.bf16.gmra.mrb[0].mxu0 %v5939
      %v6279 = vpop.f32.mrb[0].mxu0
      %v6280 = vadd.f32 %v6012, %v6279
      %v6281 = vpop.f32.mrb[0].mxu0
      %v6282 = vpop.f32.mrb[0].mxu0
      %v6283 = vadd.f32 %v6012, %v6282
      %v6284 = vpop.f32.mrb[0].mxu0
      %6285 = vmatprep.mubr.bf16.mxu0 %v5943
      %6286 = vmatmul.mubr.bf16.gmra.mrb[0].mxu0 %v5942
      %v6287 = vpop.f32.mrb[0].mxu0
      %v6288 = vadd.f32 %v6012, %v6287
      %v6289 = vpop.f32.mrb[0].mxu0
      %v6290 = vpop.f32.mrb[0].mxu0
      %v6291 = vadd.f32 %v6012, %v6290
      %v6292 = vpop.f32.mrb[0].mxu0
      %6293 = vmatprep.mubr.bf16.mxu0 %v5946
      %6294 = vmatmul.mubr.bf16.gmra.mrb[0].mxu0 %v5945
      %v6295 = vpop.f32.mrb[0].mxu0
      %v6296 = vadd.f32 %v6012, %v6295
      %v6297 = vpop.f32.mrb[0].mxu0
      %v6298 = vpop.f32.mrb[0].mxu0
      %v6299 = vadd.f32 %v6012, %v6298
      %v6300 = vpop.f32.mrb[0].mxu0
      %6301 = vmatprep.mubr.bf16.mxu0 %v5949
      %6302 = vmatmul.mubr.bf16.gmra.mrb[0].mxu0 %v5948
      %v6303 = vpop.f32.mrb[0].mxu0
      %v6304 = vadd.f32 %v6012, %v6303
      %v6305 = vpop.f32.mrb[0].mxu0
      %v6306 = vpop.f32.mrb[0].mxu0
      %v6307 = vadd.f32 %v6012, %v6306
      %v6308 = vpop.f32.mrb[0].mxu0
      %6309 = vmatprep.mubr.bf16.mxu0 %v5952
      %6310 = vmatmul.mubr.bf16.gmra.mrb[0].mxu0 %v5951
      %v6311 = vpop.f32.mrb[0].mxu0
      %v6312 = vadd.f32 %v6012, %v6311
      %v6313 = vpop.f32.mrb[0].mxu0
      %v6314 = vpop.f32.mrb[0].mxu0
      %v6315 = vadd.f32 %v6012, %v6314
      %v6316 = vpop.f32.mrb[0].mxu0
      %6317 = vmatprep.mubr.bf16.mxu0 %v5955
      %6318 = vmatmul.mubr.bf16.gmra.mrb[0].mxu0 %v5954
      %v6319 = vpop.f32.mrb[0].mxu0
      %v6320 = vadd.f32 %v6012, %v6319
      %v6321 = vpop.f32.mrb[0].mxu0
      %v6322 = vpop.f32.mrb[0].mxu0
      %v6323 = vadd.f32 %v6012, %v6322
      %v6324 = vpop.f32.mrb[0].mxu0
      %6325 = vmatprep.mubr.bf16.mxu0 %v5958
      %6326 = vmatmul.mubr.bf16.gmra.mrb[0].mxu0 %v5957
      %v6327 = vpop.f32.mrb[0].mxu0
      %v6328 = vadd.f32 %v6012, %v6327
      %v6329 = vpop.f32.mrb[0].mxu0
      %v6330 = vpop.f32.mrb[0].mxu0
      %v6331 = vadd.f32 %v6012, %v6330
      %v6332 = vpop.f32.mrb[0].mxu0
      %6333 = vdwg.mxu0
      %6334 = vmatprep.subr.bf16.mxu0 0
      %6335 = vmatpush1.bf16.msra.mxu0 %v6125
      %6336 = vmatprep.subr.bf16.mxu0 0
      %6337 = vmatpush1.bf16.msra.mxu0 %v6126
      %6338 = vmatprep.subr.bf16.mxu0 0
      %6339 = vmatpush1.bf16.msra.mxu0 %v6127
      %6340 = vmatprep.subr.bf16.mxu0 0
      %6341 = vmatpush1.bf16.msra.mxu0 %v6128
      %6342 = vmatprep.subr.bf16.mxu0 0
      %6343 = vmatpush1.bf16.msra.mxu0 %v6129
      %6344 = vmatprep.subr.bf16.mxu0 0
      %6345 = vmatpush1.bf16.msra.mxu0 %v6130
      %6346 = vmatprep.subr.bf16.mxu0 0
      %6347 = vmatpush1.bf16.msra.mxu0 %v6131
      %6348 = vmatprep.subr.bf16.mxu0 0
      %6349 = vmatpush1.bf16.msra.mxu0 %v6132
      %6350 = vmatprep.subr.bf16.mxu0 0
      %6351 = vmatpush1.bf16.msra.mxu0 0
      %6352 = vmatprep.subr.bf16.mxu0 0
      %6353 = vmatpush1.bf16.msra.mxu0 0
      %6354 = vmatprep.subr.bf16.mxu0 0
      %6355 = vmatpush1.bf16.msra.mxu0 0
      %6356 = vmatprep.subr.bf16.mxu0 0
      %6357 = vmatpush1.bf16.msra.mxu0 0
      %6358 = vmatprep.subr.bf16.mxu0 0
      %6359 = vmatpush1.bf16.msra.mxu0 0
      %6360 = vmatprep.subr.bf16.mxu0 0
      %6361 = vmatpush1.bf16.msra.mxu0 0
      %6362 = vmatprep.subr.bf16.mxu0 0
      %6363 = vmatpush1.bf16.msra.mxu0 0
      %6364 = vmatprep.subr.bf16.mxu0 0
      %6365 = vmatpush1.bf16.msra.mxu0 0
      %6366 = vmatprep.mubr.bf16.mxu0 0
      %6367 = vmatmul.mubr.bf16.gmra.mrb[0].mxu0 %v5908
      %v6368 = vpop.f32.mrb[0].mxu0
      %v6369 = vadd.f32 %v6192, %v6368
      %v6370 = vpop.f32.mrb[0].mxu0
      %v6371 = vpop.f32.mrb[0].mxu0
      %v6372 = vadd.f32 %v6195, %v6371
      %v6373 = vpop.f32.mrb[0].mxu0
      %6374 = vmatprep.mubr.bf16.mxu0 0
      %6375 = vmatmul.mubr.bf16.gmra.mrb[0].mxu0 %v5911
      %v6376 = vpop.f32.mrb[0].mxu0
      %v6377 = vadd.f32 %v6200, %v6376
      %v6378 = vpop.f32.mrb[0].mxu0
      %v6379 = vpop.f32.mrb[0].mxu0
      %v6380 = vadd.f32 %v6203, %v6379
      %v6381 = vpop.f32.mrb[0].mxu0
      %6382 = vmatprep.mubr.bf16.mxu0 0
      %6383 = vmatmul.mubr.bf16.gmra.mrb[0].mxu0 %v5914
      %v6384 = vpop.f32.mrb[0].mxu0
      %v6385 = vadd.f32 %v6208, %v6384
      %v6386 = vpop.f32.mrb[0].mxu0
      %v6387 = vpop.f32.mrb[0].mxu0
      %v6388 = vadd.f32 %v6211, %v6387
      %v6389 = vpop.f32.mrb[0].mxu0
      %6390 = vmatprep.mubr.bf16.mxu0 0
      %6391 = vmatmul.mubr.bf16.gmra.mrb[0].mxu0 %v5917
      %v6392 = vpop.f32.mrb[0].mxu0
      %v6393 = vadd.f32 %v6216, %v6392
      %v6394 = vpop.f32.mrb[0].mxu0
      %v6395 = vpop.f32.mrb[0].mxu0
      %v6396 = vadd.f32 %v6219, %v6395
      %v6397 = vpop.f32.mrb[0].mxu0
      %6398 = vmatprep.mubr.bf16.mxu0 0
      %6399 = vmatmul.mubr.bf16.gmra.mrb[0].mxu0 %v5920
      %v6400 = vpop.f32.mrb[0].mxu0
      %v6401 = vadd.f32 %v6224, %v6400
      %v6402 = vpop.f32.mrb[0].mxu0
      %v6403 = vpop.f32.mrb[0].mxu0
      %v6404 = vadd.f32 %v6227, %v6403
      %v6405 = vpop.f32.mrb[0].mxu0
      %6406 = vmatprep.mubr.bf16.mxu0 0
      %6407 = vmatmul.mubr.bf16.gmra.mrb[0].mxu0 %v5923
      %v6408 = vpop.f32.mrb[0].mxu0
      %v6409 = vadd.f32 %v6232, %v6408
      %v6410 = vpop.f32.mrb[0].mxu0
      %v6411 = vpop.f32.mrb[0].mxu0
      %v6412 = vadd.f32 %v6235, %v6411
      %v6413 = vpop.f32.mrb[0].mxu0
      %6414 = vmatprep.mubr.bf16.mxu0 0
      %6415 = vmatmul.mubr.bf16.gmra.mrb[0].mxu0 %v5926
      %v6416 = vpop.f32.mrb[0].mxu0
      %v6417 = vadd.f32 %v6240, %v6416
      %v6418 = vpop.f32.mrb[0].mxu0
      %v6419 = vpop.f32.mrb[0].mxu0
      %v6420 = vadd.f32 %v6243, %v6419
      %v6421 = vpop.f32.mrb[0].mxu0
      %6422 = vmatprep.mubr.bf16.mxu0 0
      %6423 = vmatmul.mubr.bf16.gmra.mrb[0].mxu0 %v5929
      %v6424 = vpop.f32.mrb[0].mxu0
      %v6425 = vadd.f32 %v6248, %v6424
      %v6426 = vpop.f32.mrb[0].mxu0
      %v6427 = vpop.f32.mrb[0].mxu0
      %v6428 = vadd.f32 %v6251, %v6427
      %v6429 = vpop.f32.mrb[0].mxu0
      %6430 = vmatprep.mubr.bf16.mxu0 0
      %6431 = vmatmul.mubr.bf16.gmra.mrb[0].mxu0 %v5932
      %v6432 = vpop.f32.mrb[0].mxu0
      %v6433 = vadd.f32 %v6256, %v6432
      %v6434 = vpop.f32.mrb[0].mxu0
      %v6435 = vpop.f32.mrb[0].mxu0
      %v6436 = vadd.f32 %v6259, %v6435
      %v6437 = vpop.f32.mrb[0].mxu0
      %6438 = vmatprep.mubr.bf16.mxu0 0
      %6439 = vmatmul.mubr.bf16.gmra.mrb[0].mxu0 %v5935
      %v6440 = vpop.f32.mrb[0].mxu0
      %v6441 = vadd.f32 %v6264, %v6440
      %v6442 = vpop.f32.mrb[0].mxu0
      %v6443 = vpop.f32.mrb[0].mxu0
      %v6444 = vadd.f32 %v6267, %v6443
      %v6445 = vpop.f32.mrb[0].mxu0
      %6446 = vmatprep.mubr.bf16.mxu0 0
      %6447 = vmatmul.mubr.bf16.gmra.mrb[0].mxu0 %v5938
      %v6448 = vpop.f32.mrb[0].mxu0
      %v6449 = vadd.f32 %v6272, %v6448
      %v6450 = vpop.f32.mrb[0].mxu0
      %v6451 = vpop.f32.mrb[0].mxu0
      %v6452 = vadd.f32 %v6275, %v6451
      %v6453 = vpop.f32.mrb[0].mxu0
      %6454 = vmatprep.mubr.bf16.mxu0 0
      %6455 = vmatmul.mubr.bf16.gmra.mrb[0].mxu0 %v5941
      %v6456 = vpop.f32.mrb[0].mxu0
      %v6457 = vadd.f32 %v6280, %v6456
      %v6458 = vpop.f32.mrb[0].mxu0
      %v6459 = vpop.f32.mrb[0].mxu0
      %v6460 = vadd.f32 %v6283, %v6459
      %v6461 = vpop.f32.mrb[0].mxu0
      %6462 = vmatprep.mubr.bf16.mxu0 0
      %6463 = vmatmul.mubr.bf16.gmra.mrb[0].mxu0 %v5944
      %v6464 = vpop.f32.mrb[0].mxu0
      %v6465 = vadd.f32 %v6288, %v6464
      %v6466 = vpop.f32.mrb[0].mxu0
      %v6467 = vpop.f32.mrb[0].mxu0
      %v6468 = vadd.f32 %v6291, %v6467
      %v6469 = vpop.f32.mrb[0].mxu0
      %6470 = vmatprep.mubr.bf16.mxu0 0
      %6471 = vmatmul.mubr.bf16.gmra.mrb[0].mxu0 %v5947
      %v6472 = vpop.f32.mrb[0].mxu0
      %v6473 = vadd.f32 %v6296, %v6472
      %v6474 = vpop.f32.mrb[0].mxu0
      %v6475 = vpop.f32.mrb[0].mxu0
      %v6476 = vadd.f32 %v6299, %v6475
      %v6477 = vpop.f32.mrb[0].mxu0
      %6478 = vmatprep.mubr.bf16.mxu0 0
      %6479 = vmatmul.mubr.bf16.gmra.mrb[0].mxu0 %v5950
      %v6480 = vpop.f32.mrb[0].mxu0
      %v6481 = vadd.f32 %v6304, %v6480
      %v6482 = vpop.f32.mrb[0].mxu0
      %v6483 = vpop.f32.mrb[0].mxu0
      %v6484 = vadd.f32 %v6307, %v6483
      %v6485 = vpop.f32.mrb[0].mxu0
      %6486 = vmatprep.mubr.bf16.mxu0 0
      %6487 = vmatmul.mubr.bf16.gmra.mrb[0].mxu0 %v5953
      %v6488 = vpop.f32.mrb[0].mxu0
      %v6489 = vadd.f32 %v6312, %v6488
      %v6490 = vpop.f32.mrb[0].mxu0
      %v6491 = vpop.f32.mrb[0].mxu0
      %v6492 = vadd.f32 %v6315, %v6491
      %v6493 = vpop.f32.mrb[0].mxu0
      %6494 = vmatprep.mubr.bf16.mxu0 0
      %6495 = vmatmul.mubr.bf16.gmra.mrb[0].mxu0 %v5956
      %v6496 = vpop.f32.mrb[0].mxu0
      %v6497 = vadd.f32 %v6320, %v6496
      %v6498 = vpop.f32.mrb[0].mxu0
      %v6499 = vpop.f32.mrb[0].mxu0
      %v6500 = vadd.f32 %v6323, %v6499
      %v6501 = vpop.f32.mrb[0].mxu0
      %6502 = vmatprep.mubr.bf16.mxu0 0
      %6503 = vmatmul.mubr.bf16.gmra.mrb[0].mxu0 %v5959
      %v6504 = vpop.f32.mrb[0].mxu0
      %v6505 = vadd.f32 %v6328, %v6504
      %v6506 = vpop.f32.mrb[0].mxu0
      %v6507 = vpop.f32.mrb[0].mxu0
      %v6508 = vadd.f32 %v6331, %v6507
      %v6509 = vpop.f32.mrb[0].mxu0
      %6510 = vdwg.mxu0
      %v6511 = vmul.f32 %v6369, %v2238
      %v6512 = vmul.f32 %v6372, %v2243
      %v6513 = vmul.f32 %v6377, %v2248
      %v6514 = vmul.f32 %v6380, %v2253
      %v6515 = vmul.f32 %v6385, %v2258
      %v6516 = vmul.f32 %v6388, %v2263
      %v6517 = vmul.f32 %v6393, %v2268
      %v6518 = vmul.f32 %v6396, %v2273
      %v6519 = vmul.f32 %v6401, %v2278
      %v6520 = vmul.f32 %v6404, %v2283
      %v6521 = vmul.f32 %v6409, %v2288
      %v6522 = vmul.f32 %v6412, %v2293
      %v6523 = vmul.f32 %v6417, %v2298
      %v6524 = vmul.f32 %v6420, %v2303
      %v6525 = vmul.f32 %v6425, %v2308
      %v6526 = vmul.f32 %v6428, %v2313
      %v6527 = vmul.f32 %v6433, %v2318
      %v6528 = vmul.f32 %v6436, %v2323
      %v6529 = vmul.f32 %v6441, %v2328
      %v6530 = vmul.f32 %v6444, %v2333
      %v6531 = vmul.f32 %v6449, %v2338
      %v6532 = vmul.f32 %v6452, %v2343
      %v6533 = vmul.f32 %v6457, %v2348
      %v6534 = vmul.f32 %v6460, %v2353
      %v6535 = vmul.f32 %v6465, %v2358
      %v6536 = vmul.f32 %v6468, %v2363
      %v6537 = vmul.f32 %v6473, %v2368
      %v6538 = vmul.f32 %v6476, %v2373
      %v6539 = vmul.f32 %v6481, %v2378
      %v6540 = vmul.f32 %v6484, %v2383
      %v6541 = vmul.f32 %v6489, %v2388
      %v6542 = vmul.f32 %v6492, %v2393
      %v6543 = vmul.f32 %v6497, %v2398
      %v6544 = vmul.f32 %v6500, %v2403
      %v6545 = vmul.f32 %v6505, %v2408
      %v6546 = vmul.f32 %v6508, %v2413
      %v6547 = vadd.f32 %v6511, %v6512
      %v6548 = vadd.f32 %v6547, %v6513
      %v6549 = vadd.f32 %v6548, %v6514
      %v6550 = vadd.f32 %v6549, %v6515
      %v6551 = vadd.f32 %v6550, %v6516
      %v6552 = vadd.f32 %v6551, %v6517
      %v6553 = vadd.f32 %v6552, %v6518
      %v6554 = vadd.f32 %v6553, %v6519
      %v6555 = vadd.f32 %v6554, %v6520
      %v6556 = vadd.f32 %v6555, %v6521
      %v6557 = vadd.f32 %v6556, %v6522
      %v6558 = vadd.f32 %v6557, %v6523
      %v6559 = vadd.f32 %v6558, %v6524
      %v6560 = vadd.f32 %v6559, %v6525
      %v6561 = vadd.f32 %v6560, %v6526
      %v6562 = vadd.f32 %v6561, %v6527
      %v6563 = vadd.f32 %v6562, %v6528
      %v6564 = vadd.f32 %v6563, %v6529
      %v6565 = vadd.f32 %v6564, %v6530
      %v6566 = vadd.f32 %v6565, %v6531
      %v6567 = vadd.f32 %v6566, %v6532
      %v6568 = vadd.f32 %v6567, %v6533
      %v6569 = vadd.f32 %v6568, %v6534
      %v6570 = vadd.f32 %v6569, %v6535
      %v6571 = vadd.f32 %v6570, %v6536
      %v6572 = vadd.f32 %v6571, %v6537
      %v6573 = vadd.f32 %v6572, %v6538
      %v6574 = vadd.f32 %v6573, %v6539
      %v6575 = vadd.f32 %v6574, %v6540
      %v6576 = vadd.f32 %v6575, %v6541
      %v6577 = vadd.f32 %v6576, %v6542
      %v6578 = vadd.f32 %v6577, %v6543
      %v6579 = vadd.f32 %v6578, %v6544
      %v6580 = vadd.f32 %v6579, %v6545
      %v6581 = vadd.f32 %v6580, %v6546
      %v6582 = vrot.slane %v6581, 4
      %v6583 = vadd.f32 %v6581, %v6582
      %v6584 = vrot.slane %v6583, 2
      %v6585 = vadd.f32 %v6583, %v6584
      %v6586 = vrot.slane %v6585, 1
      %v6587 = vadd.f32 %v6585, %v6586
      %v6588 = vmul.f32 %v6511, %v6511
      %v6589 = vmul.f32 %v6512, %v6512
      %v6590 = vmul.f32 %v6513, %v6513
      %v6591 = vmul.f32 %v6514, %v6514
      %v6592 = vmul.f32 %v6515, %v6515
      %v6593 = vmul.f32 %v6516, %v6516
      %v6594 = vmul.f32 %v6517, %v6517
      %v6595 = vmul.f32 %v6518, %v6518
      %v6596 = vmul.f32 %v6519, %v6519
      %v6597 = vmul.f32 %v6520, %v6520
      %v6598 = vmul.f32 %v6521, %v6521
      %v6599 = vmul.f32 %v6522, %v6522
      %v6600 = vmul.f32 %v6523, %v6523
      %v6601 = vmul.f32 %v6524, %v6524
      %v6602 = vmul.f32 %v6525, %v6525
      %v6603 = vmul.f32 %v6526, %v6526
      %v6604 = vmul.f32 %v6527, %v6527
      %v6605 = vmul.f32 %v6528, %v6528
      %v6606 = vmul.f32 %v6529, %v6529
      %v6607 = vmul.f32 %v6530, %v6530
      %v6608 = vmul.f32 %v6531, %v6531
      %v6609 = vmul.f32 %v6532, %v6532
      %v6610 = vmul.f32 %v6533, %v6533
      %v6611 = vmul.f32 %v6534, %v6534
      %v6612 = vmul.f32 %v6535, %v6535
      %v6613 = vmul.f32 %v6536, %v6536
      %v6614 = vmul.f32 %v6537, %v6537
      %v6615 = vmul.f32 %v6538, %v6538
      %v6616 = vmul.f32 %v6539, %v6539
      %v6617 = vmul.f32 %v6540, %v6540
      %v6618 = vmul.f32 %v6541, %v6541
      %v6619 = vmul.f32 %v6542, %v6542
      %v6620 = vmul.f32 %v6543, %v6543
      %v6621 = vmul.f32 %v6544, %v6544
      %v6622 = vmul.f32 %v6545, %v6545
      %v6623 = vmul.f32 %v6546, %v6546
      %v6624 = vadd.f32 %v6588, %v6589
      %v6625 = vadd.f32 %v6624, %v6590
      %v6626 = vadd.f32 %v6625, %v6591
      %v6627 = vadd.f32 %v6626, %v6592
      %v6628 = vadd.f32 %v6627, %v6593
      %v6629 = vadd.f32 %v6628, %v6594
      %v6630 = vadd.f32 %v6629, %v6595
      %v6631 = vadd.f32 %v6630, %v6596
      %v6632 = vadd.f32 %v6631, %v6597
      %v6633 = vadd.f32 %v6632, %v6598
      %v6634 = vadd.f32 %v6633, %v6599
      %v6635 = vadd.f32 %v6634, %v6600
      %v6636 = vadd.f32 %v6635, %v6601
      %v6637 = vadd.f32 %v6636, %v6602
      %v6638 = vadd.f32 %v6637, %v6603
      %v6639 = vadd.f32 %v6638, %v6604
      %v6640 = vadd.f32 %v6639, %v6605
      %v6641 = vadd.f32 %v6640, %v6606
      %v6642 = vadd.f32 %v6641, %v6607
      %v6643 = vadd.f32 %v6642, %v6608
      %v6644 = vadd.f32 %v6643, %v6609
      %v6645 = vadd.f32 %v6644, %v6610
      %v6646 = vadd.f32 %v6645, %v6611
      %v6647 = vadd.f32 %v6646, %v6612
      %v6648 = vadd.f32 %v6647, %v6613
      %v6649 = vadd.f32 %v6648, %v6614
      %v6650 = vadd.f32 %v6649, %v6615
      %v6651 = vadd.f32 %v6650, %v6616
      %v6652 = vadd.f32 %v6651, %v6617
      %v6653 = vadd.f32 %v6652, %v6618
      %v6654 = vadd.f32 %v6653, %v6619
      %v6655 = vadd.f32 %v6654, %v6620
      %v6656 = vadd.f32 %v6655, %v6621
      %v6657 = vadd.f32 %v6656, %v6622
      %v6658 = vadd.f32 %v6657, %v6623
      %v6659 = vrot.slane %v6658, 4
      %v6660 = vadd.f32 %v6658, %v6659
      %v6661 = vrot.slane %v6660, 2
      %v6662 = vadd.f32 %v6660, %v6661
      %v6663 = vrot.slane %v6662, 1
      %v6664 = vadd.f32 %v6662, %v6663
      %v6665 = vsel %vm2569, %v6587, %v6664
      %v6666 = vld [vmem:[%s8] sm:$0xff]
      %v6667 = vld [vmem:[%s8 + $0x8] sm:$0xff]
      %v6668 = vld [vmem:[%s8 + $0x10] sm:$0xff]
      %v6669 = vld [vmem:[%s8 + $0x18] sm:$0xff]
      %v6670 = vld [vmem:[%s8 + $0x20] sm:$0xff]
      %v6671 = vld [vmem:[%s8 + $0x28] sm:$0xff]
      %v6672 = vld [vmem:[%s8 + $0x30] sm:$0xff]
      %v6673 = vld [vmem:[%s8 + $0x38] sm:$0xff]
      %v6674 = vld [vmem:[%s8 + $0x40] sm:$0xff]
      %v6675 = vld [vmem:[%s8 + $0x48] sm:$0xff]
      %v6676 = vld [vmem:[%s8 + $0x50] sm:$0xff]
      %v6677 = vld [vmem:[%s8 + $0x58] sm:$0xff]
      %v6678 = vld [vmem:[%s8 + $0x60] sm:$0xff]
      %v6679 = vld [vmem:[%s8 + $0x68] sm:$0xff]
      %v6680 = vld [vmem:[%s8 + $0x70] sm:$0xff]
      %v6681 = vld [vmem:[%s8 + $0x78] sm:$0xff]
      %6682 = vmatprep.subr.mxu0 0.0
      %6683 = vmatpush1.msra.mxu0 %v6666
      %6684 = vmatprep.subr.mxu0 0.0
      %6685 = vmatpush1.msra.mxu0 %v6667
      %6686 = vmatprep.subr.mxu0 0.0
      %6687 = vmatpush1.msra.mxu0 %v6668
      %6688 = vmatprep.subr.mxu0 0.0
      %6689 = vmatpush1.msra.mxu0 %v6669
      %6690 = vmatprep.subr.mxu0 0.0
      %6691 = vmatpush1.msra.mxu0 %v6670
      %6692 = vmatprep.subr.mxu0 0.0
      %6693 = vmatpush1.msra.mxu0 %v6671
      %6694 = vmatprep.subr.mxu0 0.0
      %6695 = vmatpush1.msra.mxu0 %v6672
      %6696 = vmatprep.subr.mxu0 0.0
      %6697 = vmatpush1.msra.mxu0 %v6673
      %6698 = vmatprep.subr.mxu0 0.0
      %6699 = vmatpush1.msra.mxu0 %v6674
      %6700 = vmatprep.subr.mxu0 0.0
      %6701 = vmatpush1.msra.mxu0 %v6675
      %6702 = vmatprep.subr.mxu0 0.0
      %6703 = vmatpush1.msra.mxu0 %v6676
      %6704 = vmatprep.subr.mxu0 0.0
      %6705 = vmatpush1.msra.mxu0 %v6677
      %6706 = vmatprep.subr.mxu0 0.0
      %6707 = vmatpush1.msra.mxu0 %v6678
      %6708 = vmatprep.subr.mxu0 0.0
      %6709 = vmatpush1.msra.mxu0 %v6679
      %6710 = vmatprep.subr.mxu0 0.0
      %6711 = vmatpush1.msra.mxu0 %v6680
      %6712 = vmatprep.subr.mxu0 0.0
      %6713 = vmatpush1.msra.mxu0 %v6681
      %6714 = vmatprep.subr.mxu0 0.0
      %6715 = vmatpush1.msra.mxu0 0.0
      %6716 = vmatprep.subr.mxu0 0.0
      %6717 = vmatpush1.msra.mxu0 0.0
      %6718 = vmatprep.subr.mxu0 0.0
      %6719 = vmatpush1.msra.mxu0 0.0
      %6720 = vmatprep.subr.mxu0 0.0
      %6721 = vmatpush1.msra.mxu0 0.0
      %6722 = vmatprep.subr.mxu0 0.0
      %6723 = vmatpush1.msra.mxu0 0.0
      %6724 = vmatprep.subr.mxu0 0.0
      %6725 = vmatpush1.msra.mxu0 0.0
      %6726 = vmatprep.subr.mxu0 0.0
      %6727 = vmatpush1.msra.mxu0 0.0
      %6728 = vmatprep.subr.mxu0 0.0
      %6729 = vmatpush1.msra.mxu0 0.0
      %6730 = vmatprep.subr.mxu0 0.0
      %6731 = vmatpush1.msra.mxu0 0.0
      %6732 = vmatprep.subr.mxu0 0.0
      %6733 = vmatpush1.msra.mxu0 0.0
      %6734 = vmatprep.subr.mxu0 0.0
      %6735 = vmatpush1.msra.mxu0 0.0
      %6736 = vmatprep.subr.mxu0 0.0
      %6737 = vmatpush1.msra.mxu0 0.0
      %6738 = vmatprep.subr.mxu0 0.0
      %6739 = vmatpush1.msra.mxu0 0.0
      %6740 = vmatprep.subr.mxu0 0.0
      %6741 = vmatpush1.msra.mxu0 0.0
      %6742 = vmatprep.subr.mxu0 0.0
      %6743 = vmatpush1.msra.mxu0 0.0
      %6744 = vmatprep.subr.mxu0 0.0
      %6745 = vmatpush1.msra.mxu0 0.0
      %6746 = vmatprep.mubr.f32.mxu0 0.0
      %6747 = vmatmul.mubr.f32.gmra.mrb[0].mxu0 %v6665
      %v6748 = vpop.f32.mrb[0].mxu0
      %v6749 = vadd.f32 0.0, %v6748
      %v6750 = vpop.f32.mrb[0].mxu0
      %6751 = vdwg.mxu0
      %v6752 = vmul.f32 %v6749, 0.0009765625
      %v6753 = vmul.f32 %v6752, %v6752
      %v6755 = vrot.slane %v6753, 7
      %v6757 = vsub.f32 %v6752, %v6755
      %v6758 = vmax.f32 %v6757, 0.0
      %v6759 = vlaneseq
      %v6760 = vshrl.u32 %v6759, 7
      %v6761 = vsub.s32 0, %v6760
      %v6762 = vrot.slane %v6752, %v6761
      %v6763 = vsub.f32 %v6369, %v6762
      %v6764 = vsub.f32 %v6372, %v6762
      %v6765 = vsub.f32 %v6377, %v6762
      %v6766 = vsub.f32 %v6380, %v6762
      %v6767 = vsub.f32 %v6385, %v6762
      %v6768 = vsub.f32 %v6388, %v6762
      %v6769 = vsub.f32 %v6393, %v6762
      %v6770 = vsub.f32 %v6396, %v6762
      %v6771 = vsub.f32 %v6401, %v6762
      %v6772 = vsub.f32 %v6404, %v6762
      %v6773 = vsub.f32 %v6409, %v6762
      %v6774 = vsub.f32 %v6412, %v6762
      %v6775 = vsub.f32 %v6417, %v6762
      %v6776 = vsub.f32 %v6420, %v6762
      %v6777 = vsub.f32 %v6425, %v6762
      %v6778 = vsub.f32 %v6428, %v6762
      %v6779 = vsub.f32 %v6433, %v6762
      %v6780 = vsub.f32 %v6436, %v6762
      %v6781 = vsub.f32 %v6441, %v6762
      %v6782 = vsub.f32 %v6444, %v6762
      %v6783 = vsub.f32 %v6449, %v6762
      %v6784 = vsub.f32 %v6452, %v6762
      %v6785 = vsub.f32 %v6457, %v6762
      %v6786 = vsub.f32 %v6460, %v6762
      %v6787 = vsub.f32 %v6465, %v6762
      %v6788 = vsub.f32 %v6468, %v6762
      %v6789 = vsub.f32 %v6473, %v6762
      %v6790 = vsub.f32 %v6476, %v6762
      %v6791 = vsub.f32 %v6481, %v6762
      %v6792 = vsub.f32 %v6484, %v6762
      %v6793 = vsub.f32 %v6489, %v6762
      %v6794 = vsub.f32 %v6492, %v6762
      %v6795 = vsub.f32 %v6497, %v6762
      %v6796 = vsub.f32 %v6500, %v6762
      %v6797 = vsub.f32 %v6505, %v6762
      %v6798 = vsub.f32 %v6508, %v6762
      %v6799 = vadd.f32 %v6758, 1e-05
      %v6800 = vrsqrt.pop %v6799
      %v6801 = vlaneseq
      %v6802 = vshrl.u32 %v6801, 7
      %v6803 = vsub.s32 1, %v6802
      %v6804 = vrot.slane %v6800, %v6803
      %v6805 = vmul.f32 %v6763, %v6804
      %v6806 = vmul.f32 %v6764, %v6804
      %v6807 = vmul.f32 %v6765, %v6804
      %v6808 = vmul.f32 %v6766, %v6804
      %v6809 = vmul.f32 %v6767, %v6804
      %v6810 = vmul.f32 %v6768, %v6804
      %v6811 = vmul.f32 %v6769, %v6804
      %v6812 = vmul.f32 %v6770, %v6804
      %v6813 = vmul.f32 %v6771, %v6804
      %v6814 = vmul.f32 %v6772, %v6804
      %v6815 = vmul.f32 %v6773, %v6804
      %v6816 = vmul.f32 %v6774, %v6804
      %v6817 = vmul.f32 %v6775, %v6804
      %v6818 = vmul.f32 %v6776, %v6804
      %v6819 = vmul.f32 %v6777, %v6804
      %v6820 = vmul.f32 %v6778, %v6804
      %v6821 = vmul.f32 %v6779, %v6804
      %v6822 = vmul.f32 %v6780, %v6804
      %v6823 = vmul.f32 %v6781, %v6804
      %v6824 = vmul.f32 %v6782, %v6804
      %v6825 = vmul.f32 %v6783, %v6804
      %v6826 = vmul.f32 %v6784, %v6804
      %v6827 = vmul.f32 %v6785, %v6804
      %v6828 = vmul.f32 %v6786, %v6804
      %v6829 = vmul.f32 %v6787, %v6804
      %v6830 = vmul.f32 %v6788, %v6804
      %v6831 = vmul.f32 %v6789, %v6804
      %v6832 = vmul.f32 %v6790, %v6804
      %v6833 = vmul.f32 %v6791, %v6804
      %v6834 = vmul.f32 %v6792, %v6804
      %v6835 = vmul.f32 %v6793, %v6804
      %v6836 = vmul.f32 %v6794, %v6804
      %v6837 = vmul.f32 %v6795, %v6804
      %v6838 = vmul.f32 %v6796, %v6804
      %v6839 = vmul.f32 %v6797, %v6804
      %v6840 = vmul.f32 %v6798, %v6804
      %v6841 = vld [vmem:[%s6 + $0x2] sm:$0x1]
      %v6842 = vlaneseq
      %v6843 = vshrl.u32 %v6842, 7
      %v6844 = vsub.s32 0, %v6843
      %v6845 = vrot.slane %v6841, %v6844
      %v6846 = vmul.f32 %v6805, %v6845
      %v6847 = vmul.f32 %v6806, %v6845
      %v6848 = vmul.f32 %v6807, %v6845
      %v6849 = vmul.f32 %v6808, %v6845
      %v6850 = vmul.f32 %v6809, %v6845
      %v6851 = vmul.f32 %v6810, %v6845
      %v6852 = vmul.f32 %v6811, %v6845
      %v6853 = vmul.f32 %v6812, %v6845
      %v6854 = vmul.f32 %v6813, %v6845
      %v6855 = vmul.f32 %v6814, %v6845
      %v6856 = vmul.f32 %v6815, %v6845
      %v6857 = vmul.f32 %v6816, %v6845
      %v6858 = vmul.f32 %v6817, %v6845
      %v6859 = vmul.f32 %v6818, %v6845
      %v6860 = vmul.f32 %v6819, %v6845
      %v6861 = vmul.f32 %v6820, %v6845
      %v6862 = vmul.f32 %v6821, %v6845
      %v6863 = vmul.f32 %v6822, %v6845
      %v6864 = vmul.f32 %v6823, %v6845
      %v6865 = vmul.f32 %v6824, %v6845
      %v6866 = vmul.f32 %v6825, %v6845
      %v6867 = vmul.f32 %v6826, %v6845
      %v6868 = vmul.f32 %v6827, %v6845
      %v6869 = vmul.f32 %v6828, %v6845
      %v6870 = vmul.f32 %v6829, %v6845
      %v6871 = vmul.f32 %v6830, %v6845
      %v6872 = vmul.f32 %v6831, %v6845
      %v6873 = vmul.f32 %v6832, %v6845
      %v6874 = vmul.f32 %v6833, %v6845
      %v6875 = vmul.f32 %v6834, %v6845
      %v6876 = vmul.f32 %v6835, %v6845
      %v6877 = vmul.f32 %v6836, %v6845
      %v6878 = vmul.f32 %v6837, %v6845
      %v6879 = vmul.f32 %v6838, %v6845
      %v6880 = vmul.f32 %v6839, %v6845
      %v6881 = vmul.f32 %v6840, %v6845
      %v6882 = vld [vmem:[%s7 + $0x2] sm:$0x1]
      %v6883 = vlaneseq
      %v6884 = vshrl.u32 %v6883, 7
      %v6885 = vsub.s32 0, %v6884
      %v6886 = vrot.slane %v6882, %v6885
      %v6887 = vadd.f32 %v6846, %v6886
      %v6888 = vadd.f32 %v6847, %v6886
      %v6889 = vadd.f32 %v6848, %v6886
      %v6890 = vadd.f32 %v6849, %v6886
      %v6891 = vadd.f32 %v6850, %v6886
      %v6892 = vadd.f32 %v6851, %v6886
      %v6893 = vadd.f32 %v6852, %v6886
      %v6894 = vadd.f32 %v6853, %v6886
      %v6895 = vadd.f32 %v6854, %v6886
      %v6896 = vadd.f32 %v6855, %v6886
      %v6897 = vadd.f32 %v6856, %v6886
      %v6898 = vadd.f32 %v6857, %v6886
      %v6899 = vadd.f32 %v6858, %v6886
      %v6900 = vadd.f32 %v6859, %v6886
      %v6901 = vadd.f32 %v6860, %v6886
      %v6902 = vadd.f32 %v6861, %v6886
      %v6903 = vadd.f32 %v6862, %v6886
      %v6904 = vadd.f32 %v6863, %v6886
      %v6905 = vadd.f32 %v6864, %v6886
      %v6906 = vadd.f32 %v6865, %v6886
      %v6907 = vadd.f32 %v6866, %v6886
      %v6908 = vadd.f32 %v6867, %v6886
      %v6909 = vadd.f32 %v6868, %v6886
      %v6910 = vadd.f32 %v6869, %v6886
      %v6911 = vadd.f32 %v6870, %v6886
      %v6912 = vadd.f32 %v6871, %v6886
      %v6913 = vadd.f32 %v6872, %v6886
      %v6914 = vadd.f32 %v6873, %v6886
      %v6915 = vadd.f32 %v6874, %v6886
      %v6916 = vadd.f32 %v6875, %v6886
      %v6917 = vadd.f32 %v6876, %v6886
      %v6918 = vadd.f32 %v6877, %v6886
      %v6919 = vadd.f32 %v6878, %v6886
      %v6920 = vadd.f32 %v6879, %v6886
      %v6921 = vadd.f32 %v6880, %v6886
      %v6922 = vadd.f32 %v6881, %v6886
      %v6923 = vmax.f32 %v6887, 0.0
      %v6924 = vmax.f32 %v6888, 0.0
      %v6925 = vmax.f32 %v6889, 0.0
      %v6926 = vmax.f32 %v6890, 0.0
      %v6927 = vmax.f32 %v6891, 0.0
      %v6928 = vmax.f32 %v6892, 0.0
      %v6929 = vmax.f32 %v6893, 0.0
      %v6930 = vmax.f32 %v6894, 0.0
      %v6931 = vmax.f32 %v6895, 0.0
      %v6932 = vmax.f32 %v6896, 0.0
      %v6933 = vmax.f32 %v6897, 0.0
      %v6934 = vmax.f32 %v6898, 0.0
      %v6935 = vmax.f32 %v6899, 0.0
      %v6936 = vmax.f32 %v6900, 0.0
      %v6937 = vmax.f32 %v6901, 0.0
      %v6938 = vmax.f32 %v6902, 0.0
      %v6939 = vmax.f32 %v6903, 0.0
      %v6940 = vmax.f32 %v6904, 0.0
      %v6941 = vmax.f32 %v6905, 0.0
      %v6942 = vmax.f32 %v6906, 0.0
      %v6943 = vmax.f32 %v6907, 0.0
      %v6944 = vmax.f32 %v6908, 0.0
      %v6945 = vmax.f32 %v6909, 0.0
      %v6946 = vmax.f32 %v6910, 0.0
      %v6947 = vmax.f32 %v6911, 0.0
      %v6948 = vmax.f32 %v6912, 0.0
      %v6949 = vmax.f32 %v6913, 0.0
      %v6950 = vmax.f32 %v6914, 0.0
      %v6951 = vmax.f32 %v6915, 0.0
      %v6952 = vmax.f32 %v6916, 0.0
      %v6953 = vmax.f32 %v6917, 0.0
      %v6954 = vmax.f32 %v6918, 0.0
      %v6955 = vmax.f32 %v6919, 0.0
      %v6956 = vmax.f32 %v6920, 0.0
      %v6957 = vmax.f32 %v6921, 0.0
      %v6958 = vmax.f32 %v6922, 0.0
      %v6959 = vld [vmem:[%s359] sm:$0xff]
      %v6960 = vld [vmem:[%s359 + $0x8] sm:$0xff]
      %v6961 = vld [vmem:[%s359 + $0x10] sm:$0xff]
      %v6962 = vld [vmem:[%s359 + $0x18] sm:$0xff]
      %v6963 = vld [vmem:[%s359 + $0x20] sm:$0xff]
      %v6964 = vld [vmem:[%s359 + $0x28] sm:$0xff]
      %v6965 = vld [vmem:[%s359 + $0x30] sm:$0xff]
      %v6966 = vld [vmem:[%s359 + $0x38] sm:$0xff]
      %v6967 = vld [vmem:[%s359 + $0x40] sm:$0xff]
      %v6968 = vld [vmem:[%s359 + $0x48] sm:$0xff]
      %v6969 = vld [vmem:[%s359 + $0x50] sm:$0xff]
      %v6970 = vld [vmem:[%s359 + $0x58] sm:$0xff]
      %v6971 = vld [vmem:[%s359 + $0x60] sm:$0xff]
      %v6972 = vld [vmem:[%s359 + $0x68] sm:$0xff]
      %v6973 = vld [vmem:[%s359 + $0x70] sm:$0xff]
      %v6974 = vld [vmem:[%s359 + $0x78] sm:$0xff]
      %v6975 = vld [vmem:[%s359 + $0x80] sm:$0xff]
      %v6976 = vld [vmem:[%s359 + $0x88] sm:$0xff]
      %v6977 = vld [vmem:[%s359 + $0x90] sm:$0xff]
      %v6978 = vld [vmem:[%s359 + $0x98] sm:$0xff]
      %v6979 = vld [vmem:[%s359 + $0xa0] sm:$0xff]
      %v6980 = vld [vmem:[%s359 + $0xa8] sm:$0xff]
      %v6981 = vld [vmem:[%s359 + $0xb0] sm:$0xff]
      %v6982 = vld [vmem:[%s359 + $0xb8] sm:$0xff]
      %v6983 = vld [vmem:[%s359 + $0xc0] sm:$0xff]
      %v6984 = vld [vmem:[%s359 + $0xc8] sm:$0xff]
      %v6985 = vld [vmem:[%s359 + $0xd0] sm:$0xff]
      %v6986 = vld [vmem:[%s359 + $0xd8] sm:$0xff]
      %v6987 = vld [vmem:[%s359 + $0xe0] sm:$0xff]
      %v6988 = vld [vmem:[%s359 + $0xe8] sm:$0xff]
      %v6989 = vld [vmem:[%s359 + $0xf0] sm:$0xff]
      %v6990 = vld [vmem:[%s359 + $0xf8] sm:$0xff]
      %v6991 = vld [vmem:[%s359 + $0x100] sm:$0xff]
      %v6992 = vld [vmem:[%s359 + $0x108] sm:$0xff]
      %v6993 = vld [vmem:[%s359 + $0x110] sm:$0xff]
      %v6994 = vld [vmem:[%s359 + $0x118] sm:$0xff]
      %v6995 = vadd.f32 %v6959, %v6923
      %v6996 = vadd.f32 %v6960, %v6924
      %v6997 = vadd.f32 %v6961, %v6925
      %v6998 = vadd.f32 %v6962, %v6926
      %v6999 = vadd.f32 %v6963, %v6927
      %v7000 = vadd.f32 %v6964, %v6928
      %v7001 = vadd.f32 %v6965, %v6929
      %v7002 = vadd.f32 %v6966, %v6930
      %v7003 = vadd.f32 %v6967, %v6931
      %v7004 = vadd.f32 %v6968, %v6932
      %v7005 = vadd.f32 %v6969, %v6933
      %v7006 = vadd.f32 %v6970, %v6934
      %v7007 = vadd.f32 %v6971, %v6935
      %v7008 = vadd.f32 %v6972, %v6936
      %v7009 = vadd.f32 %v6973, %v6937
      %v7010 = vadd.f32 %v6974, %v6938
      %v7011 = vadd.f32 %v6975, %v6939
      %v7012 = vadd.f32 %v6976, %v6940
      %v7013 = vadd.f32 %v6977, %v6941
      %v7014 = vadd.f32 %v6978, %v6942
      %v7015 = vadd.f32 %v6979, %v6943
      %v7016 = vadd.f32 %v6980, %v6944
      %v7017 = vadd.f32 %v6981, %v6945
      %v7018 = vadd.f32 %v6982, %v6946
      %v7019 = vadd.f32 %v6983, %v6947
      %v7020 = vadd.f32 %v6984, %v6948
      %v7021 = vadd.f32 %v6985, %v6949
      %v7022 = vadd.f32 %v6986, %v6950
      %v7023 = vadd.f32 %v6987, %v6951
      %v7024 = vadd.f32 %v6988, %v6952
      %v7025 = vadd.f32 %v6989, %v6953
      %v7026 = vadd.f32 %v6990, %v6954
      %v7027 = vadd.f32 %v6991, %v6955
      %v7028 = vadd.f32 %v6992, %v6956
      %v7029 = vadd.f32 %v6993, %v6957
      %v7030 = vadd.f32 %v6994, %v6958
      %v7031 = vmul.f32 %v6995, 0.7072136
      %v7032 = vmul.f32 %v6996, 0.7072136
      %v7033 = vmul.f32 %v6997, 0.7072136
      %v7034 = vmul.f32 %v6998, 0.7072136
      %v7035 = vmul.f32 %v6999, 0.7072136
      %v7036 = vmul.f32 %v7000, 0.7072136
      %v7037 = vmul.f32 %v7001, 0.7072136
      %v7038 = vmul.f32 %v7002, 0.7072136
      %v7039 = vmul.f32 %v7003, 0.7072136
      %v7040 = vmul.f32 %v7004, 0.7072136
      %v7041 = vmul.f32 %v7005, 0.7072136
      %v7042 = vmul.f32 %v7006, 0.7072136
      %v7043 = vmul.f32 %v7007, 0.7072136
      %v7044 = vmul.f32 %v7008, 0.7072136
      %v7045 = vmul.f32 %v7009, 0.7072136
      %v7046 = vmul.f32 %v7010, 0.7072136
      %v7047 = vmul.f32 %v7011, 0.7072136
      %v7048 = vmul.f32 %v7012, 0.7072136
      %v7049 = vmul.f32 %v7013, 0.7072136
      %v7050 = vmul.f32 %v7014, 0.7072136
      %v7051 = vmul.f32 %v7015, 0.7072136
      %v7052 = vmul.f32 %v7016, 0.7072136
      %v7053 = vmul.f32 %v7017, 0.7072136
      %v7054 = vmul.f32 %v7018, 0.7072136
      %v7055 = vmul.f32 %v7019, 0.7072136
      %v7056 = vmul.f32 %v7020, 0.7072136
      %v7057 = vmul.f32 %v7021, 0.7072136
      %v7058 = vmul.f32 %v7022, 0.7072136
      %v7059 = vmul.f32 %v7023, 0.7072136
      %v7060 = vmul.f32 %v7024, 0.7072136
      %v7061 = vmul.f32 %v7025, 0.7072136
      %v7062 = vmul.f32 %v7026, 0.7072136
      %v7063 = vmul.f32 %v7027, 0.7072136
      %v7064 = vmul.f32 %v7028, 0.7072136
      %v7065 = vmul.f32 %v7029, 0.7072136
      %v7066 = vmul.f32 %v7030, 0.7072136
      %7067 = vst.msk [vmem:[%s359] sm:$0xff] %vm2864, %v7031
      %7068 = vst.msk [vmem:[%s359 + $0x8] sm:$0xff] %vm2864, %v7032
      %7069 = vst.msk [vmem:[%s359 + $0x10] sm:$0xff] %vm2864, %v7033
      %7070 = vst.msk [vmem:[%s359 + $0x18] sm:$0xff] %vm2864, %v7034
      %7071 = vst.msk [vmem:[%s359 + $0x20] sm:$0xff] %vm2864, %v7035
      %7072 = vst.msk [vmem:[%s359 + $0x28] sm:$0xff] %vm2864, %v7036
      %7073 = vst.msk [vmem:[%s359 + $0x30] sm:$0xff] %vm2864, %v7037
      %7074 = vst.msk [vmem:[%s359 + $0x38] sm:$0xff] %vm2864, %v7038
      %7075 = vst.msk [vmem:[%s359 + $0x40] sm:$0xff] %vm2864, %v7039
      %7076 = vst.msk [vmem:[%s359 + $0x48] sm:$0xff] %vm2864, %v7040
      %7077 = vst.msk [vmem:[%s359 + $0x50] sm:$0xff] %vm2864, %v7041
      %7078 = vst.msk [vmem:[%s359 + $0x58] sm:$0xff] %vm2864, %v7042
      %7079 = vst.msk [vmem:[%s359 + $0x60] sm:$0xff] %vm2864, %v7043
      %7080 = vst.msk [vmem:[%s359 + $0x68] sm:$0xff] %vm2864, %v7044
      %7081 = vst.msk [vmem:[%s359 + $0x70] sm:$0xff] %vm2864, %v7045
      %7082 = vst.msk [vmem:[%s359 + $0x78] sm:$0xff] %vm2864, %v7046
      %7083 = vst.msk [vmem:[%s359 + $0x80] sm:$0xff] %vm2864, %v7047
      %7084 = vst.msk [vmem:[%s359 + $0x88] sm:$0xff] %vm2864, %v7048
      %7085 = vst.msk [vmem:[%s359 + $0x90] sm:$0xff] %vm2864, %v7049
      %7086 = vst.msk [vmem:[%s359 + $0x98] sm:$0xff] %vm2864, %v7050
      %7087 = vst.msk [vmem:[%s359 + $0xa0] sm:$0xff] %vm2864, %v7051
      %7088 = vst.msk [vmem:[%s359 + $0xa8] sm:$0xff] %vm2864, %v7052
      %7089 = vst.msk [vmem:[%s359 + $0xb0] sm:$0xff] %vm2864, %v7053
      %7090 = vst.msk [vmem:[%s359 + $0xb8] sm:$0xff] %vm2864, %v7054
      %7091 = vst.msk [vmem:[%s359 + $0xc0] sm:$0xff] %vm2864, %v7055
      %7092 = vst.msk [vmem:[%s359 + $0xc8] sm:$0xff] %vm2864, %v7056
      %7093 = vst.msk [vmem:[%s359 + $0xd0] sm:$0xff] %vm2864, %v7057
      %7094 = vst.msk [vmem:[%s359 + $0xd8] sm:$0xff] %vm2864, %v7058
      %7095 = vst.msk [vmem:[%s359 + $0xe0] sm:$0xff] %vm2864, %v7059
      %7096 = vst.msk [vmem:[%s359 + $0xe8] sm:$0xff] %vm2864, %v7060
      %7097 = vst.msk [vmem:[%s359 + $0xf0] sm:$0xff] %vm2864, %v7061
      %7098 = vst.msk [vmem:[%s359 + $0xf8] sm:$0xff] %vm2864, %v7062
      %7099 = vst.msk [vmem:[%s359 + $0x100] sm:$0xff] %vm2864, %v7063
      %7100 = vst.msk [vmem:[%s359 + $0x108] sm:$0xff] %vm2864, %v7064
      %7101 = vst.msk [vmem:[%s359 + $0x110] sm:$0xff] %vm2864, %v7065
      %7102 = vst.msk [vmem:[%s359 + $0x118] sm:$0xff] %vm2864, %v7066
      %p7103 = scmp.lt.s32.totalorder %s21, 1
      %s7104 = scalar_select %p7103, %s21, 1
      %s7105 = smul.addr %s7104, 36
      %s7106 = smul.addr %s7105, 8
      %s7107 = scalar_lea.vmem %s10, %s7106
      // Predicated region
      $region61: #{conv3_forward.1} parent=59 // pred_check
        %p7108 = pneg %p254
      $region62: #{conv3_forward.1} parent=59 // pred_check_branch
        %7110 = sbr.rel (%p7108) target = $region64
      $region63: #{conv3_forward.1} parent=59 // pred_region
        _
      $region64: #{conv3_forward.1} parent=59 // pred_fallthru
        _
    $region60: #{conv3_forward.1} parent=5 // pred_fallthru
      _
    %p7111 = scmp.le.s32.totalorder 2, %s16
    // Predicated region
    $region65: #{conv3_forward.1} parent=5 // pred_check
      %p7112 = pneg %p7111
    $region66: #{conv3_forward.1} parent=5 // pred_check_branch
      %7114 = sbr.rel (%p7112) target = $region68
    $region67: #{conv3_forward.1} parent=5 // pred_region
      %s7115 = ssub.s32 %s16, 2
      // Predicated region
      $region69: #{conv3_forward.1} parent=67 // pred_check
        %p7116 = pneg %p260
      $region70: #{conv3_forward.1} parent=67 // pred_check_branch
        %7118 = sbr.rel (%p7116) target = $region72
      $region71: #{conv3_forward.1} parent=67 // pred_region
        %p7119 = scmp.lt.s32.totalorder %s22, 1
        %s7120 = scalar_select %p7119, %s22, 1
        %s7121 = smul.addr %s7120, 36
        %s7122 = smul.addr %s7121, 8
        %s7123 = scalar_lea.vmem %s10, %s7122
      $region72: #{conv3_forward.1} parent=67 // pred_fallthru
        _
    $region68: #{conv3_forward.1} parent=5 // pred_fallthru
      _
  $region6: #{conv3_forward.1} parent=0 // loop_footer
    %s20 = sadd.s32 1, %s16
  $region7: #{conv3_forward.1} parent=0 // loop_footer_branch
    %15 = sbr.rel target = $region3
  $region8: #{conv3_forward.1} parent=0 // loop_exit
    _

</llo_original>
